<compile_context>
chip_gen: v6e
topology: v6e:2x2x1
jax: 0.10.0
libtpu: 0.0.40
codegen_flags: <defaults>
</compile_context>

<pallas_src>
import jax
import jax.numpy as jnp
from jax.experimental import pallas as pl
from jax.experimental.pallas import tpu as pltpu

# ---------------------------------------------------------------------------
# Module configuration (mirrors GameEmbeddingModule.__init__, default shapes)
# ---------------------------------------------------------------------------
# distinct Linear layers: name -> (in_features, out_features), bias=False
LAYER_DEFS = [
    ("player",  4,       4),
    ("boss",    10,      2),
    ("card",    370 * 2, 32),
    ("potions", 43,      8),
    ("relics",  180,     16),
    ("map",     805,     32),
    ("screen",  9,       4),
    ("event",   56,      16),
    ("prices",  15,      4),
]
LAYER_INDEX = {name: i for i, (name, _, _) in enumerate(LAYER_DEFS)}

# which distinct layer each of the 16 split segments is routed through
MODEL_ORDER = [
    "player", "boss", "card", "potions", "relics", "map", "screen", "event",
    "relics", "card", "card", "card", "card", "card", "potions", "prices",
]
SPLIT_SIZES = [4, 10, 740, 43, 180, 805, 9, 56, 180, 740, 740, 740, 740, 740, 43, 15]
OUT_SIZES = [LAYER_DEFS[LAYER_INDEX[m]][2] for m in MODEL_ORDER]
NUM_SEGMENTS = len(MODEL_ORDER)

IN_OFFSETS = [0]
for s in SPLIT_SIZES:
    IN_OFFSETS.append(IN_OFFSETS[-1] + s)

TOTAL_IN = IN_OFFSETS[-1]          # 5785
TOTAL_OUT = sum(OUT_SIZES)         # 302 == embedding_size

# Tiny segments fused into one block-diagonal matmul (segmented path only).
TINY_SEGS = [0, 1, 3, 6, 7, 14, 15]          # player,boss,potions,screen,event,potions,prices
TINY_IN = sum(SPLIT_SIZES[s] for s in TINY_SEGS)    # 180
TINY_OUT = sum(OUT_SIZES[s] for s in TINY_SEGS)     # 46
TINY_INPUT_GROUPS = [(0, 2), (3, 4), (6, 8), (14, 16)]   # contiguous col runs
assert [s for lo, hi in TINY_INPUT_GROUPS for s in range(lo, hi)] == TINY_SEGS

BIG_LAYERS = ("card", "relics", "map")       # kept as separate matmuls (segmented path)


# ---------------------------------------------------------------------------
# Kernels
# ---------------------------------------------------------------------------
def fused_kernel(x_ref, w_ref, out_ref):
    """One block-diagonal matmul: (bm, 5785) @ (5785, 302) -> (bm, 302)."""
    # f32 -> bf16 cast on the VPU; hidden under the (dominant) input DMA.
    x = x_ref[...].astype(w_ref.dtype)
    out_ref[...] = jnp.dot(
        x, w_ref[...], preferred_element_type=jnp.float32).astype(out_ref.dtype)


def segmented_kernel(x_ref, w_card_ref, w_relics_ref, w_map_ref,
                     w_tiny_ref, out_ref):
    """Low-FLOP path (kept for v5e): per-segment matmuls grouped by weight."""
    f32 = jnp.float32
    cdt = w_card_ref.dtype
    x = x_ref[...].astype(cdt)         # single in-register cast of the tile

    big_w = {
        "card":   w_card_ref[...],     # (740, 32)
        "relics": w_relics_ref[...],   # (180, 16)
        "map":    w_map_ref[...],      # (805, 32)
    }
    w_tiny = w_tiny_ref[...]           # (180, 46) block-diagonal

    # fused tiny layers: 4 contiguous column groups -> one (bm,180)@(180,46)
    x_tiny = jnp.concatenate(
        [x[:, IN_OFFSETS[lo]:IN_OFFSETS[hi]] for lo, hi in TINY_INPUT_GROUPS],
        axis=-1)
    y_tiny = jnp.dot(x_tiny, w_tiny, preferred_element_type=f32)

    seg_out = {}

    # big layers, grouped by weight so the MXU reuses the RHS back-to-back
    for name in BIG_LAYERS:
        w = big_w[name]
        for seg in range(NUM_SEGMENTS):
            if MODEL_ORDER[seg] != name:
                continue
            a, b = IN_OFFSETS[seg], IN_OFFSETS[seg + 1]
            seg_out[seg] = jnp.dot(x[:, a:b], w, preferred_element_type=f32)

    # tiny segments: slice the fused result (columns in TINY_SEGS order)
    off = 0
    for seg in TINY_SEGS:
        w_out = OUT_SIZES[seg]
        seg_out[seg] = y_tiny[:, off:off + w_out]
        off += w_out

    # single lane-dense store in original segment order
    out = jnp.concatenate([seg_out[seg] for seg in range(NUM_SEGMENTS)], axis=-1)
    out_ref[...] = out.astype(out_ref.dtype)


# ---------------------------------------------------------------------------
# Weight preparation (wrapper-side, one-time; negligible vs per-batch traffic)
# ---------------------------------------------------------------------------
def build_tiny_block_diag(weights, dtype):
    """(180, 46) block-diagonal weight covering the 7 tiny segments."""
    w = jnp.zeros((TINY_IN, TINY_OUT), dtype)
    r = c = 0
    for seg in TINY_SEGS:
        wl = weights[LAYER_INDEX[MODEL_ORDER[seg]]].astype(dtype)
        in_f, out_f = wl.shape
        assert in_f == SPLIT_SIZES[seg] and out_f == OUT_SIZES[seg]
        w = w.at[r:r + in_f, c:c + out_f].set(wl)
        r += in_f
        c += out_f
    return w


def build_full_block_diag(weights, dtype):
    """(5785, 302) block-diagonal weight covering all 16 segments."""
    w = jnp.zeros((TOTAL_IN, TOTAL_OUT), dtype)
    c = 0
    for seg in range(NUM_SEGMENTS):
        wl = weights[LAYER_INDEX[MODEL_ORDER[seg]]].astype(dtype)
        in_f, out_f = wl.shape
        assert in_f == SPLIT_SIZES[seg] and out_f == OUT_SIZES[seg]
        r = IN_OFFSETS[seg]
        w = w.at[r:r + in_f, c:c + out_f].set(wl)
        c += out_f
    return w


# ---------------------------------------------------------------------------
# Wrapper
# ---------------------------------------------------------------------------
def _pick_bm(B, bm):
    bm = max(8, min(bm, B))
    # prefer >= 2 grid steps so both v7x TensorCores are fed by the
    # "parallel" batch axis
    if bm >= B and B >= 16:
        bm = pl.cdiv(B, 2)
    if bm < B:
        align = 128 if bm >= 128 else 8     # MXU-friendly M for large tiles
        bm = max(align, (bm // align) * align)
    return bm


def _default_mode():
    # v5e's 197 TF/s MXU has the least headroom; keep the low-FLOP segmented
    # path there, use the fully-fused single matmul elsewhere.
    try:
        kind = jax.devices()[0].device_kind.lower()
    except Exception:
        kind = ""
    if "v5 lite" in kind or "v5e" in kind or "v5lite" in kind:
        return "segmented"
    return "fused"


def game_embedding_forward(game, weights, *, bm=256, mode="auto",
                           compute_dtype=jnp.bfloat16,
                           vmem_limit_bytes=40 << 20):
    """game: (B, 5785) float32 (ingested as-is, cast in-kernel);
    weights: list of (in, out) arrays in LAYER_DEFS order (PyTorch weight
    transposed).  Returns (B, 302) float32."""
    B, F = game.shape
    assert F == TOTAL_IN

    if mode == "auto":
        mode = _default_mode()

    bm = _pick_bm(B, bm)
    grid = (pl.cdiv(B, bm),)

    cparams = pltpu.CompilerParams(
        dimension_semantics=("parallel",),      # shard batch steps across TCs
        vmem_limit_bytes=vmem_limit_bytes,      # 40 MiB: safe on v7x's 64 MiB
    )
    out_specs = pl.BlockSpec((bm, TOTAL_OUT), lambda i: (i, 0))
    x_spec = pl.BlockSpec((bm, TOTAL_IN), lambda i: (i, 0))   # streamed per step

    if mode == "fused":
        w_full = build_full_block_diag(weights, compute_dtype)   # ~3.5 MiB bf16
        return pl.pallas_call(
            fused_kernel,
            out_shape=jax.ShapeDtypeStruct((B, TOTAL_OUT), jnp.float32),
            grid=grid,
            in_specs=[x_spec,
                      pl.BlockSpec(w_full.shape, lambda i: (0, 0))],  # VMEM-resident
            out_specs=out_specs,
            compiler_params=cparams,
        )(game, w_full)

    # mode == "segmented"
    w_card = weights[LAYER_INDEX["card"]].astype(compute_dtype)
    w_relics = weights[LAYER_INDEX["relics"]].astype(compute_dtype)
    w_map = weights[LAYER_INDEX["map"]].astype(compute_dtype)
    w_tiny = build_tiny_block_diag(weights, compute_dtype)
    return pl.pallas_call(
        segmented_kernel,
        out_shape=jax.ShapeDtypeStruct((B, TOTAL_OUT), jnp.float32),
        grid=grid,
        in_specs=[x_spec,
                  pl.BlockSpec(w_card.shape, lambda i: (0, 0)),
                  pl.BlockSpec(w_relics.shape, lambda i: (0, 0)),
                  pl.BlockSpec(w_map.shape, lambda i: (0, 0)),
                  pl.BlockSpec(w_tiny.shape, lambda i: (0, 0))],
        out_specs=out_specs,
        compiler_params=cparams,
    )(game, w_card, w_relics, w_map, w_tiny)


# ---------------------------------------------------------------------------
# Pure-JAX references (mirror the PyTorch forward)
# ---------------------------------------------------------------------------
def reference_forward(game, weights, compute_dtype=jnp.float32):
    x = game.astype(compute_dtype)
    outs = []
    off = 0
    for name, in_sz in zip(MODEL_ORDER, SPLIT_SIZES):
        w = weights[LAYER_INDEX[name]].astype(compute_dtype)
        outs.append(jnp.dot(x[:, off:off + in_sz], w,
                            preferred_element_type=jnp.float32))
        off += in_sz
    return jnp.concatenate(outs, axis=-1)


# ---------------------------------------------------------------------------
# Deterministic parameter init (PyTorch Linear default: U(-1/sqrt(in), 1/sqrt(in)))
# ---------------------------------------------------------------------------
def init_weights(key):
    weights = []
    for i, (_, in_f, out_f) in enumerate(LAYER_DEFS):
        k = jax.random.fold_in(key, i)
        bound = 1.0 / (in_f ** 0.5)
        # stored pre-transposed: (in_features, out_features) so y = x @ w
        weights.append(jax.random.uniform(k, (in_f, out_f), jnp.float32, -bound, bound))
    return weights


if __name__ == "__main__":
    key = jax.random.PRNGKey(0)
    k_w, k_x = jax.random.split(key)

    weights = init_weights(k_w)

    B = 64                       # small batch; bm=16 -> grid=(4,) exercises the pipeline
    game = jax.random.normal(k_x, (B, TOTAL_IN), jnp.float32)

    ref_bf16 = reference_forward(game, weights, jnp.bfloat16)   # same compute dtype
    ref_f32 = reference_forward(game, weights, jnp.float32)     # PyTorch-parity bound

    for mode in ("fused", "segmented"):
        out = jax.block_until_ready(
            game_embedding_forward(game, weights, bm=16, mode=mode))
        assert out.shape == (B, TOTAL_OUT), (mode, out.shape)
        assert jnp.allclose(out, ref_bf16, atol=2e-3, rtol=2e-3), \
            f"{mode}: mismatch vs bf16 reference"
        assert jnp.allclose(out, ref_f32, atol=5e-2, rtol=5e-2), \
            f"{mode}: bf16-compute drift vs f32 reference too large"

    # ragged batch: B not divisible by bm exercises the masked final tile
    B2 = 56
    game2 = jax.random.normal(jax.random.fold_in(key, 7), (B2, TOTAL_IN), jnp.float32)
    out2 = jax.block_until_ready(
        game_embedding_forward(game2, weights, bm=16, mode="fused"))
    ref2 = reference_forward(game2, weights, jnp.bfloat16)
    assert out2.shape == (B2, TOTAL_OUT), out2.shape
    assert jnp.allclose(out2, ref2, atol=2e-3, rtol=2e-3), "ragged-batch mismatch"

    print("KERNEL_OK")
</pallas_src>

<mosaic_0001>
module attributes {stable_mosaic.version = 11 : i64} {
  func.func @fused_kernel(%arg0: i32, %arg1: memref<16x5785xf32, #tpu.memory_space<vmem>>, %arg2: memref<5785x302xbf16, #tpu.memory_space<vmem>>, %arg3: memref<16x302xf32, #tpu.memory_space<vmem>>) attributes {dimension_semantics = [#tpu.dimension_semantics<parallel>], iteration_bounds = array<i64: 4>, scalar_prefetch = 0 : i64, scratch_operands = 0 : i64, tpu.core_type = #tpu.core_type<tc>, window_params = [{transform_indices = @transform_0, window_bounds = array<i64: 16, 5785>}, {pipeline_mode = #tpu.pipeline_mode<synchronous>, transform_indices = @transform_1, window_bounds = array<i64: 5785, 302>}, {transform_indices = @transform_2, window_bounds = array<i64: 16, 302>}]} {
    %c0 = arith.constant 0 : index
    %c0_0 = arith.constant 0 : index
    %0 = vector.load %arg1[%c0, %c0_0] : memref<16x5785xf32, #tpu.memory_space<vmem>>, vector<16x5785xf32>
    %1 = arith.truncf %0 : vector<16x5785xf32> to vector<16x5785xbf16>
    %c0_1 = arith.constant 0 : index
    %c0_2 = arith.constant 0 : index
    %2 = vector.load %arg2[%c0_1, %c0_2] : memref<5785x302xbf16, #tpu.memory_space<vmem>>, vector<5785x302xbf16>
    %cst = arith.constant dense<0.000000e+00> : vector<16x302xf32>
    %3 = tpu.matmul %1, %2, %cst {dimension_numbers = #tpu.dot_dimension_numbers<[1], [0], [0], [1], [0, 0, 1, 1], [], []>} : vector<16x5785xbf16>, vector<5785x302xbf16>, vector<16x302xf32> -> vector<16x302xf32>
    %c0_3 = arith.constant 0 : index
    %c0_4 = arith.constant 0 : index
    %4 = vector.load %arg3[%c0_3, %c0_4] : memref<16x302xf32, #tpu.memory_space<vmem>>, vector<16x302xf32>
    tpu.vector_store %arg3[%c0_3, %c0_4], %3 {strides = array<i32>} : memref<16x302xf32, #tpu.memory_space<vmem>>, vector<16x302xf32>,
    return
  }
  func.func @transform_0(%arg0: i32) -> (i32, i32) {
    %c0_i32 = arith.constant 0 : i32
    %c0_i32_0 = arith.constant 0 : i32
    return %arg0, %c0_i32 : i32, i32
  }
  func.func @transform_1(%arg0: i32) -> (i32, i32) {
    %c0_i32 = arith.constant 0 : i32
    %c0_i32_0 = arith.constant 0 : i32
    %c0_i32_1 = arith.constant 0 : i32
    return %c0_i32, %c0_i32_0 : i32, i32
  }
  func.func @transform_2(%arg0: i32) -> (i32, i32) {
    %c0_i32 = arith.constant 0 : i32
    %c0_i32_0 = arith.constant 0 : i32
    return %arg0, %c0_i32 : i32, i32
  }
}

</mosaic_0001>

<llo_original>
// kernel: tpu_custom_call.1
$region0: #{tpu_custom_call.1}
  #allocation0 [shape = 'u32[]', space=smem, size = 0x4, offset = 0x4, fixed_abs, tag = 'smem constant byte address 0x4 - core index']
  #allocation1 [shape = 'u32[144,128]{1,0:T(1,128)}', space=vmem, size = 0x12000, scoped, tag = 'internal scratch']
  %s0 = inlined_call_operand.vmem [shape: f32[64,5785], index: 0, kind: input, shape index: {}]
  %s1 = inlined_call_operand.vmem [shape: bf16[5785,302], index: 1, kind: input, shape index: {}]
  %s2 = inlined_call_operand.hbm [shape: f32[64,302], index: 2, kind: output, shape index: {}]
  %s3 = sld [smem:[#allocation0]]
  $region41: #{tpu_custom_call.1} parent=0
    _
  %s5 = ssub.s32 1, %s3
  %s6 = scalar_select 0, %s5, %s3
  $region1: #{tpu_custom_call.1} parent=0
    #allocation2 [shape = 'u8[49152]{0}', space=vmem, size = 0xc000, scoped, tag = 'output window, operand 0']
    #allocation3 [shape = 's32[2]{0}', space=sflag, size = 0x8, scoped, tag = 'scoped memory for tpu_custom_call.1']
    %7 = vsyncpa [#allocation3], 0
    %s8 = scalar_lea.sflag [#allocation3], 1
    %9 = vsyncpa %s8, 0
    loop: start=0, step=1, limit=6
    $region2: #{tpu_custom_call.1} parent=1 // loop_pre_header
      _
    $region3: #{tpu_custom_call.1} parent=1 // loop_header
      %s11 = sphi 0, %s15
      %p12 = scmp.ge.s32.totalorder %s11, 6
      %s21 = sphi 0, %s23
      %s24 = sphi 0, %s21
      %s25 = sphi 0, %s24
      %s41 = sphi 0, %s25
      %s45 = sphi 0, %s45
      %s47 = sphi 0, %s45
      %s48 = sphi 0, %s47
      %s62 = sphi 0, %s48
      %s68 = sphi 0, %s70
      %s71 = sphi 0, %s68
      %s72 = sphi 0, %s71
      %s88 = sphi 0, %s72
    $region4: #{tpu_custom_call.1} parent=1 // loop_header_branch
      %14 = sbr.rel (%p12) target = $region8
    $region5: #{tpu_custom_call.1} parent=1 // loop_body
      %s16 = ssub.s32 %s11, 1
      %s17 = ssub.s32 %s11, 2
      %s18 = sadd.s32 %s11, 1
      %s19 = ssub.s32 %s11, %s18
      %p20 = scmp.eq.s32.totalorder %s19, 0
      %s22 = sadd.s32 %s21, 1
      %s23 = scalar_select %p20, %s21, %s22
      %p26 = pneg %p20
      %p27 = scmp.eq.s32.totalorder %s11, 3
      %p28 = por %p26, %p27
      %p29 = scmp.ne.s32.totalorder %s21, %s24
      %p30 = scmp.eq.s32.totalorder %s11, 0
      %p31 = por %p29, %p30
      %p32 = scmp.ne.s32.totalorder %s21, %s24
      %p33 = scmp.eq.s32.totalorder %s16, 3
      %p34 = por %p32, %p33
      %p35 = scmp.ne.s32.totalorder %s24, %s25
      %p36 = scmp.eq.s32.totalorder %s16, 0
      %p37 = por %p35, %p36
      %p38 = scmp.ne.s32.totalorder %s24, %s25
      %p39 = scmp.eq.s32.totalorder %s17, 3
      %p40 = por %p38, %p39
      %p42 = scmp.ne.s32.totalorder %s25, %s41
      %p43 = scmp.eq.s32.totalorder %s17, 0
      %p44 = por %p42, %p43
      %s46 = sadd.s32 %s45, 1
      %p49 = scmp.eq.s32.totalorder %s11, 3
      %p50 = scmp.ne.s32.totalorder %s45, %s47
      %p51 = scmp.eq.s32.totalorder %s11, 0
      %p52 = por %p50, %p51
      %p53 = scmp.ne.s32.totalorder %s45, %s47
      %p54 = scmp.eq.s32.totalorder %s16, 3
      %p55 = por %p53, %p54
      %p56 = scmp.ne.s32.totalorder %s47, %s48
      %p57 = scmp.eq.s32.totalorder %s16, 0
      %p58 = por %p56, %p57
      %p59 = scmp.ne.s32.totalorder %s47, %s48
      %p60 = scmp.eq.s32.totalorder %s17, 3
      %p61 = por %p59, %p60
      %p63 = scmp.ne.s32.totalorder %s48, %s62
      %p64 = scmp.eq.s32.totalorder %s17, 0
      %p65 = por %p63, %p64
      %s66 = ssub.s32 %s11, %s18
      %p67 = scmp.eq.s32.totalorder %s66, 0
      %s69 = sadd.s32 %s68, 1
      %s70 = scalar_select %p67, %s68, %s69
      %p73 = pneg %p67
      %p74 = scmp.eq.s32.totalorder %s11, 3
      %p75 = por %p73, %p74
      %p76 = scmp.ne.s32.totalorder %s68, %s71
      %p77 = scmp.eq.s32.totalorder %s11, 0
      %p78 = por %p76, %p77
      %p79 = scmp.ne.s32.totalorder %s68, %s71
      %p80 = scmp.eq.s32.totalorder %s16, 3
      %p81 = por %p79, %p80
      %p82 = scmp.ne.s32.totalorder %s71, %s72
      %p83 = scmp.eq.s32.totalorder %s16, 0
      %p84 = por %p82, %p83
      %p85 = scmp.ne.s32.totalorder %s71, %s72
      %p86 = scmp.eq.s32.totalorder %s17, 3
      %p87 = por %p85, %p86
      %p89 = scmp.ne.s32.totalorder %s72, %s88
      %p90 = scmp.eq.s32.totalorder %s17, 0
      %p91 = por %p89, %p90
      %p92 = scmp.le.s32.totalorder 1, %s11
      %p93 = scmp.lt.s32.totalorder %s11, 5
      %p94 = pnand %p92, %p93
      %p95 = pneg %p94
      // Predicated region
      $region9: #{tpu_custom_call.1} parent=5 // pred_check
        _
      $region10: #{tpu_custom_call.1} parent=5 // pred_check_branch
        %97 = sbr.rel (%p94) target = $region12
      $region11: #{tpu_custom_call.1} parent=5 // pred_region
        %s98 = ssub.s32 %s11, 1
        // Predicated region
        $region13: #{tpu_custom_call.1} parent=11 // pred_check
          %p99 = pneg %p58
        $region14: #{tpu_custom_call.1} parent=11 // pred_check_branch
          %101 = sbr.rel (%p99) target = $region16
        $region15: #{tpu_custom_call.1} parent=11 // pred_region
          _
        $region16: #{tpu_custom_call.1} parent=11 // pred_fallthru
          _
      $region12: #{tpu_custom_call.1} parent=5 // pred_fallthru
        _
      %p102 = scmp.lt.s32.totalorder %s11, 4
      // Predicated region
      $region17: #{tpu_custom_call.1} parent=5 // pred_check
        %p103 = pneg %p102
      $region18: #{tpu_custom_call.1} parent=5 // pred_check_branch
        %105 = sbr.rel (%p103) target = $region20
      $region19: #{tpu_custom_call.1} parent=5 // pred_region
        // Predicated region
        $region21: #{tpu_custom_call.1} parent=19 // pred_check
          %p106 = pneg %p31
        $region22: #{tpu_custom_call.1} parent=19 // pred_check_branch
          %108 = sbr.rel (%p106) target = $region24
        $region23: #{tpu_custom_call.1} parent=19 // pred_region
          %s109 = smul.u32 2, %s11
          %p110 = scmp.lt.s32.totalorder %s109, 7
          %s111 = scalar_select %p110, %s109, 7
          %s112 = smul.addr %s111, 46
          %s113 = smul.addr %s112, 8
          %s114 = scalar_lea.vmem %s0, %s113
          %s115 = smul.u32 2, %s11
        $region24: #{tpu_custom_call.1} parent=19 // pred_fallthru
          _
      $region20: #{tpu_custom_call.1} parent=5 // pred_fallthru
        _
      %p116 = scmp.le.s32.totalorder 1, %s11
      %p117 = scmp.lt.s32.totalorder %s11, 5
      %p118 = pnand %p116, %p117
      %p119 = pneg %p118
      // Predicated region
      $region25: #{tpu_custom_call.1} parent=5 // pred_check
        _
      $region26: #{tpu_custom_call.1} parent=5 // pred_check_branch
        %121 = sbr.rel (%p118) target = $region28
      $region27: #{tpu_custom_call.1} parent=5 // pred_region
        %s122 = ssub.s32 %s11, 1
        %s123 = smul.u32 2, %s16
        %p124 = scmp.lt.s32.totalorder %s123, 7
        %s125 = scalar_select %p124, %s123, 7
        %s126 = smul.addr %s125, 46
        %s127 = smul.addr %s126, 8
        %s128 = scalar_lea.vmem %s0, %s127
        %p129 = pneg %p37
        %p130 = pneg %p34
        %p131 = pneg %p58
        %p132 = pneg %p55
        %p133 = pneg %p84
        %p134 = pneg %p81
        %s135 = sand.u32 %s71, 1
        %s136 = scalar_lea.sflag [#allocation3], %s135
        %s137 = sand.u32 %s71, 1
        %s138 = smul.addr %s137, 48
        %s139 = scalar_lea.vmem [#allocation2], %s138
        %s140 = smul.u32 2, %s16
        %p141 = scmp.lt.s32.totalorder %s140, 7
        %s142 = scalar_select %p141, %s140, 7
        %s143 = smul.addr %s142, 46
        %s144 = smul.addr %s143, 8
        %s145 = scalar_lea.vmem %s0, %s144
        %s146 = smul.u32 2, %s16
        %s147 = smul.u32 2, %s16
        %v149 = vld [vmem:[%s145] sm:$0xff]
        %v150 = vld [vmem:[%s145 + $0x8] sm:$0xff]
        %v151 = vld [vmem:[%s145 + $0x10] sm:$0xff]
        %v152 = vld [vmem:[%s145 + $0x18] sm:$0xff]
        %v153 = vld [vmem:[%s145 + $0x20] sm:$0xff]
        %v154 = vld [vmem:[%s145 + $0x28] sm:$0xff]
        %v155 = vld [vmem:[%s145 + $0x30] sm:$0xff]
        %v156 = vld [vmem:[%s145 + $0x38] sm:$0xff]
        %v157 = vld [vmem:[%s145 + $0x40] sm:$0xff]
        %v158 = vld [vmem:[%s145 + $0x48] sm:$0xff]
        %v159 = vld [vmem:[%s145 + $0x50] sm:$0xff]
        %v160 = vld [vmem:[%s145 + $0x58] sm:$0xff]
        %v161 = vld [vmem:[%s145 + $0x60] sm:$0xff]
        %v162 = vld [vmem:[%s145 + $0x68] sm:$0xff]
        %v163 = vld [vmem:[%s145 + $0x70] sm:$0xff]
        %v164 = vld [vmem:[%s145 + $0x78] sm:$0xff]
        %v165 = vld [vmem:[%s145 + $0x80] sm:$0xff]
        %v166 = vld [vmem:[%s145 + $0x88] sm:$0xff]
        %v167 = vld [vmem:[%s145 + $0x90] sm:$0xff]
        %v168 = vld [vmem:[%s145 + $0x98] sm:$0xff]
        %v169 = vld [vmem:[%s145 + $0xa0] sm:$0xff]
        %v170 = vld [vmem:[%s145 + $0xa8] sm:$0xff]
        %v171 = vld [vmem:[%s145 + $0xb0] sm:$0xff]
        %v172 = vld [vmem:[%s145 + $0xb8] sm:$0xff]
        %v173 = vld [vmem:[%s145 + $0xc0] sm:$0xff]
        %v174 = vld [vmem:[%s145 + $0xc8] sm:$0xff]
        %v175 = vld [vmem:[%s145 + $0xd0] sm:$0xff]
        %v176 = vld [vmem:[%s145 + $0xd8] sm:$0xff]
        %v177 = vld [vmem:[%s145 + $0xe0] sm:$0xff]
        %v178 = vld [vmem:[%s145 + $0xe8] sm:$0xff]
        %v179 = vld [vmem:[%s145 + $0xf0] sm:$0xff]
        %v180 = vld [vmem:[%s145 + $0xf8] sm:$0xff]
        %v181 = vld [vmem:[%s145 + $0x100] sm:$0xff]
        %v182 = vld [vmem:[%s145 + $0x108] sm:$0xff]
        %v183 = vld [vmem:[%s145 + $0x110] sm:$0xff]
        %v184 = vld [vmem:[%s145 + $0x118] sm:$0xff]
        %v185 = vld [vmem:[%s145 + $0x120] sm:$0xff]
        %v186 = vld [vmem:[%s145 + $0x128] sm:$0xff]
        %v187 = vld [vmem:[%s145 + $0x130] sm:$0xff]
        %v188 = vld [vmem:[%s145 + $0x138] sm:$0xff]
        %v189 = vld [vmem:[%s145 + $0x140] sm:$0xff]
        %v190 = vld [vmem:[%s145 + $0x148] sm:$0xff]
        %v191 = vld [vmem:[%s145 + $0x150] sm:$0xff]
        %v192 = vld [vmem:[%s145 + $0x158] sm:$0xff]
        %v193 = vld [vmem:[%s145 + $0x160] sm:$0xff]
        %v194 = vld [vmem:[%s145 + $0x168] sm:$0xff]
        %v195 = vld [vmem:[%s145 + $0x170] sm:$0xff]
        %v196 = vld [vmem:[%s145 + $0x178] sm:$0xff]
        %v197 = vld [vmem:[%s145 + $0x180] sm:$0xff]
        %v198 = vld [vmem:[%s145 + $0x188] sm:$0xff]
        %v199 = vld [vmem:[%s145 + $0x190] sm:$0xff]
        %v200 = vld [vmem:[%s145 + $0x198] sm:$0xff]
        %v201 = vld [vmem:[%s145 + $0x1a0] sm:$0xff]
        %v202 = vld [vmem:[%s145 + $0x1a8] sm:$0xff]
        %v203 = vld [vmem:[%s145 + $0x1b0] sm:$0xff]
        %v204 = vld [vmem:[%s145 + $0x1b8] sm:$0xff]
        %v205 = vld [vmem:[%s145 + $0x1c0] sm:$0xff]
        %v206 = vld [vmem:[%s145 + $0x1c8] sm:$0xff]
        %v207 = vld [vmem:[%s145 + $0x1d0] sm:$0xff]
        %v208 = vld [vmem:[%s145 + $0x1d8] sm:$0xff]
        %v209 = vld [vmem:[%s145 + $0x1e0] sm:$0xff]
        %v210 = vld [vmem:[%s145 + $0x1e8] sm:$0xff]
        %v211 = vld [vmem:[%s145 + $0x1f0] sm:$0xff]
        %v212 = vld [vmem:[%s145 + $0x1f8] sm:$0xff]
        %v213 = vld [vmem:[%s145 + $0x200] sm:$0xff]
        %v214 = vld [vmem:[%s145 + $0x208] sm:$0xff]
        %v215 = vld [vmem:[%s145 + $0x210] sm:$0xff]
        %v216 = vld [vmem:[%s145 + $0x218] sm:$0xff]
        %v217 = vld [vmem:[%s145 + $0x220] sm:$0xff]
        %v218 = vld [vmem:[%s145 + $0x228] sm:$0xff]
        %v219 = vld [vmem:[%s145 + $0x230] sm:$0xff]
        %v220 = vld [vmem:[%s145 + $0x238] sm:$0xff]
        %v221 = vld [vmem:[%s145 + $0x240] sm:$0xff]
        %v222 = vld [vmem:[%s145 + $0x248] sm:$0xff]
        %v223 = vld [vmem:[%s145 + $0x250] sm:$0xff]
        %v224 = vld [vmem:[%s145 + $0x258] sm:$0xff]
        %v225 = vld [vmem:[%s145 + $0x260] sm:$0xff]
        %v226 = vld [vmem:[%s145 + $0x268] sm:$0xff]
        %v227 = vld [vmem:[%s145 + $0x270] sm:$0xff]
        %v228 = vld [vmem:[%s145 + $0x278] sm:$0xff]
        %v229 = vld [vmem:[%s145 + $0x280] sm:$0xff]
        %v230 = vld [vmem:[%s145 + $0x288] sm:$0xff]
        %v231 = vld [vmem:[%s145 + $0x290] sm:$0xff]
        %v232 = vld [vmem:[%s145 + $0x298] sm:$0xff]
        %v233 = vld [vmem:[%s145 + $0x2a0] sm:$0xff]
        %v234 = vld [vmem:[%s145 + $0x2a8] sm:$0xff]
        %v235 = vld [vmem:[%s145 + $0x2b0] sm:$0xff]
        %v236 = vld [vmem:[%s145 + $0x2b8] sm:$0xff]
        %v237 = vld [vmem:[%s145 + $0x2c0] sm:$0xff]
        %v238 = vld [vmem:[%s145 + $0x2c8] sm:$0xff]
        %v239 = vld [vmem:[%s145 + $0x2d0] sm:$0xff]
        %v240 = vld [vmem:[%s145 + $0x2d8] sm:$0xff]
        %v241 = vpack.c.bf16 %v195, %v149
        %v242 = vpack.c.bf16 %v196, %v150
        %v243 = vpack.c.bf16 %v197, %v151
        %v244 = vpack.c.bf16 %v198, %v152
        %v245 = vpack.c.bf16 %v199, %v153
        %v246 = vpack.c.bf16 %v200, %v154
        %v247 = vpack.c.bf16 %v201, %v155
        %v248 = vpack.c.bf16 %v202, %v156
        %v249 = vpack.c.bf16 %v203, %v157
        %v250 = vpack.c.bf16 %v204, %v158
        %v251 = vpack.c.bf16 %v205, %v159
        %v252 = vpack.c.bf16 %v206, %v160
        %v253 = vpack.c.bf16 %v207, %v161
        %v254 = vpack.c.bf16 %v208, %v162
        %v255 = vpack.c.bf16 %v209, %v163
        %v256 = vpack.c.bf16 %v210, %v164
        %v257 = vpack.c.bf16 %v211, %v165
        %v258 = vpack.c.bf16 %v212, %v166
        %v259 = vpack.c.bf16 %v213, %v167
        %v260 = vpack.c.bf16 %v214, %v168
        %v261 = vpack.c.bf16 %v215, %v169
        %v262 = vpack.c.bf16 %v216, %v170
        %v263 = vpack.c.bf16 %v217, %v171
        %v264 = vpack.c.bf16 %v218, %v172
        %v265 = vpack.c.bf16 %v219, %v173
        %v266 = vpack.c.bf16 %v220, %v174
        %v267 = vpack.c.bf16 %v221, %v175
        %v268 = vpack.c.bf16 %v222, %v176
        %v269 = vpack.c.bf16 %v223, %v177
        %v270 = vpack.c.bf16 %v224, %v178
        %v271 = vpack.c.bf16 %v225, %v179
        %v272 = vpack.c.bf16 %v226, %v180
        %v273 = vpack.c.bf16 %v227, %v181
        %v274 = vpack.c.bf16 %v228, %v182
        %v275 = vpack.c.bf16 %v229, %v183
        %v276 = vpack.c.bf16 %v230, %v184
        %v277 = vpack.c.bf16 %v231, %v185
        %v278 = vpack.c.bf16 %v232, %v186
        %v279 = vpack.c.bf16 %v233, %v187
        %v280 = vpack.c.bf16 %v234, %v188
        %v281 = vpack.c.bf16 %v235, %v189
        %v282 = vpack.c.bf16 %v236, %v190
        %v283 = vpack.c.bf16 %v237, %v191
        %v284 = vpack.c.bf16 %v238, %v192
        %v285 = vpack.c.bf16 %v239, %v193
        %v286 = vpack.c.bf16 %v240, %v194
        %v287 = vld [vmem:[%s1] sm:$0xff]
        %v288 = vld [vmem:[%s1 + $0x8] sm:$0xf]
        %v289 = vld [vmem:[%s1 + $0xc] sm:$0xff]
        %v290 = vld [vmem:[%s1 + $0x14] sm:$0xf]
        %v291 = vld [vmem:[%s1 + $0x18] sm:$0xff]
        %v292 = vld [vmem:[%s1 + $0x20] sm:$0xf]
        %v293 = vld [vmem:[%s1 + $0x24] sm:$0xff]
        %v294 = vld [vmem:[%s1 + $0x2c] sm:$0xf]
        %v295 = vld [vmem:[%s1 + $0x30] sm:$0xff]
        %v296 = vld [vmem:[%s1 + $0x38] sm:$0xf]
        %v297 = vld [vmem:[%s1 + $0x3c] sm:$0xff]
        %v298 = vld [vmem:[%s1 + $0x44] sm:$0xf]
        %v299 = vld [vmem:[%s1 + $0x48] sm:$0xff]
        %v300 = vld [vmem:[%s1 + $0x50] sm:$0xf]
        %v301 = vld [vmem:[%s1 + $0x54] sm:$0xff]
        %v302 = vld [vmem:[%s1 + $0x5c] sm:$0xf]
        %v303 = vld [vmem:[%s1 + $0x60] sm:$0xff]
        %v304 = vld [vmem:[%s1 + $0x68] sm:$0xf]
        %v305 = vld [vmem:[%s1 + $0x6c] sm:$0xff]
        %v306 = vld [vmem:[%s1 + $0x74] sm:$0xf]
        %v307 = vld [vmem:[%s1 + $0x78] sm:$0xff]
        %v308 = vld [vmem:[%s1 + $0x80] sm:$0xf]
        %v309 = vld [vmem:[%s1 + $0x84] sm:$0xff]
        %v310 = vld [vmem:[%s1 + $0x8c] sm:$0xf]
        %v311 = vld [vmem:[%s1 + $0x90] sm:$0xff]
        %v312 = vld [vmem:[%s1 + $0x98] sm:$0xf]
        %v313 = vld [vmem:[%s1 + $0x9c] sm:$0xff]
        %v314 = vld [vmem:[%s1 + $0xa4] sm:$0xf]
        %v315 = vld [vmem:[%s1 + $0xa8] sm:$0xff]
        %v316 = vld [vmem:[%s1 + $0xb0] sm:$0xf]
        %v317 = vld [vmem:[%s1 + $0xb4] sm:$0xff]
        %v318 = vld [vmem:[%s1 + $0xbc] sm:$0xf]
        %v319 = vld [vmem:[%s1 + $0xc0] sm:$0xff]
        %v320 = vld [vmem:[%s1 + $0xc8] sm:$0xf]
        %v321 = vld [vmem:[%s1 + $0xcc] sm:$0xff]
        %v322 = vld [vmem:[%s1 + $0xd4] sm:$0xf]
        %v323 = vld [vmem:[%s1 + $0xd8] sm:$0xff]
        %v324 = vld [vmem:[%s1 + $0xe0] sm:$0xf]
        %v325 = vld [vmem:[%s1 + $0xe4] sm:$0xff]
        %v326 = vld [vmem:[%s1 + $0xec] sm:$0xf]
        %v327 = vld [vmem:[%s1 + $0xf0] sm:$0xff]
        %v328 = vld [vmem:[%s1 + $0xf8] sm:$0xf]
        %v329 = vld [vmem:[%s1 + $0xfc] sm:$0xff]
        %v330 = vld [vmem:[%s1 + $0x104] sm:$0xf]
        %v331 = vld [vmem:[%s1 + $0x108] sm:$0xff]
        %v332 = vld [vmem:[%s1 + $0x110] sm:$0xf]
        %v333 = vld [vmem:[%s1 + $0x114] sm:$0xff]
        %v334 = vld [vmem:[%s1 + $0x11c] sm:$0xf]
        %v335 = vld [vmem:[%s1 + $0x120] sm:$0xff]
        %v336 = vld [vmem:[%s1 + $0x128] sm:$0xf]
        %v337 = vld [vmem:[%s1 + $0x12c] sm:$0xff]
        %v338 = vld [vmem:[%s1 + $0x134] sm:$0xf]
        %v339 = vld [vmem:[%s1 + $0x138] sm:$0xff]
        %v340 = vld [vmem:[%s1 + $0x140] sm:$0xf]
        %v341 = vld [vmem:[%s1 + $0x144] sm:$0xff]
        %v342 = vld [vmem:[%s1 + $0x14c] sm:$0xf]
        %v343 = vld [vmem:[%s1 + $0x150] sm:$0xff]
        %v344 = vld [vmem:[%s1 + $0x158] sm:$0xf]
        %v345 = vld [vmem:[%s1 + $0x15c] sm:$0xff]
        %v346 = vld [vmem:[%s1 + $0x164] sm:$0xf]
        %v347 = vld [vmem:[%s1 + $0x168] sm:$0xff]
        %v348 = vld [vmem:[%s1 + $0x170] sm:$0xf]
        %v349 = vld [vmem:[%s1 + $0x174] sm:$0xff]
        %v350 = vld [vmem:[%s1 + $0x17c] sm:$0xf]
        %v351 = vld [vmem:[%s1 + $0x180] sm:$0xff]
        %v352 = vld [vmem:[%s1 + $0x188] sm:$0xf]
        %v353 = vld [vmem:[%s1 + $0x18c] sm:$0xff]
        %v354 = vld [vmem:[%s1 + $0x194] sm:$0xf]
        %v355 = vld [vmem:[%s1 + $0x198] sm:$0xff]
        %v356 = vld [vmem:[%s1 + $0x1a0] sm:$0xf]
        %v357 = vld [vmem:[%s1 + $0x1a4] sm:$0xff]
        %v358 = vld [vmem:[%s1 + $0x1ac] sm:$0xf]
        %v359 = vld [vmem:[%s1 + $0x1b0] sm:$0xff]
        %v360 = vld [vmem:[%s1 + $0x1b8] sm:$0xf]
        %v361 = vld [vmem:[%s1 + $0x1bc] sm:$0xff]
        %v362 = vld [vmem:[%s1 + $0x1c4] sm:$0xf]
        %v363 = vld [vmem:[%s1 + $0x1c8] sm:$0xff]
        %v364 = vld [vmem:[%s1 + $0x1d0] sm:$0xf]
        %v365 = vld [vmem:[%s1 + $0x1d4] sm:$0xff]
        %v366 = vld [vmem:[%s1 + $0x1dc] sm:$0xf]
        %v367 = vld [vmem:[%s1 + $0x1e0] sm:$0xff]
        %v368 = vld [vmem:[%s1 + $0x1e8] sm:$0xf]
        %v369 = vld [vmem:[%s1 + $0x1ec] sm:$0xff]
        %v370 = vld [vmem:[%s1 + $0x1f4] sm:$0xf]
        %v371 = vld [vmem:[%s1 + $0x1f8] sm:$0xff]
        %v372 = vld [vmem:[%s1 + $0x200] sm:$0xf]
        %v373 = vld [vmem:[%s1 + $0x204] sm:$0xff]
        %v374 = vld [vmem:[%s1 + $0x20c] sm:$0xf]
        %v375 = vld [vmem:[%s1 + $0x210] sm:$0xff]
        %v376 = vld [vmem:[%s1 + $0x218] sm:$0xf]
        %v377 = vld [vmem:[%s1 + $0x21c] sm:$0xff]
        %v378 = vld [vmem:[%s1 + $0x224] sm:$0xf]
        %v379 = vld [vmem:[%s1 + $0x228] sm:$0xff]
        %v380 = vld [vmem:[%s1 + $0x230] sm:$0xf]
        %v381 = vld [vmem:[%s1 + $0x234] sm:$0xff]
        %v382 = vld [vmem:[%s1 + $0x23c] sm:$0xf]
        %v383 = vld [vmem:[%s1 + $0x240] sm:$0xff]
        %v384 = vld [vmem:[%s1 + $0x248] sm:$0xf]
        %v385 = vld [vmem:[%s1 + $0x24c] sm:$0xff]
        %v386 = vld [vmem:[%s1 + $0x254] sm:$0xf]
        %v387 = vld [vmem:[%s1 + $0x258] sm:$0xff]
        %v388 = vld [vmem:[%s1 + $0x260] sm:$0xf]
        %v389 = vld [vmem:[%s1 + $0x264] sm:$0xff]
        %v390 = vld [vmem:[%s1 + $0x26c] sm:$0xf]
        %v391 = vld [vmem:[%s1 + $0x270] sm:$0xff]
        %v392 = vld [vmem:[%s1 + $0x278] sm:$0xf]
        %v393 = vld [vmem:[%s1 + $0x27c] sm:$0xff]
        %v394 = vld [vmem:[%s1 + $0x284] sm:$0xf]
        %v395 = vld [vmem:[%s1 + $0x288] sm:$0xff]
        %v396 = vld [vmem:[%s1 + $0x290] sm:$0xf]
        %v397 = vld [vmem:[%s1 + $0x294] sm:$0xff]
        %v398 = vld [vmem:[%s1 + $0x29c] sm:$0xf]
        %v399 = vld [vmem:[%s1 + $0x2a0] sm:$0xff]
        %v400 = vld [vmem:[%s1 + $0x2a8] sm:$0xf]
        %v401 = vld [vmem:[%s1 + $0x2ac] sm:$0xff]
        %v402 = vld [vmem:[%s1 + $0x2b4] sm:$0xf]
        %v403 = vld [vmem:[%s1 + $0x2b8] sm:$0xff]
        %v404 = vld [vmem:[%s1 + $0x2c0] sm:$0xf]
        %v405 = vld [vmem:[%s1 + $0x2c4] sm:$0xff]
        %v406 = vld [vmem:[%s1 + $0x2cc] sm:$0xf]
        %v407 = vld [vmem:[%s1 + $0x2d0] sm:$0xff]
        %v408 = vld [vmem:[%s1 + $0x2d8] sm:$0xf]
        %v409 = vld [vmem:[%s1 + $0x2dc] sm:$0xff]
        %v410 = vld [vmem:[%s1 + $0x2e4] sm:$0xf]
        %v411 = vld [vmem:[%s1 + $0x2e8] sm:$0xff]
        %v412 = vld [vmem:[%s1 + $0x2f0] sm:$0xf]
        %v413 = vld [vmem:[%s1 + $0x2f4] sm:$0xff]
        %v414 = vld [vmem:[%s1 + $0x2fc] sm:$0xf]
        %v415 = vld [vmem:[%s1 + $0x300] sm:$0xff]
        %v416 = vld [vmem:[%s1 + $0x308] sm:$0xf]
        %v417 = vld [vmem:[%s1 + $0x30c] sm:$0xff]
        %v418 = vld [vmem:[%s1 + $0x314] sm:$0xf]
        %v419 = vld [vmem:[%s1 + $0x318] sm:$0xff]
        %v420 = vld [vmem:[%s1 + $0x320] sm:$0xf]
        %v421 = vld [vmem:[%s1 + $0x324] sm:$0xff]
        %v422 = vld [vmem:[%s1 + $0x32c] sm:$0xf]
        %v423 = vld [vmem:[%s1 + $0x330] sm:$0xff]
        %v424 = vld [vmem:[%s1 + $0x338] sm:$0xf]
        %v425 = vld [vmem:[%s1 + $0x33c] sm:$0xff]
        %v426 = vld [vmem:[%s1 + $0x344] sm:$0xf]
        %v427 = vld [vmem:[%s1 + $0x348] sm:$0xff]
        %v428 = vld [vmem:[%s1 + $0x350] sm:$0xf]
        %v429 = vld [vmem:[%s1 + $0x354] sm:$0xff]
        %v430 = vld [vmem:[%s1 + $0x35c] sm:$0xf]
        %v431 = vld [vmem:[%s1 + $0x360] sm:$0xff]
        %v432 = vld [vmem:[%s1 + $0x368] sm:$0xf]
        %v433 = vld [vmem:[%s1 + $0x36c] sm:$0xff]
        %v434 = vld [vmem:[%s1 + $0x374] sm:$0xf]
        %v435 = vld [vmem:[%s1 + $0x378] sm:$0xff]
        %v436 = vld [vmem:[%s1 + $0x380] sm:$0xf]
        %v437 = vld [vmem:[%s1 + $0x384] sm:$0xff]
        %v438 = vld [vmem:[%s1 + $0x38c] sm:$0xf]
        %v439 = vld [vmem:[%s1 + $0x390] sm:$0xff]
        %v440 = vld [vmem:[%s1 + $0x398] sm:$0xf]
        %v441 = vld [vmem:[%s1 + $0x39c] sm:$0xff]
        %v442 = vld [vmem:[%s1 + $0x3a4] sm:$0xf]
        %v443 = vld [vmem:[%s1 + $0x3a8] sm:$0xff]
        %v444 = vld [vmem:[%s1 + $0x3b0] sm:$0xf]
        %v445 = vld [vmem:[%s1 + $0x3b4] sm:$0xff]
        %v446 = vld [vmem:[%s1 + $0x3bc] sm:$0xf]
        %v447 = vld [vmem:[%s1 + $0x3c0] sm:$0xff]
        %v448 = vld [vmem:[%s1 + $0x3c8] sm:$0xf]
        %v449 = vld [vmem:[%s1 + $0x3cc] sm:$0xff]
        %v450 = vld [vmem:[%s1 + $0x3d4] sm:$0xf]
        %v451 = vld [vmem:[%s1 + $0x3d8] sm:$0xff]
        %v452 = vld [vmem:[%s1 + $0x3e0] sm:$0xf]
        %v453 = vld [vmem:[%s1 + $0x3e4] sm:$0xff]
        %v454 = vld [vmem:[%s1 + $0x3ec] sm:$0xf]
        %v455 = vld [vmem:[%s1 + $0x3f0] sm:$0xff]
        %v456 = vld [vmem:[%s1 + $0x3f8] sm:$0xf]
        %v457 = vld [vmem:[%s1 + $0x3fc] sm:$0xff]
        %v458 = vld [vmem:[%s1 + $0x404] sm:$0xf]
        %v459 = vld [vmem:[%s1 + $0x408] sm:$0xff]
        %v460 = vld [vmem:[%s1 + $0x410] sm:$0xf]
        %v461 = vld [vmem:[%s1 + $0x414] sm:$0xff]
        %v462 = vld [vmem:[%s1 + $0x41c] sm:$0xf]
        %v463 = vld [vmem:[%s1 + $0x420] sm:$0xff]
        %v464 = vld [vmem:[%s1 + $0x428] sm:$0xf]
        %v465 = vld [vmem:[%s1 + $0x42c] sm:$0xff]
        %v466 = vld [vmem:[%s1 + $0x434] sm:$0xf]
        %v467 = vld [vmem:[%s1 + $0x438] sm:$0xff]
        %v468 = vld [vmem:[%s1 + $0x440] sm:$0xf]
        %v469 = vld [vmem:[%s1 + $0x444] sm:$0xff]
        %v470 = vld [vmem:[%s1 + $0x44c] sm:$0xf]
        %v471 = vld [vmem:[%s1 + $0x450] sm:$0xff]
        %v472 = vld [vmem:[%s1 + $0x458] sm:$0xf]
        %v473 = vld [vmem:[%s1 + $0x45c] sm:$0xff]
        %v474 = vld [vmem:[%s1 + $0x464] sm:$0xf]
        %v475 = vld [vmem:[%s1 + $0x468] sm:$0xff]
        %v476 = vld [vmem:[%s1 + $0x470] sm:$0xf]
        %v477 = vld [vmem:[%s1 + $0x474] sm:$0xff]
        %v478 = vld [vmem:[%s1 + $0x47c] sm:$0xf]
        %v479 = vld [vmem:[%s1 + $0x480] sm:$0xff]
        %v480 = vld [vmem:[%s1 + $0x488] sm:$0xf]
        %v481 = vld [vmem:[%s1 + $0x48c] sm:$0xff]
        %v482 = vld [vmem:[%s1 + $0x494] sm:$0xf]
        %v483 = vld [vmem:[%s1 + $0x498] sm:$0xff]
        %v484 = vld [vmem:[%s1 + $0x4a0] sm:$0xf]
        %v485 = vld [vmem:[%s1 + $0x4a4] sm:$0xff]
        %v486 = vld [vmem:[%s1 + $0x4ac] sm:$0xf]
        %v487 = vld [vmem:[%s1 + $0x4b0] sm:$0xff]
        %v488 = vld [vmem:[%s1 + $0x4b8] sm:$0xf]
        %v489 = vld [vmem:[%s1 + $0x4bc] sm:$0xff]
        %v490 = vld [vmem:[%s1 + $0x4c4] sm:$0xf]
        %v491 = vld [vmem:[%s1 + $0x4c8] sm:$0xff]
        %v492 = vld [vmem:[%s1 + $0x4d0] sm:$0xf]
        %v493 = vld [vmem:[%s1 + $0x4d4] sm:$0xff]
        %v494 = vld [vmem:[%s1 + $0x4dc] sm:$0xf]
        %v495 = vld [vmem:[%s1 + $0x4e0] sm:$0xff]
        %v496 = vld [vmem:[%s1 + $0x4e8] sm:$0xf]
        %v497 = vld [vmem:[%s1 + $0x4ec] sm:$0xff]
        %v498 = vld [vmem:[%s1 + $0x4f4] sm:$0xf]
        %v499 = vld [vmem:[%s1 + $0x4f8] sm:$0xff]
        %v500 = vld [vmem:[%s1 + $0x500] sm:$0xf]
        %v501 = vld [vmem:[%s1 + $0x504] sm:$0xff]
        %v502 = vld [vmem:[%s1 + $0x50c] sm:$0xf]
        %v503 = vld [vmem:[%s1 + $0x510] sm:$0xff]
        %v504 = vld [vmem:[%s1 + $0x518] sm:$0xf]
        %v505 = vld [vmem:[%s1 + $0x51c] sm:$0xff]
        %v506 = vld [vmem:[%s1 + $0x524] sm:$0xf]
        %v507 = vld [vmem:[%s1 + $0x528] sm:$0xff]
        %v508 = vld [vmem:[%s1 + $0x530] sm:$0xf]
        %v509 = vld [vmem:[%s1 + $0x534] sm:$0xff]
        %v510 = vld [vmem:[%s1 + $0x53c] sm:$0xf]
        %v511 = vld [vmem:[%s1 + $0x540] sm:$0xff]
        %v512 = vld [vmem:[%s1 + $0x548] sm:$0xf]
        %v513 = vld [vmem:[%s1 + $0x54c] sm:$0xff]
        %v514 = vld [vmem:[%s1 + $0x554] sm:$0xf]
        %v515 = vld [vmem:[%s1 + $0x558] sm:$0xff]
        %v516 = vld [vmem:[%s1 + $0x560] sm:$0xf]
        %v517 = vld [vmem:[%s1 + $0x564] sm:$0xff]
        %v518 = vld [vmem:[%s1 + $0x56c] sm:$0xf]
        %v519 = vld [vmem:[%s1 + $0x570] sm:$0xff]
        %v520 = vld [vmem:[%s1 + $0x578] sm:$0xf]
        %v521 = vld [vmem:[%s1 + $0x57c] sm:$0xff]
        %v522 = vld [vmem:[%s1 + $0x584] sm:$0xf]
        %v523 = vld [vmem:[%s1 + $0x588] sm:$0xff]
        %v524 = vld [vmem:[%s1 + $0x590] sm:$0xf]
        %v525 = vld [vmem:[%s1 + $0x594] sm:$0xff]
        %v526 = vld [vmem:[%s1 + $0x59c] sm:$0xf]
        %v527 = vld [vmem:[%s1 + $0x5a0] sm:$0xff]
        %v528 = vld [vmem:[%s1 + $0x5a8] sm:$0xf]
        %v529 = vld [vmem:[%s1 + $0x5ac] sm:$0xff]
        %v530 = vld [vmem:[%s1 + $0x5b4] sm:$0xf]
        %v531 = vld [vmem:[%s1 + $0x5b8] sm:$0xff]
        %v532 = vld [vmem:[%s1 + $0x5c0] sm:$0xf]
        %v533 = vld [vmem:[%s1 + $0x5c4] sm:$0xff]
        %v534 = vld [vmem:[%s1 + $0x5cc] sm:$0xf]
        %v535 = vld [vmem:[%s1 + $0x5d0] sm:$0xff]
        %v536 = vld [vmem:[%s1 + $0x5d8] sm:$0xf]
        %v537 = vld [vmem:[%s1 + $0x5dc] sm:$0xff]
        %v538 = vld [vmem:[%s1 + $0x5e4] sm:$0xf]
        %v539 = vld [vmem:[%s1 + $0x5e8] sm:$0xff]
        %v540 = vld [vmem:[%s1 + $0x5f0] sm:$0xf]
        %v541 = vld [vmem:[%s1 + $0x5f4] sm:$0xff]
        %v542 = vld [vmem:[%s1 + $0x5fc] sm:$0xf]
        %v543 = vld [vmem:[%s1 + $0x600] sm:$0xff]
        %v544 = vld [vmem:[%s1 + $0x608] sm:$0xf]
        %v545 = vld [vmem:[%s1 + $0x60c] sm:$0xff]
        %v546 = vld [vmem:[%s1 + $0x614] sm:$0xf]
        %v547 = vld [vmem:[%s1 + $0x618] sm:$0xff]
        %v548 = vld [vmem:[%s1 + $0x620] sm:$0xf]
        %v549 = vld [vmem:[%s1 + $0x624] sm:$0xff]
        %v550 = vld [vmem:[%s1 + $0x62c] sm:$0xf]
        %v551 = vld [vmem:[%s1 + $0x630] sm:$0xff]
        %v552 = vld [vmem:[%s1 + $0x638] sm:$0xf]
        %v553 = vld [vmem:[%s1 + $0x63c] sm:$0xff]
        %v554 = vld [vmem:[%s1 + $0x644] sm:$0xf]
        %v555 = vld [vmem:[%s1 + $0x648] sm:$0xff]
        %v556 = vld [vmem:[%s1 + $0x650] sm:$0xf]
        %v557 = vld [vmem:[%s1 + $0x654] sm:$0xff]
        %v558 = vld [vmem:[%s1 + $0x65c] sm:$0xf]
        %v559 = vld [vmem:[%s1 + $0x660] sm:$0xff]
        %v560 = vld [vmem:[%s1 + $0x668] sm:$0xf]
        %v561 = vld [vmem:[%s1 + $0x66c] sm:$0xff]
        %v562 = vld [vmem:[%s1 + $0x674] sm:$0xf]
        %v563 = vld [vmem:[%s1 + $0x678] sm:$0xff]
        %v564 = vld [vmem:[%s1 + $0x680] sm:$0xf]
        %v565 = vld [vmem:[%s1 + $0x684] sm:$0xff]
        %v566 = vld [vmem:[%s1 + $0x68c] sm:$0xf]
        %v567 = vld [vmem:[%s1 + $0x690] sm:$0xff]
        %v568 = vld [vmem:[%s1 + $0x698] sm:$0xf]
        %v569 = vld [vmem:[%s1 + $0x69c] sm:$0xff]
        %v570 = vld [vmem:[%s1 + $0x6a4] sm:$0xf]
        %v571 = vld [vmem:[%s1 + $0x6a8] sm:$0xff]
        %v572 = vld [vmem:[%s1 + $0x6b0] sm:$0xf]
        %v573 = vld [vmem:[%s1 + $0x6b4] sm:$0xff]
        %v574 = vld [vmem:[%s1 + $0x6bc] sm:$0xf]
        %v575 = vld [vmem:[%s1 + $0x6c0] sm:$0xff]
        %v576 = vld [vmem:[%s1 + $0x6c8] sm:$0xf]
        %v577 = vld [vmem:[%s1 + $0x6cc] sm:$0xff]
        %v578 = vld [vmem:[%s1 + $0x6d4] sm:$0xf]
        %v579 = vld [vmem:[%s1 + $0x6d8] sm:$0xff]
        %v580 = vld [vmem:[%s1 + $0x6e0] sm:$0xf]
        %v581 = vld [vmem:[%s1 + $0x6e4] sm:$0xff]
        %v582 = vld [vmem:[%s1 + $0x6ec] sm:$0xf]
        %v583 = vld [vmem:[%s1 + $0x6f0] sm:$0xff]
        %v584 = vld [vmem:[%s1 + $0x6f8] sm:$0xf]
        %v585 = vld [vmem:[%s1 + $0x6fc] sm:$0xff]
        %v586 = vld [vmem:[%s1 + $0x704] sm:$0xf]
        %v587 = vld [vmem:[%s1 + $0x708] sm:$0xff]
        %v588 = vld [vmem:[%s1 + $0x710] sm:$0xf]
        %v589 = vld [vmem:[%s1 + $0x714] sm:$0xff]
        %v590 = vld [vmem:[%s1 + $0x71c] sm:$0xf]
        %v591 = vld [vmem:[%s1 + $0x720] sm:$0xff]
        %v592 = vld [vmem:[%s1 + $0x728] sm:$0xf]
        %v593 = vld [vmem:[%s1 + $0x72c] sm:$0xff]
        %v594 = vld [vmem:[%s1 + $0x734] sm:$0xf]
        %v595 = vld [vmem:[%s1 + $0x738] sm:$0xff]
        %v596 = vld [vmem:[%s1 + $0x740] sm:$0xf]
        %v597 = vld [vmem:[%s1 + $0x744] sm:$0xff]
        %v598 = vld [vmem:[%s1 + $0x74c] sm:$0xf]
        %v599 = vld [vmem:[%s1 + $0x750] sm:$0xff]
        %v600 = vld [vmem:[%s1 + $0x758] sm:$0xf]
        %v601 = vld [vmem:[%s1 + $0x75c] sm:$0xff]
        %v602 = vld [vmem:[%s1 + $0x764] sm:$0xf]
        %v603 = vld [vmem:[%s1 + $0x768] sm:$0xff]
        %v604 = vld [vmem:[%s1 + $0x770] sm:$0xf]
        %v605 = vld [vmem:[%s1 + $0x774] sm:$0xff]
        %v606 = vld [vmem:[%s1 + $0x77c] sm:$0xf]
        %v607 = vld [vmem:[%s1 + $0x780] sm:$0xff]
        %v608 = vld [vmem:[%s1 + $0x788] sm:$0xf]
        %v609 = vld [vmem:[%s1 + $0x78c] sm:$0xff]
        %v610 = vld [vmem:[%s1 + $0x794] sm:$0xf]
        %v611 = vld [vmem:[%s1 + $0x798] sm:$0xff]
        %v612 = vld [vmem:[%s1 + $0x7a0] sm:$0xf]
        %v613 = vld [vmem:[%s1 + $0x7a4] sm:$0xff]
        %v614 = vld [vmem:[%s1 + $0x7ac] sm:$0xf]
        %v615 = vld [vmem:[%s1 + $0x7b0] sm:$0xff]
        %v616 = vld [vmem:[%s1 + $0x7b8] sm:$0xf]
        %v617 = vld [vmem:[%s1 + $0x7bc] sm:$0xff]
        %v618 = vld [vmem:[%s1 + $0x7c4] sm:$0xf]
        %v619 = vld [vmem:[%s1 + $0x7c8] sm:$0xff]
        %v620 = vld [vmem:[%s1 + $0x7d0] sm:$0xf]
        %v621 = vld [vmem:[%s1 + $0x7d4] sm:$0xff]
        %v622 = vld [vmem:[%s1 + $0x7dc] sm:$0xf]
        %v623 = vld [vmem:[%s1 + $0x7e0] sm:$0xff]
        %v624 = vld [vmem:[%s1 + $0x7e8] sm:$0xf]
        %v625 = vld [vmem:[%s1 + $0x7ec] sm:$0xff]
        %v626 = vld [vmem:[%s1 + $0x7f4] sm:$0xf]
        %v627 = vld [vmem:[%s1 + $0x7f8] sm:$0xff]
        %v628 = vld [vmem:[%s1 + $0x800] sm:$0xf]
        %v629 = vld [vmem:[%s1 + $0x804] sm:$0xff]
        %v630 = vld [vmem:[%s1 + $0x80c] sm:$0xf]
        %v631 = vld [vmem:[%s1 + $0x810] sm:$0xff]
        %v632 = vld [vmem:[%s1 + $0x818] sm:$0xf]
        %v633 = vld [vmem:[%s1 + $0x81c] sm:$0xff]
        %v634 = vld [vmem:[%s1 + $0x824] sm:$0xf]
        %v635 = vld [vmem:[%s1 + $0x828] sm:$0xff]
        %v636 = vld [vmem:[%s1 + $0x830] sm:$0xf]
        %v637 = vld [vmem:[%s1 + $0x834] sm:$0xff]
        %v638 = vld [vmem:[%s1 + $0x83c] sm:$0xf]
        %v639 = vld [vmem:[%s1 + $0x840] sm:$0xff]
        %v640 = vld [vmem:[%s1 + $0x848] sm:$0xf]
        %v641 = vld [vmem:[%s1 + $0x84c] sm:$0xff]
        %v642 = vld [vmem:[%s1 + $0x854] sm:$0xf]
        %v643 = vld [vmem:[%s1 + $0x858] sm:$0xff]
        %v644 = vld [vmem:[%s1 + $0x860] sm:$0xf]
        %v645 = vld [vmem:[%s1 + $0x864] sm:$0xff]
        %v646 = vld [vmem:[%s1 + $0x86c] sm:$0xf]
        %v647 = vld [vmem:[%s1 + $0x870] sm:$0xff]
        %v648 = vld [vmem:[%s1 + $0x878] sm:$0xf]
        %v649 = vld [vmem:[%s1 + $0x87c] sm:$0xff]
        %v650 = vld [vmem:[%s1 + $0x884] sm:$0xf]
        %v651 = vld [vmem:[%s1 + $0x888] sm:$0xff]
        %v652 = vld [vmem:[%s1 + $0x890] sm:$0xf]
        %v653 = vld [vmem:[%s1 + $0x894] sm:$0xff]
        %v654 = vld [vmem:[%s1 + $0x89c] sm:$0xf]
        %v655 = vld [vmem:[%s1 + $0x8a0] sm:$0xff]
        %v656 = vld [vmem:[%s1 + $0x8a8] sm:$0xf]
        %v657 = vld [vmem:[%s1 + $0x8ac] sm:$0xff]
        %v658 = vld [vmem:[%s1 + $0x8b4] sm:$0xf]
        %v659 = vld [vmem:[%s1 + $0x8b8] sm:$0xff]
        %v660 = vld [vmem:[%s1 + $0x8c0] sm:$0xf]
        %v661 = vld [vmem:[%s1 + $0x8c4] sm:$0xff]
        %v662 = vld [vmem:[%s1 + $0x8cc] sm:$0xf]
        %v663 = vld [vmem:[%s1 + $0x8d0] sm:$0xff]
        %v664 = vld [vmem:[%s1 + $0x8d8] sm:$0xf]
        %v665 = vld [vmem:[%s1 + $0x8dc] sm:$0xff]
        %v666 = vld [vmem:[%s1 + $0x8e4] sm:$0xf]
        %v667 = vld [vmem:[%s1 + $0x8e8] sm:$0xff]
        %v668 = vld [vmem:[%s1 + $0x8f0] sm:$0xf]
        %v669 = vld [vmem:[%s1 + $0x8f4] sm:$0xff]
        %v670 = vld [vmem:[%s1 + $0x8fc] sm:$0xf]
        %v671 = vld [vmem:[%s1 + $0x900] sm:$0xff]
        %v672 = vld [vmem:[%s1 + $0x908] sm:$0xf]
        %v673 = vld [vmem:[%s1 + $0x90c] sm:$0xff]
        %v674 = vld [vmem:[%s1 + $0x914] sm:$0xf]
        %v675 = vld [vmem:[%s1 + $0x918] sm:$0xff]
        %v676 = vld [vmem:[%s1 + $0x920] sm:$0xf]
        %v677 = vld [vmem:[%s1 + $0x924] sm:$0xff]
        %v678 = vld [vmem:[%s1 + $0x92c] sm:$0xf]
        %v679 = vld [vmem:[%s1 + $0x930] sm:$0xff]
        %v680 = vld [vmem:[%s1 + $0x938] sm:$0xf]
        %v681 = vld [vmem:[%s1 + $0x93c] sm:$0xff]
        %v682 = vld [vmem:[%s1 + $0x944] sm:$0xf]
        %v683 = vld [vmem:[%s1 + $0x948] sm:$0xff]
        %v684 = vld [vmem:[%s1 + $0x950] sm:$0xf]
        %v685 = vld [vmem:[%s1 + $0x954] sm:$0xff]
        %v686 = vld [vmem:[%s1 + $0x95c] sm:$0xf]
        %v687 = vld [vmem:[%s1 + $0x960] sm:$0xff]
        %v688 = vld [vmem:[%s1 + $0x968] sm:$0xf]
        %v689 = vld [vmem:[%s1 + $0x96c] sm:$0xff]
        %v690 = vld [vmem:[%s1 + $0x974] sm:$0xf]
        %v691 = vld [vmem:[%s1 + $0x978] sm:$0xff]
        %v692 = vld [vmem:[%s1 + $0x980] sm:$0xf]
        %v693 = vld [vmem:[%s1 + $0x984] sm:$0xff]
        %v694 = vld [vmem:[%s1 + $0x98c] sm:$0xf]
        %v695 = vld [vmem:[%s1 + $0x990] sm:$0xff]
        %v696 = vld [vmem:[%s1 + $0x998] sm:$0xf]
        %v697 = vld [vmem:[%s1 + $0x99c] sm:$0xff]
        %v698 = vld [vmem:[%s1 + $0x9a4] sm:$0xf]
        %v699 = vld [vmem:[%s1 + $0x9a8] sm:$0xff]
        %v700 = vld [vmem:[%s1 + $0x9b0] sm:$0xf]
        %v701 = vld [vmem:[%s1 + $0x9b4] sm:$0xff]
        %v702 = vld [vmem:[%s1 + $0x9bc] sm:$0xf]
        %v703 = vld [vmem:[%s1 + $0x9c0] sm:$0xff]
        %v704 = vld [vmem:[%s1 + $0x9c8] sm:$0xf]
        %v705 = vld [vmem:[%s1 + $0x9cc] sm:$0xff]
        %v706 = vld [vmem:[%s1 + $0x9d4] sm:$0xf]
        %v707 = vld [vmem:[%s1 + $0x9d8] sm:$0xff]
        %v708 = vld [vmem:[%s1 + $0x9e0] sm:$0xf]
        %v709 = vld [vmem:[%s1 + $0x9e4] sm:$0xff]
        %v710 = vld [vmem:[%s1 + $0x9ec] sm:$0xf]
        %v711 = vld [vmem:[%s1 + $0x9f0] sm:$0xff]
        %v712 = vld [vmem:[%s1 + $0x9f8] sm:$0xf]
        %v713 = vld [vmem:[%s1 + $0x9fc] sm:$0xff]
        %v714 = vld [vmem:[%s1 + $0xa04] sm:$0xf]
        %v715 = vld [vmem:[%s1 + $0xa08] sm:$0xff]
        %v716 = vld [vmem:[%s1 + $0xa10] sm:$0xf]
        %v717 = vld [vmem:[%s1 + $0xa14] sm:$0xff]
        %v718 = vld [vmem:[%s1 + $0xa1c] sm:$0xf]
        %v719 = vld [vmem:[%s1 + $0xa20] sm:$0xff]
        %v720 = vld [vmem:[%s1 + $0xa28] sm:$0xf]
        %v721 = vld [vmem:[%s1 + $0xa2c] sm:$0xff]
        %v722 = vld [vmem:[%s1 + $0xa34] sm:$0xf]
        %v723 = vld [vmem:[%s1 + $0xa38] sm:$0xff]
        %v724 = vld [vmem:[%s1 + $0xa40] sm:$0xf]
        %v725 = vld [vmem:[%s1 + $0xa44] sm:$0xff]
        %v726 = vld [vmem:[%s1 + $0xa4c] sm:$0xf]
        %v727 = vld [vmem:[%s1 + $0xa50] sm:$0xff]
        %v728 = vld [vmem:[%s1 + $0xa58] sm:$0xf]
        %v729 = vld [vmem:[%s1 + $0xa5c] sm:$0xff]
        %v730 = vld [vmem:[%s1 + $0xa64] sm:$0xf]
        %v731 = vld [vmem:[%s1 + $0xa68] sm:$0xff]
        %v732 = vld [vmem:[%s1 + $0xa70] sm:$0xf]
        %v733 = vld [vmem:[%s1 + $0xa74] sm:$0xff]
        %v734 = vld [vmem:[%s1 + $0xa7c] sm:$0xf]
        %v735 = vld [vmem:[%s1 + $0xa80] sm:$0xff]
        %v736 = vld [vmem:[%s1 + $0xa88] sm:$0xf]
        %v737 = vld [vmem:[%s1 + $0xa8c] sm:$0xff]
        %v738 = vld [vmem:[%s1 + $0xa94] sm:$0xf]
        %v739 = vld [vmem:[%s1 + $0xa98] sm:$0xff]
        %v740 = vld [vmem:[%s1 + $0xaa0] sm:$0xf]
        %v741 = vld [vmem:[%s1 + $0xaa4] sm:$0xff]
        %v742 = vld [vmem:[%s1 + $0xaac] sm:$0xf]
        %v743 = vld [vmem:[%s1 + $0xab0] sm:$0xff]
        %v744 = vld [vmem:[%s1 + $0xab8] sm:$0xf]
        %v745 = vld [vmem:[%s1 + $0xabc] sm:$0xff]
        %v746 = vld [vmem:[%s1 + $0xac4] sm:$0xf]
        %v747 = vld [vmem:[%s1 + $0xac8] sm:$0xff]
        %v748 = vld [vmem:[%s1 + $0xad0] sm:$0xf]
        %v749 = vld [vmem:[%s1 + $0xad4] sm:$0xff]
        %v750 = vld [vmem:[%s1 + $0xadc] sm:$0xf]
        %v751 = vld [vmem:[%s1 + $0xae0] sm:$0xff]
        %v752 = vld [vmem:[%s1 + $0xae8] sm:$0xf]
        %v753 = vld [vmem:[%s1 + $0xaec] sm:$0xff]
        %v754 = vld [vmem:[%s1 + $0xaf4] sm:$0xf]
        %v755 = vld [vmem:[%s1 + $0xaf8] sm:$0xff]
        %v756 = vld [vmem:[%s1 + $0xb00] sm:$0xf]
        %v757 = vld [vmem:[%s1 + $0xb04] sm:$0xff]
        %v758 = vld [vmem:[%s1 + $0xb0c] sm:$0xf]
        %v759 = vld [vmem:[%s1 + $0xb10] sm:$0xff]
        %v760 = vld [vmem:[%s1 + $0xb18] sm:$0xf]
        %v761 = vld [vmem:[%s1 + $0xb1c] sm:$0xff]
        %v762 = vld [vmem:[%s1 + $0xb24] sm:$0xf]
        %v763 = vld [vmem:[%s1 + $0xb28] sm:$0xff]
        %v764 = vld [vmem:[%s1 + $0xb30] sm:$0xf]
        %v765 = vld [vmem:[%s1 + $0xb34] sm:$0xff]
        %v766 = vld [vmem:[%s1 + $0xb3c] sm:$0xf]
        %v767 = vld [vmem:[%s1 + $0xb40] sm:$0xff]
        %v768 = vld [vmem:[%s1 + $0xb48] sm:$0xf]
        %v769 = vld [vmem:[%s1 + $0xb4c] sm:$0xff]
        %v770 = vld [vmem:[%s1 + $0xb54] sm:$0xf]
        %v771 = vld [vmem:[%s1 + $0xb58] sm:$0xff]
        %v772 = vld [vmem:[%s1 + $0xb60] sm:$0xf]
        %v773 = vld [vmem:[%s1 + $0xb64] sm:$0xff]
        %v774 = vld [vmem:[%s1 + $0xb6c] sm:$0xf]
        %v775 = vld [vmem:[%s1 + $0xb70] sm:$0xff]
        %v776 = vld [vmem:[%s1 + $0xb78] sm:$0xf]
        %v777 = vld [vmem:[%s1 + $0xb7c] sm:$0xff]
        %v778 = vld [vmem:[%s1 + $0xb84] sm:$0xf]
        %v779 = vld [vmem:[%s1 + $0xb88] sm:$0xff]
        %v780 = vld [vmem:[%s1 + $0xb90] sm:$0xf]
        %v781 = vld [vmem:[%s1 + $0xb94] sm:$0xff]
        %v782 = vld [vmem:[%s1 + $0xb9c] sm:$0xf]
        %v783 = vld [vmem:[%s1 + $0xba0] sm:$0xff]
        %v784 = vld [vmem:[%s1 + $0xba8] sm:$0xf]
        %v785 = vld [vmem:[%s1 + $0xbac] sm:$0xff]
        %v786 = vld [vmem:[%s1 + $0xbb4] sm:$0xf]
        %v787 = vld [vmem:[%s1 + $0xbb8] sm:$0xff]
        %v788 = vld [vmem:[%s1 + $0xbc0] sm:$0xf]
        %v789 = vld [vmem:[%s1 + $0xbc4] sm:$0xff]
        %v790 = vld [vmem:[%s1 + $0xbcc] sm:$0xf]
        %v791 = vld [vmem:[%s1 + $0xbd0] sm:$0xff]
        %v792 = vld [vmem:[%s1 + $0xbd8] sm:$0xf]
        %v793 = vld [vmem:[%s1 + $0xbdc] sm:$0xff]
        %v794 = vld [vmem:[%s1 + $0xbe4] sm:$0xf]
        %v795 = vld [vmem:[%s1 + $0xbe8] sm:$0xff]
        %v796 = vld [vmem:[%s1 + $0xbf0] sm:$0xf]
        %v797 = vld [vmem:[%s1 + $0xbf4] sm:$0xff]
        %v798 = vld [vmem:[%s1 + $0xbfc] sm:$0xf]
        %v799 = vld [vmem:[%s1 + $0xc00] sm:$0xff]
        %v800 = vld [vmem:[%s1 + $0xc08] sm:$0xf]
        %v801 = vld [vmem:[%s1 + $0xc0c] sm:$0xff]
        %v802 = vld [vmem:[%s1 + $0xc14] sm:$0xf]
        %v803 = vld [vmem:[%s1 + $0xc18] sm:$0xff]
        %v804 = vld [vmem:[%s1 + $0xc20] sm:$0xf]
        %v805 = vld [vmem:[%s1 + $0xc24] sm:$0xff]
        %v806 = vld [vmem:[%s1 + $0xc2c] sm:$0xf]
        %v807 = vld [vmem:[%s1 + $0xc30] sm:$0xff]
        %v808 = vld [vmem:[%s1 + $0xc38] sm:$0xf]
        %v809 = vld [vmem:[%s1 + $0xc3c] sm:$0xff]
        %v810 = vld [vmem:[%s1 + $0xc44] sm:$0xf]
        %v811 = vld [vmem:[%s1 + $0xc48] sm:$0xff]
        %v812 = vld [vmem:[%s1 + $0xc50] sm:$0xf]
        %v813 = vld [vmem:[%s1 + $0xc54] sm:$0xff]
        %v814 = vld [vmem:[%s1 + $0xc5c] sm:$0xf]
        %v815 = vld [vmem:[%s1 + $0xc60] sm:$0xff]
        %v816 = vld [vmem:[%s1 + $0xc68] sm:$0xf]
        %v817 = vld [vmem:[%s1 + $0xc6c] sm:$0xff]
        %v818 = vld [vmem:[%s1 + $0xc74] sm:$0xf]
        %v819 = vld [vmem:[%s1 + $0xc78] sm:$0xff]
        %v820 = vld [vmem:[%s1 + $0xc80] sm:$0xf]
        %v821 = vld [vmem:[%s1 + $0xc84] sm:$0xff]
        %v822 = vld [vmem:[%s1 + $0xc8c] sm:$0xf]
        %v823 = vld [vmem:[%s1 + $0xc90] sm:$0xff]
        %v824 = vld [vmem:[%s1 + $0xc98] sm:$0xf]
        %v825 = vld [vmem:[%s1 + $0xc9c] sm:$0xff]
        %v826 = vld [vmem:[%s1 + $0xca4] sm:$0xf]
        %v827 = vld [vmem:[%s1 + $0xca8] sm:$0xff]
        %v828 = vld [vmem:[%s1 + $0xcb0] sm:$0xf]
        %v829 = vld [vmem:[%s1 + $0xcb4] sm:$0xff]
        %v830 = vld [vmem:[%s1 + $0xcbc] sm:$0xf]
        %v831 = vld [vmem:[%s1 + $0xcc0] sm:$0xff]
        %v832 = vld [vmem:[%s1 + $0xcc8] sm:$0xf]
        %v833 = vld [vmem:[%s1 + $0xccc] sm:$0xff]
        %v834 = vld [vmem:[%s1 + $0xcd4] sm:$0xf]
        %v835 = vld [vmem:[%s1 + $0xcd8] sm:$0xff]
        %v836 = vld [vmem:[%s1 + $0xce0] sm:$0xf]
        %v837 = vld [vmem:[%s1 + $0xce4] sm:$0xff]
        %v838 = vld [vmem:[%s1 + $0xcec] sm:$0xf]
        %v839 = vld [vmem:[%s1 + $0xcf0] sm:$0xff]
        %v840 = vld [vmem:[%s1 + $0xcf8] sm:$0xf]
        %v841 = vld [vmem:[%s1 + $0xcfc] sm:$0xff]
        %v842 = vld [vmem:[%s1 + $0xd04] sm:$0xf]
        %v843 = vld [vmem:[%s1 + $0xd08] sm:$0xff]
        %v844 = vld [vmem:[%s1 + $0xd10] sm:$0xf]
        %v845 = vld [vmem:[%s1 + $0xd14] sm:$0xff]
        %v846 = vld [vmem:[%s1 + $0xd1c] sm:$0xf]
        %v847 = vld [vmem:[%s1 + $0xd20] sm:$0xff]
        %v848 = vld [vmem:[%s1 + $0xd28] sm:$0xf]
        %v849 = vld [vmem:[%s1 + $0xd2c] sm:$0xff]
        %v850 = vld [vmem:[%s1 + $0xd34] sm:$0xf]
        %v851 = vld [vmem:[%s1 + $0xd38] sm:$0xff]
        %v852 = vld [vmem:[%s1 + $0xd40] sm:$0xf]
        %v853 = vld [vmem:[%s1 + $0xd44] sm:$0xff]
        %v854 = vld [vmem:[%s1 + $0xd4c] sm:$0xf]
        %v855 = vld [vmem:[%s1 + $0xd50] sm:$0xff]
        %v856 = vld [vmem:[%s1 + $0xd58] sm:$0xf]
        %v857 = vld [vmem:[%s1 + $0xd5c] sm:$0xff]
        %v858 = vld [vmem:[%s1 + $0xd64] sm:$0xf]
        %v859 = vld [vmem:[%s1 + $0xd68] sm:$0xff]
        %v860 = vld [vmem:[%s1 + $0xd70] sm:$0xf]
        %v861 = vld [vmem:[%s1 + $0xd74] sm:$0xff]
        %v862 = vld [vmem:[%s1 + $0xd7c] sm:$0xf]
        %v863 = vld [vmem:[%s1 + $0xd80] sm:$0xff]
        %v864 = vld [vmem:[%s1 + $0xd88] sm:$0xf]
        %v865 = vld [vmem:[%s1 + $0xd8c] sm:$0xff]
        %v866 = vld [vmem:[%s1 + $0xd94] sm:$0xf]
        %v867 = vld [vmem:[%s1 + $0xd98] sm:$0xff]
        %v868 = vld [vmem:[%s1 + $0xda0] sm:$0xf]
        %v869 = vld [vmem:[%s1 + $0xda4] sm:$0xff]
        %v870 = vld [vmem:[%s1 + $0xdac] sm:$0xf]
        %v871 = vld [vmem:[%s1 + $0xdb0] sm:$0xff]
        %v872 = vld [vmem:[%s1 + $0xdb8] sm:$0xf]
        %v873 = vld [vmem:[%s1 + $0xdbc] sm:$0xff]
        %v874 = vld [vmem:[%s1 + $0xdc4] sm:$0xf]
        %v875 = vld [vmem:[%s1 + $0xdc8] sm:$0xff]
        %v876 = vld [vmem:[%s1 + $0xdd0] sm:$0xf]
        %v877 = vld [vmem:[%s1 + $0xdd4] sm:$0xff]
        %v878 = vld [vmem:[%s1 + $0xddc] sm:$0xf]
        %v879 = vld [vmem:[%s1 + $0xde0] sm:$0xff]
        %v880 = vld [vmem:[%s1 + $0xde8] sm:$0xf]
        %v881 = vld [vmem:[%s1 + $0xdec] sm:$0xff]
        %v882 = vld [vmem:[%s1 + $0xdf4] sm:$0xf]
        %v883 = vld [vmem:[%s1 + $0xdf8] sm:$0xff]
        %v884 = vld [vmem:[%s1 + $0xe00] sm:$0xf]
        %v885 = vld [vmem:[%s1 + $0xe04] sm:$0xff]
        %v886 = vld [vmem:[%s1 + $0xe0c] sm:$0xf]
        %v887 = vld [vmem:[%s1 + $0xe10] sm:$0xff]
        %v888 = vld [vmem:[%s1 + $0xe18] sm:$0xf]
        %v889 = vld [vmem:[%s1 + $0xe1c] sm:$0xff]
        %v890 = vld [vmem:[%s1 + $0xe24] sm:$0xf]
        %v891 = vld [vmem:[%s1 + $0xe28] sm:$0xff]
        %v892 = vld [vmem:[%s1 + $0xe30] sm:$0xf]
        %v893 = vld [vmem:[%s1 + $0xe34] sm:$0xff]
        %v894 = vld [vmem:[%s1 + $0xe3c] sm:$0xf]
        %v895 = vld [vmem:[%s1 + $0xe40] sm:$0xff]
        %v896 = vld [vmem:[%s1 + $0xe48] sm:$0xf]
        %v897 = vld [vmem:[%s1 + $0xe4c] sm:$0xff]
        %v898 = vld [vmem:[%s1 + $0xe54] sm:$0xf]
        %v899 = vld [vmem:[%s1 + $0xe58] sm:$0xff]
        %v900 = vld [vmem:[%s1 + $0xe60] sm:$0xf]
        %v901 = vld [vmem:[%s1 + $0xe64] sm:$0xff]
        %v902 = vld [vmem:[%s1 + $0xe6c] sm:$0xf]
        %v903 = vld [vmem:[%s1 + $0xe70] sm:$0xff]
        %v904 = vld [vmem:[%s1 + $0xe78] sm:$0xf]
        %v905 = vld [vmem:[%s1 + $0xe7c] sm:$0xff]
        %v906 = vld [vmem:[%s1 + $0xe84] sm:$0xf]
        %v907 = vld [vmem:[%s1 + $0xe88] sm:$0xff]
        %v908 = vld [vmem:[%s1 + $0xe90] sm:$0xf]
        %v909 = vld [vmem:[%s1 + $0xe94] sm:$0xff]
        %v910 = vld [vmem:[%s1 + $0xe9c] sm:$0xf]
        %v911 = vld [vmem:[%s1 + $0xea0] sm:$0xff]
        %v912 = vld [vmem:[%s1 + $0xea8] sm:$0xf]
        %v913 = vld [vmem:[%s1 + $0xeac] sm:$0xff]
        %v914 = vld [vmem:[%s1 + $0xeb4] sm:$0xf]
        %v915 = vld [vmem:[%s1 + $0xeb8] sm:$0xff]
        %v916 = vld [vmem:[%s1 + $0xec0] sm:$0xf]
        %v917 = vld [vmem:[%s1 + $0xec4] sm:$0xff]
        %v918 = vld [vmem:[%s1 + $0xecc] sm:$0xf]
        %v919 = vld [vmem:[%s1 + $0xed0] sm:$0xff]
        %v920 = vld [vmem:[%s1 + $0xed8] sm:$0xf]
        %v921 = vld [vmem:[%s1 + $0xedc] sm:$0xff]
        %v922 = vld [vmem:[%s1 + $0xee4] sm:$0xf]
        %v923 = vld [vmem:[%s1 + $0xee8] sm:$0xff]
        %v924 = vld [vmem:[%s1 + $0xef0] sm:$0xf]
        %v925 = vld [vmem:[%s1 + $0xef4] sm:$0xff]
        %v926 = vld [vmem:[%s1 + $0xefc] sm:$0xf]
        %v927 = vld [vmem:[%s1 + $0xf00] sm:$0xff]
        %v928 = vld [vmem:[%s1 + $0xf08] sm:$0xf]
        %v929 = vld [vmem:[%s1 + $0xf0c] sm:$0xff]
        %v930 = vld [vmem:[%s1 + $0xf14] sm:$0xf]
        %v931 = vld [vmem:[%s1 + $0xf18] sm:$0xff]
        %v932 = vld [vmem:[%s1 + $0xf20] sm:$0xf]
        %v933 = vld [vmem:[%s1 + $0xf24] sm:$0xff]
        %v934 = vld [vmem:[%s1 + $0xf2c] sm:$0xf]
        %v935 = vld [vmem:[%s1 + $0xf30] sm:$0xff]
        %v936 = vld [vmem:[%s1 + $0xf38] sm:$0xf]
        %v937 = vld [vmem:[%s1 + $0xf3c] sm:$0xff]
        %v938 = vld [vmem:[%s1 + $0xf44] sm:$0xf]
        %v939 = vld [vmem:[%s1 + $0xf48] sm:$0xff]
        %v940 = vld [vmem:[%s1 + $0xf50] sm:$0xf]
        %v941 = vld [vmem:[%s1 + $0xf54] sm:$0xff]
        %v942 = vld [vmem:[%s1 + $0xf5c] sm:$0xf]
        %v943 = vld [vmem:[%s1 + $0xf60] sm:$0xff]
        %v944 = vld [vmem:[%s1 + $0xf68] sm:$0xf]
        %v945 = vld [vmem:[%s1 + $0xf6c] sm:$0xff]
        %v946 = vld [vmem:[%s1 + $0xf74] sm:$0xf]
        %v947 = vld [vmem:[%s1 + $0xf78] sm:$0xff]
        %v948 = vld [vmem:[%s1 + $0xf80] sm:$0xf]
        %v949 = vld [vmem:[%s1 + $0xf84] sm:$0xff]
        %v950 = vld [vmem:[%s1 + $0xf8c] sm:$0xf]
        %v951 = vld [vmem:[%s1 + $0xf90] sm:$0xff]
        %v952 = vld [vmem:[%s1 + $0xf98] sm:$0xf]
        %v953 = vld [vmem:[%s1 + $0xf9c] sm:$0xff]
        %v954 = vld [vmem:[%s1 + $0xfa4] sm:$0xf]
        %v955 = vld [vmem:[%s1 + $0xfa8] sm:$0xff]
        %v956 = vld [vmem:[%s1 + $0xfb0] sm:$0xf]
        %v957 = vld [vmem:[%s1 + $0xfb4] sm:$0xff]
        %v958 = vld [vmem:[%s1 + $0xfbc] sm:$0xf]
        %v959 = vld [vmem:[%s1 + $0xfc0] sm:$0xff]
        %v960 = vld [vmem:[%s1 + $0xfc8] sm:$0xf]
        %v961 = vld [vmem:[%s1 + $0xfcc] sm:$0xff]
        %v962 = vld [vmem:[%s1 + $0xfd4] sm:$0xf]
        %v963 = vld [vmem:[%s1 + $0xfd8] sm:$0xff]
        %v964 = vld [vmem:[%s1 + $0xfe0] sm:$0xf]
        %v965 = vld [vmem:[%s1 + $0xfe4] sm:$0xff]
        %v966 = vld [vmem:[%s1 + $0xfec] sm:$0xf]
        %v967 = vld [vmem:[%s1 + $0xff0] sm:$0xff]
        %v968 = vld [vmem:[%s1 + $0xff8] sm:$0xf]
        %v969 = vld [vmem:[%s1 + $0xffc] sm:$0xff]
        %v970 = vld [vmem:[%s1 + $0x1004] sm:$0xf]
        %v971 = vld [vmem:[%s1 + $0x1008] sm:$0xff]
        %v972 = vld [vmem:[%s1 + $0x1010] sm:$0xf]
        %v973 = vld [vmem:[%s1 + $0x1014] sm:$0xff]
        %v974 = vld [vmem:[%s1 + $0x101c] sm:$0xf]
        %v975 = vld [vmem:[%s1 + $0x1020] sm:$0xff]
        %v976 = vld [vmem:[%s1 + $0x1028] sm:$0xf]
        %v977 = vld [vmem:[%s1 + $0x102c] sm:$0xff]
        %v978 = vld [vmem:[%s1 + $0x1034] sm:$0xf]
        %v979 = vld [vmem:[%s1 + $0x1038] sm:$0xff]
        %v980 = vld [vmem:[%s1 + $0x1040] sm:$0xf]
        %v981 = vld [vmem:[%s1 + $0x1044] sm:$0xff]
        %v982 = vld [vmem:[%s1 + $0x104c] sm:$0xf]
        %v983 = vld [vmem:[%s1 + $0x1050] sm:$0xff]
        %v984 = vld [vmem:[%s1 + $0x1058] sm:$0xf]
        %v985 = vld [vmem:[%s1 + $0x105c] sm:$0xff]
        %v986 = vld [vmem:[%s1 + $0x1064] sm:$0xf]
        %v987 = vld [vmem:[%s1 + $0x1068] sm:$0xff]
        %v988 = vld [vmem:[%s1 + $0x1070] sm:$0xf]
        %v989 = vld [vmem:[%s1 + $0x1074] sm:$0xff]
        %v990 = vld [vmem:[%s1 + $0x107c] sm:$0xf]
        %v991 = vld [vmem:[%s1 + $0x1080] sm:$0xff]
        %v992 = vld [vmem:[%s1 + $0x1088] sm:$0xf]
        %v993 = vld [vmem:[%s1 + $0x108c] sm:$0xff]
        %v994 = vld [vmem:[%s1 + $0x1094] sm:$0xf]
        %v995 = vld [vmem:[%s1 + $0x1098] sm:$0xff]
        %v996 = vld [vmem:[%s1 + $0x10a0] sm:$0xf]
        %v997 = vld [vmem:[%s1 + $0x10a4] sm:$0xff]
        %v998 = vld [vmem:[%s1 + $0x10ac] sm:$0xf]
        %v999 = vld [vmem:[%s1 + $0x10b0] sm:$0xff]
        %v1000 = vld [vmem:[%s1 + $0x10b8] sm:$0xf]
        %v1001 = vld [vmem:[%s1 + $0x10bc] sm:$0xff]
        %v1002 = vld [vmem:[%s1 + $0x10c4] sm:$0xf]
        %v1003 = vld [vmem:[%s1 + $0x10c8] sm:$0xff]
        %v1004 = vld [vmem:[%s1 + $0x10d0] sm:$0xf]
        %v1005 = vld [vmem:[%s1 + $0x10d4] sm:$0xff]
        %v1006 = vld [vmem:[%s1 + $0x10dc] sm:$0xf]
        %v1007 = vld [vmem:[%s1 + $0x10e0] sm:$0xff]
        %v1008 = vld [vmem:[%s1 + $0x10e8] sm:$0xf]
        %v1009 = vld [vmem:[%s1 + $0x10ec] sm:$0xff]
        %v1010 = vld [vmem:[%s1 + $0x10f4] sm:$0xf]
        %v1011 = vld [vmem:[%s1 + $0x10f8] sm:$0xff]
        %v1012 = vld [vmem:[%s1 + $0x1100] sm:$0xf]
        %v1013 = vld [vmem:[%s1 + $0x1104] sm:$0xff]
        %v1014 = vld [vmem:[%s1 + $0x110c] sm:$0xf]
        %v1015 = vld [vmem:[%s1 + $0x1110] sm:$0xff]
        %v1016 = vld [vmem:[%s1 + $0x1118] sm:$0xf]
        %v1017 = vld [vmem:[%s1 + $0x111c] sm:$0xff]
        %v1018 = vld [vmem:[%s1 + $0x1124] sm:$0xf]
        %v1019 = vld [vmem:[%s1 + $0x1128] sm:$0xff]
        %v1020 = vld [vmem:[%s1 + $0x1130] sm:$0xf]
        %v1021 = vld [vmem:[%s1 + $0x1134] sm:$0xff]
        %v1022 = vld [vmem:[%s1 + $0x113c] sm:$0xf]
        %v1023 = vld [vmem:[%s1 + $0x1140] sm:$0xff]
        %v1024 = vld [vmem:[%s1 + $0x1148] sm:$0xf]
        %v1025 = vld [vmem:[%s1 + $0x114c] sm:$0xff]
        %v1026 = vld [vmem:[%s1 + $0x1154] sm:$0xf]
        %v1027 = vld [vmem:[%s1 + $0x1158] sm:$0xff]
        %v1028 = vld [vmem:[%s1 + $0x1160] sm:$0xf]
        %v1029 = vld [vmem:[%s1 + $0x1164] sm:$0xff]
        %v1030 = vld [vmem:[%s1 + $0x116c] sm:$0xf]
        %v1031 = vld [vmem:[%s1 + $0x1170] sm:$0xff]
        %v1032 = vld [vmem:[%s1 + $0x1178] sm:$0xf]
        %v1033 = vld [vmem:[%s1 + $0x117c] sm:$0xff]
        %v1034 = vld [vmem:[%s1 + $0x1184] sm:$0xf]
        %v1035 = vld [vmem:[%s1 + $0x1188] sm:$0xff]
        %v1036 = vld [vmem:[%s1 + $0x1190] sm:$0xf]
        %v1037 = vld [vmem:[%s1 + $0x1194] sm:$0xff]
        %v1038 = vld [vmem:[%s1 + $0x119c] sm:$0xf]
        %v1039 = vld [vmem:[%s1 + $0x11a0] sm:$0xff]
        %v1040 = vld [vmem:[%s1 + $0x11a8] sm:$0xf]
        %v1041 = vld [vmem:[%s1 + $0x11ac] sm:$0xff]
        %v1042 = vld [vmem:[%s1 + $0x11b4] sm:$0xf]
        %v1043 = vld [vmem:[%s1 + $0x11b8] sm:$0xff]
        %v1044 = vld [vmem:[%s1 + $0x11c0] sm:$0xf]
        %v1045 = vld [vmem:[%s1 + $0x11c4] sm:$0xff]
        %v1046 = vld [vmem:[%s1 + $0x11cc] sm:$0xf]
        %v1047 = vld [vmem:[%s1 + $0x11d0] sm:$0xff]
        %v1048 = vld [vmem:[%s1 + $0x11d8] sm:$0xf]
        %v1049 = vld [vmem:[%s1 + $0x11dc] sm:$0xff]
        %v1050 = vld [vmem:[%s1 + $0x11e4] sm:$0xf]
        %v1051 = vld [vmem:[%s1 + $0x11e8] sm:$0xff]
        %v1052 = vld [vmem:[%s1 + $0x11f0] sm:$0xf]
        %v1053 = vld [vmem:[%s1 + $0x11f4] sm:$0xff]
        %v1054 = vld [vmem:[%s1 + $0x11fc] sm:$0xf]
        %v1055 = vld [vmem:[%s1 + $0x1200] sm:$0xff]
        %v1056 = vld [vmem:[%s1 + $0x1208] sm:$0xf]
        %v1057 = vld [vmem:[%s1 + $0x120c] sm:$0xff]
        %v1058 = vld [vmem:[%s1 + $0x1214] sm:$0xf]
        %v1059 = vld [vmem:[%s1 + $0x1218] sm:$0xff]
        %v1060 = vld [vmem:[%s1 + $0x1220] sm:$0xf]
        %v1061 = vld [vmem:[%s1 + $0x1224] sm:$0xff]
        %v1062 = vld [vmem:[%s1 + $0x122c] sm:$0xf]
        %v1063 = vld [vmem:[%s1 + $0x1230] sm:$0xff]
        %v1064 = vld [vmem:[%s1 + $0x1238] sm:$0xf]
        %v1065 = vld [vmem:[%s1 + $0x123c] sm:$0xff]
        %v1066 = vld [vmem:[%s1 + $0x1244] sm:$0xf]
        %v1067 = vld [vmem:[%s1 + $0x1248] sm:$0xff]
        %v1068 = vld [vmem:[%s1 + $0x1250] sm:$0xf]
        %v1069 = vld [vmem:[%s1 + $0x1254] sm:$0xff]
        %v1070 = vld [vmem:[%s1 + $0x125c] sm:$0xf]
        %v1071 = vld [vmem:[%s1 + $0x1260] sm:$0xff]
        %v1072 = vld [vmem:[%s1 + $0x1268] sm:$0xf]
        %v1073 = vld [vmem:[%s1 + $0x126c] sm:$0xff]
        %v1074 = vld [vmem:[%s1 + $0x1274] sm:$0xf]
        %v1075 = vld [vmem:[%s1 + $0x1278] sm:$0xff]
        %v1076 = vld [vmem:[%s1 + $0x1280] sm:$0xf]
        %v1077 = vld [vmem:[%s1 + $0x1284] sm:$0xff]
        %v1078 = vld [vmem:[%s1 + $0x128c] sm:$0xf]
        %v1079 = vld [vmem:[%s1 + $0x1290] sm:$0xff]
        %v1080 = vld [vmem:[%s1 + $0x1298] sm:$0xf]
        %v1081 = vld [vmem:[%s1 + $0x129c] sm:$0xff]
        %v1082 = vld [vmem:[%s1 + $0x12a4] sm:$0xf]
        %v1083 = vld [vmem:[%s1 + $0x12a8] sm:$0xff]
        %v1084 = vld [vmem:[%s1 + $0x12b0] sm:$0xf]
        %v1085 = vld [vmem:[%s1 + $0x12b4] sm:$0xff]
        %v1086 = vld [vmem:[%s1 + $0x12bc] sm:$0xf]
        %v1087 = vld [vmem:[%s1 + $0x12c0] sm:$0xff]
        %v1088 = vld [vmem:[%s1 + $0x12c8] sm:$0xf]
        %v1089 = vld [vmem:[%s1 + $0x12cc] sm:$0xff]
        %v1090 = vld [vmem:[%s1 + $0x12d4] sm:$0xf]
        %v1091 = vld [vmem:[%s1 + $0x12d8] sm:$0xff]
        %v1092 = vld [vmem:[%s1 + $0x12e0] sm:$0xf]
        %v1093 = vld [vmem:[%s1 + $0x12e4] sm:$0xff]
        %v1094 = vld [vmem:[%s1 + $0x12ec] sm:$0xf]
        %v1095 = vld [vmem:[%s1 + $0x12f0] sm:$0xff]
        %v1096 = vld [vmem:[%s1 + $0x12f8] sm:$0xf]
        %v1097 = vld [vmem:[%s1 + $0x12fc] sm:$0xff]
        %v1098 = vld [vmem:[%s1 + $0x1304] sm:$0xf]
        %v1099 = vld [vmem:[%s1 + $0x1308] sm:$0xff]
        %v1100 = vld [vmem:[%s1 + $0x1310] sm:$0xf]
        %v1101 = vld [vmem:[%s1 + $0x1314] sm:$0xff]
        %v1102 = vld [vmem:[%s1 + $0x131c] sm:$0xf]
        %v1103 = vld [vmem:[%s1 + $0x1320] sm:$0xff]
        %v1104 = vld [vmem:[%s1 + $0x1328] sm:$0xf]
        %v1105 = vld [vmem:[%s1 + $0x132c] sm:$0xff]
        %v1106 = vld [vmem:[%s1 + $0x1334] sm:$0xf]
        %v1107 = vld [vmem:[%s1 + $0x1338] sm:$0xff]
        %v1108 = vld [vmem:[%s1 + $0x1340] sm:$0xf]
        %v1109 = vld [vmem:[%s1 + $0x1344] sm:$0xff]
        %v1110 = vld [vmem:[%s1 + $0x134c] sm:$0xf]
        %v1111 = vld [vmem:[%s1 + $0x1350] sm:$0xff]
        %v1112 = vld [vmem:[%s1 + $0x1358] sm:$0xf]
        %v1113 = vld [vmem:[%s1 + $0x135c] sm:$0xff]
        %v1114 = vld [vmem:[%s1 + $0x1364] sm:$0xf]
        %v1115 = vld [vmem:[%s1 + $0x1368] sm:$0xff]
        %v1116 = vld [vmem:[%s1 + $0x1370] sm:$0xf]
        %v1117 = vld [vmem:[%s1 + $0x1374] sm:$0xff]
        %v1118 = vld [vmem:[%s1 + $0x137c] sm:$0xf]
        %v1119 = vld [vmem:[%s1 + $0x1380] sm:$0xff]
        %v1120 = vld [vmem:[%s1 + $0x1388] sm:$0xf]
        %v1121 = vld [vmem:[%s1 + $0x138c] sm:$0xff]
        %v1122 = vld [vmem:[%s1 + $0x1394] sm:$0xf]
        %v1123 = vld [vmem:[%s1 + $0x1398] sm:$0xff]
        %v1124 = vld [vmem:[%s1 + $0x13a0] sm:$0xf]
        %v1125 = vld [vmem:[%s1 + $0x13a4] sm:$0xff]
        %v1126 = vld [vmem:[%s1 + $0x13ac] sm:$0xf]
        %v1127 = vld [vmem:[%s1 + $0x13b0] sm:$0xff]
        %v1128 = vld [vmem:[%s1 + $0x13b8] sm:$0xf]
        %v1129 = vld [vmem:[%s1 + $0x13bc] sm:$0xff]
        %v1130 = vld [vmem:[%s1 + $0x13c4] sm:$0xf]
        %v1131 = vld [vmem:[%s1 + $0x13c8] sm:$0xff]
        %v1132 = vld [vmem:[%s1 + $0x13d0] sm:$0xf]
        %v1133 = vld [vmem:[%s1 + $0x13d4] sm:$0xff]
        %v1134 = vld [vmem:[%s1 + $0x13dc] sm:$0xf]
        %v1135 = vld [vmem:[%s1 + $0x13e0] sm:$0xff]
        %v1136 = vld [vmem:[%s1 + $0x13e8] sm:$0xf]
        %v1137 = vld [vmem:[%s1 + $0x13ec] sm:$0xff]
        %v1138 = vld [vmem:[%s1 + $0x13f4] sm:$0xf]
        %v1139 = vld [vmem:[%s1 + $0x13f8] sm:$0xff]
        %v1140 = vld [vmem:[%s1 + $0x1400] sm:$0xf]
        %v1141 = vld [vmem:[%s1 + $0x1404] sm:$0xff]
        %v1142 = vld [vmem:[%s1 + $0x140c] sm:$0xf]
        %v1143 = vld [vmem:[%s1 + $0x1410] sm:$0xff]
        %v1144 = vld [vmem:[%s1 + $0x1418] sm:$0xf]
        %v1145 = vld [vmem:[%s1 + $0x141c] sm:$0xff]
        %v1146 = vld [vmem:[%s1 + $0x1424] sm:$0xf]
        %v1147 = vld [vmem:[%s1 + $0x1428] sm:$0xff]
        %v1148 = vld [vmem:[%s1 + $0x1430] sm:$0xf]
        %v1149 = vld [vmem:[%s1 + $0x1434] sm:$0xff]
        %v1150 = vld [vmem:[%s1 + $0x143c] sm:$0xf]
        %v1151 = vld [vmem:[%s1 + $0x1440] sm:$0xff]
        %v1152 = vld [vmem:[%s1 + $0x1448] sm:$0xf]
        %v1153 = vld [vmem:[%s1 + $0x144c] sm:$0xff]
        %v1154 = vld [vmem:[%s1 + $0x1454] sm:$0xf]
        %v1155 = vld [vmem:[%s1 + $0x1458] sm:$0xff]
        %v1156 = vld [vmem:[%s1 + $0x1460] sm:$0xf]
        %v1157 = vld [vmem:[%s1 + $0x1464] sm:$0xff]
        %v1158 = vld [vmem:[%s1 + $0x146c] sm:$0xf]
        %v1159 = vld [vmem:[%s1 + $0x1470] sm:$0xff]
        %v1160 = vld [vmem:[%s1 + $0x1478] sm:$0xf]
        %v1161 = vld [vmem:[%s1 + $0x147c] sm:$0xff]
        %v1162 = vld [vmem:[%s1 + $0x1484] sm:$0xf]
        %v1163 = vld [vmem:[%s1 + $0x1488] sm:$0xff]
        %v1164 = vld [vmem:[%s1 + $0x1490] sm:$0xf]
        %v1165 = vld [vmem:[%s1 + $0x1494] sm:$0xff]
        %v1166 = vld [vmem:[%s1 + $0x149c] sm:$0xf]
        %v1167 = vld [vmem:[%s1 + $0x14a0] sm:$0xff]
        %v1168 = vld [vmem:[%s1 + $0x14a8] sm:$0xf]
        %v1169 = vld [vmem:[%s1 + $0x14ac] sm:$0xff]
        %v1170 = vld [vmem:[%s1 + $0x14b4] sm:$0xf]
        %v1171 = vld [vmem:[%s1 + $0x14b8] sm:$0xff]
        %v1172 = vld [vmem:[%s1 + $0x14c0] sm:$0xf]
        %v1173 = vld [vmem:[%s1 + $0x14c4] sm:$0xff]
        %v1174 = vld [vmem:[%s1 + $0x14cc] sm:$0xf]
        %v1175 = vld [vmem:[%s1 + $0x14d0] sm:$0xff]
        %v1176 = vld [vmem:[%s1 + $0x14d8] sm:$0xf]
        %v1177 = vld [vmem:[%s1 + $0x14dc] sm:$0xff]
        %v1178 = vld [vmem:[%s1 + $0x14e4] sm:$0xf]
        %v1179 = vld [vmem:[%s1 + $0x14e8] sm:$0xff]
        %v1180 = vld [vmem:[%s1 + $0x14f0] sm:$0xf]
        %v1181 = vld [vmem:[%s1 + $0x14f4] sm:$0xff]
        %v1182 = vld [vmem:[%s1 + $0x14fc] sm:$0xf]
        %v1183 = vld [vmem:[%s1 + $0x1500] sm:$0xff]
        %v1184 = vld [vmem:[%s1 + $0x1508] sm:$0xf]
        %v1185 = vld [vmem:[%s1 + $0x150c] sm:$0xff]
        %v1186 = vld [vmem:[%s1 + $0x1514] sm:$0xf]
        %v1187 = vld [vmem:[%s1 + $0x1518] sm:$0xff]
        %v1188 = vld [vmem:[%s1 + $0x1520] sm:$0xf]
        %v1189 = vld [vmem:[%s1 + $0x1524] sm:$0xff]
        %v1190 = vld [vmem:[%s1 + $0x152c] sm:$0xf]
        %v1191 = vld [vmem:[%s1 + $0x1530] sm:$0xff]
        %v1192 = vld [vmem:[%s1 + $0x1538] sm:$0xf]
        %v1193 = vld [vmem:[%s1 + $0x153c] sm:$0xff]
        %v1194 = vld [vmem:[%s1 + $0x1544] sm:$0xf]
        %v1195 = vld [vmem:[%s1 + $0x1548] sm:$0xff]
        %v1196 = vld [vmem:[%s1 + $0x1550] sm:$0xf]
        %v1197 = vld [vmem:[%s1 + $0x1554] sm:$0xff]
        %v1198 = vld [vmem:[%s1 + $0x155c] sm:$0xf]
        %v1199 = vld [vmem:[%s1 + $0x1560] sm:$0xff]
        %v1200 = vld [vmem:[%s1 + $0x1568] sm:$0xf]
        %v1201 = vld [vmem:[%s1 + $0x156c] sm:$0xff]
        %v1202 = vld [vmem:[%s1 + $0x1574] sm:$0xf]
        %v1203 = vld [vmem:[%s1 + $0x1578] sm:$0xff]
        %v1204 = vld [vmem:[%s1 + $0x1580] sm:$0xf]
        %v1205 = vld [vmem:[%s1 + $0x1584] sm:$0xff]
        %v1206 = vld [vmem:[%s1 + $0x158c] sm:$0xf]
        %v1207 = vld [vmem:[%s1 + $0x1590] sm:$0xff]
        %v1208 = vld [vmem:[%s1 + $0x1598] sm:$0xf]
        %v1209 = vld [vmem:[%s1 + $0x159c] sm:$0xff]
        %v1210 = vld [vmem:[%s1 + $0x15a4] sm:$0xf]
        %v1211 = vld [vmem:[%s1 + $0x15a8] sm:$0xff]
        %v1212 = vld [vmem:[%s1 + $0x15b0] sm:$0xf]
        %v1213 = vld [vmem:[%s1 + $0x15b4] sm:$0xff]
        %v1214 = vld [vmem:[%s1 + $0x15bc] sm:$0xf]
        %v1215 = vld [vmem:[%s1 + $0x15c0] sm:$0xff]
        %v1216 = vld [vmem:[%s1 + $0x15c8] sm:$0xf]
        %v1217 = vld [vmem:[%s1 + $0x15cc] sm:$0xff]
        %v1218 = vld [vmem:[%s1 + $0x15d4] sm:$0xf]
        %v1219 = vld [vmem:[%s1 + $0x15d8] sm:$0xff]
        %v1220 = vld [vmem:[%s1 + $0x15e0] sm:$0xf]
        %v1221 = vld [vmem:[%s1 + $0x15e4] sm:$0xff]
        %v1222 = vld [vmem:[%s1 + $0x15ec] sm:$0xf]
        %v1223 = vld [vmem:[%s1 + $0x15f0] sm:$0xff]
        %v1224 = vld [vmem:[%s1 + $0x15f8] sm:$0xf]
        %v1225 = vld [vmem:[%s1 + $0x15fc] sm:$0xff]
        %v1226 = vld [vmem:[%s1 + $0x1604] sm:$0xf]
        %v1227 = vld [vmem:[%s1 + $0x1608] sm:$0xff]
        %v1228 = vld [vmem:[%s1 + $0x1610] sm:$0xf]
        %v1229 = vld [vmem:[%s1 + $0x1614] sm:$0xff]
        %v1230 = vld [vmem:[%s1 + $0x161c] sm:$0xf]
        %v1231 = vld [vmem:[%s1 + $0x1620] sm:$0xff]
        %v1232 = vld [vmem:[%s1 + $0x1628] sm:$0xf]
        %v1233 = vld [vmem:[%s1 + $0x162c] sm:$0xff]
        %v1234 = vld [vmem:[%s1 + $0x1634] sm:$0xf]
        %v1235 = vld [vmem:[%s1 + $0x1638] sm:$0xff]
        %v1236 = vld [vmem:[%s1 + $0x1640] sm:$0xf]
        %v1237 = vld [vmem:[%s1 + $0x1644] sm:$0xff]
        %v1238 = vld [vmem:[%s1 + $0x164c] sm:$0xf]
        %v1239 = vld [vmem:[%s1 + $0x1650] sm:$0xff]
        %v1240 = vld [vmem:[%s1 + $0x1658] sm:$0xf]
        %v1241 = vld [vmem:[%s1 + $0x165c] sm:$0xff]
        %v1242 = vld [vmem:[%s1 + $0x1664] sm:$0xf]
        %v1243 = vld [vmem:[%s1 + $0x1668] sm:$0xff]
        %v1244 = vld [vmem:[%s1 + $0x1670] sm:$0xf]
        %v1245 = vld [vmem:[%s1 + $0x1674] sm:$0xff]
        %v1246 = vld [vmem:[%s1 + $0x167c] sm:$0xf]
        %v1247 = vld [vmem:[%s1 + $0x1680] sm:$0xff]
        %v1248 = vld [vmem:[%s1 + $0x1688] sm:$0xf]
        %v1249 = vld [vmem:[%s1 + $0x168c] sm:$0xff]
        %v1250 = vld [vmem:[%s1 + $0x1694] sm:$0xf]
        %v1251 = vld [vmem:[%s1 + $0x1698] sm:$0xff]
        %v1252 = vld [vmem:[%s1 + $0x16a0] sm:$0xf]
        %v1253 = vld [vmem:[%s1 + $0x16a4] sm:$0xff]
        %v1254 = vld [vmem:[%s1 + $0x16ac] sm:$0xf]
        %v1255 = vld [vmem:[%s1 + $0x16b0] sm:$0xff]
        %v1256 = vld [vmem:[%s1 + $0x16b8] sm:$0xf]
        %v1257 = vld [vmem:[%s1 + $0x16bc] sm:$0xff]
        %v1258 = vld [vmem:[%s1 + $0x16c4] sm:$0xf]
        %v1259 = vld [vmem:[%s1 + $0x16c8] sm:$0xff]
        %v1260 = vld [vmem:[%s1 + $0x16d0] sm:$0xf]
        %v1261 = vld [vmem:[%s1 + $0x16d4] sm:$0xff]
        %v1262 = vld [vmem:[%s1 + $0x16dc] sm:$0xf]
        %v1263 = vld [vmem:[%s1 + $0x16e0] sm:$0xff]
        %v1264 = vld [vmem:[%s1 + $0x16e8] sm:$0xf]
        %v1265 = vld [vmem:[%s1 + $0x16ec] sm:$0xff]
        %v1266 = vld [vmem:[%s1 + $0x16f4] sm:$0xf]
        %v1267 = vld [vmem:[%s1 + $0x16f8] sm:$0xff]
        %v1268 = vld [vmem:[%s1 + $0x1700] sm:$0xf]
        %v1269 = vld [vmem:[%s1 + $0x1704] sm:$0xff]
        %v1270 = vld [vmem:[%s1 + $0x170c] sm:$0xf]
        %v1271 = vld [vmem:[%s1 + $0x1710] sm:$0xff]
        %v1272 = vld [vmem:[%s1 + $0x1718] sm:$0xf]
        %v1273 = vld [vmem:[%s1 + $0x171c] sm:$0xff]
        %v1274 = vld [vmem:[%s1 + $0x1724] sm:$0xf]
        %v1275 = vld [vmem:[%s1 + $0x1728] sm:$0xff]
        %v1276 = vld [vmem:[%s1 + $0x1730] sm:$0xf]
        %v1277 = vld [vmem:[%s1 + $0x1734] sm:$0xff]
        %v1278 = vld [vmem:[%s1 + $0x173c] sm:$0xf]
        %v1279 = vld [vmem:[%s1 + $0x1740] sm:$0xff]
        %v1280 = vld [vmem:[%s1 + $0x1748] sm:$0xf]
        %v1281 = vld [vmem:[%s1 + $0x174c] sm:$0xff]
        %v1282 = vld [vmem:[%s1 + $0x1754] sm:$0xf]
        %v1283 = vld [vmem:[%s1 + $0x1758] sm:$0xff]
        %v1284 = vld [vmem:[%s1 + $0x1760] sm:$0xf]
        %v1285 = vld [vmem:[%s1 + $0x1764] sm:$0xff]
        %v1286 = vld [vmem:[%s1 + $0x176c] sm:$0xf]
        %v1287 = vld [vmem:[%s1 + $0x1770] sm:$0xff]
        %v1288 = vld [vmem:[%s1 + $0x1778] sm:$0xf]
        %v1289 = vld [vmem:[%s1 + $0x177c] sm:$0xff]
        %v1290 = vld [vmem:[%s1 + $0x1784] sm:$0xf]
        %v1291 = vld [vmem:[%s1 + $0x1788] sm:$0xff]
        %v1292 = vld [vmem:[%s1 + $0x1790] sm:$0xf]
        %v1293 = vld [vmem:[%s1 + $0x1794] sm:$0xff]
        %v1294 = vld [vmem:[%s1 + $0x179c] sm:$0xf]
        %v1295 = vld [vmem:[%s1 + $0x17a0] sm:$0xff]
        %v1296 = vld [vmem:[%s1 + $0x17a8] sm:$0xf]
        %v1297 = vld [vmem:[%s1 + $0x17ac] sm:$0xff]
        %v1298 = vld [vmem:[%s1 + $0x17b4] sm:$0xf]
        %v1299 = vld [vmem:[%s1 + $0x17b8] sm:$0xff]
        %v1300 = vld [vmem:[%s1 + $0x17c0] sm:$0xf]
        %v1301 = vld [vmem:[%s1 + $0x17c4] sm:$0xff]
        %v1302 = vld [vmem:[%s1 + $0x17cc] sm:$0xf]
        %v1303 = vld [vmem:[%s1 + $0x17d0] sm:$0xff]
        %v1304 = vld [vmem:[%s1 + $0x17d8] sm:$0xf]
        %v1305 = vld [vmem:[%s1 + $0x17dc] sm:$0xff]
        %v1306 = vld [vmem:[%s1 + $0x17e4] sm:$0xf]
        %v1307 = vld [vmem:[%s1 + $0x17e8] sm:$0xff]
        %v1308 = vld [vmem:[%s1 + $0x17f0] sm:$0xf]
        %v1309 = vld [vmem:[%s1 + $0x17f4] sm:$0xff]
        %v1310 = vld [vmem:[%s1 + $0x17fc] sm:$0xf]
        %v1311 = vld [vmem:[%s1 + $0x1800] sm:$0xff]
        %v1312 = vld [vmem:[%s1 + $0x1808] sm:$0xf]
        %v1313 = vld [vmem:[%s1 + $0x180c] sm:$0xff]
        %v1314 = vld [vmem:[%s1 + $0x1814] sm:$0xf]
        %v1315 = vld [vmem:[%s1 + $0x1818] sm:$0xff]
        %v1316 = vld [vmem:[%s1 + $0x1820] sm:$0xf]
        %v1317 = vld [vmem:[%s1 + $0x1824] sm:$0xff]
        %v1318 = vld [vmem:[%s1 + $0x182c] sm:$0xf]
        %v1319 = vld [vmem:[%s1 + $0x1830] sm:$0xff]
        %v1320 = vld [vmem:[%s1 + $0x1838] sm:$0xf]
        %v1321 = vld [vmem:[%s1 + $0x183c] sm:$0xff]
        %v1322 = vld [vmem:[%s1 + $0x1844] sm:$0xf]
        %v1323 = vld [vmem:[%s1 + $0x1848] sm:$0xff]
        %v1324 = vld [vmem:[%s1 + $0x1850] sm:$0xf]
        %v1325 = vld [vmem:[%s1 + $0x1854] sm:$0xff]
        %v1326 = vld [vmem:[%s1 + $0x185c] sm:$0xf]
        %v1327 = vld [vmem:[%s1 + $0x1860] sm:$0xff]
        %v1328 = vld [vmem:[%s1 + $0x1868] sm:$0xf]
        %v1329 = vld [vmem:[%s1 + $0x186c] sm:$0xff]
        %v1330 = vld [vmem:[%s1 + $0x1874] sm:$0xf]
        %v1331 = vld [vmem:[%s1 + $0x1878] sm:$0xff]
        %v1332 = vld [vmem:[%s1 + $0x1880] sm:$0xf]
        %v1333 = vld [vmem:[%s1 + $0x1884] sm:$0xff]
        %v1334 = vld [vmem:[%s1 + $0x188c] sm:$0xf]
        %v1335 = vld [vmem:[%s1 + $0x1890] sm:$0xff]
        %v1336 = vld [vmem:[%s1 + $0x1898] sm:$0xf]
        %v1337 = vld [vmem:[%s1 + $0x189c] sm:$0xff]
        %v1338 = vld [vmem:[%s1 + $0x18a4] sm:$0xf]
        %v1339 = vld [vmem:[%s1 + $0x18a8] sm:$0xff]
        %v1340 = vld [vmem:[%s1 + $0x18b0] sm:$0xf]
        %v1341 = vld [vmem:[%s1 + $0x18b4] sm:$0xff]
        %v1342 = vld [vmem:[%s1 + $0x18bc] sm:$0xf]
        %v1343 = vld [vmem:[%s1 + $0x18c0] sm:$0xff]
        %v1344 = vld [vmem:[%s1 + $0x18c8] sm:$0xf]
        %v1345 = vld [vmem:[%s1 + $0x18cc] sm:$0xff]
        %v1346 = vld [vmem:[%s1 + $0x18d4] sm:$0xf]
        %v1347 = vld [vmem:[%s1 + $0x18d8] sm:$0xff]
        %v1348 = vld [vmem:[%s1 + $0x18e0] sm:$0xf]
        %v1349 = vld [vmem:[%s1 + $0x18e4] sm:$0xff]
        %v1350 = vld [vmem:[%s1 + $0x18ec] sm:$0xf]
        %v1351 = vld [vmem:[%s1 + $0x18f0] sm:$0xff]
        %v1352 = vld [vmem:[%s1 + $0x18f8] sm:$0xf]
        %v1353 = vld [vmem:[%s1 + $0x18fc] sm:$0xff]
        %v1354 = vld [vmem:[%s1 + $0x1904] sm:$0xf]
        %v1355 = vld [vmem:[%s1 + $0x1908] sm:$0xff]
        %v1356 = vld [vmem:[%s1 + $0x1910] sm:$0xf]
        %v1357 = vld [vmem:[%s1 + $0x1914] sm:$0xff]
        %v1358 = vld [vmem:[%s1 + $0x191c] sm:$0xf]
        %v1359 = vld [vmem:[%s1 + $0x1920] sm:$0xff]
        %v1360 = vld [vmem:[%s1 + $0x1928] sm:$0xf]
        %v1361 = vld [vmem:[%s1 + $0x192c] sm:$0xff]
        %v1362 = vld [vmem:[%s1 + $0x1934] sm:$0xf]
        %v1363 = vld [vmem:[%s1 + $0x1938] sm:$0xff]
        %v1364 = vld [vmem:[%s1 + $0x1940] sm:$0xf]
        %v1365 = vld [vmem:[%s1 + $0x1944] sm:$0xff]
        %v1366 = vld [vmem:[%s1 + $0x194c] sm:$0xf]
        %v1367 = vld [vmem:[%s1 + $0x1950] sm:$0xff]
        %v1368 = vld [vmem:[%s1 + $0x1958] sm:$0xf]
        %v1369 = vld [vmem:[%s1 + $0x195c] sm:$0xff]
        %v1370 = vld [vmem:[%s1 + $0x1964] sm:$0xf]
        %v1371 = vld [vmem:[%s1 + $0x1968] sm:$0xff]
        %v1372 = vld [vmem:[%s1 + $0x1970] sm:$0xf]
        %v1373 = vld [vmem:[%s1 + $0x1974] sm:$0xff]
        %v1374 = vld [vmem:[%s1 + $0x197c] sm:$0xf]
        %v1375 = vld [vmem:[%s1 + $0x1980] sm:$0xff]
        %v1376 = vld [vmem:[%s1 + $0x1988] sm:$0xf]
        %v1377 = vld [vmem:[%s1 + $0x198c] sm:$0xff]
        %v1378 = vld [vmem:[%s1 + $0x1994] sm:$0xf]
        %v1379 = vld [vmem:[%s1 + $0x1998] sm:$0xff]
        %v1380 = vld [vmem:[%s1 + $0x19a0] sm:$0xf]
        %v1381 = vld [vmem:[%s1 + $0x19a4] sm:$0xff]
        %v1382 = vld [vmem:[%s1 + $0x19ac] sm:$0xf]
        %v1383 = vld [vmem:[%s1 + $0x19b0] sm:$0xff]
        %v1384 = vld [vmem:[%s1 + $0x19b8] sm:$0xf]
        %v1385 = vld [vmem:[%s1 + $0x19bc] sm:$0xff]
        %v1386 = vld [vmem:[%s1 + $0x19c4] sm:$0xf]
        %v1387 = vld [vmem:[%s1 + $0x19c8] sm:$0xff]
        %v1388 = vld [vmem:[%s1 + $0x19d0] sm:$0xf]
        %v1389 = vld [vmem:[%s1 + $0x19d4] sm:$0xff]
        %v1390 = vld [vmem:[%s1 + $0x19dc] sm:$0xf]
        %v1391 = vld [vmem:[%s1 + $0x19e0] sm:$0xff]
        %v1392 = vld [vmem:[%s1 + $0x19e8] sm:$0xf]
        %v1393 = vld [vmem:[%s1 + $0x19ec] sm:$0xff]
        %v1394 = vld [vmem:[%s1 + $0x19f4] sm:$0xf]
        %v1395 = vld [vmem:[%s1 + $0x19f8] sm:$0xff]
        %v1396 = vld [vmem:[%s1 + $0x1a00] sm:$0xf]
        %v1397 = vld [vmem:[%s1 + $0x1a04] sm:$0xff]
        %v1398 = vld [vmem:[%s1 + $0x1a0c] sm:$0xf]
        %v1399 = vld [vmem:[%s1 + $0x1a10] sm:$0xff]
        %v1400 = vld [vmem:[%s1 + $0x1a18] sm:$0xf]
        %v1401 = vld [vmem:[%s1 + $0x1a1c] sm:$0xff]
        %v1402 = vld [vmem:[%s1 + $0x1a24] sm:$0xf]
        %v1403 = vld [vmem:[%s1 + $0x1a28] sm:$0xff]
        %v1404 = vld [vmem:[%s1 + $0x1a30] sm:$0xf]
        %v1405 = vld [vmem:[%s1 + $0x1a34] sm:$0xff]
        %v1406 = vld [vmem:[%s1 + $0x1a3c] sm:$0xf]
        %v1407 = vld [vmem:[%s1 + $0x1a40] sm:$0xff]
        %v1408 = vld [vmem:[%s1 + $0x1a48] sm:$0xf]
        %v1409 = vld [vmem:[%s1 + $0x1a4c] sm:$0xff]
        %v1410 = vld [vmem:[%s1 + $0x1a54] sm:$0xf]
        %v1411 = vld [vmem:[%s1 + $0x1a58] sm:$0xff]
        %v1412 = vld [vmem:[%s1 + $0x1a60] sm:$0xf]
        %v1413 = vld [vmem:[%s1 + $0x1a64] sm:$0xff]
        %v1414 = vld [vmem:[%s1 + $0x1a6c] sm:$0xf]
        %v1415 = vld [vmem:[%s1 + $0x1a70] sm:$0xff]
        %v1416 = vld [vmem:[%s1 + $0x1a78] sm:$0xf]
        %v1417 = vld [vmem:[%s1 + $0x1a7c] sm:$0xff]
        %v1418 = vld [vmem:[%s1 + $0x1a84] sm:$0xf]
        %v1419 = vld [vmem:[%s1 + $0x1a88] sm:$0xff]
        %v1420 = vld [vmem:[%s1 + $0x1a90] sm:$0xf]
        %v1421 = vld [vmem:[%s1 + $0x1a94] sm:$0xff]
        %v1422 = vld [vmem:[%s1 + $0x1a9c] sm:$0xf]
        %v1423 = vld [vmem:[%s1 + $0x1aa0] sm:$0xff]
        %v1424 = vld [vmem:[%s1 + $0x1aa8] sm:$0xf]
        %v1425 = vld [vmem:[%s1 + $0x1aac] sm:$0xff]
        %v1426 = vld [vmem:[%s1 + $0x1ab4] sm:$0xf]
        %v1427 = vld [vmem:[%s1 + $0x1ab8] sm:$0xff]
        %v1428 = vld [vmem:[%s1 + $0x1ac0] sm:$0xf]
        %v1429 = vld [vmem:[%s1 + $0x1ac4] sm:$0xff]
        %v1430 = vld [vmem:[%s1 + $0x1acc] sm:$0xf]
        %v1431 = vld [vmem:[%s1 + $0x1ad0] sm:$0xff]
        %v1432 = vld [vmem:[%s1 + $0x1ad8] sm:$0xf]
        %v1433 = vld [vmem:[%s1 + $0x1adc] sm:$0xff]
        %v1434 = vld [vmem:[%s1 + $0x1ae4] sm:$0xf]
        %v1435 = vld [vmem:[%s1 + $0x1ae8] sm:$0xff]
        %v1436 = vld [vmem:[%s1 + $0x1af0] sm:$0xf]
        %v1437 = vld [vmem:[%s1 + $0x1af4] sm:$0xff]
        %v1438 = vld [vmem:[%s1 + $0x1afc] sm:$0xf]
        %v1439 = vld [vmem:[%s1 + $0x1b00] sm:$0xff]
        %v1440 = vld [vmem:[%s1 + $0x1b08] sm:$0xf]
        %v1441 = vld [vmem:[%s1 + $0x1b0c] sm:$0xff]
        %v1442 = vld [vmem:[%s1 + $0x1b14] sm:$0xf]
        %v1443 = vld [vmem:[%s1 + $0x1b18] sm:$0xff]
        %v1444 = vld [vmem:[%s1 + $0x1b20] sm:$0xf]
        %v1445 = vld [vmem:[%s1 + $0x1b24] sm:$0xff]
        %v1446 = vld [vmem:[%s1 + $0x1b2c] sm:$0xf]
        %v1447 = vld [vmem:[%s1 + $0x1b30] sm:$0xff]
        %v1448 = vld [vmem:[%s1 + $0x1b38] sm:$0xf]
        %v1449 = vld [vmem:[%s1 + $0x1b3c] sm:$0xff]
        %v1450 = vld [vmem:[%s1 + $0x1b44] sm:$0xf]
        %v1451 = vld [vmem:[%s1 + $0x1b48] sm:$0xff]
        %v1452 = vld [vmem:[%s1 + $0x1b50] sm:$0xf]
        %v1453 = vld [vmem:[%s1 + $0x1b54] sm:$0xff]
        %v1454 = vld [vmem:[%s1 + $0x1b5c] sm:$0xf]
        %v1455 = vld [vmem:[%s1 + $0x1b60] sm:$0xff]
        %v1456 = vld [vmem:[%s1 + $0x1b68] sm:$0xf]
        %v1457 = vld [vmem:[%s1 + $0x1b6c] sm:$0xff]
        %v1458 = vld [vmem:[%s1 + $0x1b74] sm:$0xf]
        %v1459 = vld [vmem:[%s1 + $0x1b78] sm:$0xff]
        %v1460 = vld [vmem:[%s1 + $0x1b80] sm:$0xf]
        %v1461 = vld [vmem:[%s1 + $0x1b84] sm:$0xff]
        %v1462 = vld [vmem:[%s1 + $0x1b8c] sm:$0xf]
        %v1463 = vld [vmem:[%s1 + $0x1b90] sm:$0xff]
        %v1464 = vld [vmem:[%s1 + $0x1b98] sm:$0xf]
        %v1465 = vld [vmem:[%s1 + $0x1b9c] sm:$0xff]
        %v1466 = vld [vmem:[%s1 + $0x1ba4] sm:$0xf]
        %v1467 = vld [vmem:[%s1 + $0x1ba8] sm:$0xff]
        %v1468 = vld [vmem:[%s1 + $0x1bb0] sm:$0xf]
        %v1469 = vld [vmem:[%s1 + $0x1bb4] sm:$0xff]
        %v1470 = vld [vmem:[%s1 + $0x1bbc] sm:$0xf]
        %v1471 = vld [vmem:[%s1 + $0x1bc0] sm:$0xff]
        %v1472 = vld [vmem:[%s1 + $0x1bc8] sm:$0xf]
        %v1473 = vld [vmem:[%s1 + $0x1bcc] sm:$0xff]
        %v1474 = vld [vmem:[%s1 + $0x1bd4] sm:$0xf]
        %v1475 = vld [vmem:[%s1 + $0x1bd8] sm:$0xff]
        %v1476 = vld [vmem:[%s1 + $0x1be0] sm:$0xf]
        %v1477 = vld [vmem:[%s1 + $0x1be4] sm:$0xff]
        %v1478 = vld [vmem:[%s1 + $0x1bec] sm:$0xf]
        %v1479 = vld [vmem:[%s1 + $0x1bf0] sm:$0xff]
        %v1480 = vld [vmem:[%s1 + $0x1bf8] sm:$0xf]
        %v1481 = vld [vmem:[%s1 + $0x1bfc] sm:$0xff]
        %v1482 = vld [vmem:[%s1 + $0x1c04] sm:$0xf]
        %v1483 = vld [vmem:[%s1 + $0x1c08] sm:$0xff]
        %v1484 = vld [vmem:[%s1 + $0x1c10] sm:$0xf]
        %v1485 = vld [vmem:[%s1 + $0x1c14] sm:$0xff]
        %v1486 = vld [vmem:[%s1 + $0x1c1c] sm:$0xf]
        %v1487 = vld [vmem:[%s1 + $0x1c20] sm:$0xff]
        %v1488 = vld [vmem:[%s1 + $0x1c28] sm:$0xf]
        %v1489 = vld [vmem:[%s1 + $0x1c2c] sm:$0xff]
        %v1490 = vld [vmem:[%s1 + $0x1c34] sm:$0xf]
        %v1491 = vld [vmem:[%s1 + $0x1c38] sm:$0xff]
        %v1492 = vld [vmem:[%s1 + $0x1c40] sm:$0xf]
        %v1493 = vld [vmem:[%s1 + $0x1c44] sm:$0xff]
        %v1494 = vld [vmem:[%s1 + $0x1c4c] sm:$0xf]
        %v1495 = vld [vmem:[%s1 + $0x1c50] sm:$0xff]
        %v1496 = vld [vmem:[%s1 + $0x1c58] sm:$0xf]
        %v1497 = vld [vmem:[%s1 + $0x1c5c] sm:$0xff]
        %v1498 = vld [vmem:[%s1 + $0x1c64] sm:$0xf]
        %v1499 = vld [vmem:[%s1 + $0x1c68] sm:$0xff]
        %v1500 = vld [vmem:[%s1 + $0x1c70] sm:$0xf]
        %v1501 = vld [vmem:[%s1 + $0x1c74] sm:$0xff]
        %v1502 = vld [vmem:[%s1 + $0x1c7c] sm:$0xf]
        %v1503 = vld [vmem:[%s1 + $0x1c80] sm:$0xff]
        %v1504 = vld [vmem:[%s1 + $0x1c88] sm:$0xf]
        %v1505 = vld [vmem:[%s1 + $0x1c8c] sm:$0xff]
        %v1506 = vld [vmem:[%s1 + $0x1c94] sm:$0xf]
        %v1507 = vld [vmem:[%s1 + $0x1c98] sm:$0xff]
        %v1508 = vld [vmem:[%s1 + $0x1ca0] sm:$0xf]
        %v1509 = vld [vmem:[%s1 + $0x1ca4] sm:$0xff]
        %v1510 = vld [vmem:[%s1 + $0x1cac] sm:$0xf]
        %v1511 = vld [vmem:[%s1 + $0x1cb0] sm:$0xff]
        %v1512 = vld [vmem:[%s1 + $0x1cb8] sm:$0xf]
        %v1513 = vld [vmem:[%s1 + $0x1cbc] sm:$0xff]
        %v1514 = vld [vmem:[%s1 + $0x1cc4] sm:$0xf]
        %v1515 = vld [vmem:[%s1 + $0x1cc8] sm:$0xff]
        %v1516 = vld [vmem:[%s1 + $0x1cd0] sm:$0xf]
        %v1517 = vld [vmem:[%s1 + $0x1cd4] sm:$0xff]
        %v1518 = vld [vmem:[%s1 + $0x1cdc] sm:$0xf]
        %v1519 = vld [vmem:[%s1 + $0x1ce0] sm:$0xff]
        %v1520 = vld [vmem:[%s1 + $0x1ce8] sm:$0xf]
        %v1521 = vld [vmem:[%s1 + $0x1cec] sm:$0xff]
        %v1522 = vld [vmem:[%s1 + $0x1cf4] sm:$0xf]
        %v1523 = vld [vmem:[%s1 + $0x1cf8] sm:$0xff]
        %v1524 = vld [vmem:[%s1 + $0x1d00] sm:$0xf]
        %v1525 = vld [vmem:[%s1 + $0x1d04] sm:$0xff]
        %v1526 = vld [vmem:[%s1 + $0x1d0c] sm:$0xf]
        %v1527 = vld [vmem:[%s1 + $0x1d10] sm:$0xff]
        %v1528 = vld [vmem:[%s1 + $0x1d18] sm:$0xf]
        %v1529 = vld [vmem:[%s1 + $0x1d1c] sm:$0xff]
        %v1530 = vld [vmem:[%s1 + $0x1d24] sm:$0xf]
        %v1531 = vld [vmem:[%s1 + $0x1d28] sm:$0xff]
        %v1532 = vld [vmem:[%s1 + $0x1d30] sm:$0xf]
        %v1533 = vld [vmem:[%s1 + $0x1d34] sm:$0xff]
        %v1534 = vld [vmem:[%s1 + $0x1d3c] sm:$0xf]
        %v1535 = vld [vmem:[%s1 + $0x1d40] sm:$0xff]
        %v1536 = vld [vmem:[%s1 + $0x1d48] sm:$0xf]
        %v1537 = vld [vmem:[%s1 + $0x1d4c] sm:$0xff]
        %v1538 = vld [vmem:[%s1 + $0x1d54] sm:$0xf]
        %v1539 = vld [vmem:[%s1 + $0x1d58] sm:$0xff]
        %v1540 = vld [vmem:[%s1 + $0x1d60] sm:$0xf]
        %v1541 = vld [vmem:[%s1 + $0x1d64] sm:$0xff]
        %v1542 = vld [vmem:[%s1 + $0x1d6c] sm:$0xf]
        %v1543 = vld [vmem:[%s1 + $0x1d70] sm:$0xff]
        %v1544 = vld [vmem:[%s1 + $0x1d78] sm:$0xf]
        %v1545 = vld [vmem:[%s1 + $0x1d7c] sm:$0xff]
        %v1546 = vld [vmem:[%s1 + $0x1d84] sm:$0xf]
        %v1547 = vld [vmem:[%s1 + $0x1d88] sm:$0xff]
        %v1548 = vld [vmem:[%s1 + $0x1d90] sm:$0xf]
        %v1549 = vld [vmem:[%s1 + $0x1d94] sm:$0xff]
        %v1550 = vld [vmem:[%s1 + $0x1d9c] sm:$0xf]
        %v1551 = vld [vmem:[%s1 + $0x1da0] sm:$0xff]
        %v1552 = vld [vmem:[%s1 + $0x1da8] sm:$0xf]
        %v1553 = vld [vmem:[%s1 + $0x1dac] sm:$0xff]
        %v1554 = vld [vmem:[%s1 + $0x1db4] sm:$0xf]
        %v1555 = vld [vmem:[%s1 + $0x1db8] sm:$0xff]
        %v1556 = vld [vmem:[%s1 + $0x1dc0] sm:$0xf]
        %v1557 = vld [vmem:[%s1 + $0x1dc4] sm:$0xff]
        %v1558 = vld [vmem:[%s1 + $0x1dcc] sm:$0xf]
        %v1559 = vld [vmem:[%s1 + $0x1dd0] sm:$0xff]
        %v1560 = vld [vmem:[%s1 + $0x1dd8] sm:$0xf]
        %v1561 = vld [vmem:[%s1 + $0x1ddc] sm:$0xff]
        %v1562 = vld [vmem:[%s1 + $0x1de4] sm:$0xf]
        %v1563 = vld [vmem:[%s1 + $0x1de8] sm:$0xff]
        %v1564 = vld [vmem:[%s1 + $0x1df0] sm:$0xf]
        %v1565 = vld [vmem:[%s1 + $0x1df4] sm:$0xff]
        %v1566 = vld [vmem:[%s1 + $0x1dfc] sm:$0xf]
        %v1567 = vld [vmem:[%s1 + $0x1e00] sm:$0xff]
        %v1568 = vld [vmem:[%s1 + $0x1e08] sm:$0xf]
        %v1569 = vld [vmem:[%s1 + $0x1e0c] sm:$0xff]
        %v1570 = vld [vmem:[%s1 + $0x1e14] sm:$0xf]
        %v1571 = vld [vmem:[%s1 + $0x1e18] sm:$0xff]
        %v1572 = vld [vmem:[%s1 + $0x1e20] sm:$0xf]
        %v1573 = vld [vmem:[%s1 + $0x1e24] sm:$0xff]
        %v1574 = vld [vmem:[%s1 + $0x1e2c] sm:$0xf]
        %v1575 = vld [vmem:[%s1 + $0x1e30] sm:$0xff]
        %v1576 = vld [vmem:[%s1 + $0x1e38] sm:$0xf]
        %v1577 = vld [vmem:[%s1 + $0x1e3c] sm:$0xff]
        %v1578 = vld [vmem:[%s1 + $0x1e44] sm:$0xf]
        %v1579 = vld [vmem:[%s1 + $0x1e48] sm:$0xff]
        %v1580 = vld [vmem:[%s1 + $0x1e50] sm:$0xf]
        %v1581 = vld [vmem:[%s1 + $0x1e54] sm:$0xff]
        %v1582 = vld [vmem:[%s1 + $0x1e5c] sm:$0xf]
        %v1583 = vld [vmem:[%s1 + $0x1e60] sm:$0xff]
        %v1584 = vld [vmem:[%s1 + $0x1e68] sm:$0xf]
        %v1585 = vld [vmem:[%s1 + $0x1e6c] sm:$0xff]
        %v1586 = vld [vmem:[%s1 + $0x1e74] sm:$0xf]
        %v1587 = vld [vmem:[%s1 + $0x1e78] sm:$0xff]
        %v1588 = vld [vmem:[%s1 + $0x1e80] sm:$0xf]
        %v1589 = vld [vmem:[%s1 + $0x1e84] sm:$0xff]
        %v1590 = vld [vmem:[%s1 + $0x1e8c] sm:$0xf]
        %v1591 = vld [vmem:[%s1 + $0x1e90] sm:$0xff]
        %v1592 = vld [vmem:[%s1 + $0x1e98] sm:$0xf]
        %v1593 = vld [vmem:[%s1 + $0x1e9c] sm:$0xff]
        %v1594 = vld [vmem:[%s1 + $0x1ea4] sm:$0xf]
        %v1595 = vld [vmem:[%s1 + $0x1ea8] sm:$0xff]
        %v1596 = vld [vmem:[%s1 + $0x1eb0] sm:$0xf]
        %v1597 = vld [vmem:[%s1 + $0x1eb4] sm:$0xff]
        %v1598 = vld [vmem:[%s1 + $0x1ebc] sm:$0xf]
        %v1599 = vld [vmem:[%s1 + $0x1ec0] sm:$0xff]
        %v1600 = vld [vmem:[%s1 + $0x1ec8] sm:$0xf]
        %v1601 = vld [vmem:[%s1 + $0x1ecc] sm:$0xff]
        %v1602 = vld [vmem:[%s1 + $0x1ed4] sm:$0xf]
        %v1603 = vld [vmem:[%s1 + $0x1ed8] sm:$0xff]
        %v1604 = vld [vmem:[%s1 + $0x1ee0] sm:$0xf]
        %v1605 = vld [vmem:[%s1 + $0x1ee4] sm:$0xff]
        %v1606 = vld [vmem:[%s1 + $0x1eec] sm:$0xf]
        %v1607 = vld [vmem:[%s1 + $0x1ef0] sm:$0xff]
        %v1608 = vld [vmem:[%s1 + $0x1ef8] sm:$0xf]
        %v1609 = vld [vmem:[%s1 + $0x1efc] sm:$0xff]
        %v1610 = vld [vmem:[%s1 + $0x1f04] sm:$0xf]
        %v1611 = vld [vmem:[%s1 + $0x1f08] sm:$0xff]
        %v1612 = vld [vmem:[%s1 + $0x1f10] sm:$0xf]
        %v1613 = vld [vmem:[%s1 + $0x1f14] sm:$0xff]
        %v1614 = vld [vmem:[%s1 + $0x1f1c] sm:$0xf]
        %v1615 = vld [vmem:[%s1 + $0x1f20] sm:$0xff]
        %v1616 = vld [vmem:[%s1 + $0x1f28] sm:$0xf]
        %v1617 = vld [vmem:[%s1 + $0x1f2c] sm:$0xff]
        %v1618 = vld [vmem:[%s1 + $0x1f34] sm:$0xf]
        %v1619 = vld [vmem:[%s1 + $0x1f38] sm:$0xff]
        %v1620 = vld [vmem:[%s1 + $0x1f40] sm:$0xf]
        %v1621 = vld [vmem:[%s1 + $0x1f44] sm:$0xff]
        %v1622 = vld [vmem:[%s1 + $0x1f4c] sm:$0xf]
        %v1623 = vld [vmem:[%s1 + $0x1f50] sm:$0xff]
        %v1624 = vld [vmem:[%s1 + $0x1f58] sm:$0xf]
        %v1625 = vld [vmem:[%s1 + $0x1f5c] sm:$0xff]
        %v1626 = vld [vmem:[%s1 + $0x1f64] sm:$0xf]
        %v1627 = vld [vmem:[%s1 + $0x1f68] sm:$0xff]
        %v1628 = vld [vmem:[%s1 + $0x1f70] sm:$0xf]
        %v1629 = vld [vmem:[%s1 + $0x1f74] sm:$0xff]
        %v1630 = vld [vmem:[%s1 + $0x1f7c] sm:$0xf]
        %v1631 = vld [vmem:[%s1 + $0x1f80] sm:$0xff]
        %v1632 = vld [vmem:[%s1 + $0x1f88] sm:$0xf]
        %v1633 = vld [vmem:[%s1 + $0x1f8c] sm:$0xff]
        %v1634 = vld [vmem:[%s1 + $0x1f94] sm:$0xf]
        %v1635 = vld [vmem:[%s1 + $0x1f98] sm:$0xff]
        %v1636 = vld [vmem:[%s1 + $0x1fa0] sm:$0xf]
        %v1637 = vld [vmem:[%s1 + $0x1fa4] sm:$0xff]
        %v1638 = vld [vmem:[%s1 + $0x1fac] sm:$0xf]
        %v1639 = vld [vmem:[%s1 + $0x1fb0] sm:$0xff]
        %v1640 = vld [vmem:[%s1 + $0x1fb8] sm:$0xf]
        %v1641 = vld [vmem:[%s1 + $0x1fbc] sm:$0xff]
        %v1642 = vld [vmem:[%s1 + $0x1fc4] sm:$0xf]
        %v1643 = vld [vmem:[%s1 + $0x1fc8] sm:$0xff]
        %v1644 = vld [vmem:[%s1 + $0x1fd0] sm:$0xf]
        %v1645 = vld [vmem:[%s1 + $0x1fd4] sm:$0xff]
        %v1646 = vld [vmem:[%s1 + $0x1fdc] sm:$0xf]
        %v1647 = vld [vmem:[%s1 + $0x1fe0] sm:$0xff]
        %v1648 = vld [vmem:[%s1 + $0x1fe8] sm:$0xf]
        %v1649 = vld [vmem:[%s1 + $0x1fec] sm:$0xff]
        %v1650 = vld [vmem:[%s1 + $0x1ff4] sm:$0xf]
        %v1651 = vld [vmem:[%s1 + $0x1ff8] sm:$0xff]
        %v1652 = vld [vmem:[%s1 + $0x2000] sm:$0xf]
        %v1653 = vld [vmem:[%s1 + $0x2004] sm:$0xff]
        %v1654 = vld [vmem:[%s1 + $0x200c] sm:$0xf]
        %v1655 = vld [vmem:[%s1 + $0x2010] sm:$0xff]
        %v1656 = vld [vmem:[%s1 + $0x2018] sm:$0xf]
        %v1657 = vld [vmem:[%s1 + $0x201c] sm:$0xff]
        %v1658 = vld [vmem:[%s1 + $0x2024] sm:$0xf]
        %v1659 = vld [vmem:[%s1 + $0x2028] sm:$0xff]
        %v1660 = vld [vmem:[%s1 + $0x2030] sm:$0xf]
        %v1661 = vld [vmem:[%s1 + $0x2034] sm:$0xff]
        %v1662 = vld [vmem:[%s1 + $0x203c] sm:$0xf]
        %v1663 = vld [vmem:[%s1 + $0x2040] sm:$0xff]
        %v1664 = vld [vmem:[%s1 + $0x2048] sm:$0xf]
        %v1665 = vld [vmem:[%s1 + $0x204c] sm:$0xff]
        %v1666 = vld [vmem:[%s1 + $0x2054] sm:$0xf]
        %v1667 = vld [vmem:[%s1 + $0x2058] sm:$0xff]
        %v1668 = vld [vmem:[%s1 + $0x2060] sm:$0xf]
        %v1669 = vld [vmem:[%s1 + $0x2064] sm:$0xff]
        %v1670 = vld [vmem:[%s1 + $0x206c] sm:$0xf]
        %v1671 = vld [vmem:[%s1 + $0x2070] sm:$0xff]
        %v1672 = vld [vmem:[%s1 + $0x2078] sm:$0xf]
        %v1673 = vld [vmem:[%s1 + $0x207c] sm:$0xff]
        %v1674 = vld [vmem:[%s1 + $0x2084] sm:$0xf]
        %v1675 = vld [vmem:[%s1 + $0x2088] sm:$0xff]
        %v1676 = vld [vmem:[%s1 + $0x2090] sm:$0xf]
        %v1677 = vld [vmem:[%s1 + $0x2094] sm:$0xff]
        %v1678 = vld [vmem:[%s1 + $0x209c] sm:$0xf]
        %v1679 = vld [vmem:[%s1 + $0x20a0] sm:$0xff]
        %v1680 = vld [vmem:[%s1 + $0x20a8] sm:$0xf]
        %v1681 = vld [vmem:[%s1 + $0x20ac] sm:$0xff]
        %v1682 = vld [vmem:[%s1 + $0x20b4] sm:$0xf]
        %v1683 = vld [vmem:[%s1 + $0x20b8] sm:$0xff]
        %v1684 = vld [vmem:[%s1 + $0x20c0] sm:$0xf]
        %v1685 = vld [vmem:[%s1 + $0x20c4] sm:$0xff]
        %v1686 = vld [vmem:[%s1 + $0x20cc] sm:$0xf]
        %v1687 = vld [vmem:[%s1 + $0x20d0] sm:$0xff]
        %v1688 = vld [vmem:[%s1 + $0x20d8] sm:$0xf]
        %v1689 = vld [vmem:[%s1 + $0x20dc] sm:$0xff]
        %v1690 = vld [vmem:[%s1 + $0x20e4] sm:$0xf]
        %v1691 = vld [vmem:[%s1 + $0x20e8] sm:$0xff]
        %v1692 = vld [vmem:[%s1 + $0x20f0] sm:$0xf]
        %v1693 = vld [vmem:[%s1 + $0x20f4] sm:$0xff]
        %v1694 = vld [vmem:[%s1 + $0x20fc] sm:$0xf]
        %v1695 = vld [vmem:[%s1 + $0x2100] sm:$0xff]
        %v1696 = vld [vmem:[%s1 + $0x2108] sm:$0xf]
        %v1697 = vld [vmem:[%s1 + $0x210c] sm:$0xff]
        %v1698 = vld [vmem:[%s1 + $0x2114] sm:$0xf]
        %v1699 = vld [vmem:[%s1 + $0x2118] sm:$0xff]
        %v1700 = vld [vmem:[%s1 + $0x2120] sm:$0xf]
        %v1701 = vld [vmem:[%s1 + $0x2124] sm:$0xff]
        %v1702 = vld [vmem:[%s1 + $0x212c] sm:$0xf]
        %v1703 = vld [vmem:[%s1 + $0x2130] sm:$0xff]
        %v1704 = vld [vmem:[%s1 + $0x2138] sm:$0xf]
        %v1705 = vld [vmem:[%s1 + $0x213c] sm:$0xff]
        %v1706 = vld [vmem:[%s1 + $0x2144] sm:$0xf]
        %v1707 = vld [vmem:[%s1 + $0x2148] sm:$0xff]
        %v1708 = vld [vmem:[%s1 + $0x2150] sm:$0xf]
        %v1709 = vld [vmem:[%s1 + $0x2154] sm:$0xff]
        %v1710 = vld [vmem:[%s1 + $0x215c] sm:$0xf]
        %v1711 = vld [vmem:[%s1 + $0x2160] sm:$0xff]
        %v1712 = vld [vmem:[%s1 + $0x2168] sm:$0xf]
        %v1713 = vld [vmem:[%s1 + $0x216c] sm:$0xff]
        %v1714 = vld [vmem:[%s1 + $0x2174] sm:$0xf]
        %v1715 = vld [vmem:[%s1 + $0x2178] sm:$0xff]
        %v1716 = vld [vmem:[%s1 + $0x2180] sm:$0xf]
        %v1717 = vld [vmem:[%s1 + $0x2184] sm:$0xff]
        %v1718 = vld [vmem:[%s1 + $0x218c] sm:$0xf]
        %v1719 = vld [vmem:[%s1 + $0x2190] sm:$0xff]
        %v1720 = vld [vmem:[%s1 + $0x2198] sm:$0xf]
        %v1721 = vld [vmem:[%s1 + $0x219c] sm:$0xff]
        %v1722 = vld [vmem:[%s1 + $0x21a4] sm:$0xf]
        %v1723 = vld [vmem:[%s1 + $0x21a8] sm:$0xff]
        %v1724 = vld [vmem:[%s1 + $0x21b0] sm:$0xf]
        %v1725 = vld [vmem:[%s1 + $0x21b4] sm:$0xff]
        %v1726 = vld [vmem:[%s1 + $0x21bc] sm:$0xf]
        %v1727 = vld [vmem:[%s1 + $0x21c0] sm:$0xff]
        %v1728 = vld [vmem:[%s1 + $0x21c8] sm:$0xf]
        %v1729 = vld [vmem:[%s1 + $0x21cc] sm:$0xff]
        %v1730 = vld [vmem:[%s1 + $0x21d4] sm:$0xf]
        %v1731 = vld [vmem:[%s1 + $0x21d8] sm:$0xff]
        %v1732 = vld [vmem:[%s1 + $0x21e0] sm:$0xf]
        %v1733 = vld [vmem:[%s1 + $0x21e4] sm:$0x11]
        %v1734 = vld [vmem:[%s1 + $0x21ec] sm:$0x1]
        %v3183 = vunpack.c.l.b16 %v287
        %v3184 = vunpack.c.h.b16 %v287
        %v3185 = vunpack.c.l.b16 %v288
        %v3186 = vunpack.c.l.b16 %v289
        %v3187 = vunpack.c.h.b16 %v289
        %v3188 = vunpack.c.l.b16 %v290
        %v3189 = vunpack.c.l.b16 %v291
        %v3190 = vunpack.c.h.b16 %v291
        %v3191 = vunpack.c.l.b16 %v292
        %v3192 = vunpack.c.l.b16 %v293
        %v3193 = vunpack.c.h.b16 %v293
        %v3194 = vunpack.c.l.b16 %v294
        %v3195 = vunpack.c.l.b16 %v295
        %v3196 = vunpack.c.h.b16 %v295
        %v3197 = vunpack.c.l.b16 %v296
        %v3198 = vunpack.c.l.b16 %v297
        %v3199 = vunpack.c.h.b16 %v297
        %v3200 = vunpack.c.l.b16 %v298
        %v3201 = vunpack.c.l.b16 %v299
        %v3202 = vunpack.c.h.b16 %v299
        %v3203 = vunpack.c.l.b16 %v300
        %v3204 = vunpack.c.l.b16 %v301
        %v3205 = vunpack.c.h.b16 %v301
        %v3206 = vunpack.c.l.b16 %v302
        %v3207 = vunpack.c.l.b16 %v303
        %v3208 = vunpack.c.h.b16 %v303
        %v3209 = vunpack.c.l.b16 %v304
        %v3210 = vunpack.c.l.b16 %v305
        %v3211 = vunpack.c.h.b16 %v305
        %v3212 = vunpack.c.l.b16 %v306
        %v3213 = vunpack.c.l.b16 %v307
        %v3214 = vunpack.c.h.b16 %v307
        %v3215 = vunpack.c.l.b16 %v308
        %v3216 = vunpack.c.l.b16 %v309
        %v3217 = vunpack.c.h.b16 %v309
        %v3218 = vunpack.c.l.b16 %v310
        %v3219 = vunpack.c.l.b16 %v311
        %v3220 = vunpack.c.h.b16 %v311
        %v3221 = vunpack.c.l.b16 %v312
        %v3222 = vunpack.c.l.b16 %v313
        %v3223 = vunpack.c.h.b16 %v313
        %v3224 = vunpack.c.l.b16 %v314
        %v3225 = vunpack.c.l.b16 %v315
        %v3226 = vunpack.c.h.b16 %v315
        %v3227 = vunpack.c.l.b16 %v316
        %v3228 = vunpack.c.l.b16 %v317
        %v3229 = vunpack.c.h.b16 %v317
        %v3230 = vunpack.c.l.b16 %v318
        %v3231 = vunpack.c.l.b16 %v319
        %v3232 = vunpack.c.h.b16 %v319
        %v3233 = vunpack.c.l.b16 %v320
        %v3234 = vunpack.c.l.b16 %v321
        %v3235 = vunpack.c.h.b16 %v321
        %v3236 = vunpack.c.l.b16 %v322
        %v3237 = vunpack.c.l.b16 %v323
        %v3238 = vunpack.c.h.b16 %v323
        %v3239 = vunpack.c.l.b16 %v324
        %v3240 = vunpack.c.l.b16 %v325
        %v3241 = vunpack.c.h.b16 %v325
        %v3242 = vunpack.c.l.b16 %v326
        %v3243 = vunpack.c.l.b16 %v327
        %v3244 = vunpack.c.h.b16 %v327
        %v3245 = vunpack.c.l.b16 %v328
        %v3246 = vunpack.c.l.b16 %v329
        %v3247 = vunpack.c.h.b16 %v329
        %v3248 = vunpack.c.l.b16 %v330
        %v3249 = vunpack.c.l.b16 %v331
        %v3250 = vunpack.c.h.b16 %v331
        %v3251 = vunpack.c.l.b16 %v332
        %v3252 = vunpack.c.l.b16 %v333
        %v3253 = vunpack.c.h.b16 %v333
        %v3254 = vunpack.c.l.b16 %v334
        %v3255 = vunpack.c.l.b16 %v335
        %v3256 = vunpack.c.h.b16 %v335
        %v3257 = vunpack.c.l.b16 %v336
        %v3258 = vunpack.c.l.b16 %v337
        %v3259 = vunpack.c.h.b16 %v337
        %v3260 = vunpack.c.l.b16 %v338
        %v3261 = vunpack.c.l.b16 %v339
        %v3262 = vunpack.c.h.b16 %v339
        %v3263 = vunpack.c.l.b16 %v340
        %v3264 = vunpack.c.l.b16 %v341
        %v3265 = vunpack.c.h.b16 %v341
        %v3266 = vunpack.c.l.b16 %v342
        %v3267 = vunpack.c.l.b16 %v343
        %v3268 = vunpack.c.h.b16 %v343
        %v3269 = vunpack.c.l.b16 %v344
        %v3270 = vunpack.c.l.b16 %v345
        %v3271 = vunpack.c.h.b16 %v345
        %v3272 = vunpack.c.l.b16 %v346
        %v3273 = vunpack.c.l.b16 %v347
        %v3274 = vunpack.c.h.b16 %v347
        %v3275 = vunpack.c.l.b16 %v348
        %v3276 = vunpack.c.l.b16 %v349
        %v3277 = vunpack.c.h.b16 %v349
        %v3278 = vunpack.c.l.b16 %v350
        %v3279 = vunpack.c.l.b16 %v351
        %v3280 = vunpack.c.h.b16 %v351
        %v3281 = vunpack.c.l.b16 %v352
        %v3282 = vunpack.c.l.b16 %v353
        %v3283 = vunpack.c.h.b16 %v353
        %v3284 = vunpack.c.l.b16 %v354
        %v3285 = vunpack.c.l.b16 %v355
        %v3286 = vunpack.c.h.b16 %v355
        %v3287 = vunpack.c.l.b16 %v356
        %v3288 = vunpack.c.l.b16 %v357
        %v3289 = vunpack.c.h.b16 %v357
        %v3290 = vunpack.c.l.b16 %v358
        %v3291 = vunpack.c.l.b16 %v359
        %v3292 = vunpack.c.h.b16 %v359
        %v3293 = vunpack.c.l.b16 %v360
        %v3294 = vunpack.c.l.b16 %v361
        %v3295 = vunpack.c.h.b16 %v361
        %v3296 = vunpack.c.l.b16 %v362
        %v3297 = vunpack.c.l.b16 %v363
        %v3298 = vunpack.c.h.b16 %v363
        %v3299 = vunpack.c.l.b16 %v364
        %v3300 = vunpack.c.l.b16 %v365
        %v3301 = vunpack.c.h.b16 %v365
        %v3302 = vunpack.c.l.b16 %v366
        %v3303 = vunpack.c.l.b16 %v367
        %v3304 = vunpack.c.h.b16 %v367
        %v3305 = vunpack.c.l.b16 %v368
        %v3306 = vunpack.c.l.b16 %v369
        %v3307 = vunpack.c.h.b16 %v369
        %v3308 = vunpack.c.l.b16 %v370
        %v3309 = vunpack.c.l.b16 %v371
        %v3310 = vunpack.c.h.b16 %v371
        %v3311 = vunpack.c.l.b16 %v372
        %v3312 = vunpack.c.l.b16 %v373
        %v3313 = vunpack.c.h.b16 %v373
        %v3314 = vunpack.c.l.b16 %v374
        %v3315 = vunpack.c.l.b16 %v375
        %v3316 = vunpack.c.h.b16 %v375
        %v3317 = vunpack.c.l.b16 %v376
        %v3318 = vunpack.c.l.b16 %v377
        %v3319 = vunpack.c.h.b16 %v377
        %v3320 = vunpack.c.l.b16 %v378
        %v3321 = vunpack.c.l.b16 %v379
        %v3322 = vunpack.c.h.b16 %v379
        %v3323 = vunpack.c.l.b16 %v380
        %v3324 = vunpack.c.l.b16 %v381
        %v3325 = vunpack.c.h.b16 %v381
        %v3326 = vunpack.c.l.b16 %v382
        %v3327 = vunpack.c.l.b16 %v383
        %v3328 = vunpack.c.h.b16 %v383
        %v3329 = vunpack.c.l.b16 %v384
        %v3330 = vunpack.c.l.b16 %v385
        %v3331 = vunpack.c.h.b16 %v385
        %v3332 = vunpack.c.l.b16 %v386
        %v3333 = vunpack.c.l.b16 %v387
        %v3334 = vunpack.c.h.b16 %v387
        %v3335 = vunpack.c.l.b16 %v388
        %v3336 = vunpack.c.l.b16 %v389
        %v3337 = vunpack.c.h.b16 %v389
        %v3338 = vunpack.c.l.b16 %v390
        %v3339 = vunpack.c.l.b16 %v391
        %v3340 = vunpack.c.h.b16 %v391
        %v3341 = vunpack.c.l.b16 %v392
        %v3342 = vunpack.c.l.b16 %v393
        %v3343 = vunpack.c.h.b16 %v393
        %v3344 = vunpack.c.l.b16 %v394
        %v3345 = vunpack.c.l.b16 %v395
        %v3346 = vunpack.c.h.b16 %v395
        %v3347 = vunpack.c.l.b16 %v396
        %v3348 = vunpack.c.l.b16 %v397
        %v3349 = vunpack.c.h.b16 %v397
        %v3350 = vunpack.c.l.b16 %v398
        %v3351 = vunpack.c.l.b16 %v399
        %v3352 = vunpack.c.h.b16 %v399
        %v3353 = vunpack.c.l.b16 %v400
        %v3354 = vunpack.c.l.b16 %v401
        %v3355 = vunpack.c.h.b16 %v401
        %v3356 = vunpack.c.l.b16 %v402
        %v3357 = vunpack.c.l.b16 %v403
        %v3358 = vunpack.c.h.b16 %v403
        %v3359 = vunpack.c.l.b16 %v404
        %v3360 = vunpack.c.l.b16 %v405
        %v3361 = vunpack.c.h.b16 %v405
        %v3362 = vunpack.c.l.b16 %v406
        %v3363 = vunpack.c.l.b16 %v407
        %v3364 = vunpack.c.h.b16 %v407
        %v3365 = vunpack.c.l.b16 %v408
        %v3366 = vunpack.c.l.b16 %v409
        %v3367 = vunpack.c.h.b16 %v409
        %v3368 = vunpack.c.l.b16 %v410
        %v3369 = vunpack.c.l.b16 %v411
        %v3370 = vunpack.c.h.b16 %v411
        %v3371 = vunpack.c.l.b16 %v412
        %v3372 = vunpack.c.l.b16 %v413
        %v3373 = vunpack.c.h.b16 %v413
        %v3374 = vunpack.c.l.b16 %v414
        %v3375 = vunpack.c.l.b16 %v415
        %v3376 = vunpack.c.h.b16 %v415
        %v3377 = vunpack.c.l.b16 %v416
        %v3378 = vunpack.c.l.b16 %v417
        %v3379 = vunpack.c.h.b16 %v417
        %v3380 = vunpack.c.l.b16 %v418
        %v3381 = vunpack.c.l.b16 %v419
        %v3382 = vunpack.c.h.b16 %v419
        %v3383 = vunpack.c.l.b16 %v420
        %v3384 = vunpack.c.l.b16 %v421
        %v3385 = vunpack.c.h.b16 %v421
        %v3386 = vunpack.c.l.b16 %v422
        %v3387 = vunpack.c.l.b16 %v423
        %v3388 = vunpack.c.h.b16 %v423
        %v3389 = vunpack.c.l.b16 %v424
        %v3390 = vunpack.c.l.b16 %v425
        %v3391 = vunpack.c.h.b16 %v425
        %v3392 = vunpack.c.l.b16 %v426
        %v3393 = vunpack.c.l.b16 %v427
        %v3394 = vunpack.c.h.b16 %v427
        %v3395 = vunpack.c.l.b16 %v428
        %v3396 = vunpack.c.l.b16 %v429
        %v3397 = vunpack.c.h.b16 %v429
        %v3398 = vunpack.c.l.b16 %v430
        %v3399 = vunpack.c.l.b16 %v431
        %v3400 = vunpack.c.h.b16 %v431
        %v3401 = vunpack.c.l.b16 %v432
        %v3402 = vunpack.c.l.b16 %v433
        %v3403 = vunpack.c.h.b16 %v433
        %v3404 = vunpack.c.l.b16 %v434
        %v3405 = vunpack.c.l.b16 %v435
        %v3406 = vunpack.c.h.b16 %v435
        %v3407 = vunpack.c.l.b16 %v436
        %v3408 = vunpack.c.l.b16 %v437
        %v3409 = vunpack.c.h.b16 %v437
        %v3410 = vunpack.c.l.b16 %v438
        %v3411 = vunpack.c.l.b16 %v439
        %v3412 = vunpack.c.h.b16 %v439
        %v3413 = vunpack.c.l.b16 %v440
        %v3414 = vunpack.c.l.b16 %v441
        %v3415 = vunpack.c.h.b16 %v441
        %v3416 = vunpack.c.l.b16 %v442
        %v3417 = vunpack.c.l.b16 %v443
        %v3418 = vunpack.c.h.b16 %v443
        %v3419 = vunpack.c.l.b16 %v444
        %v3420 = vunpack.c.l.b16 %v445
        %v3421 = vunpack.c.h.b16 %v445
        %v3422 = vunpack.c.l.b16 %v446
        %v3423 = vunpack.c.l.b16 %v447
        %v3424 = vunpack.c.h.b16 %v447
        %v3425 = vunpack.c.l.b16 %v448
        %v3426 = vunpack.c.l.b16 %v449
        %v3427 = vunpack.c.h.b16 %v449
        %v3428 = vunpack.c.l.b16 %v450
        %v3429 = vunpack.c.l.b16 %v451
        %v3430 = vunpack.c.h.b16 %v451
        %v3431 = vunpack.c.l.b16 %v452
        %v3432 = vunpack.c.l.b16 %v453
        %v3433 = vunpack.c.h.b16 %v453
        %v3434 = vunpack.c.l.b16 %v454
        %v3435 = vunpack.c.l.b16 %v455
        %v3436 = vunpack.c.h.b16 %v455
        %v3437 = vunpack.c.l.b16 %v456
        %v3438 = vunpack.c.l.b16 %v457
        %v3439 = vunpack.c.h.b16 %v457
        %v3440 = vunpack.c.l.b16 %v458
        %v3441 = vunpack.c.l.b16 %v459
        %v3442 = vunpack.c.h.b16 %v459
        %v3443 = vunpack.c.l.b16 %v460
        %v3444 = vunpack.c.l.b16 %v461
        %v3445 = vunpack.c.h.b16 %v461
        %v3446 = vunpack.c.l.b16 %v462
        %v3447 = vunpack.c.l.b16 %v463
        %v3448 = vunpack.c.h.b16 %v463
        %v3449 = vunpack.c.l.b16 %v464
        %v3450 = vunpack.c.l.b16 %v465
        %v3451 = vunpack.c.h.b16 %v465
        %v3452 = vunpack.c.l.b16 %v466
        %v3453 = vunpack.c.l.b16 %v467
        %v3454 = vunpack.c.h.b16 %v467
        %v3455 = vunpack.c.l.b16 %v468
        %v3456 = vunpack.c.l.b16 %v469
        %v3457 = vunpack.c.h.b16 %v469
        %v3458 = vunpack.c.l.b16 %v470
        %v3459 = vunpack.c.l.b16 %v471
        %v3460 = vunpack.c.h.b16 %v471
        %v3461 = vunpack.c.l.b16 %v472
        %v3462 = vunpack.c.l.b16 %v473
        %v3463 = vunpack.c.h.b16 %v473
        %v3464 = vunpack.c.l.b16 %v474
        %v3465 = vunpack.c.l.b16 %v475
        %v3466 = vunpack.c.h.b16 %v475
        %v3467 = vunpack.c.l.b16 %v476
        %v3468 = vunpack.c.l.b16 %v477
        %v3469 = vunpack.c.h.b16 %v477
        %v3470 = vunpack.c.l.b16 %v478
        %v3471 = vunpack.c.l.b16 %v479
        %v3472 = vunpack.c.h.b16 %v479
        %v3473 = vunpack.c.l.b16 %v480
        %v3474 = vunpack.c.l.b16 %v481
        %v3475 = vunpack.c.h.b16 %v481
        %v3476 = vunpack.c.l.b16 %v482
        %v3477 = vunpack.c.l.b16 %v483
        %v3478 = vunpack.c.h.b16 %v483
        %v3479 = vunpack.c.l.b16 %v484
        %v3480 = vunpack.c.l.b16 %v485
        %v3481 = vunpack.c.h.b16 %v485
        %v3482 = vunpack.c.l.b16 %v486
        %v3483 = vunpack.c.l.b16 %v487
        %v3484 = vunpack.c.h.b16 %v487
        %v3485 = vunpack.c.l.b16 %v488
        %v3486 = vunpack.c.l.b16 %v489
        %v3487 = vunpack.c.h.b16 %v489
        %v3488 = vunpack.c.l.b16 %v490
        %v3489 = vunpack.c.l.b16 %v491
        %v3490 = vunpack.c.h.b16 %v491
        %v3491 = vunpack.c.l.b16 %v492
        %v3492 = vunpack.c.l.b16 %v493
        %v3493 = vunpack.c.h.b16 %v493
        %v3494 = vunpack.c.l.b16 %v494
        %v3495 = vunpack.c.l.b16 %v495
        %v3496 = vunpack.c.h.b16 %v495
        %v3497 = vunpack.c.l.b16 %v496
        %v3498 = vunpack.c.l.b16 %v497
        %v3499 = vunpack.c.h.b16 %v497
        %v3500 = vunpack.c.l.b16 %v498
        %v3501 = vunpack.c.l.b16 %v499
        %v3502 = vunpack.c.h.b16 %v499
        %v3503 = vunpack.c.l.b16 %v500
        %v3504 = vunpack.c.l.b16 %v501
        %v3505 = vunpack.c.h.b16 %v501
        %v3506 = vunpack.c.l.b16 %v502
        %v3507 = vunpack.c.l.b16 %v503
        %v3508 = vunpack.c.h.b16 %v503
        %v3509 = vunpack.c.l.b16 %v504
        %v3510 = vunpack.c.l.b16 %v505
        %v3511 = vunpack.c.h.b16 %v505
        %v3512 = vunpack.c.l.b16 %v506
        %v3513 = vunpack.c.l.b16 %v507
        %v3514 = vunpack.c.h.b16 %v507
        %v3515 = vunpack.c.l.b16 %v508
        %v3516 = vunpack.c.l.b16 %v509
        %v3517 = vunpack.c.h.b16 %v509
        %v3518 = vunpack.c.l.b16 %v510
        %v3519 = vunpack.c.l.b16 %v511
        %v3520 = vunpack.c.h.b16 %v511
        %v3521 = vunpack.c.l.b16 %v512
        %v3522 = vunpack.c.l.b16 %v513
        %v3523 = vunpack.c.h.b16 %v513
        %v3524 = vunpack.c.l.b16 %v514
        %v3525 = vunpack.c.l.b16 %v515
        %v3526 = vunpack.c.h.b16 %v515
        %v3527 = vunpack.c.l.b16 %v516
        %v3528 = vunpack.c.l.b16 %v517
        %v3529 = vunpack.c.h.b16 %v517
        %v3530 = vunpack.c.l.b16 %v518
        %v3531 = vunpack.c.l.b16 %v519
        %v3532 = vunpack.c.h.b16 %v519
        %v3533 = vunpack.c.l.b16 %v520
        %v3534 = vunpack.c.l.b16 %v521
        %v3535 = vunpack.c.h.b16 %v521
        %v3536 = vunpack.c.l.b16 %v522
        %v3537 = vunpack.c.l.b16 %v523
        %v3538 = vunpack.c.h.b16 %v523
        %v3539 = vunpack.c.l.b16 %v524
        %v3540 = vunpack.c.l.b16 %v525
        %v3541 = vunpack.c.h.b16 %v525
        %v3542 = vunpack.c.l.b16 %v526
        %v3543 = vunpack.c.l.b16 %v527
        %v3544 = vunpack.c.h.b16 %v527
        %v3545 = vunpack.c.l.b16 %v528
        %v3546 = vunpack.c.l.b16 %v529
        %v3547 = vunpack.c.h.b16 %v529
        %v3548 = vunpack.c.l.b16 %v530
        %v3549 = vunpack.c.l.b16 %v531
        %v3550 = vunpack.c.h.b16 %v531
        %v3551 = vunpack.c.l.b16 %v532
        %v3552 = vunpack.c.l.b16 %v533
        %v3553 = vunpack.c.h.b16 %v533
        %v3554 = vunpack.c.l.b16 %v534
        %v3555 = vunpack.c.l.b16 %v535
        %v3556 = vunpack.c.h.b16 %v535
        %v3557 = vunpack.c.l.b16 %v536
        %v3558 = vunpack.c.l.b16 %v537
        %v3559 = vunpack.c.h.b16 %v537
        %v3560 = vunpack.c.l.b16 %v538
        %v3561 = vunpack.c.l.b16 %v539
        %v3562 = vunpack.c.h.b16 %v539
        %v3563 = vunpack.c.l.b16 %v540
        %v3564 = vunpack.c.l.b16 %v541
        %v3565 = vunpack.c.h.b16 %v541
        %v3566 = vunpack.c.l.b16 %v542
        %v3567 = vunpack.c.l.b16 %v543
        %v3568 = vunpack.c.h.b16 %v543
        %v3569 = vunpack.c.l.b16 %v544
        %v3570 = vunpack.c.l.b16 %v545
        %v3571 = vunpack.c.h.b16 %v545
        %v3572 = vunpack.c.l.b16 %v546
        %v3573 = vunpack.c.l.b16 %v547
        %v3574 = vunpack.c.h.b16 %v547
        %v3575 = vunpack.c.l.b16 %v548
        %v3576 = vunpack.c.l.b16 %v549
        %v3577 = vunpack.c.h.b16 %v549
        %v3578 = vunpack.c.l.b16 %v550
        %v3579 = vunpack.c.l.b16 %v551
        %v3580 = vunpack.c.h.b16 %v551
        %v3581 = vunpack.c.l.b16 %v552
        %v3582 = vunpack.c.l.b16 %v553
        %v3583 = vunpack.c.h.b16 %v553
        %v3584 = vunpack.c.l.b16 %v554
        %v3585 = vunpack.c.l.b16 %v555
        %v3586 = vunpack.c.h.b16 %v555
        %v3587 = vunpack.c.l.b16 %v556
        %v3588 = vunpack.c.l.b16 %v557
        %v3589 = vunpack.c.h.b16 %v557
        %v3590 = vunpack.c.l.b16 %v558
        %v3591 = vunpack.c.l.b16 %v559
        %v3592 = vunpack.c.h.b16 %v559
        %v3593 = vunpack.c.l.b16 %v560
        %v3594 = vunpack.c.l.b16 %v561
        %v3595 = vunpack.c.h.b16 %v561
        %v3596 = vunpack.c.l.b16 %v562
        %v3597 = vunpack.c.l.b16 %v563
        %v3598 = vunpack.c.h.b16 %v563
        %v3599 = vunpack.c.l.b16 %v564
        %v3600 = vunpack.c.l.b16 %v565
        %v3601 = vunpack.c.h.b16 %v565
        %v3602 = vunpack.c.l.b16 %v566
        %v3603 = vunpack.c.l.b16 %v567
        %v3604 = vunpack.c.h.b16 %v567
        %v3605 = vunpack.c.l.b16 %v568
        %v3606 = vunpack.c.l.b16 %v569
        %v3607 = vunpack.c.h.b16 %v569
        %v3608 = vunpack.c.l.b16 %v570
        %v3609 = vunpack.c.l.b16 %v571
        %v3610 = vunpack.c.h.b16 %v571
        %v3611 = vunpack.c.l.b16 %v572
        %v3612 = vunpack.c.l.b16 %v573
        %v3613 = vunpack.c.h.b16 %v573
        %v3614 = vunpack.c.l.b16 %v574
        %v3615 = vunpack.c.l.b16 %v575
        %v3616 = vunpack.c.h.b16 %v575
        %v3617 = vunpack.c.l.b16 %v576
        %v3618 = vunpack.c.l.b16 %v577
        %v3619 = vunpack.c.h.b16 %v577
        %v3620 = vunpack.c.l.b16 %v578
        %v3621 = vunpack.c.l.b16 %v579
        %v3622 = vunpack.c.h.b16 %v579
        %v3623 = vunpack.c.l.b16 %v580
        %v3624 = vunpack.c.l.b16 %v581
        %v3625 = vunpack.c.h.b16 %v581
        %v3626 = vunpack.c.l.b16 %v582
        %v3627 = vunpack.c.l.b16 %v583
        %v3628 = vunpack.c.h.b16 %v583
        %v3629 = vunpack.c.l.b16 %v584
        %v3630 = vunpack.c.l.b16 %v585
        %v3631 = vunpack.c.h.b16 %v585
        %v3632 = vunpack.c.l.b16 %v586
        %v3633 = vunpack.c.l.b16 %v587
        %v3634 = vunpack.c.h.b16 %v587
        %v3635 = vunpack.c.l.b16 %v588
        %v3636 = vunpack.c.l.b16 %v589
        %v3637 = vunpack.c.h.b16 %v589
        %v3638 = vunpack.c.l.b16 %v590
        %v3639 = vunpack.c.l.b16 %v591
        %v3640 = vunpack.c.h.b16 %v591
        %v3641 = vunpack.c.l.b16 %v592
        %v3642 = vunpack.c.l.b16 %v593
        %v3643 = vunpack.c.h.b16 %v593
        %v3644 = vunpack.c.l.b16 %v594
        %v3645 = vunpack.c.l.b16 %v595
        %v3646 = vunpack.c.h.b16 %v595
        %v3647 = vunpack.c.l.b16 %v596
        %v3648 = vunpack.c.l.b16 %v597
        %v3649 = vunpack.c.h.b16 %v597
        %v3650 = vunpack.c.l.b16 %v598
        %v3651 = vunpack.c.l.b16 %v599
        %v3652 = vunpack.c.h.b16 %v599
        %v3653 = vunpack.c.l.b16 %v600
        %v3654 = vunpack.c.l.b16 %v601
        %v3655 = vunpack.c.h.b16 %v601
        %v3656 = vunpack.c.l.b16 %v602
        %v3657 = vunpack.c.l.b16 %v603
        %v3658 = vunpack.c.h.b16 %v603
        %v3659 = vunpack.c.l.b16 %v604
        %v3660 = vunpack.c.l.b16 %v605
        %v3661 = vunpack.c.h.b16 %v605
        %v3662 = vunpack.c.l.b16 %v606
        %v3663 = vunpack.c.l.b16 %v607
        %v3664 = vunpack.c.h.b16 %v607
        %v3665 = vunpack.c.l.b16 %v608
        %v3666 = vunpack.c.l.b16 %v609
        %v3667 = vunpack.c.h.b16 %v609
        %v3668 = vunpack.c.l.b16 %v610
        %v3669 = vunpack.c.l.b16 %v611
        %v3670 = vunpack.c.h.b16 %v611
        %v3671 = vunpack.c.l.b16 %v612
        %v3672 = vunpack.c.l.b16 %v613
        %v3673 = vunpack.c.h.b16 %v613
        %v3674 = vunpack.c.l.b16 %v614
        %v3675 = vunpack.c.l.b16 %v615
        %v3676 = vunpack.c.h.b16 %v615
        %v3677 = vunpack.c.l.b16 %v616
        %v3678 = vunpack.c.l.b16 %v617
        %v3679 = vunpack.c.h.b16 %v617
        %v3680 = vunpack.c.l.b16 %v618
        %v3681 = vunpack.c.l.b16 %v619
        %v3682 = vunpack.c.h.b16 %v619
        %v3683 = vunpack.c.l.b16 %v620
        %v3684 = vunpack.c.l.b16 %v621
        %v3685 = vunpack.c.h.b16 %v621
        %v3686 = vunpack.c.l.b16 %v622
        %v3687 = vunpack.c.l.b16 %v623
        %v3688 = vunpack.c.h.b16 %v623
        %v3689 = vunpack.c.l.b16 %v624
        %v3690 = vunpack.c.l.b16 %v625
        %v3691 = vunpack.c.h.b16 %v625
        %v3692 = vunpack.c.l.b16 %v626
        %v3693 = vunpack.c.l.b16 %v627
        %v3694 = vunpack.c.h.b16 %v627
        %v3695 = vunpack.c.l.b16 %v628
        %v3696 = vunpack.c.l.b16 %v629
        %v3697 = vunpack.c.h.b16 %v629
        %v3698 = vunpack.c.l.b16 %v630
        %v3699 = vunpack.c.l.b16 %v631
        %v3700 = vunpack.c.h.b16 %v631
        %v3701 = vunpack.c.l.b16 %v632
        %v3702 = vunpack.c.l.b16 %v633
        %v3703 = vunpack.c.h.b16 %v633
        %v3704 = vunpack.c.l.b16 %v634
        %v3705 = vunpack.c.l.b16 %v635
        %v3706 = vunpack.c.h.b16 %v635
        %v3707 = vunpack.c.l.b16 %v636
        %v3708 = vunpack.c.l.b16 %v637
        %v3709 = vunpack.c.h.b16 %v637
        %v3710 = vunpack.c.l.b16 %v638
        %v3711 = vunpack.c.l.b16 %v639
        %v3712 = vunpack.c.h.b16 %v639
        %v3713 = vunpack.c.l.b16 %v640
        %v3714 = vunpack.c.l.b16 %v641
        %v3715 = vunpack.c.h.b16 %v641
        %v3716 = vunpack.c.l.b16 %v642
        %v3717 = vunpack.c.l.b16 %v643
        %v3718 = vunpack.c.h.b16 %v643
        %v3719 = vunpack.c.l.b16 %v644
        %v3720 = vunpack.c.l.b16 %v645
        %v3721 = vunpack.c.h.b16 %v645
        %v3722 = vunpack.c.l.b16 %v646
        %v3723 = vunpack.c.l.b16 %v647
        %v3724 = vunpack.c.h.b16 %v647
        %v3725 = vunpack.c.l.b16 %v648
        %v3726 = vunpack.c.l.b16 %v649
        %v3727 = vunpack.c.h.b16 %v649
        %v3728 = vunpack.c.l.b16 %v650
        %v3729 = vunpack.c.l.b16 %v651
        %v3730 = vunpack.c.h.b16 %v651
        %v3731 = vunpack.c.l.b16 %v652
        %v3732 = vunpack.c.l.b16 %v653
        %v3733 = vunpack.c.h.b16 %v653
        %v3734 = vunpack.c.l.b16 %v654
        %v3735 = vunpack.c.l.b16 %v655
        %v3736 = vunpack.c.h.b16 %v655
        %v3737 = vunpack.c.l.b16 %v656
        %v3738 = vunpack.c.l.b16 %v657
        %v3739 = vunpack.c.h.b16 %v657
        %v3740 = vunpack.c.l.b16 %v658
        %v3741 = vunpack.c.l.b16 %v659
        %v3742 = vunpack.c.h.b16 %v659
        %v3743 = vunpack.c.l.b16 %v660
        %v3744 = vunpack.c.l.b16 %v661
        %v3745 = vunpack.c.h.b16 %v661
        %v3746 = vunpack.c.l.b16 %v662
        %v3747 = vunpack.c.l.b16 %v663
        %v3748 = vunpack.c.h.b16 %v663
        %v3749 = vunpack.c.l.b16 %v664
        %v3750 = vunpack.c.l.b16 %v665
        %v3751 = vunpack.c.h.b16 %v665
        %v3752 = vunpack.c.l.b16 %v666
        %v3753 = vunpack.c.l.b16 %v667
        %v3754 = vunpack.c.h.b16 %v667
        %v3755 = vunpack.c.l.b16 %v668
        %v3756 = vunpack.c.l.b16 %v669
        %v3757 = vunpack.c.h.b16 %v669
        %v3758 = vunpack.c.l.b16 %v670
        %v3759 = vunpack.c.l.b16 %v671
        %v3760 = vunpack.c.h.b16 %v671
        %v3761 = vunpack.c.l.b16 %v672
        %v3762 = vunpack.c.l.b16 %v673
        %v3763 = vunpack.c.h.b16 %v673
        %v3764 = vunpack.c.l.b16 %v674
        %v3765 = vunpack.c.l.b16 %v675
        %v3766 = vunpack.c.h.b16 %v675
        %v3767 = vunpack.c.l.b16 %v676
        %v3768 = vunpack.c.l.b16 %v677
        %v3769 = vunpack.c.h.b16 %v677
        %v3770 = vunpack.c.l.b16 %v678
        %v3771 = vunpack.c.l.b16 %v679
        %v3772 = vunpack.c.h.b16 %v679
        %v3773 = vunpack.c.l.b16 %v680
        %v3774 = vunpack.c.l.b16 %v681
        %v3775 = vunpack.c.h.b16 %v681
        %v3776 = vunpack.c.l.b16 %v682
        %v3777 = vunpack.c.l.b16 %v683
        %v3778 = vunpack.c.h.b16 %v683
        %v3779 = vunpack.c.l.b16 %v684
        %v3780 = vunpack.c.l.b16 %v685
        %v3781 = vunpack.c.h.b16 %v685
        %v3782 = vunpack.c.l.b16 %v686
        %v3783 = vunpack.c.l.b16 %v687
        %v3784 = vunpack.c.h.b16 %v687
        %v3785 = vunpack.c.l.b16 %v688
        %v3786 = vunpack.c.l.b16 %v689
        %v3787 = vunpack.c.h.b16 %v689
        %v3788 = vunpack.c.l.b16 %v690
        %v3789 = vunpack.c.l.b16 %v691
        %v3790 = vunpack.c.h.b16 %v691
        %v3791 = vunpack.c.l.b16 %v692
        %v3792 = vunpack.c.l.b16 %v693
        %v3793 = vunpack.c.h.b16 %v693
        %v3794 = vunpack.c.l.b16 %v694
        %v3795 = vunpack.c.l.b16 %v695
        %v3796 = vunpack.c.h.b16 %v695
        %v3797 = vunpack.c.l.b16 %v696
        %v3798 = vunpack.c.l.b16 %v697
        %v3799 = vunpack.c.h.b16 %v697
        %v3800 = vunpack.c.l.b16 %v698
        %v3801 = vunpack.c.l.b16 %v699
        %v3802 = vunpack.c.h.b16 %v699
        %v3803 = vunpack.c.l.b16 %v700
        %v3804 = vunpack.c.l.b16 %v701
        %v3805 = vunpack.c.h.b16 %v701
        %v3806 = vunpack.c.l.b16 %v702
        %v3807 = vunpack.c.l.b16 %v703
        %v3808 = vunpack.c.h.b16 %v703
        %v3809 = vunpack.c.l.b16 %v704
        %v3810 = vunpack.c.l.b16 %v705
        %v3811 = vunpack.c.h.b16 %v705
        %v3812 = vunpack.c.l.b16 %v706
        %v3813 = vunpack.c.l.b16 %v707
        %v3814 = vunpack.c.h.b16 %v707
        %v3815 = vunpack.c.l.b16 %v708
        %v3816 = vunpack.c.l.b16 %v709
        %v3817 = vunpack.c.h.b16 %v709
        %v3818 = vunpack.c.l.b16 %v710
        %v3819 = vunpack.c.l.b16 %v711
        %v3820 = vunpack.c.h.b16 %v711
        %v3821 = vunpack.c.l.b16 %v712
        %v3822 = vunpack.c.l.b16 %v713
        %v3823 = vunpack.c.h.b16 %v713
        %v3824 = vunpack.c.l.b16 %v714
        %v3825 = vunpack.c.l.b16 %v715
        %v3826 = vunpack.c.h.b16 %v715
        %v3827 = vunpack.c.l.b16 %v716
        %v3828 = vunpack.c.l.b16 %v717
        %v3829 = vunpack.c.h.b16 %v717
        %v3830 = vunpack.c.l.b16 %v718
        %v3831 = vunpack.c.l.b16 %v719
        %v3832 = vunpack.c.h.b16 %v719
        %v3833 = vunpack.c.l.b16 %v720
        %v3834 = vunpack.c.l.b16 %v721
        %v3835 = vunpack.c.h.b16 %v721
        %v3836 = vunpack.c.l.b16 %v722
        %v3837 = vunpack.c.l.b16 %v723
        %v3838 = vunpack.c.h.b16 %v723
        %v3839 = vunpack.c.l.b16 %v724
        %v3840 = vunpack.c.l.b16 %v725
        %v3841 = vunpack.c.h.b16 %v725
        %v3842 = vunpack.c.l.b16 %v726
        %v3843 = vunpack.c.l.b16 %v727
        %v3844 = vunpack.c.h.b16 %v727
        %v3845 = vunpack.c.l.b16 %v728
        %v3846 = vunpack.c.l.b16 %v729
        %v3847 = vunpack.c.h.b16 %v729
        %v3848 = vunpack.c.l.b16 %v730
        %v3849 = vunpack.c.l.b16 %v731
        %v3850 = vunpack.c.h.b16 %v731
        %v3851 = vunpack.c.l.b16 %v732
        %v3852 = vunpack.c.l.b16 %v733
        %v3853 = vunpack.c.h.b16 %v733
        %v3854 = vunpack.c.l.b16 %v734
        %v3855 = vunpack.c.l.b16 %v735
        %v3856 = vunpack.c.h.b16 %v735
        %v3857 = vunpack.c.l.b16 %v736
        %v3858 = vunpack.c.l.b16 %v737
        %v3859 = vunpack.c.h.b16 %v737
        %v3860 = vunpack.c.l.b16 %v738
        %v3861 = vunpack.c.l.b16 %v739
        %v3862 = vunpack.c.h.b16 %v739
        %v3863 = vunpack.c.l.b16 %v740
        %v3864 = vunpack.c.l.b16 %v741
        %v3865 = vunpack.c.h.b16 %v741
        %v3866 = vunpack.c.l.b16 %v742
        %v3867 = vunpack.c.l.b16 %v743
        %v3868 = vunpack.c.h.b16 %v743
        %v3869 = vunpack.c.l.b16 %v744
        %v3870 = vunpack.c.l.b16 %v745
        %v3871 = vunpack.c.h.b16 %v745
        %v3872 = vunpack.c.l.b16 %v746
        %v3873 = vunpack.c.l.b16 %v747
        %v3874 = vunpack.c.h.b16 %v747
        %v3875 = vunpack.c.l.b16 %v748
        %v3876 = vunpack.c.l.b16 %v749
        %v3877 = vunpack.c.h.b16 %v749
        %v3878 = vunpack.c.l.b16 %v750
        %v3879 = vunpack.c.l.b16 %v751
        %v3880 = vunpack.c.h.b16 %v751
        %v3881 = vunpack.c.l.b16 %v752
        %v3882 = vunpack.c.l.b16 %v753
        %v3883 = vunpack.c.h.b16 %v753
        %v3884 = vunpack.c.l.b16 %v754
        %v3885 = vunpack.c.l.b16 %v755
        %v3886 = vunpack.c.h.b16 %v755
        %v3887 = vunpack.c.l.b16 %v756
        %v3888 = vunpack.c.l.b16 %v757
        %v3889 = vunpack.c.h.b16 %v757
        %v3890 = vunpack.c.l.b16 %v758
        %v3891 = vunpack.c.l.b16 %v759
        %v3892 = vunpack.c.h.b16 %v759
        %v3893 = vunpack.c.l.b16 %v760
        %v3894 = vunpack.c.l.b16 %v761
        %v3895 = vunpack.c.h.b16 %v761
        %v3896 = vunpack.c.l.b16 %v762
        %v3897 = vunpack.c.l.b16 %v763
        %v3898 = vunpack.c.h.b16 %v763
        %v3899 = vunpack.c.l.b16 %v764
        %v3900 = vunpack.c.l.b16 %v765
        %v3901 = vunpack.c.h.b16 %v765
        %v3902 = vunpack.c.l.b16 %v766
        %v3903 = vunpack.c.l.b16 %v767
        %v3904 = vunpack.c.h.b16 %v767
        %v3905 = vunpack.c.l.b16 %v768
        %v3906 = vunpack.c.l.b16 %v769
        %v3907 = vunpack.c.h.b16 %v769
        %v3908 = vunpack.c.l.b16 %v770
        %v3909 = vunpack.c.l.b16 %v771
        %v3910 = vunpack.c.h.b16 %v771
        %v3911 = vunpack.c.l.b16 %v772
        %v3912 = vunpack.c.l.b16 %v773
        %v3913 = vunpack.c.h.b16 %v773
        %v3914 = vunpack.c.l.b16 %v774
        %v3915 = vunpack.c.l.b16 %v775
        %v3916 = vunpack.c.h.b16 %v775
        %v3917 = vunpack.c.l.b16 %v776
        %v3918 = vunpack.c.l.b16 %v777
        %v3919 = vunpack.c.h.b16 %v777
        %v3920 = vunpack.c.l.b16 %v778
        %v3921 = vunpack.c.l.b16 %v779
        %v3922 = vunpack.c.h.b16 %v779
        %v3923 = vunpack.c.l.b16 %v780
        %v3924 = vunpack.c.l.b16 %v781
        %v3925 = vunpack.c.h.b16 %v781
        %v3926 = vunpack.c.l.b16 %v782
        %v3927 = vunpack.c.l.b16 %v783
        %v3928 = vunpack.c.h.b16 %v783
        %v3929 = vunpack.c.l.b16 %v784
        %v3930 = vunpack.c.l.b16 %v785
        %v3931 = vunpack.c.h.b16 %v785
        %v3932 = vunpack.c.l.b16 %v786
        %v3933 = vunpack.c.l.b16 %v787
        %v3934 = vunpack.c.h.b16 %v787
        %v3935 = vunpack.c.l.b16 %v788
        %v3936 = vunpack.c.l.b16 %v789
        %v3937 = vunpack.c.h.b16 %v789
        %v3938 = vunpack.c.l.b16 %v790
        %v3939 = vunpack.c.l.b16 %v791
        %v3940 = vunpack.c.h.b16 %v791
        %v3941 = vunpack.c.l.b16 %v792
        %v3942 = vunpack.c.l.b16 %v793
        %v3943 = vunpack.c.h.b16 %v793
        %v3944 = vunpack.c.l.b16 %v794
        %v3945 = vunpack.c.l.b16 %v795
        %v3946 = vunpack.c.h.b16 %v795
        %v3947 = vunpack.c.l.b16 %v796
        %v3948 = vunpack.c.l.b16 %v797
        %v3949 = vunpack.c.h.b16 %v797
        %v3950 = vunpack.c.l.b16 %v798
        %v3951 = vunpack.c.l.b16 %v799
        %v3952 = vunpack.c.h.b16 %v799
        %v3953 = vunpack.c.l.b16 %v800
        %v3954 = vunpack.c.l.b16 %v801
        %v3955 = vunpack.c.h.b16 %v801
        %v3956 = vunpack.c.l.b16 %v802
        %v3957 = vunpack.c.l.b16 %v803
        %v3958 = vunpack.c.h.b16 %v803
        %v3959 = vunpack.c.l.b16 %v804
        %v3960 = vunpack.c.l.b16 %v805
        %v3961 = vunpack.c.h.b16 %v805
        %v3962 = vunpack.c.l.b16 %v806
        %v3963 = vunpack.c.l.b16 %v807
        %v3964 = vunpack.c.h.b16 %v807
        %v3965 = vunpack.c.l.b16 %v808
        %v3966 = vunpack.c.l.b16 %v809
        %v3967 = vunpack.c.h.b16 %v809
        %v3968 = vunpack.c.l.b16 %v810
        %v3969 = vunpack.c.l.b16 %v811
        %v3970 = vunpack.c.h.b16 %v811
        %v3971 = vunpack.c.l.b16 %v812
        %v3972 = vunpack.c.l.b16 %v813
        %v3973 = vunpack.c.h.b16 %v813
        %v3974 = vunpack.c.l.b16 %v814
        %v3975 = vunpack.c.l.b16 %v815
        %v3976 = vunpack.c.h.b16 %v815
        %v3977 = vunpack.c.l.b16 %v816
        %v3978 = vunpack.c.l.b16 %v817
        %v3979 = vunpack.c.h.b16 %v817
        %v3980 = vunpack.c.l.b16 %v818
        %v3981 = vunpack.c.l.b16 %v819
        %v3982 = vunpack.c.h.b16 %v819
        %v3983 = vunpack.c.l.b16 %v820
        %v3984 = vunpack.c.l.b16 %v821
        %v3985 = vunpack.c.h.b16 %v821
        %v3986 = vunpack.c.l.b16 %v822
        %v3987 = vunpack.c.l.b16 %v823
        %v3988 = vunpack.c.h.b16 %v823
        %v3989 = vunpack.c.l.b16 %v824
        %v3990 = vunpack.c.l.b16 %v825
        %v3991 = vunpack.c.h.b16 %v825
        %v3992 = vunpack.c.l.b16 %v826
        %v3993 = vunpack.c.l.b16 %v827
        %v3994 = vunpack.c.h.b16 %v827
        %v3995 = vunpack.c.l.b16 %v828
        %v3996 = vunpack.c.l.b16 %v829
        %v3997 = vunpack.c.h.b16 %v829
        %v3998 = vunpack.c.l.b16 %v830
        %v3999 = vunpack.c.l.b16 %v831
        %v4000 = vunpack.c.h.b16 %v831
        %v4001 = vunpack.c.l.b16 %v832
        %v4002 = vunpack.c.l.b16 %v833
        %v4003 = vunpack.c.h.b16 %v833
        %v4004 = vunpack.c.l.b16 %v834
        %v4005 = vunpack.c.l.b16 %v835
        %v4006 = vunpack.c.h.b16 %v835
        %v4007 = vunpack.c.l.b16 %v836
        %v4008 = vunpack.c.l.b16 %v837
        %v4009 = vunpack.c.h.b16 %v837
        %v4010 = vunpack.c.l.b16 %v838
        %v4011 = vunpack.c.l.b16 %v839
        %v4012 = vunpack.c.h.b16 %v839
        %v4013 = vunpack.c.l.b16 %v840
        %v4014 = vunpack.c.l.b16 %v841
        %v4015 = vunpack.c.h.b16 %v841
        %v4016 = vunpack.c.l.b16 %v842
        %v4017 = vunpack.c.l.b16 %v843
        %v4018 = vunpack.c.h.b16 %v843
        %v4019 = vunpack.c.l.b16 %v844
        %v4020 = vunpack.c.l.b16 %v845
        %v4021 = vunpack.c.h.b16 %v845
        %v4022 = vunpack.c.l.b16 %v846
        %v4023 = vunpack.c.l.b16 %v847
        %v4024 = vunpack.c.h.b16 %v847
        %v4025 = vunpack.c.l.b16 %v848
        %v4026 = vunpack.c.l.b16 %v849
        %v4027 = vunpack.c.h.b16 %v849
        %v4028 = vunpack.c.l.b16 %v850
        %v4029 = vunpack.c.l.b16 %v851
        %v4030 = vunpack.c.h.b16 %v851
        %v4031 = vunpack.c.l.b16 %v852
        %v4032 = vunpack.c.l.b16 %v853
        %v4033 = vunpack.c.h.b16 %v853
        %v4034 = vunpack.c.l.b16 %v854
        %v4035 = vunpack.c.l.b16 %v855
        %v4036 = vunpack.c.h.b16 %v855
        %v4037 = vunpack.c.l.b16 %v856
        %v4038 = vunpack.c.l.b16 %v857
        %v4039 = vunpack.c.h.b16 %v857
        %v4040 = vunpack.c.l.b16 %v858
        %v4041 = vunpack.c.l.b16 %v859
        %v4042 = vunpack.c.h.b16 %v859
        %v4043 = vunpack.c.l.b16 %v860
        %v4044 = vunpack.c.l.b16 %v861
        %v4045 = vunpack.c.h.b16 %v861
        %v4046 = vunpack.c.l.b16 %v862
        %v4047 = vunpack.c.l.b16 %v863
        %v4048 = vunpack.c.h.b16 %v863
        %v4049 = vunpack.c.l.b16 %v864
        %v4050 = vunpack.c.l.b16 %v865
        %v4051 = vunpack.c.h.b16 %v865
        %v4052 = vunpack.c.l.b16 %v866
        %v4053 = vunpack.c.l.b16 %v867
        %v4054 = vunpack.c.h.b16 %v867
        %v4055 = vunpack.c.l.b16 %v868
        %v4056 = vunpack.c.l.b16 %v869
        %v4057 = vunpack.c.h.b16 %v869
        %v4058 = vunpack.c.l.b16 %v870
        %v4059 = vunpack.c.l.b16 %v871
        %v4060 = vunpack.c.h.b16 %v871
        %v4061 = vunpack.c.l.b16 %v872
        %v4062 = vunpack.c.l.b16 %v873
        %v4063 = vunpack.c.h.b16 %v873
        %v4064 = vunpack.c.l.b16 %v874
        %v4065 = vunpack.c.l.b16 %v875
        %v4066 = vunpack.c.h.b16 %v875
        %v4067 = vunpack.c.l.b16 %v876
        %v4068 = vunpack.c.l.b16 %v877
        %v4069 = vunpack.c.h.b16 %v877
        %v4070 = vunpack.c.l.b16 %v878
        %v4071 = vunpack.c.l.b16 %v879
        %v4072 = vunpack.c.h.b16 %v879
        %v4073 = vunpack.c.l.b16 %v880
        %v4074 = vunpack.c.l.b16 %v881
        %v4075 = vunpack.c.h.b16 %v881
        %v4076 = vunpack.c.l.b16 %v882
        %v4077 = vunpack.c.l.b16 %v883
        %v4078 = vunpack.c.h.b16 %v883
        %v4079 = vunpack.c.l.b16 %v884
        %v4080 = vunpack.c.l.b16 %v885
        %v4081 = vunpack.c.h.b16 %v885
        %v4082 = vunpack.c.l.b16 %v886
        %v4083 = vunpack.c.l.b16 %v887
        %v4084 = vunpack.c.h.b16 %v887
        %v4085 = vunpack.c.l.b16 %v888
        %v4086 = vunpack.c.l.b16 %v889
        %v4087 = vunpack.c.h.b16 %v889
        %v4088 = vunpack.c.l.b16 %v890
        %v4089 = vunpack.c.l.b16 %v891
        %v4090 = vunpack.c.h.b16 %v891
        %v4091 = vunpack.c.l.b16 %v892
        %v4092 = vunpack.c.l.b16 %v893
        %v4093 = vunpack.c.h.b16 %v893
        %v4094 = vunpack.c.l.b16 %v894
        %v4095 = vunpack.c.l.b16 %v895
        %v4096 = vunpack.c.h.b16 %v895
        %v4097 = vunpack.c.l.b16 %v896
        %v4098 = vunpack.c.l.b16 %v897
        %v4099 = vunpack.c.h.b16 %v897
        %v4100 = vunpack.c.l.b16 %v898
        %v4101 = vunpack.c.l.b16 %v899
        %v4102 = vunpack.c.h.b16 %v899
        %v4103 = vunpack.c.l.b16 %v900
        %v4104 = vunpack.c.l.b16 %v901
        %v4105 = vunpack.c.h.b16 %v901
        %v4106 = vunpack.c.l.b16 %v902
        %v4107 = vunpack.c.l.b16 %v903
        %v4108 = vunpack.c.h.b16 %v903
        %v4109 = vunpack.c.l.b16 %v904
        %v4110 = vunpack.c.l.b16 %v905
        %v4111 = vunpack.c.h.b16 %v905
        %v4112 = vunpack.c.l.b16 %v906
        %v4113 = vunpack.c.l.b16 %v907
        %v4114 = vunpack.c.h.b16 %v907
        %v4115 = vunpack.c.l.b16 %v908
        %v4116 = vunpack.c.l.b16 %v909
        %v4117 = vunpack.c.h.b16 %v909
        %v4118 = vunpack.c.l.b16 %v910
        %v4119 = vunpack.c.l.b16 %v911
        %v4120 = vunpack.c.h.b16 %v911
        %v4121 = vunpack.c.l.b16 %v912
        %v4122 = vunpack.c.l.b16 %v913
        %v4123 = vunpack.c.h.b16 %v913
        %v4124 = vunpack.c.l.b16 %v914
        %v4125 = vunpack.c.l.b16 %v915
        %v4126 = vunpack.c.h.b16 %v915
        %v4127 = vunpack.c.l.b16 %v916
        %v4128 = vunpack.c.l.b16 %v917
        %v4129 = vunpack.c.h.b16 %v917
        %v4130 = vunpack.c.l.b16 %v918
        %v4131 = vunpack.c.l.b16 %v919
        %v4132 = vunpack.c.h.b16 %v919
        %v4133 = vunpack.c.l.b16 %v920
        %v4134 = vunpack.c.l.b16 %v921
        %v4135 = vunpack.c.h.b16 %v921
        %v4136 = vunpack.c.l.b16 %v922
        %v4137 = vunpack.c.l.b16 %v923
        %v4138 = vunpack.c.h.b16 %v923
        %v4139 = vunpack.c.l.b16 %v924
        %v4140 = vunpack.c.l.b16 %v925
        %v4141 = vunpack.c.h.b16 %v925
        %v4142 = vunpack.c.l.b16 %v926
        %v4143 = vunpack.c.l.b16 %v927
        %v4144 = vunpack.c.h.b16 %v927
        %v4145 = vunpack.c.l.b16 %v928
        %v4146 = vunpack.c.l.b16 %v929
        %v4147 = vunpack.c.h.b16 %v929
        %v4148 = vunpack.c.l.b16 %v930
        %v4149 = vunpack.c.l.b16 %v931
        %v4150 = vunpack.c.h.b16 %v931
        %v4151 = vunpack.c.l.b16 %v932
        %v4152 = vunpack.c.l.b16 %v933
        %v4153 = vunpack.c.h.b16 %v933
        %v4154 = vunpack.c.l.b16 %v934
        %v4155 = vunpack.c.l.b16 %v935
        %v4156 = vunpack.c.h.b16 %v935
        %v4157 = vunpack.c.l.b16 %v936
        %v4158 = vunpack.c.l.b16 %v937
        %v4159 = vunpack.c.h.b16 %v937
        %v4160 = vunpack.c.l.b16 %v938
        %v4161 = vunpack.c.l.b16 %v939
        %v4162 = vunpack.c.h.b16 %v939
        %v4163 = vunpack.c.l.b16 %v940
        %v4164 = vunpack.c.l.b16 %v941
        %v4165 = vunpack.c.h.b16 %v941
        %v4166 = vunpack.c.l.b16 %v942
        %v4167 = vunpack.c.l.b16 %v943
        %v4168 = vunpack.c.h.b16 %v943
        %v4169 = vunpack.c.l.b16 %v944
        %v4170 = vunpack.c.l.b16 %v945
        %v4171 = vunpack.c.h.b16 %v945
        %v4172 = vunpack.c.l.b16 %v946
        %v4173 = vunpack.c.l.b16 %v947
        %v4174 = vunpack.c.h.b16 %v947
        %v4175 = vunpack.c.l.b16 %v948
        %v4176 = vunpack.c.l.b16 %v949
        %v4177 = vunpack.c.h.b16 %v949
        %v4178 = vunpack.c.l.b16 %v950
        %v4179 = vunpack.c.l.b16 %v951
        %v4180 = vunpack.c.h.b16 %v951
        %v4181 = vunpack.c.l.b16 %v952
        %v4182 = vunpack.c.l.b16 %v953
        %v4183 = vunpack.c.h.b16 %v953
        %v4184 = vunpack.c.l.b16 %v954
        %v4185 = vunpack.c.l.b16 %v955
        %v4186 = vunpack.c.h.b16 %v955
        %v4187 = vunpack.c.l.b16 %v956
        %v4188 = vunpack.c.l.b16 %v957
        %v4189 = vunpack.c.h.b16 %v957
        %v4190 = vunpack.c.l.b16 %v958
        %v4191 = vunpack.c.l.b16 %v959
        %v4192 = vunpack.c.h.b16 %v959
        %v4193 = vunpack.c.l.b16 %v960
        %v4194 = vunpack.c.l.b16 %v961
        %v4195 = vunpack.c.h.b16 %v961
        %v4196 = vunpack.c.l.b16 %v962
        %v4197 = vunpack.c.l.b16 %v963
        %v4198 = vunpack.c.h.b16 %v963
        %v4199 = vunpack.c.l.b16 %v964
        %v4200 = vunpack.c.l.b16 %v965
        %v4201 = vunpack.c.h.b16 %v965
        %v4202 = vunpack.c.l.b16 %v966
        %v4203 = vunpack.c.l.b16 %v967
        %v4204 = vunpack.c.h.b16 %v967
        %v4205 = vunpack.c.l.b16 %v968
        %v4206 = vunpack.c.l.b16 %v969
        %v4207 = vunpack.c.h.b16 %v969
        %v4208 = vunpack.c.l.b16 %v970
        %v4209 = vunpack.c.l.b16 %v971
        %v4210 = vunpack.c.h.b16 %v971
        %v4211 = vunpack.c.l.b16 %v972
        %v4212 = vunpack.c.l.b16 %v973
        %v4213 = vunpack.c.h.b16 %v973
        %v4214 = vunpack.c.l.b16 %v974
        %v4215 = vunpack.c.l.b16 %v975
        %v4216 = vunpack.c.h.b16 %v975
        %v4217 = vunpack.c.l.b16 %v976
        %v4218 = vunpack.c.l.b16 %v977
        %v4219 = vunpack.c.h.b16 %v977
        %v4220 = vunpack.c.l.b16 %v978
        %v4221 = vunpack.c.l.b16 %v979
        %v4222 = vunpack.c.h.b16 %v979
        %v4223 = vunpack.c.l.b16 %v980
        %v4224 = vunpack.c.l.b16 %v981
        %v4225 = vunpack.c.h.b16 %v981
        %v4226 = vunpack.c.l.b16 %v982
        %v4227 = vunpack.c.l.b16 %v983
        %v4228 = vunpack.c.h.b16 %v983
        %v4229 = vunpack.c.l.b16 %v984
        %v4230 = vunpack.c.l.b16 %v985
        %v4231 = vunpack.c.h.b16 %v985
        %v4232 = vunpack.c.l.b16 %v986
        %v4233 = vunpack.c.l.b16 %v987
        %v4234 = vunpack.c.h.b16 %v987
        %v4235 = vunpack.c.l.b16 %v988
        %v4236 = vunpack.c.l.b16 %v989
        %v4237 = vunpack.c.h.b16 %v989
        %v4238 = vunpack.c.l.b16 %v990
        %v4239 = vunpack.c.l.b16 %v991
        %v4240 = vunpack.c.h.b16 %v991
        %v4241 = vunpack.c.l.b16 %v992
        %v4242 = vunpack.c.l.b16 %v993
        %v4243 = vunpack.c.h.b16 %v993
        %v4244 = vunpack.c.l.b16 %v994
        %v4245 = vunpack.c.l.b16 %v995
        %v4246 = vunpack.c.h.b16 %v995
        %v4247 = vunpack.c.l.b16 %v996
        %v4248 = vunpack.c.l.b16 %v997
        %v4249 = vunpack.c.h.b16 %v997
        %v4250 = vunpack.c.l.b16 %v998
        %v4251 = vunpack.c.l.b16 %v999
        %v4252 = vunpack.c.h.b16 %v999
        %v4253 = vunpack.c.l.b16 %v1000
        %v4254 = vunpack.c.l.b16 %v1001
        %v4255 = vunpack.c.h.b16 %v1001
        %v4256 = vunpack.c.l.b16 %v1002
        %v4257 = vunpack.c.l.b16 %v1003
        %v4258 = vunpack.c.h.b16 %v1003
        %v4259 = vunpack.c.l.b16 %v1004
        %v4260 = vunpack.c.l.b16 %v1005
        %v4261 = vunpack.c.h.b16 %v1005
        %v4262 = vunpack.c.l.b16 %v1006
        %v4263 = vunpack.c.l.b16 %v1007
        %v4264 = vunpack.c.h.b16 %v1007
        %v4265 = vunpack.c.l.b16 %v1008
        %v4266 = vunpack.c.l.b16 %v1009
        %v4267 = vunpack.c.h.b16 %v1009
        %v4268 = vunpack.c.l.b16 %v1010
        %v4269 = vunpack.c.l.b16 %v1011
        %v4270 = vunpack.c.h.b16 %v1011
        %v4271 = vunpack.c.l.b16 %v1012
        %v4272 = vunpack.c.l.b16 %v1013
        %v4273 = vunpack.c.h.b16 %v1013
        %v4274 = vunpack.c.l.b16 %v1014
        %v4275 = vunpack.c.l.b16 %v1015
        %v4276 = vunpack.c.h.b16 %v1015
        %v4277 = vunpack.c.l.b16 %v1016
        %v4278 = vunpack.c.l.b16 %v1017
        %v4279 = vunpack.c.h.b16 %v1017
        %v4280 = vunpack.c.l.b16 %v1018
        %v4281 = vunpack.c.l.b16 %v1019
        %v4282 = vunpack.c.h.b16 %v1019
        %v4283 = vunpack.c.l.b16 %v1020
        %v4284 = vunpack.c.l.b16 %v1021
        %v4285 = vunpack.c.h.b16 %v1021
        %v4286 = vunpack.c.l.b16 %v1022
        %v4287 = vunpack.c.l.b16 %v1023
        %v4288 = vunpack.c.h.b16 %v1023
        %v4289 = vunpack.c.l.b16 %v1024
        %v4290 = vunpack.c.l.b16 %v1025
        %v4291 = vunpack.c.h.b16 %v1025
        %v4292 = vunpack.c.l.b16 %v1026
        %v4293 = vunpack.c.l.b16 %v1027
        %v4294 = vunpack.c.h.b16 %v1027
        %v4295 = vunpack.c.l.b16 %v1028
        %v4296 = vunpack.c.l.b16 %v1029
        %v4297 = vunpack.c.h.b16 %v1029
        %v4298 = vunpack.c.l.b16 %v1030
        %v4299 = vunpack.c.l.b16 %v1031
        %v4300 = vunpack.c.h.b16 %v1031
        %v4301 = vunpack.c.l.b16 %v1032
        %v4302 = vunpack.c.l.b16 %v1033
        %v4303 = vunpack.c.h.b16 %v1033
        %v4304 = vunpack.c.l.b16 %v1034
        %v4305 = vunpack.c.l.b16 %v1035
        %v4306 = vunpack.c.h.b16 %v1035
        %v4307 = vunpack.c.l.b16 %v1036
        %v4308 = vunpack.c.l.b16 %v1037
        %v4309 = vunpack.c.h.b16 %v1037
        %v4310 = vunpack.c.l.b16 %v1038
        %v4311 = vunpack.c.l.b16 %v1039
        %v4312 = vunpack.c.h.b16 %v1039
        %v4313 = vunpack.c.l.b16 %v1040
        %v4314 = vunpack.c.l.b16 %v1041
        %v4315 = vunpack.c.h.b16 %v1041
        %v4316 = vunpack.c.l.b16 %v1042
        %v4317 = vunpack.c.l.b16 %v1043
        %v4318 = vunpack.c.h.b16 %v1043
        %v4319 = vunpack.c.l.b16 %v1044
        %v4320 = vunpack.c.l.b16 %v1045
        %v4321 = vunpack.c.h.b16 %v1045
        %v4322 = vunpack.c.l.b16 %v1046
        %v4323 = vunpack.c.l.b16 %v1047
        %v4324 = vunpack.c.h.b16 %v1047
        %v4325 = vunpack.c.l.b16 %v1048
        %v4326 = vunpack.c.l.b16 %v1049
        %v4327 = vunpack.c.h.b16 %v1049
        %v4328 = vunpack.c.l.b16 %v1050
        %v4329 = vunpack.c.l.b16 %v1051
        %v4330 = vunpack.c.h.b16 %v1051
        %v4331 = vunpack.c.l.b16 %v1052
        %v4332 = vunpack.c.l.b16 %v1053
        %v4333 = vunpack.c.h.b16 %v1053
        %v4334 = vunpack.c.l.b16 %v1054
        %v4335 = vunpack.c.l.b16 %v1055
        %v4336 = vunpack.c.h.b16 %v1055
        %v4337 = vunpack.c.l.b16 %v1056
        %v4338 = vunpack.c.l.b16 %v1057
        %v4339 = vunpack.c.h.b16 %v1057
        %v4340 = vunpack.c.l.b16 %v1058
        %v4341 = vunpack.c.l.b16 %v1059
        %v4342 = vunpack.c.h.b16 %v1059
        %v4343 = vunpack.c.l.b16 %v1060
        %v4344 = vunpack.c.l.b16 %v1061
        %v4345 = vunpack.c.h.b16 %v1061
        %v4346 = vunpack.c.l.b16 %v1062
        %v4347 = vunpack.c.l.b16 %v1063
        %v4348 = vunpack.c.h.b16 %v1063
        %v4349 = vunpack.c.l.b16 %v1064
        %v4350 = vunpack.c.l.b16 %v1065
        %v4351 = vunpack.c.h.b16 %v1065
        %v4352 = vunpack.c.l.b16 %v1066
        %v4353 = vunpack.c.l.b16 %v1067
        %v4354 = vunpack.c.h.b16 %v1067
        %v4355 = vunpack.c.l.b16 %v1068
        %v4356 = vunpack.c.l.b16 %v1069
        %v4357 = vunpack.c.h.b16 %v1069
        %v4358 = vunpack.c.l.b16 %v1070
        %v4359 = vunpack.c.l.b16 %v1071
        %v4360 = vunpack.c.h.b16 %v1071
        %v4361 = vunpack.c.l.b16 %v1072
        %v4362 = vunpack.c.l.b16 %v1073
        %v4363 = vunpack.c.h.b16 %v1073
        %v4364 = vunpack.c.l.b16 %v1074
        %v4365 = vunpack.c.l.b16 %v1075
        %v4366 = vunpack.c.h.b16 %v1075
        %v4367 = vunpack.c.l.b16 %v1076
        %v4368 = vunpack.c.l.b16 %v1077
        %v4369 = vunpack.c.h.b16 %v1077
        %v4370 = vunpack.c.l.b16 %v1078
        %v4371 = vunpack.c.l.b16 %v1079
        %v4372 = vunpack.c.h.b16 %v1079
        %v4373 = vunpack.c.l.b16 %v1080
        %v4374 = vunpack.c.l.b16 %v1081
        %v4375 = vunpack.c.h.b16 %v1081
        %v4376 = vunpack.c.l.b16 %v1082
        %v4377 = vunpack.c.l.b16 %v1083
        %v4378 = vunpack.c.h.b16 %v1083
        %v4379 = vunpack.c.l.b16 %v1084
        %v4380 = vunpack.c.l.b16 %v1085
        %v4381 = vunpack.c.h.b16 %v1085
        %v4382 = vunpack.c.l.b16 %v1086
        %v4383 = vunpack.c.l.b16 %v1087
        %v4384 = vunpack.c.h.b16 %v1087
        %v4385 = vunpack.c.l.b16 %v1088
        %v4386 = vunpack.c.l.b16 %v1089
        %v4387 = vunpack.c.h.b16 %v1089
        %v4388 = vunpack.c.l.b16 %v1090
        %v4389 = vunpack.c.l.b16 %v1091
        %v4390 = vunpack.c.h.b16 %v1091
        %v4391 = vunpack.c.l.b16 %v1092
        %v4392 = vunpack.c.l.b16 %v1093
        %v4393 = vunpack.c.h.b16 %v1093
        %v4394 = vunpack.c.l.b16 %v1094
        %v4395 = vunpack.c.l.b16 %v1095
        %v4396 = vunpack.c.h.b16 %v1095
        %v4397 = vunpack.c.l.b16 %v1096
        %v4398 = vunpack.c.l.b16 %v1097
        %v4399 = vunpack.c.h.b16 %v1097
        %v4400 = vunpack.c.l.b16 %v1098
        %v4401 = vunpack.c.l.b16 %v1099
        %v4402 = vunpack.c.h.b16 %v1099
        %v4403 = vunpack.c.l.b16 %v1100
        %v4404 = vunpack.c.l.b16 %v1101
        %v4405 = vunpack.c.h.b16 %v1101
        %v4406 = vunpack.c.l.b16 %v1102
        %v4407 = vunpack.c.l.b16 %v1103
        %v4408 = vunpack.c.h.b16 %v1103
        %v4409 = vunpack.c.l.b16 %v1104
        %v4410 = vunpack.c.l.b16 %v1105
        %v4411 = vunpack.c.h.b16 %v1105
        %v4412 = vunpack.c.l.b16 %v1106
        %v4413 = vunpack.c.l.b16 %v1107
        %v4414 = vunpack.c.h.b16 %v1107
        %v4415 = vunpack.c.l.b16 %v1108
        %v4416 = vunpack.c.l.b16 %v1109
        %v4417 = vunpack.c.h.b16 %v1109
        %v4418 = vunpack.c.l.b16 %v1110
        %v4419 = vunpack.c.l.b16 %v1111
        %v4420 = vunpack.c.h.b16 %v1111
        %v4421 = vunpack.c.l.b16 %v1112
        %v4422 = vunpack.c.l.b16 %v1113
        %v4423 = vunpack.c.h.b16 %v1113
        %v4424 = vunpack.c.l.b16 %v1114
        %v4425 = vunpack.c.l.b16 %v1115
        %v4426 = vunpack.c.h.b16 %v1115
        %v4427 = vunpack.c.l.b16 %v1116
        %v4428 = vunpack.c.l.b16 %v1117
        %v4429 = vunpack.c.h.b16 %v1117
        %v4430 = vunpack.c.l.b16 %v1118
        %v4431 = vunpack.c.l.b16 %v1119
        %v4432 = vunpack.c.h.b16 %v1119
        %v4433 = vunpack.c.l.b16 %v1120
        %v4434 = vunpack.c.l.b16 %v1121
        %v4435 = vunpack.c.h.b16 %v1121
        %v4436 = vunpack.c.l.b16 %v1122
        %v4437 = vunpack.c.l.b16 %v1123
        %v4438 = vunpack.c.h.b16 %v1123
        %v4439 = vunpack.c.l.b16 %v1124
        %v4440 = vunpack.c.l.b16 %v1125
        %v4441 = vunpack.c.h.b16 %v1125
        %v4442 = vunpack.c.l.b16 %v1126
        %v4443 = vunpack.c.l.b16 %v1127
        %v4444 = vunpack.c.h.b16 %v1127
        %v4445 = vunpack.c.l.b16 %v1128
        %v4446 = vunpack.c.l.b16 %v1129
        %v4447 = vunpack.c.h.b16 %v1129
        %v4448 = vunpack.c.l.b16 %v1130
        %v4449 = vunpack.c.l.b16 %v1131
        %v4450 = vunpack.c.h.b16 %v1131
        %v4451 = vunpack.c.l.b16 %v1132
        %v4452 = vunpack.c.l.b16 %v1133
        %v4453 = vunpack.c.h.b16 %v1133
        %v4454 = vunpack.c.l.b16 %v1134
        %v4455 = vunpack.c.l.b16 %v1135
        %v4456 = vunpack.c.h.b16 %v1135
        %v4457 = vunpack.c.l.b16 %v1136
        %v4458 = vunpack.c.l.b16 %v1137
        %v4459 = vunpack.c.h.b16 %v1137
        %v4460 = vunpack.c.l.b16 %v1138
        %v4461 = vunpack.c.l.b16 %v1139
        %v4462 = vunpack.c.h.b16 %v1139
        %v4463 = vunpack.c.l.b16 %v1140
        %v4464 = vunpack.c.l.b16 %v1141
        %v4465 = vunpack.c.h.b16 %v1141
        %v4466 = vunpack.c.l.b16 %v1142
        %v4467 = vunpack.c.l.b16 %v1143
        %v4468 = vunpack.c.h.b16 %v1143
        %v4469 = vunpack.c.l.b16 %v1144
        %v4470 = vunpack.c.l.b16 %v1145
        %v4471 = vunpack.c.h.b16 %v1145
        %v4472 = vunpack.c.l.b16 %v1146
        %v4473 = vunpack.c.l.b16 %v1147
        %v4474 = vunpack.c.h.b16 %v1147
        %v4475 = vunpack.c.l.b16 %v1148
        %v4476 = vunpack.c.l.b16 %v1149
        %v4477 = vunpack.c.h.b16 %v1149
        %v4478 = vunpack.c.l.b16 %v1150
        %v4479 = vunpack.c.l.b16 %v1151
        %v4480 = vunpack.c.h.b16 %v1151
        %v4481 = vunpack.c.l.b16 %v1152
        %v4482 = vunpack.c.l.b16 %v1153
        %v4483 = vunpack.c.h.b16 %v1153
        %v4484 = vunpack.c.l.b16 %v1154
        %v4485 = vunpack.c.l.b16 %v1155
        %v4486 = vunpack.c.h.b16 %v1155
        %v4487 = vunpack.c.l.b16 %v1156
        %v4488 = vunpack.c.l.b16 %v1157
        %v4489 = vunpack.c.h.b16 %v1157
        %v4490 = vunpack.c.l.b16 %v1158
        %v4491 = vunpack.c.l.b16 %v1159
        %v4492 = vunpack.c.h.b16 %v1159
        %v4493 = vunpack.c.l.b16 %v1160
        %v4494 = vunpack.c.l.b16 %v1161
        %v4495 = vunpack.c.h.b16 %v1161
        %v4496 = vunpack.c.l.b16 %v1162
        %v4497 = vunpack.c.l.b16 %v1163
        %v4498 = vunpack.c.h.b16 %v1163
        %v4499 = vunpack.c.l.b16 %v1164
        %v4500 = vunpack.c.l.b16 %v1165
        %v4501 = vunpack.c.h.b16 %v1165
        %v4502 = vunpack.c.l.b16 %v1166
        %v4503 = vunpack.c.l.b16 %v1167
        %v4504 = vunpack.c.h.b16 %v1167
        %v4505 = vunpack.c.l.b16 %v1168
        %v4506 = vunpack.c.l.b16 %v1169
        %v4507 = vunpack.c.h.b16 %v1169
        %v4508 = vunpack.c.l.b16 %v1170
        %v4509 = vunpack.c.l.b16 %v1171
        %v4510 = vunpack.c.h.b16 %v1171
        %v4511 = vunpack.c.l.b16 %v1172
        %v4512 = vunpack.c.l.b16 %v1173
        %v4513 = vunpack.c.h.b16 %v1173
        %v4514 = vunpack.c.l.b16 %v1174
        %v4515 = vunpack.c.l.b16 %v1175
        %v4516 = vunpack.c.h.b16 %v1175
        %v4517 = vunpack.c.l.b16 %v1176
        %v4518 = vunpack.c.l.b16 %v1177
        %v4519 = vunpack.c.h.b16 %v1177
        %v4520 = vunpack.c.l.b16 %v1178
        %v4521 = vunpack.c.l.b16 %v1179
        %v4522 = vunpack.c.h.b16 %v1179
        %v4523 = vunpack.c.l.b16 %v1180
        %v4524 = vunpack.c.l.b16 %v1181
        %v4525 = vunpack.c.h.b16 %v1181
        %v4526 = vunpack.c.l.b16 %v1182
        %v4527 = vunpack.c.l.b16 %v1183
        %v4528 = vunpack.c.h.b16 %v1183
        %v4529 = vunpack.c.l.b16 %v1184
        %v4530 = vunpack.c.l.b16 %v1185
        %v4531 = vunpack.c.h.b16 %v1185
        %v4532 = vunpack.c.l.b16 %v1186
        %v4533 = vunpack.c.l.b16 %v1187
        %v4534 = vunpack.c.h.b16 %v1187
        %v4535 = vunpack.c.l.b16 %v1188
        %v4536 = vunpack.c.l.b16 %v1189
        %v4537 = vunpack.c.h.b16 %v1189
        %v4538 = vunpack.c.l.b16 %v1190
        %v4539 = vunpack.c.l.b16 %v1191
        %v4540 = vunpack.c.h.b16 %v1191
        %v4541 = vunpack.c.l.b16 %v1192
        %v4542 = vunpack.c.l.b16 %v1193
        %v4543 = vunpack.c.h.b16 %v1193
        %v4544 = vunpack.c.l.b16 %v1194
        %v4545 = vunpack.c.l.b16 %v1195
        %v4546 = vunpack.c.h.b16 %v1195
        %v4547 = vunpack.c.l.b16 %v1196
        %v4548 = vunpack.c.l.b16 %v1197
        %v4549 = vunpack.c.h.b16 %v1197
        %v4550 = vunpack.c.l.b16 %v1198
        %v4551 = vunpack.c.l.b16 %v1199
        %v4552 = vunpack.c.h.b16 %v1199
        %v4553 = vunpack.c.l.b16 %v1200
        %v4554 = vunpack.c.l.b16 %v1201
        %v4555 = vunpack.c.h.b16 %v1201
        %v4556 = vunpack.c.l.b16 %v1202
        %v4557 = vunpack.c.l.b16 %v1203
        %v4558 = vunpack.c.h.b16 %v1203
        %v4559 = vunpack.c.l.b16 %v1204
        %v4560 = vunpack.c.l.b16 %v1205
        %v4561 = vunpack.c.h.b16 %v1205
        %v4562 = vunpack.c.l.b16 %v1206
        %v4563 = vunpack.c.l.b16 %v1207
        %v4564 = vunpack.c.h.b16 %v1207
        %v4565 = vunpack.c.l.b16 %v1208
        %v4566 = vunpack.c.l.b16 %v1209
        %v4567 = vunpack.c.h.b16 %v1209
        %v4568 = vunpack.c.l.b16 %v1210
        %v4569 = vunpack.c.l.b16 %v1211
        %v4570 = vunpack.c.h.b16 %v1211
        %v4571 = vunpack.c.l.b16 %v1212
        %v4572 = vunpack.c.l.b16 %v1213
        %v4573 = vunpack.c.h.b16 %v1213
        %v4574 = vunpack.c.l.b16 %v1214
        %v4575 = vunpack.c.l.b16 %v1215
        %v4576 = vunpack.c.h.b16 %v1215
        %v4577 = vunpack.c.l.b16 %v1216
        %v4578 = vunpack.c.l.b16 %v1217
        %v4579 = vunpack.c.h.b16 %v1217
        %v4580 = vunpack.c.l.b16 %v1218
        %v4581 = vunpack.c.l.b16 %v1219
        %v4582 = vunpack.c.h.b16 %v1219
        %v4583 = vunpack.c.l.b16 %v1220
        %v4584 = vunpack.c.l.b16 %v1221
        %v4585 = vunpack.c.h.b16 %v1221
        %v4586 = vunpack.c.l.b16 %v1222
        %v4587 = vunpack.c.l.b16 %v1223
        %v4588 = vunpack.c.h.b16 %v1223
        %v4589 = vunpack.c.l.b16 %v1224
        %v4590 = vunpack.c.l.b16 %v1225
        %v4591 = vunpack.c.h.b16 %v1225
        %v4592 = vunpack.c.l.b16 %v1226
        %v4593 = vunpack.c.l.b16 %v1227
        %v4594 = vunpack.c.h.b16 %v1227
        %v4595 = vunpack.c.l.b16 %v1228
        %v4596 = vunpack.c.l.b16 %v1229
        %v4597 = vunpack.c.h.b16 %v1229
        %v4598 = vunpack.c.l.b16 %v1230
        %v4599 = vunpack.c.l.b16 %v1231
        %v4600 = vunpack.c.h.b16 %v1231
        %v4601 = vunpack.c.l.b16 %v1232
        %v4602 = vunpack.c.l.b16 %v1233
        %v4603 = vunpack.c.h.b16 %v1233
        %v4604 = vunpack.c.l.b16 %v1234
        %v4605 = vunpack.c.l.b16 %v1235
        %v4606 = vunpack.c.h.b16 %v1235
        %v4607 = vunpack.c.l.b16 %v1236
        %v4608 = vunpack.c.l.b16 %v1237
        %v4609 = vunpack.c.h.b16 %v1237
        %v4610 = vunpack.c.l.b16 %v1238
        %v4611 = vunpack.c.l.b16 %v1239
        %v4612 = vunpack.c.h.b16 %v1239
        %v4613 = vunpack.c.l.b16 %v1240
        %v4614 = vunpack.c.l.b16 %v1241
        %v4615 = vunpack.c.h.b16 %v1241
        %v4616 = vunpack.c.l.b16 %v1242
        %v4617 = vunpack.c.l.b16 %v1243
        %v4618 = vunpack.c.h.b16 %v1243
        %v4619 = vunpack.c.l.b16 %v1244
        %v4620 = vunpack.c.l.b16 %v1245
        %v4621 = vunpack.c.h.b16 %v1245
        %v4622 = vunpack.c.l.b16 %v1246
        %v4623 = vunpack.c.l.b16 %v1247
        %v4624 = vunpack.c.h.b16 %v1247
        %v4625 = vunpack.c.l.b16 %v1248
        %v4626 = vunpack.c.l.b16 %v1249
        %v4627 = vunpack.c.h.b16 %v1249
        %v4628 = vunpack.c.l.b16 %v1250
        %v4629 = vunpack.c.l.b16 %v1251
        %v4630 = vunpack.c.h.b16 %v1251
        %v4631 = vunpack.c.l.b16 %v1252
        %v4632 = vunpack.c.l.b16 %v1253
        %v4633 = vunpack.c.h.b16 %v1253
        %v4634 = vunpack.c.l.b16 %v1254
        %v4635 = vunpack.c.l.b16 %v1255
        %v4636 = vunpack.c.h.b16 %v1255
        %v4637 = vunpack.c.l.b16 %v1256
        %v4638 = vunpack.c.l.b16 %v1257
        %v4639 = vunpack.c.h.b16 %v1257
        %v4640 = vunpack.c.l.b16 %v1258
        %v4641 = vunpack.c.l.b16 %v1259
        %v4642 = vunpack.c.h.b16 %v1259
        %v4643 = vunpack.c.l.b16 %v1260
        %v4644 = vunpack.c.l.b16 %v1261
        %v4645 = vunpack.c.h.b16 %v1261
        %v4646 = vunpack.c.l.b16 %v1262
        %v4647 = vunpack.c.l.b16 %v1263
        %v4648 = vunpack.c.h.b16 %v1263
        %v4649 = vunpack.c.l.b16 %v1264
        %v4650 = vunpack.c.l.b16 %v1265
        %v4651 = vunpack.c.h.b16 %v1265
        %v4652 = vunpack.c.l.b16 %v1266
        %v4653 = vunpack.c.l.b16 %v1267
        %v4654 = vunpack.c.h.b16 %v1267
        %v4655 = vunpack.c.l.b16 %v1268
        %v4656 = vunpack.c.l.b16 %v1269
        %v4657 = vunpack.c.h.b16 %v1269
        %v4658 = vunpack.c.l.b16 %v1270
        %v4659 = vunpack.c.l.b16 %v1271
        %v4660 = vunpack.c.h.b16 %v1271
        %v4661 = vunpack.c.l.b16 %v1272
        %v4662 = vunpack.c.l.b16 %v1273
        %v4663 = vunpack.c.h.b16 %v1273
        %v4664 = vunpack.c.l.b16 %v1274
        %v4665 = vunpack.c.l.b16 %v1275
        %v4666 = vunpack.c.h.b16 %v1275
        %v4667 = vunpack.c.l.b16 %v1276
        %v4668 = vunpack.c.l.b16 %v1277
        %v4669 = vunpack.c.h.b16 %v1277
        %v4670 = vunpack.c.l.b16 %v1278
        %v4671 = vunpack.c.l.b16 %v1279
        %v4672 = vunpack.c.h.b16 %v1279
        %v4673 = vunpack.c.l.b16 %v1280
        %v4674 = vunpack.c.l.b16 %v1281
        %v4675 = vunpack.c.h.b16 %v1281
        %v4676 = vunpack.c.l.b16 %v1282
        %v4677 = vunpack.c.l.b16 %v1283
        %v4678 = vunpack.c.h.b16 %v1283
        %v4679 = vunpack.c.l.b16 %v1284
        %v4680 = vunpack.c.l.b16 %v1285
        %v4681 = vunpack.c.h.b16 %v1285
        %v4682 = vunpack.c.l.b16 %v1286
        %v4683 = vunpack.c.l.b16 %v1287
        %v4684 = vunpack.c.h.b16 %v1287
        %v4685 = vunpack.c.l.b16 %v1288
        %v4686 = vunpack.c.l.b16 %v1289
        %v4687 = vunpack.c.h.b16 %v1289
        %v4688 = vunpack.c.l.b16 %v1290
        %v4689 = vunpack.c.l.b16 %v1291
        %v4690 = vunpack.c.h.b16 %v1291
        %v4691 = vunpack.c.l.b16 %v1292
        %v4692 = vunpack.c.l.b16 %v1293
        %v4693 = vunpack.c.h.b16 %v1293
        %v4694 = vunpack.c.l.b16 %v1294
        %v4695 = vunpack.c.l.b16 %v1295
        %v4696 = vunpack.c.h.b16 %v1295
        %v4697 = vunpack.c.l.b16 %v1296
        %v4698 = vunpack.c.l.b16 %v1297
        %v4699 = vunpack.c.h.b16 %v1297
        %v4700 = vunpack.c.l.b16 %v1298
        %v4701 = vunpack.c.l.b16 %v1299
        %v4702 = vunpack.c.h.b16 %v1299
        %v4703 = vunpack.c.l.b16 %v1300
        %v4704 = vunpack.c.l.b16 %v1301
        %v4705 = vunpack.c.h.b16 %v1301
        %v4706 = vunpack.c.l.b16 %v1302
        %v4707 = vunpack.c.l.b16 %v1303
        %v4708 = vunpack.c.h.b16 %v1303
        %v4709 = vunpack.c.l.b16 %v1304
        %v4710 = vunpack.c.l.b16 %v1305
        %v4711 = vunpack.c.h.b16 %v1305
        %v4712 = vunpack.c.l.b16 %v1306
        %v4713 = vunpack.c.l.b16 %v1307
        %v4714 = vunpack.c.h.b16 %v1307
        %v4715 = vunpack.c.l.b16 %v1308
        %v4716 = vunpack.c.l.b16 %v1309
        %v4717 = vunpack.c.h.b16 %v1309
        %v4718 = vunpack.c.l.b16 %v1310
        %v4719 = vunpack.c.l.b16 %v1311
        %v4720 = vunpack.c.h.b16 %v1311
        %v4721 = vunpack.c.l.b16 %v1312
        %v4722 = vunpack.c.l.b16 %v1313
        %v4723 = vunpack.c.h.b16 %v1313
        %v4724 = vunpack.c.l.b16 %v1314
        %v4725 = vunpack.c.l.b16 %v1315
        %v4726 = vunpack.c.h.b16 %v1315
        %v4727 = vunpack.c.l.b16 %v1316
        %v4728 = vunpack.c.l.b16 %v1317
        %v4729 = vunpack.c.h.b16 %v1317
        %v4730 = vunpack.c.l.b16 %v1318
        %v4731 = vunpack.c.l.b16 %v1319
        %v4732 = vunpack.c.h.b16 %v1319
        %v4733 = vunpack.c.l.b16 %v1320
        %v4734 = vunpack.c.l.b16 %v1321
        %v4735 = vunpack.c.h.b16 %v1321
        %v4736 = vunpack.c.l.b16 %v1322
        %v4737 = vunpack.c.l.b16 %v1323
        %v4738 = vunpack.c.h.b16 %v1323
        %v4739 = vunpack.c.l.b16 %v1324
        %v4740 = vunpack.c.l.b16 %v1325
        %v4741 = vunpack.c.h.b16 %v1325
        %v4742 = vunpack.c.l.b16 %v1326
        %v4743 = vunpack.c.l.b16 %v1327
        %v4744 = vunpack.c.h.b16 %v1327
        %v4745 = vunpack.c.l.b16 %v1328
        %v4746 = vunpack.c.l.b16 %v1329
        %v4747 = vunpack.c.h.b16 %v1329
        %v4748 = vunpack.c.l.b16 %v1330
        %v4749 = vunpack.c.l.b16 %v1331
        %v4750 = vunpack.c.h.b16 %v1331
        %v4751 = vunpack.c.l.b16 %v1332
        %v4752 = vunpack.c.l.b16 %v1333
        %v4753 = vunpack.c.h.b16 %v1333
        %v4754 = vunpack.c.l.b16 %v1334
        %v4755 = vunpack.c.l.b16 %v1335
        %v4756 = vunpack.c.h.b16 %v1335
        %v4757 = vunpack.c.l.b16 %v1336
        %v4758 = vunpack.c.l.b16 %v1337
        %v4759 = vunpack.c.h.b16 %v1337
        %v4760 = vunpack.c.l.b16 %v1338
        %v4761 = vunpack.c.l.b16 %v1339
        %v4762 = vunpack.c.h.b16 %v1339
        %v4763 = vunpack.c.l.b16 %v1340
        %v4764 = vunpack.c.l.b16 %v1341
        %v4765 = vunpack.c.h.b16 %v1341
        %v4766 = vunpack.c.l.b16 %v1342
        %v4767 = vunpack.c.l.b16 %v1343
        %v4768 = vunpack.c.h.b16 %v1343
        %v4769 = vunpack.c.l.b16 %v1344
        %v4770 = vunpack.c.l.b16 %v1345
        %v4771 = vunpack.c.h.b16 %v1345
        %v4772 = vunpack.c.l.b16 %v1346
        %v4773 = vunpack.c.l.b16 %v1347
        %v4774 = vunpack.c.h.b16 %v1347
        %v4775 = vunpack.c.l.b16 %v1348
        %v4776 = vunpack.c.l.b16 %v1349
        %v4777 = vunpack.c.h.b16 %v1349
        %v4778 = vunpack.c.l.b16 %v1350
        %v4779 = vunpack.c.l.b16 %v1351
        %v4780 = vunpack.c.h.b16 %v1351
        %v4781 = vunpack.c.l.b16 %v1352
        %v4782 = vunpack.c.l.b16 %v1353
        %v4783 = vunpack.c.h.b16 %v1353
        %v4784 = vunpack.c.l.b16 %v1354
        %v4785 = vunpack.c.l.b16 %v1355
        %v4786 = vunpack.c.h.b16 %v1355
        %v4787 = vunpack.c.l.b16 %v1356
        %v4788 = vunpack.c.l.b16 %v1357
        %v4789 = vunpack.c.h.b16 %v1357
        %v4790 = vunpack.c.l.b16 %v1358
        %v4791 = vunpack.c.l.b16 %v1359
        %v4792 = vunpack.c.h.b16 %v1359
        %v4793 = vunpack.c.l.b16 %v1360
        %v4794 = vunpack.c.l.b16 %v1361
        %v4795 = vunpack.c.h.b16 %v1361
        %v4796 = vunpack.c.l.b16 %v1362
        %v4797 = vunpack.c.l.b16 %v1363
        %v4798 = vunpack.c.h.b16 %v1363
        %v4799 = vunpack.c.l.b16 %v1364
        %v4800 = vunpack.c.l.b16 %v1365
        %v4801 = vunpack.c.h.b16 %v1365
        %v4802 = vunpack.c.l.b16 %v1366
        %v4803 = vunpack.c.l.b16 %v1367
        %v4804 = vunpack.c.h.b16 %v1367
        %v4805 = vunpack.c.l.b16 %v1368
        %v4806 = vunpack.c.l.b16 %v1369
        %v4807 = vunpack.c.h.b16 %v1369
        %v4808 = vunpack.c.l.b16 %v1370
        %v4809 = vunpack.c.l.b16 %v1371
        %v4810 = vunpack.c.h.b16 %v1371
        %v4811 = vunpack.c.l.b16 %v1372
        %v4812 = vunpack.c.l.b16 %v1373
        %v4813 = vunpack.c.h.b16 %v1373
        %v4814 = vunpack.c.l.b16 %v1374
        %v4815 = vunpack.c.l.b16 %v1375
        %v4816 = vunpack.c.h.b16 %v1375
        %v4817 = vunpack.c.l.b16 %v1376
        %v4818 = vunpack.c.l.b16 %v1377
        %v4819 = vunpack.c.h.b16 %v1377
        %v4820 = vunpack.c.l.b16 %v1378
        %v4821 = vunpack.c.l.b16 %v1379
        %v4822 = vunpack.c.h.b16 %v1379
        %v4823 = vunpack.c.l.b16 %v1380
        %v4824 = vunpack.c.l.b16 %v1381
        %v4825 = vunpack.c.h.b16 %v1381
        %v4826 = vunpack.c.l.b16 %v1382
        %v4827 = vunpack.c.l.b16 %v1383
        %v4828 = vunpack.c.h.b16 %v1383
        %v4829 = vunpack.c.l.b16 %v1384
        %v4830 = vunpack.c.l.b16 %v1385
        %v4831 = vunpack.c.h.b16 %v1385
        %v4832 = vunpack.c.l.b16 %v1386
        %v4833 = vunpack.c.l.b16 %v1387
        %v4834 = vunpack.c.h.b16 %v1387
        %v4835 = vunpack.c.l.b16 %v1388
        %v4836 = vunpack.c.l.b16 %v1389
        %v4837 = vunpack.c.h.b16 %v1389
        %v4838 = vunpack.c.l.b16 %v1390
        %v4839 = vunpack.c.l.b16 %v1391
        %v4840 = vunpack.c.h.b16 %v1391
        %v4841 = vunpack.c.l.b16 %v1392
        %v4842 = vunpack.c.l.b16 %v1393
        %v4843 = vunpack.c.h.b16 %v1393
        %v4844 = vunpack.c.l.b16 %v1394
        %v4845 = vunpack.c.l.b16 %v1395
        %v4846 = vunpack.c.h.b16 %v1395
        %v4847 = vunpack.c.l.b16 %v1396
        %v4848 = vunpack.c.l.b16 %v1397
        %v4849 = vunpack.c.h.b16 %v1397
        %v4850 = vunpack.c.l.b16 %v1398
        %v4851 = vunpack.c.l.b16 %v1399
        %v4852 = vunpack.c.h.b16 %v1399
        %v4853 = vunpack.c.l.b16 %v1400
        %v4854 = vunpack.c.l.b16 %v1401
        %v4855 = vunpack.c.h.b16 %v1401
        %v4856 = vunpack.c.l.b16 %v1402
        %v4857 = vunpack.c.l.b16 %v1403
        %v4858 = vunpack.c.h.b16 %v1403
        %v4859 = vunpack.c.l.b16 %v1404
        %v4860 = vunpack.c.l.b16 %v1405
        %v4861 = vunpack.c.h.b16 %v1405
        %v4862 = vunpack.c.l.b16 %v1406
        %v4863 = vunpack.c.l.b16 %v1407
        %v4864 = vunpack.c.h.b16 %v1407
        %v4865 = vunpack.c.l.b16 %v1408
        %v4866 = vunpack.c.l.b16 %v1409
        %v4867 = vunpack.c.h.b16 %v1409
        %v4868 = vunpack.c.l.b16 %v1410
        %v4869 = vunpack.c.l.b16 %v1411
        %v4870 = vunpack.c.h.b16 %v1411
        %v4871 = vunpack.c.l.b16 %v1412
        %v4872 = vunpack.c.l.b16 %v1413
        %v4873 = vunpack.c.h.b16 %v1413
        %v4874 = vunpack.c.l.b16 %v1414
        %v4875 = vunpack.c.l.b16 %v1415
        %v4876 = vunpack.c.h.b16 %v1415
        %v4877 = vunpack.c.l.b16 %v1416
        %v4878 = vunpack.c.l.b16 %v1417
        %v4879 = vunpack.c.h.b16 %v1417
        %v4880 = vunpack.c.l.b16 %v1418
        %v4881 = vunpack.c.l.b16 %v1419
        %v4882 = vunpack.c.h.b16 %v1419
        %v4883 = vunpack.c.l.b16 %v1420
        %v4884 = vunpack.c.l.b16 %v1421
        %v4885 = vunpack.c.h.b16 %v1421
        %v4886 = vunpack.c.l.b16 %v1422
        %v4887 = vunpack.c.l.b16 %v1423
        %v4888 = vunpack.c.h.b16 %v1423
        %v4889 = vunpack.c.l.b16 %v1424
        %v4890 = vunpack.c.l.b16 %v1425
        %v4891 = vunpack.c.h.b16 %v1425
        %v4892 = vunpack.c.l.b16 %v1426
        %v4893 = vunpack.c.l.b16 %v1427
        %v4894 = vunpack.c.h.b16 %v1427
        %v4895 = vunpack.c.l.b16 %v1428
        %v4896 = vunpack.c.l.b16 %v1429
        %v4897 = vunpack.c.h.b16 %v1429
        %v4898 = vunpack.c.l.b16 %v1430
        %v4899 = vunpack.c.l.b16 %v1431
        %v4900 = vunpack.c.h.b16 %v1431
        %v4901 = vunpack.c.l.b16 %v1432
        %v4902 = vunpack.c.l.b16 %v1433
        %v4903 = vunpack.c.h.b16 %v1433
        %v4904 = vunpack.c.l.b16 %v1434
        %v4905 = vunpack.c.l.b16 %v1435
        %v4906 = vunpack.c.h.b16 %v1435
        %v4907 = vunpack.c.l.b16 %v1436
        %v4908 = vunpack.c.l.b16 %v1437
        %v4909 = vunpack.c.h.b16 %v1437
        %v4910 = vunpack.c.l.b16 %v1438
        %v4911 = vunpack.c.l.b16 %v1439
        %v4912 = vunpack.c.h.b16 %v1439
        %v4913 = vunpack.c.l.b16 %v1440
        %v4914 = vunpack.c.l.b16 %v1441
        %v4915 = vunpack.c.h.b16 %v1441
        %v4916 = vunpack.c.l.b16 %v1442
        %v4917 = vunpack.c.l.b16 %v1443
        %v4918 = vunpack.c.h.b16 %v1443
        %v4919 = vunpack.c.l.b16 %v1444
        %v4920 = vunpack.c.l.b16 %v1445
        %v4921 = vunpack.c.h.b16 %v1445
        %v4922 = vunpack.c.l.b16 %v1446
        %v4923 = vunpack.c.l.b16 %v1447
        %v4924 = vunpack.c.h.b16 %v1447
        %v4925 = vunpack.c.l.b16 %v1448
        %v4926 = vunpack.c.l.b16 %v1449
        %v4927 = vunpack.c.h.b16 %v1449
        %v4928 = vunpack.c.l.b16 %v1450
        %v4929 = vunpack.c.l.b16 %v1451
        %v4930 = vunpack.c.h.b16 %v1451
        %v4931 = vunpack.c.l.b16 %v1452
        %v4932 = vunpack.c.l.b16 %v1453
        %v4933 = vunpack.c.h.b16 %v1453
        %v4934 = vunpack.c.l.b16 %v1454
        %v4935 = vunpack.c.l.b16 %v1455
        %v4936 = vunpack.c.h.b16 %v1455
        %v4937 = vunpack.c.l.b16 %v1456
        %v4938 = vunpack.c.l.b16 %v1457
        %v4939 = vunpack.c.h.b16 %v1457
        %v4940 = vunpack.c.l.b16 %v1458
        %v4941 = vunpack.c.l.b16 %v1459
        %v4942 = vunpack.c.h.b16 %v1459
        %v4943 = vunpack.c.l.b16 %v1460
        %v4944 = vunpack.c.l.b16 %v1461
        %v4945 = vunpack.c.h.b16 %v1461
        %v4946 = vunpack.c.l.b16 %v1462
        %v4947 = vunpack.c.l.b16 %v1463
        %v4948 = vunpack.c.h.b16 %v1463
        %v4949 = vunpack.c.l.b16 %v1464
        %v4950 = vunpack.c.l.b16 %v1465
        %v4951 = vunpack.c.h.b16 %v1465
        %v4952 = vunpack.c.l.b16 %v1466
        %v4953 = vunpack.c.l.b16 %v1467
        %v4954 = vunpack.c.h.b16 %v1467
        %v4955 = vunpack.c.l.b16 %v1468
        %v4956 = vunpack.c.l.b16 %v1469
        %v4957 = vunpack.c.h.b16 %v1469
        %v4958 = vunpack.c.l.b16 %v1470
        %v4959 = vunpack.c.l.b16 %v1471
        %v4960 = vunpack.c.h.b16 %v1471
        %v4961 = vunpack.c.l.b16 %v1472
        %v4962 = vunpack.c.l.b16 %v1473
        %v4963 = vunpack.c.h.b16 %v1473
        %v4964 = vunpack.c.l.b16 %v1474
        %v4965 = vunpack.c.l.b16 %v1475
        %v4966 = vunpack.c.h.b16 %v1475
        %v4967 = vunpack.c.l.b16 %v1476
        %v4968 = vunpack.c.l.b16 %v1477
        %v4969 = vunpack.c.h.b16 %v1477
        %v4970 = vunpack.c.l.b16 %v1478
        %v4971 = vunpack.c.l.b16 %v1479
        %v4972 = vunpack.c.h.b16 %v1479
        %v4973 = vunpack.c.l.b16 %v1480
        %v4974 = vunpack.c.l.b16 %v1481
        %v4975 = vunpack.c.h.b16 %v1481
        %v4976 = vunpack.c.l.b16 %v1482
        %v4977 = vunpack.c.l.b16 %v1483
        %v4978 = vunpack.c.h.b16 %v1483
        %v4979 = vunpack.c.l.b16 %v1484
        %v4980 = vunpack.c.l.b16 %v1485
        %v4981 = vunpack.c.h.b16 %v1485
        %v4982 = vunpack.c.l.b16 %v1486
        %v4983 = vunpack.c.l.b16 %v1487
        %v4984 = vunpack.c.h.b16 %v1487
        %v4985 = vunpack.c.l.b16 %v1488
        %v4986 = vunpack.c.l.b16 %v1489
        %v4987 = vunpack.c.h.b16 %v1489
        %v4988 = vunpack.c.l.b16 %v1490
        %v4989 = vunpack.c.l.b16 %v1491
        %v4990 = vunpack.c.h.b16 %v1491
        %v4991 = vunpack.c.l.b16 %v1492
        %v4992 = vunpack.c.l.b16 %v1493
        %v4993 = vunpack.c.h.b16 %v1493
        %v4994 = vunpack.c.l.b16 %v1494
        %v4995 = vunpack.c.l.b16 %v1495
        %v4996 = vunpack.c.h.b16 %v1495
        %v4997 = vunpack.c.l.b16 %v1496
        %v4998 = vunpack.c.l.b16 %v1497
        %v4999 = vunpack.c.h.b16 %v1497
        %v5000 = vunpack.c.l.b16 %v1498
        %v5001 = vunpack.c.l.b16 %v1499
        %v5002 = vunpack.c.h.b16 %v1499
        %v5003 = vunpack.c.l.b16 %v1500
        %v5004 = vunpack.c.l.b16 %v1501
        %v5005 = vunpack.c.h.b16 %v1501
        %v5006 = vunpack.c.l.b16 %v1502
        %v5007 = vunpack.c.l.b16 %v1503
        %v5008 = vunpack.c.h.b16 %v1503
        %v5009 = vunpack.c.l.b16 %v1504
        %v5010 = vunpack.c.l.b16 %v1505
        %v5011 = vunpack.c.h.b16 %v1505
        %v5012 = vunpack.c.l.b16 %v1506
        %v5013 = vunpack.c.l.b16 %v1507
        %v5014 = vunpack.c.h.b16 %v1507
        %v5015 = vunpack.c.l.b16 %v1508
        %v5016 = vunpack.c.l.b16 %v1509
        %v5017 = vunpack.c.h.b16 %v1509
        %v5018 = vunpack.c.l.b16 %v1510
        %v5019 = vunpack.c.l.b16 %v1511
        %v5020 = vunpack.c.h.b16 %v1511
        %v5021 = vunpack.c.l.b16 %v1512
        %v5022 = vunpack.c.l.b16 %v1513
        %v5023 = vunpack.c.h.b16 %v1513
        %v5024 = vunpack.c.l.b16 %v1514
        %v5025 = vunpack.c.l.b16 %v1515
        %v5026 = vunpack.c.h.b16 %v1515
        %v5027 = vunpack.c.l.b16 %v1516
        %v5028 = vunpack.c.l.b16 %v1517
        %v5029 = vunpack.c.h.b16 %v1517
        %v5030 = vunpack.c.l.b16 %v1518
        %v5031 = vunpack.c.l.b16 %v1519
        %v5032 = vunpack.c.h.b16 %v1519
        %v5033 = vunpack.c.l.b16 %v1520
        %v5034 = vunpack.c.l.b16 %v1521
        %v5035 = vunpack.c.h.b16 %v1521
        %v5036 = vunpack.c.l.b16 %v1522
        %v5037 = vunpack.c.l.b16 %v1523
        %v5038 = vunpack.c.h.b16 %v1523
        %v5039 = vunpack.c.l.b16 %v1524
        %v5040 = vunpack.c.l.b16 %v1525
        %v5041 = vunpack.c.h.b16 %v1525
        %v5042 = vunpack.c.l.b16 %v1526
        %v5043 = vunpack.c.l.b16 %v1527
        %v5044 = vunpack.c.h.b16 %v1527
        %v5045 = vunpack.c.l.b16 %v1528
        %v5046 = vunpack.c.l.b16 %v1529
        %v5047 = vunpack.c.h.b16 %v1529
        %v5048 = vunpack.c.l.b16 %v1530
        %v5049 = vunpack.c.l.b16 %v1531
        %v5050 = vunpack.c.h.b16 %v1531
        %v5051 = vunpack.c.l.b16 %v1532
        %v5052 = vunpack.c.l.b16 %v1533
        %v5053 = vunpack.c.h.b16 %v1533
        %v5054 = vunpack.c.l.b16 %v1534
        %v5055 = vunpack.c.l.b16 %v1535
        %v5056 = vunpack.c.h.b16 %v1535
        %v5057 = vunpack.c.l.b16 %v1536
        %v5058 = vunpack.c.l.b16 %v1537
        %v5059 = vunpack.c.h.b16 %v1537
        %v5060 = vunpack.c.l.b16 %v1538
        %v5061 = vunpack.c.l.b16 %v1539
        %v5062 = vunpack.c.h.b16 %v1539
        %v5063 = vunpack.c.l.b16 %v1540
        %v5064 = vunpack.c.l.b16 %v1541
        %v5065 = vunpack.c.h.b16 %v1541
        %v5066 = vunpack.c.l.b16 %v1542
        %v5067 = vunpack.c.l.b16 %v1543
        %v5068 = vunpack.c.h.b16 %v1543
        %v5069 = vunpack.c.l.b16 %v1544
        %v5070 = vunpack.c.l.b16 %v1545
        %v5071 = vunpack.c.h.b16 %v1545
        %v5072 = vunpack.c.l.b16 %v1546
        %v5073 = vunpack.c.l.b16 %v1547
        %v5074 = vunpack.c.h.b16 %v1547
        %v5075 = vunpack.c.l.b16 %v1548
        %v5076 = vunpack.c.l.b16 %v1549
        %v5077 = vunpack.c.h.b16 %v1549
        %v5078 = vunpack.c.l.b16 %v1550
        %v5079 = vunpack.c.l.b16 %v1551
        %v5080 = vunpack.c.h.b16 %v1551
        %v5081 = vunpack.c.l.b16 %v1552
        %v5082 = vunpack.c.l.b16 %v1553
        %v5083 = vunpack.c.h.b16 %v1553
        %v5084 = vunpack.c.l.b16 %v1554
        %v5085 = vunpack.c.l.b16 %v1555
        %v5086 = vunpack.c.h.b16 %v1555
        %v5087 = vunpack.c.l.b16 %v1556
        %v5088 = vunpack.c.l.b16 %v1557
        %v5089 = vunpack.c.h.b16 %v1557
        %v5090 = vunpack.c.l.b16 %v1558
        %v5091 = vunpack.c.l.b16 %v1559
        %v5092 = vunpack.c.h.b16 %v1559
        %v5093 = vunpack.c.l.b16 %v1560
        %v5094 = vunpack.c.l.b16 %v1561
        %v5095 = vunpack.c.h.b16 %v1561
        %v5096 = vunpack.c.l.b16 %v1562
        %v5097 = vunpack.c.l.b16 %v1563
        %v5098 = vunpack.c.h.b16 %v1563
        %v5099 = vunpack.c.l.b16 %v1564
        %v5100 = vunpack.c.l.b16 %v1565
        %v5101 = vunpack.c.h.b16 %v1565
        %v5102 = vunpack.c.l.b16 %v1566
        %v5103 = vunpack.c.l.b16 %v1567
        %v5104 = vunpack.c.h.b16 %v1567
        %v5105 = vunpack.c.l.b16 %v1568
        %v5106 = vunpack.c.l.b16 %v1569
        %v5107 = vunpack.c.h.b16 %v1569
        %v5108 = vunpack.c.l.b16 %v1570
        %v5109 = vunpack.c.l.b16 %v1571
        %v5110 = vunpack.c.h.b16 %v1571
        %v5111 = vunpack.c.l.b16 %v1572
        %v5112 = vunpack.c.l.b16 %v1573
        %v5113 = vunpack.c.h.b16 %v1573
        %v5114 = vunpack.c.l.b16 %v1574
        %v5115 = vunpack.c.l.b16 %v1575
        %v5116 = vunpack.c.h.b16 %v1575
        %v5117 = vunpack.c.l.b16 %v1576
        %v5118 = vunpack.c.l.b16 %v1577
        %v5119 = vunpack.c.h.b16 %v1577
        %v5120 = vunpack.c.l.b16 %v1578
        %v5121 = vunpack.c.l.b16 %v1579
        %v5122 = vunpack.c.h.b16 %v1579
        %v5123 = vunpack.c.l.b16 %v1580
        %v5124 = vunpack.c.l.b16 %v1581
        %v5125 = vunpack.c.h.b16 %v1581
        %v5126 = vunpack.c.l.b16 %v1582
        %v5127 = vunpack.c.l.b16 %v1583
        %v5128 = vunpack.c.h.b16 %v1583
        %v5129 = vunpack.c.l.b16 %v1584
        %v5130 = vunpack.c.l.b16 %v1585
        %v5131 = vunpack.c.h.b16 %v1585
        %v5132 = vunpack.c.l.b16 %v1586
        %v5133 = vunpack.c.l.b16 %v1587
        %v5134 = vunpack.c.h.b16 %v1587
        %v5135 = vunpack.c.l.b16 %v1588
        %v5136 = vunpack.c.l.b16 %v1589
        %v5137 = vunpack.c.h.b16 %v1589
        %v5138 = vunpack.c.l.b16 %v1590
        %v5139 = vunpack.c.l.b16 %v1591
        %v5140 = vunpack.c.h.b16 %v1591
        %v5141 = vunpack.c.l.b16 %v1592
        %v5142 = vunpack.c.l.b16 %v1593
        %v5143 = vunpack.c.h.b16 %v1593
        %v5144 = vunpack.c.l.b16 %v1594
        %v5145 = vunpack.c.l.b16 %v1595
        %v5146 = vunpack.c.h.b16 %v1595
        %v5147 = vunpack.c.l.b16 %v1596
        %v5148 = vunpack.c.l.b16 %v1597
        %v5149 = vunpack.c.h.b16 %v1597
        %v5150 = vunpack.c.l.b16 %v1598
        %v5151 = vunpack.c.l.b16 %v1599
        %v5152 = vunpack.c.h.b16 %v1599
        %v5153 = vunpack.c.l.b16 %v1600
        %v5154 = vunpack.c.l.b16 %v1601
        %v5155 = vunpack.c.h.b16 %v1601
        %v5156 = vunpack.c.l.b16 %v1602
        %v5157 = vunpack.c.l.b16 %v1603
        %v5158 = vunpack.c.h.b16 %v1603
        %v5159 = vunpack.c.l.b16 %v1604
        %v5160 = vunpack.c.l.b16 %v1605
        %v5161 = vunpack.c.h.b16 %v1605
        %v5162 = vunpack.c.l.b16 %v1606
        %v5163 = vunpack.c.l.b16 %v1607
        %v5164 = vunpack.c.h.b16 %v1607
        %v5165 = vunpack.c.l.b16 %v1608
        %v5166 = vunpack.c.l.b16 %v1609
        %v5167 = vunpack.c.h.b16 %v1609
        %v5168 = vunpack.c.l.b16 %v1610
        %v5169 = vunpack.c.l.b16 %v1611
        %v5170 = vunpack.c.h.b16 %v1611
        %v5171 = vunpack.c.l.b16 %v1612
        %v5172 = vunpack.c.l.b16 %v1613
        %v5173 = vunpack.c.h.b16 %v1613
        %v5174 = vunpack.c.l.b16 %v1614
        %v5175 = vunpack.c.l.b16 %v1615
        %v5176 = vunpack.c.h.b16 %v1615
        %v5177 = vunpack.c.l.b16 %v1616
        %v5178 = vunpack.c.l.b16 %v1617
        %v5179 = vunpack.c.h.b16 %v1617
        %v5180 = vunpack.c.l.b16 %v1618
        %v5181 = vunpack.c.l.b16 %v1619
        %v5182 = vunpack.c.h.b16 %v1619
        %v5183 = vunpack.c.l.b16 %v1620
        %v5184 = vunpack.c.l.b16 %v1621
        %v5185 = vunpack.c.h.b16 %v1621
        %v5186 = vunpack.c.l.b16 %v1622
        %v5187 = vunpack.c.l.b16 %v1623
        %v5188 = vunpack.c.h.b16 %v1623
        %v5189 = vunpack.c.l.b16 %v1624
        %v5190 = vunpack.c.l.b16 %v1625
        %v5191 = vunpack.c.h.b16 %v1625
        %v5192 = vunpack.c.l.b16 %v1626
        %v5193 = vunpack.c.l.b16 %v1627
        %v5194 = vunpack.c.h.b16 %v1627
        %v5195 = vunpack.c.l.b16 %v1628
        %v5196 = vunpack.c.l.b16 %v1629
        %v5197 = vunpack.c.h.b16 %v1629
        %v5198 = vunpack.c.l.b16 %v1630
        %v5199 = vunpack.c.l.b16 %v1631
        %v5200 = vunpack.c.h.b16 %v1631
        %v5201 = vunpack.c.l.b16 %v1632
        %v5202 = vunpack.c.l.b16 %v1633
        %v5203 = vunpack.c.h.b16 %v1633
        %v5204 = vunpack.c.l.b16 %v1634
        %v5205 = vunpack.c.l.b16 %v1635
        %v5206 = vunpack.c.h.b16 %v1635
        %v5207 = vunpack.c.l.b16 %v1636
        %v5208 = vunpack.c.l.b16 %v1637
        %v5209 = vunpack.c.h.b16 %v1637
        %v5210 = vunpack.c.l.b16 %v1638
        %v5211 = vunpack.c.l.b16 %v1639
        %v5212 = vunpack.c.h.b16 %v1639
        %v5213 = vunpack.c.l.b16 %v1640
        %v5214 = vunpack.c.l.b16 %v1641
        %v5215 = vunpack.c.h.b16 %v1641
        %v5216 = vunpack.c.l.b16 %v1642
        %v5217 = vunpack.c.l.b16 %v1643
        %v5218 = vunpack.c.h.b16 %v1643
        %v5219 = vunpack.c.l.b16 %v1644
        %v5220 = vunpack.c.l.b16 %v1645
        %v5221 = vunpack.c.h.b16 %v1645
        %v5222 = vunpack.c.l.b16 %v1646
        %v5223 = vunpack.c.l.b16 %v1647
        %v5224 = vunpack.c.h.b16 %v1647
        %v5225 = vunpack.c.l.b16 %v1648
        %v5226 = vunpack.c.l.b16 %v1649
        %v5227 = vunpack.c.h.b16 %v1649
        %v5228 = vunpack.c.l.b16 %v1650
        %v5229 = vunpack.c.l.b16 %v1651
        %v5230 = vunpack.c.h.b16 %v1651
        %v5231 = vunpack.c.l.b16 %v1652
        %v5232 = vunpack.c.l.b16 %v1653
        %v5233 = vunpack.c.h.b16 %v1653
        %v5234 = vunpack.c.l.b16 %v1654
        %v5235 = vunpack.c.l.b16 %v1655
        %v5236 = vunpack.c.h.b16 %v1655
        %v5237 = vunpack.c.l.b16 %v1656
        %v5238 = vunpack.c.l.b16 %v1657
        %v5239 = vunpack.c.h.b16 %v1657
        %v5240 = vunpack.c.l.b16 %v1658
        %v5241 = vunpack.c.l.b16 %v1659
        %v5242 = vunpack.c.h.b16 %v1659
        %v5243 = vunpack.c.l.b16 %v1660
        %v5244 = vunpack.c.l.b16 %v1661
        %v5245 = vunpack.c.h.b16 %v1661
        %v5246 = vunpack.c.l.b16 %v1662
        %v5247 = vunpack.c.l.b16 %v1663
        %v5248 = vunpack.c.h.b16 %v1663
        %v5249 = vunpack.c.l.b16 %v1664
        %v5250 = vunpack.c.l.b16 %v1665
        %v5251 = vunpack.c.h.b16 %v1665
        %v5252 = vunpack.c.l.b16 %v1666
        %v5253 = vunpack.c.l.b16 %v1667
        %v5254 = vunpack.c.h.b16 %v1667
        %v5255 = vunpack.c.l.b16 %v1668
        %v5256 = vunpack.c.l.b16 %v1669
        %v5257 = vunpack.c.h.b16 %v1669
        %v5258 = vunpack.c.l.b16 %v1670
        %v5259 = vunpack.c.l.b16 %v1671
        %v5260 = vunpack.c.h.b16 %v1671
        %v5261 = vunpack.c.l.b16 %v1672
        %v5262 = vunpack.c.l.b16 %v1673
        %v5263 = vunpack.c.h.b16 %v1673
        %v5264 = vunpack.c.l.b16 %v1674
        %v5265 = vunpack.c.l.b16 %v1675
        %v5266 = vunpack.c.h.b16 %v1675
        %v5267 = vunpack.c.l.b16 %v1676
        %v5268 = vunpack.c.l.b16 %v1677
        %v5269 = vunpack.c.h.b16 %v1677
        %v5270 = vunpack.c.l.b16 %v1678
        %v5271 = vunpack.c.l.b16 %v1679
        %v5272 = vunpack.c.h.b16 %v1679
        %v5273 = vunpack.c.l.b16 %v1680
        %v5274 = vunpack.c.l.b16 %v1681
        %v5275 = vunpack.c.h.b16 %v1681
        %v5276 = vunpack.c.l.b16 %v1682
        %v5277 = vunpack.c.l.b16 %v1683
        %v5278 = vunpack.c.h.b16 %v1683
        %v5279 = vunpack.c.l.b16 %v1684
        %v5280 = vunpack.c.l.b16 %v1685
        %v5281 = vunpack.c.h.b16 %v1685
        %v5282 = vunpack.c.l.b16 %v1686
        %v5283 = vunpack.c.l.b16 %v1687
        %v5284 = vunpack.c.h.b16 %v1687
        %v5285 = vunpack.c.l.b16 %v1688
        %v5286 = vunpack.c.l.b16 %v1689
        %v5287 = vunpack.c.h.b16 %v1689
        %v5288 = vunpack.c.l.b16 %v1690
        %v5289 = vunpack.c.l.b16 %v1691
        %v5290 = vunpack.c.h.b16 %v1691
        %v5291 = vunpack.c.l.b16 %v1692
        %v5292 = vunpack.c.l.b16 %v1693
        %v5293 = vunpack.c.h.b16 %v1693
        %v5294 = vunpack.c.l.b16 %v1694
        %v5295 = vunpack.c.l.b16 %v1695
        %v5296 = vunpack.c.h.b16 %v1695
        %v5297 = vunpack.c.l.b16 %v1696
        %v5298 = vunpack.c.l.b16 %v1697
        %v5299 = vunpack.c.h.b16 %v1697
        %v5300 = vunpack.c.l.b16 %v1698
        %v5301 = vunpack.c.l.b16 %v1699
        %v5302 = vunpack.c.h.b16 %v1699
        %v5303 = vunpack.c.l.b16 %v1700
        %v5304 = vunpack.c.l.b16 %v1701
        %v5305 = vunpack.c.h.b16 %v1701
        %v5306 = vunpack.c.l.b16 %v1702
        %v5307 = vunpack.c.l.b16 %v1703
        %v5308 = vunpack.c.h.b16 %v1703
        %v5309 = vunpack.c.l.b16 %v1704
        %v5310 = vunpack.c.l.b16 %v1705
        %v5311 = vunpack.c.h.b16 %v1705
        %v5312 = vunpack.c.l.b16 %v1706
        %v5313 = vunpack.c.l.b16 %v1707
        %v5314 = vunpack.c.h.b16 %v1707
        %v5315 = vunpack.c.l.b16 %v1708
        %v5316 = vunpack.c.l.b16 %v1709
        %v5317 = vunpack.c.h.b16 %v1709
        %v5318 = vunpack.c.l.b16 %v1710
        %v5319 = vunpack.c.l.b16 %v1711
        %v5320 = vunpack.c.h.b16 %v1711
        %v5321 = vunpack.c.l.b16 %v1712
        %v5322 = vunpack.c.l.b16 %v1713
        %v5323 = vunpack.c.h.b16 %v1713
        %v5324 = vunpack.c.l.b16 %v1714
        %v5325 = vunpack.c.l.b16 %v1715
        %v5326 = vunpack.c.h.b16 %v1715
        %v5327 = vunpack.c.l.b16 %v1716
        %v5328 = vunpack.c.l.b16 %v1717
        %v5329 = vunpack.c.h.b16 %v1717
        %v5330 = vunpack.c.l.b16 %v1718
        %v5331 = vunpack.c.l.b16 %v1719
        %v5332 = vunpack.c.h.b16 %v1719
        %v5333 = vunpack.c.l.b16 %v1720
        %v5334 = vunpack.c.l.b16 %v1721
        %v5335 = vunpack.c.h.b16 %v1721
        %v5336 = vunpack.c.l.b16 %v1722
        %v5337 = vunpack.c.l.b16 %v1723
        %v5338 = vunpack.c.h.b16 %v1723
        %v5339 = vunpack.c.l.b16 %v1724
        %v5340 = vunpack.c.l.b16 %v1725
        %v5341 = vunpack.c.h.b16 %v1725
        %v5342 = vunpack.c.l.b16 %v1726
        %v5343 = vunpack.c.l.b16 %v1727
        %v5344 = vunpack.c.h.b16 %v1727
        %v5345 = vunpack.c.l.b16 %v1728
        %v5346 = vunpack.c.l.b16 %v1729
        %v5347 = vunpack.c.h.b16 %v1729
        %v5348 = vunpack.c.l.b16 %v1730
        %v5349 = vunpack.c.l.b16 %v1731
        %v5350 = vunpack.c.h.b16 %v1731
        %v5351 = vunpack.c.l.b16 %v1732
        %v5352 = vunpack.c.l.b16 %v1733
        %v5353 = vunpack.c.h.b16 %v1733
        %v5354 = vunpack.c.l.b16 %v1734
        %v5355 = vpack.c.b16 %v3186, %v3183
        %v5356 = vpack.c.b16 %v3187, %v3184
        %v5357 = vpack.c.b16 %v3188, %v3185
        %v5358 = vpack.c.b16 %v3192, %v3189
        %v5359 = vpack.c.b16 %v3193, %v3190
        %v5360 = vpack.c.b16 %v3194, %v3191
        %v5361 = vpack.c.b16 %v3198, %v3195
        %v5362 = vpack.c.b16 %v3199, %v3196
        %v5363 = vpack.c.b16 %v3200, %v3197
        %v5364 = vpack.c.b16 %v3204, %v3201
        %v5365 = vpack.c.b16 %v3205, %v3202
        %v5366 = vpack.c.b16 %v3206, %v3203
        %v5367 = vpack.c.b16 %v3210, %v3207
        %v5368 = vpack.c.b16 %v3211, %v3208
        %v5369 = vpack.c.b16 %v3212, %v3209
        %v5370 = vpack.c.b16 %v3216, %v3213
        %v5371 = vpack.c.b16 %v3217, %v3214
        %v5372 = vpack.c.b16 %v3218, %v3215
        %v5373 = vpack.c.b16 %v3222, %v3219
        %v5374 = vpack.c.b16 %v3223, %v3220
        %v5375 = vpack.c.b16 %v3224, %v3221
        %v5376 = vpack.c.b16 %v3228, %v3225
        %v5377 = vpack.c.b16 %v3229, %v3226
        %v5378 = vpack.c.b16 %v3230, %v3227
        %v5379 = vpack.c.b16 %v3234, %v3231
        %v5380 = vpack.c.b16 %v3235, %v3232
        %v5381 = vpack.c.b16 %v3236, %v3233
        %v5382 = vpack.c.b16 %v3240, %v3237
        %v5383 = vpack.c.b16 %v3241, %v3238
        %v5384 = vpack.c.b16 %v3242, %v3239
        %v5385 = vpack.c.b16 %v3246, %v3243
        %v5386 = vpack.c.b16 %v3247, %v3244
        %v5387 = vpack.c.b16 %v3248, %v3245
        %v5388 = vpack.c.b16 %v3252, %v3249
        %v5389 = vpack.c.b16 %v3253, %v3250
        %v5390 = vpack.c.b16 %v3254, %v3251
        %v5391 = vpack.c.b16 %v3258, %v3255
        %v5392 = vpack.c.b16 %v3259, %v3256
        %v5393 = vpack.c.b16 %v3260, %v3257
        %v5394 = vpack.c.b16 %v3264, %v3261
        %v5395 = vpack.c.b16 %v3265, %v3262
        %v5396 = vpack.c.b16 %v3266, %v3263
        %v5397 = vpack.c.b16 %v3270, %v3267
        %v5398 = vpack.c.b16 %v3271, %v3268
        %v5399 = vpack.c.b16 %v3272, %v3269
        %v5400 = vpack.c.b16 %v3276, %v3273
        %v5401 = vpack.c.b16 %v3277, %v3274
        %v5402 = vpack.c.b16 %v3278, %v3275
        %v5403 = vpack.c.b16 %v3282, %v3279
        %v5404 = vpack.c.b16 %v3283, %v3280
        %v5405 = vpack.c.b16 %v3284, %v3281
        %v5406 = vpack.c.b16 %v3288, %v3285
        %v5407 = vpack.c.b16 %v3289, %v3286
        %v5408 = vpack.c.b16 %v3290, %v3287
        %v5409 = vpack.c.b16 %v3294, %v3291
        %v5410 = vpack.c.b16 %v3295, %v3292
        %v5411 = vpack.c.b16 %v3296, %v3293
        %v5412 = vpack.c.b16 %v3300, %v3297
        %v5413 = vpack.c.b16 %v3301, %v3298
        %v5414 = vpack.c.b16 %v3302, %v3299
        %v5415 = vpack.c.b16 %v3306, %v3303
        %v5416 = vpack.c.b16 %v3307, %v3304
        %v5417 = vpack.c.b16 %v3308, %v3305
        %v5418 = vpack.c.b16 %v3312, %v3309
        %v5419 = vpack.c.b16 %v3313, %v3310
        %v5420 = vpack.c.b16 %v3314, %v3311
        %v5421 = vpack.c.b16 %v3318, %v3315
        %v5422 = vpack.c.b16 %v3319, %v3316
        %v5423 = vpack.c.b16 %v3320, %v3317
        %v5424 = vpack.c.b16 %v3324, %v3321
        %v5425 = vpack.c.b16 %v3325, %v3322
        %v5426 = vpack.c.b16 %v3326, %v3323
        %v5427 = vpack.c.b16 %v3330, %v3327
        %v5428 = vpack.c.b16 %v3331, %v3328
        %v5429 = vpack.c.b16 %v3332, %v3329
        %v5430 = vpack.c.b16 %v3336, %v3333
        %v5431 = vpack.c.b16 %v3337, %v3334
        %v5432 = vpack.c.b16 %v3338, %v3335
        %v5433 = vpack.c.b16 %v3342, %v3339
        %v5434 = vpack.c.b16 %v3343, %v3340
        %v5435 = vpack.c.b16 %v3344, %v3341
        %v5436 = vpack.c.b16 %v3348, %v3345
        %v5437 = vpack.c.b16 %v3349, %v3346
        %v5438 = vpack.c.b16 %v3350, %v3347
        %v5439 = vpack.c.b16 %v3354, %v3351
        %v5440 = vpack.c.b16 %v3355, %v3352
        %v5441 = vpack.c.b16 %v3356, %v3353
        %v5442 = vpack.c.b16 %v3360, %v3357
        %v5443 = vpack.c.b16 %v3361, %v3358
        %v5444 = vpack.c.b16 %v3362, %v3359
        %v5445 = vpack.c.b16 %v3366, %v3363
        %v5446 = vpack.c.b16 %v3367, %v3364
        %v5447 = vpack.c.b16 %v3368, %v3365
        %v5448 = vpack.c.b16 %v3372, %v3369
        %v5449 = vpack.c.b16 %v3373, %v3370
        %v5450 = vpack.c.b16 %v3374, %v3371
        %v5451 = vpack.c.b16 %v3378, %v3375
        %v5452 = vpack.c.b16 %v3379, %v3376
        %v5453 = vpack.c.b16 %v3380, %v3377
        %v5454 = vpack.c.b16 %v3384, %v3381
        %v5455 = vpack.c.b16 %v3385, %v3382
        %v5456 = vpack.c.b16 %v3386, %v3383
        %v5457 = vpack.c.b16 %v3390, %v3387
        %v5458 = vpack.c.b16 %v3391, %v3388
        %v5459 = vpack.c.b16 %v3392, %v3389
        %v5460 = vpack.c.b16 %v3396, %v3393
        %v5461 = vpack.c.b16 %v3397, %v3394
        %v5462 = vpack.c.b16 %v3398, %v3395
        %v5463 = vpack.c.b16 %v3402, %v3399
        %v5464 = vpack.c.b16 %v3403, %v3400
        %v5465 = vpack.c.b16 %v3404, %v3401
        %v5466 = vpack.c.b16 %v3408, %v3405
        %v5467 = vpack.c.b16 %v3409, %v3406
        %v5468 = vpack.c.b16 %v3410, %v3407
        %v5469 = vpack.c.b16 %v3414, %v3411
        %v5470 = vpack.c.b16 %v3415, %v3412
        %v5471 = vpack.c.b16 %v3416, %v3413
        %v5472 = vpack.c.b16 %v3420, %v3417
        %v5473 = vpack.c.b16 %v3421, %v3418
        %v5474 = vpack.c.b16 %v3422, %v3419
        %v5475 = vpack.c.b16 %v3426, %v3423
        %v5476 = vpack.c.b16 %v3427, %v3424
        %v5477 = vpack.c.b16 %v3428, %v3425
        %v5478 = vpack.c.b16 %v3432, %v3429
        %v5479 = vpack.c.b16 %v3433, %v3430
        %v5480 = vpack.c.b16 %v3434, %v3431
        %v5481 = vpack.c.b16 %v3438, %v3435
        %v5482 = vpack.c.b16 %v3439, %v3436
        %v5483 = vpack.c.b16 %v3440, %v3437
        %v5484 = vpack.c.b16 %v3444, %v3441
        %v5485 = vpack.c.b16 %v3445, %v3442
        %v5486 = vpack.c.b16 %v3446, %v3443
        %v5487 = vpack.c.b16 %v3450, %v3447
        %v5488 = vpack.c.b16 %v3451, %v3448
        %v5489 = vpack.c.b16 %v3452, %v3449
        %v5490 = vpack.c.b16 %v3456, %v3453
        %v5491 = vpack.c.b16 %v3457, %v3454
        %v5492 = vpack.c.b16 %v3458, %v3455
        %v5493 = vpack.c.b16 %v3462, %v3459
        %v5494 = vpack.c.b16 %v3463, %v3460
        %v5495 = vpack.c.b16 %v3464, %v3461
        %v5496 = vpack.c.b16 %v3468, %v3465
        %v5497 = vpack.c.b16 %v3469, %v3466
        %v5498 = vpack.c.b16 %v3470, %v3467
        %v5499 = vpack.c.b16 %v3474, %v3471
        %v5500 = vpack.c.b16 %v3475, %v3472
        %v5501 = vpack.c.b16 %v3476, %v3473
        %v5502 = vpack.c.b16 %v3480, %v3477
        %v5503 = vpack.c.b16 %v3481, %v3478
        %v5504 = vpack.c.b16 %v3482, %v3479
        %v5505 = vpack.c.b16 %v3486, %v3483
        %v5506 = vpack.c.b16 %v3487, %v3484
        %v5507 = vpack.c.b16 %v3488, %v3485
        %v5508 = vpack.c.b16 %v3492, %v3489
        %v5509 = vpack.c.b16 %v3493, %v3490
        %v5510 = vpack.c.b16 %v3494, %v3491
        %v5511 = vpack.c.b16 %v3498, %v3495
        %v5512 = vpack.c.b16 %v3499, %v3496
        %v5513 = vpack.c.b16 %v3500, %v3497
        %v5514 = vpack.c.b16 %v3504, %v3501
        %v5515 = vpack.c.b16 %v3505, %v3502
        %v5516 = vpack.c.b16 %v3506, %v3503
        %v5517 = vpack.c.b16 %v3510, %v3507
        %v5518 = vpack.c.b16 %v3511, %v3508
        %v5519 = vpack.c.b16 %v3512, %v3509
        %v5520 = vpack.c.b16 %v3516, %v3513
        %v5521 = vpack.c.b16 %v3517, %v3514
        %v5522 = vpack.c.b16 %v3518, %v3515
        %v5523 = vpack.c.b16 %v3522, %v3519
        %v5524 = vpack.c.b16 %v3523, %v3520
        %v5525 = vpack.c.b16 %v3524, %v3521
        %v5526 = vpack.c.b16 %v3528, %v3525
        %v5527 = vpack.c.b16 %v3529, %v3526
        %v5528 = vpack.c.b16 %v3530, %v3527
        %v5529 = vpack.c.b16 %v3534, %v3531
        %v5530 = vpack.c.b16 %v3535, %v3532
        %v5531 = vpack.c.b16 %v3536, %v3533
        %v5532 = vpack.c.b16 %v3540, %v3537
        %v5533 = vpack.c.b16 %v3541, %v3538
        %v5534 = vpack.c.b16 %v3542, %v3539
        %v5535 = vpack.c.b16 %v3546, %v3543
        %v5536 = vpack.c.b16 %v3547, %v3544
        %v5537 = vpack.c.b16 %v3548, %v3545
        %v5538 = vpack.c.b16 %v3552, %v3549
        %v5539 = vpack.c.b16 %v3553, %v3550
        %v5540 = vpack.c.b16 %v3554, %v3551
        %v5541 = vpack.c.b16 %v3558, %v3555
        %v5542 = vpack.c.b16 %v3559, %v3556
        %v5543 = vpack.c.b16 %v3560, %v3557
        %v5544 = vpack.c.b16 %v3564, %v3561
        %v5545 = vpack.c.b16 %v3565, %v3562
        %v5546 = vpack.c.b16 %v3566, %v3563
        %v5547 = vpack.c.b16 %v3570, %v3567
        %v5548 = vpack.c.b16 %v3571, %v3568
        %v5549 = vpack.c.b16 %v3572, %v3569
        %v5550 = vpack.c.b16 %v3576, %v3573
        %v5551 = vpack.c.b16 %v3577, %v3574
        %v5552 = vpack.c.b16 %v3578, %v3575
        %v5553 = vpack.c.b16 %v3582, %v3579
        %v5554 = vpack.c.b16 %v3583, %v3580
        %v5555 = vpack.c.b16 %v3584, %v3581
        %v5556 = vpack.c.b16 %v3588, %v3585
        %v5557 = vpack.c.b16 %v3589, %v3586
        %v5558 = vpack.c.b16 %v3590, %v3587
        %v5559 = vpack.c.b16 %v3594, %v3591
        %v5560 = vpack.c.b16 %v3595, %v3592
        %v5561 = vpack.c.b16 %v3596, %v3593
        %v5562 = vpack.c.b16 %v3600, %v3597
        %v5563 = vpack.c.b16 %v3601, %v3598
        %v5564 = vpack.c.b16 %v3602, %v3599
        %v5565 = vpack.c.b16 %v3606, %v3603
        %v5566 = vpack.c.b16 %v3607, %v3604
        %v5567 = vpack.c.b16 %v3608, %v3605
        %v5568 = vpack.c.b16 %v3612, %v3609
        %v5569 = vpack.c.b16 %v3613, %v3610
        %v5570 = vpack.c.b16 %v3614, %v3611
        %v5571 = vpack.c.b16 %v3618, %v3615
        %v5572 = vpack.c.b16 %v3619, %v3616
        %v5573 = vpack.c.b16 %v3620, %v3617
        %v5574 = vpack.c.b16 %v3624, %v3621
        %v5575 = vpack.c.b16 %v3625, %v3622
        %v5576 = vpack.c.b16 %v3626, %v3623
        %v5577 = vpack.c.b16 %v3630, %v3627
        %v5578 = vpack.c.b16 %v3631, %v3628
        %v5579 = vpack.c.b16 %v3632, %v3629
        %v5580 = vpack.c.b16 %v3636, %v3633
        %v5581 = vpack.c.b16 %v3637, %v3634
        %v5582 = vpack.c.b16 %v3638, %v3635
        %v5583 = vpack.c.b16 %v3642, %v3639
        %v5584 = vpack.c.b16 %v3643, %v3640
        %v5585 = vpack.c.b16 %v3644, %v3641
        %v5586 = vpack.c.b16 %v3648, %v3645
        %v5587 = vpack.c.b16 %v3649, %v3646
        %v5588 = vpack.c.b16 %v3650, %v3647
        %v5589 = vpack.c.b16 %v3654, %v3651
        %v5590 = vpack.c.b16 %v3655, %v3652
        %v5591 = vpack.c.b16 %v3656, %v3653
        %v5592 = vpack.c.b16 %v3660, %v3657
        %v5593 = vpack.c.b16 %v3661, %v3658
        %v5594 = vpack.c.b16 %v3662, %v3659
        %v5595 = vpack.c.b16 %v3666, %v3663
        %v5596 = vpack.c.b16 %v3667, %v3664
        %v5597 = vpack.c.b16 %v3668, %v3665
        %v5598 = vpack.c.b16 %v3672, %v3669
        %v5599 = vpack.c.b16 %v3673, %v3670
        %v5600 = vpack.c.b16 %v3674, %v3671
        %v5601 = vpack.c.b16 %v3678, %v3675
        %v5602 = vpack.c.b16 %v3679, %v3676
        %v5603 = vpack.c.b16 %v3680, %v3677
        %v5604 = vpack.c.b16 %v3684, %v3681
        %v5605 = vpack.c.b16 %v3685, %v3682
        %v5606 = vpack.c.b16 %v3686, %v3683
        %v5607 = vpack.c.b16 %v3690, %v3687
        %v5608 = vpack.c.b16 %v3691, %v3688
        %v5609 = vpack.c.b16 %v3692, %v3689
        %v5610 = vpack.c.b16 %v3696, %v3693
        %v5611 = vpack.c.b16 %v3697, %v3694
        %v5612 = vpack.c.b16 %v3698, %v3695
        %v5613 = vpack.c.b16 %v3702, %v3699
        %v5614 = vpack.c.b16 %v3703, %v3700
        %v5615 = vpack.c.b16 %v3704, %v3701
        %v5616 = vpack.c.b16 %v3708, %v3705
        %v5617 = vpack.c.b16 %v3709, %v3706
        %v5618 = vpack.c.b16 %v3710, %v3707
        %v5619 = vpack.c.b16 %v3714, %v3711
        %v5620 = vpack.c.b16 %v3715, %v3712
        %v5621 = vpack.c.b16 %v3716, %v3713
        %v5622 = vpack.c.b16 %v3720, %v3717
        %v5623 = vpack.c.b16 %v3721, %v3718
        %v5624 = vpack.c.b16 %v3722, %v3719
        %v5625 = vpack.c.b16 %v3726, %v3723
        %v5626 = vpack.c.b16 %v3727, %v3724
        %v5627 = vpack.c.b16 %v3728, %v3725
        %v5628 = vpack.c.b16 %v3732, %v3729
        %v5629 = vpack.c.b16 %v3733, %v3730
        %v5630 = vpack.c.b16 %v3734, %v3731
        %v5631 = vpack.c.b16 %v3738, %v3735
        %v5632 = vpack.c.b16 %v3739, %v3736
        %v5633 = vpack.c.b16 %v3740, %v3737
        %v5634 = vpack.c.b16 %v3744, %v3741
        %v5635 = vpack.c.b16 %v3745, %v3742
        %v5636 = vpack.c.b16 %v3746, %v3743
        %v5637 = vpack.c.b16 %v3750, %v3747
        %v5638 = vpack.c.b16 %v3751, %v3748
        %v5639 = vpack.c.b16 %v3752, %v3749
        %v5640 = vpack.c.b16 %v3756, %v3753
        %v5641 = vpack.c.b16 %v3757, %v3754
        %v5642 = vpack.c.b16 %v3758, %v3755
        %v5643 = vpack.c.b16 %v3762, %v3759
        %v5644 = vpack.c.b16 %v3763, %v3760
        %v5645 = vpack.c.b16 %v3764, %v3761
        %v5646 = vpack.c.b16 %v3768, %v3765
        %v5647 = vpack.c.b16 %v3769, %v3766
        %v5648 = vpack.c.b16 %v3770, %v3767
        %v5649 = vpack.c.b16 %v3774, %v3771
        %v5650 = vpack.c.b16 %v3775, %v3772
        %v5651 = vpack.c.b16 %v3776, %v3773
        %v5652 = vpack.c.b16 %v3780, %v3777
        %v5653 = vpack.c.b16 %v3781, %v3778
        %v5654 = vpack.c.b16 %v3782, %v3779
        %v5655 = vpack.c.b16 %v3786, %v3783
        %v5656 = vpack.c.b16 %v3787, %v3784
        %v5657 = vpack.c.b16 %v3788, %v3785
        %v5658 = vpack.c.b16 %v3792, %v3789
        %v5659 = vpack.c.b16 %v3793, %v3790
        %v5660 = vpack.c.b16 %v3794, %v3791
        %v5661 = vpack.c.b16 %v3798, %v3795
        %v5662 = vpack.c.b16 %v3799, %v3796
        %v5663 = vpack.c.b16 %v3800, %v3797
        %v5664 = vpack.c.b16 %v3804, %v3801
        %v5665 = vpack.c.b16 %v3805, %v3802
        %v5666 = vpack.c.b16 %v3806, %v3803
        %v5667 = vpack.c.b16 %v3810, %v3807
        %v5668 = vpack.c.b16 %v3811, %v3808
        %v5669 = vpack.c.b16 %v3812, %v3809
        %v5670 = vpack.c.b16 %v3816, %v3813
        %v5671 = vpack.c.b16 %v3817, %v3814
        %v5672 = vpack.c.b16 %v3818, %v3815
        %v5673 = vpack.c.b16 %v3822, %v3819
        %v5674 = vpack.c.b16 %v3823, %v3820
        %v5675 = vpack.c.b16 %v3824, %v3821
        %v5676 = vpack.c.b16 %v3828, %v3825
        %v5677 = vpack.c.b16 %v3829, %v3826
        %v5678 = vpack.c.b16 %v3830, %v3827
        %v5679 = vpack.c.b16 %v3834, %v3831
        %v5680 = vpack.c.b16 %v3835, %v3832
        %v5681 = vpack.c.b16 %v3836, %v3833
        %v5682 = vpack.c.b16 %v3840, %v3837
        %v5683 = vpack.c.b16 %v3841, %v3838
        %v5684 = vpack.c.b16 %v3842, %v3839
        %v5685 = vpack.c.b16 %v3846, %v3843
        %v5686 = vpack.c.b16 %v3847, %v3844
        %v5687 = vpack.c.b16 %v3848, %v3845
        %v5688 = vpack.c.b16 %v3852, %v3849
        %v5689 = vpack.c.b16 %v3853, %v3850
        %v5690 = vpack.c.b16 %v3854, %v3851
        %v5691 = vpack.c.b16 %v3858, %v3855
        %v5692 = vpack.c.b16 %v3859, %v3856
        %v5693 = vpack.c.b16 %v3860, %v3857
        %v5694 = vpack.c.b16 %v3864, %v3861
        %v5695 = vpack.c.b16 %v3865, %v3862
        %v5696 = vpack.c.b16 %v3866, %v3863
        %v5697 = vpack.c.b16 %v3870, %v3867
        %v5698 = vpack.c.b16 %v3871, %v3868
        %v5699 = vpack.c.b16 %v3872, %v3869
        %v5700 = vpack.c.b16 %v3876, %v3873
        %v5701 = vpack.c.b16 %v3877, %v3874
        %v5702 = vpack.c.b16 %v3878, %v3875
        %v5703 = vpack.c.b16 %v3882, %v3879
        %v5704 = vpack.c.b16 %v3883, %v3880
        %v5705 = vpack.c.b16 %v3884, %v3881
        %v5706 = vpack.c.b16 %v3888, %v3885
        %v5707 = vpack.c.b16 %v3889, %v3886
        %v5708 = vpack.c.b16 %v3890, %v3887
        %v5709 = vpack.c.b16 %v3894, %v3891
        %v5710 = vpack.c.b16 %v3895, %v3892
        %v5711 = vpack.c.b16 %v3896, %v3893
        %v5712 = vpack.c.b16 %v3900, %v3897
        %v5713 = vpack.c.b16 %v3901, %v3898
        %v5714 = vpack.c.b16 %v3902, %v3899
        %v5715 = vpack.c.b16 %v3906, %v3903
        %v5716 = vpack.c.b16 %v3907, %v3904
        %v5717 = vpack.c.b16 %v3908, %v3905
        %v5718 = vpack.c.b16 %v3912, %v3909
        %v5719 = vpack.c.b16 %v3913, %v3910
        %v5720 = vpack.c.b16 %v3914, %v3911
        %v5721 = vpack.c.b16 %v3918, %v3915
        %v5722 = vpack.c.b16 %v3919, %v3916
        %v5723 = vpack.c.b16 %v3920, %v3917
        %v5724 = vpack.c.b16 %v3924, %v3921
        %v5725 = vpack.c.b16 %v3925, %v3922
        %v5726 = vpack.c.b16 %v3926, %v3923
        %v5727 = vpack.c.b16 %v3930, %v3927
        %v5728 = vpack.c.b16 %v3931, %v3928
        %v5729 = vpack.c.b16 %v3932, %v3929
        %v5730 = vpack.c.b16 %v3936, %v3933
        %v5731 = vpack.c.b16 %v3937, %v3934
        %v5732 = vpack.c.b16 %v3938, %v3935
        %v5733 = vpack.c.b16 %v3942, %v3939
        %v5734 = vpack.c.b16 %v3943, %v3940
        %v5735 = vpack.c.b16 %v3944, %v3941
        %v5736 = vpack.c.b16 %v3948, %v3945
        %v5737 = vpack.c.b16 %v3949, %v3946
        %v5738 = vpack.c.b16 %v3950, %v3947
        %v5739 = vpack.c.b16 %v3954, %v3951
        %v5740 = vpack.c.b16 %v3955, %v3952
        %v5741 = vpack.c.b16 %v3956, %v3953
        %v5742 = vpack.c.b16 %v3960, %v3957
        %v5743 = vpack.c.b16 %v3961, %v3958
        %v5744 = vpack.c.b16 %v3962, %v3959
        %v5745 = vpack.c.b16 %v3966, %v3963
        %v5746 = vpack.c.b16 %v3967, %v3964
        %v5747 = vpack.c.b16 %v3968, %v3965
        %v5748 = vpack.c.b16 %v3972, %v3969
        %v5749 = vpack.c.b16 %v3973, %v3970
        %v5750 = vpack.c.b16 %v3974, %v3971
        %v5751 = vpack.c.b16 %v3978, %v3975
        %v5752 = vpack.c.b16 %v3979, %v3976
        %v5753 = vpack.c.b16 %v3980, %v3977
        %v5754 = vpack.c.b16 %v3984, %v3981
        %v5755 = vpack.c.b16 %v3985, %v3982
        %v5756 = vpack.c.b16 %v3986, %v3983
        %v5757 = vpack.c.b16 %v3990, %v3987
        %v5758 = vpack.c.b16 %v3991, %v3988
        %v5759 = vpack.c.b16 %v3992, %v3989
        %v5760 = vpack.c.b16 %v3996, %v3993
        %v5761 = vpack.c.b16 %v3997, %v3994
        %v5762 = vpack.c.b16 %v3998, %v3995
        %v5763 = vpack.c.b16 %v4002, %v3999
        %v5764 = vpack.c.b16 %v4003, %v4000
        %v5765 = vpack.c.b16 %v4004, %v4001
        %v5766 = vpack.c.b16 %v4008, %v4005
        %v5767 = vpack.c.b16 %v4009, %v4006
        %v5768 = vpack.c.b16 %v4010, %v4007
        %v5769 = vpack.c.b16 %v4014, %v4011
        %v5770 = vpack.c.b16 %v4015, %v4012
        %v5771 = vpack.c.b16 %v4016, %v4013
        %v5772 = vpack.c.b16 %v4020, %v4017
        %v5773 = vpack.c.b16 %v4021, %v4018
        %v5774 = vpack.c.b16 %v4022, %v4019
        %v5775 = vpack.c.b16 %v4026, %v4023
        %v5776 = vpack.c.b16 %v4027, %v4024
        %v5777 = vpack.c.b16 %v4028, %v4025
        %v5778 = vpack.c.b16 %v4032, %v4029
        %v5779 = vpack.c.b16 %v4033, %v4030
        %v5780 = vpack.c.b16 %v4034, %v4031
        %v5781 = vpack.c.b16 %v4038, %v4035
        %v5782 = vpack.c.b16 %v4039, %v4036
        %v5783 = vpack.c.b16 %v4040, %v4037
        %v5784 = vpack.c.b16 %v4044, %v4041
        %v5785 = vpack.c.b16 %v4045, %v4042
        %v5786 = vpack.c.b16 %v4046, %v4043
        %v5787 = vpack.c.b16 %v4050, %v4047
        %v5788 = vpack.c.b16 %v4051, %v4048
        %v5789 = vpack.c.b16 %v4052, %v4049
        %v5790 = vpack.c.b16 %v4056, %v4053
        %v5791 = vpack.c.b16 %v4057, %v4054
        %v5792 = vpack.c.b16 %v4058, %v4055
        %v5793 = vpack.c.b16 %v4062, %v4059
        %v5794 = vpack.c.b16 %v4063, %v4060
        %v5795 = vpack.c.b16 %v4064, %v4061
        %v5796 = vpack.c.b16 %v4068, %v4065
        %v5797 = vpack.c.b16 %v4069, %v4066
        %v5798 = vpack.c.b16 %v4070, %v4067
        %v5799 = vpack.c.b16 %v4074, %v4071
        %v5800 = vpack.c.b16 %v4075, %v4072
        %v5801 = vpack.c.b16 %v4076, %v4073
        %v5802 = vpack.c.b16 %v4080, %v4077
        %v5803 = vpack.c.b16 %v4081, %v4078
        %v5804 = vpack.c.b16 %v4082, %v4079
        %v5805 = vpack.c.b16 %v4086, %v4083
        %v5806 = vpack.c.b16 %v4087, %v4084
        %v5807 = vpack.c.b16 %v4088, %v4085
        %v5808 = vpack.c.b16 %v4092, %v4089
        %v5809 = vpack.c.b16 %v4093, %v4090
        %v5810 = vpack.c.b16 %v4094, %v4091
        %v5811 = vpack.c.b16 %v4098, %v4095
        %v5812 = vpack.c.b16 %v4099, %v4096
        %v5813 = vpack.c.b16 %v4100, %v4097
        %v5814 = vpack.c.b16 %v4104, %v4101
        %v5815 = vpack.c.b16 %v4105, %v4102
        %v5816 = vpack.c.b16 %v4106, %v4103
        %v5817 = vpack.c.b16 %v4110, %v4107
        %v5818 = vpack.c.b16 %v4111, %v4108
        %v5819 = vpack.c.b16 %v4112, %v4109
        %v5820 = vpack.c.b16 %v4116, %v4113
        %v5821 = vpack.c.b16 %v4117, %v4114
        %v5822 = vpack.c.b16 %v4118, %v4115
        %v5823 = vpack.c.b16 %v4122, %v4119
        %v5824 = vpack.c.b16 %v4123, %v4120
        %v5825 = vpack.c.b16 %v4124, %v4121
        %v5826 = vpack.c.b16 %v4128, %v4125
        %v5827 = vpack.c.b16 %v4129, %v4126
        %v5828 = vpack.c.b16 %v4130, %v4127
        %v5829 = vpack.c.b16 %v4134, %v4131
        %v5830 = vpack.c.b16 %v4135, %v4132
        %v5831 = vpack.c.b16 %v4136, %v4133
        %v5832 = vpack.c.b16 %v4140, %v4137
        %v5833 = vpack.c.b16 %v4141, %v4138
        %v5834 = vpack.c.b16 %v4142, %v4139
        %v5835 = vpack.c.b16 %v4146, %v4143
        %v5836 = vpack.c.b16 %v4147, %v4144
        %v5837 = vpack.c.b16 %v4148, %v4145
        %v5838 = vpack.c.b16 %v4152, %v4149
        %v5839 = vpack.c.b16 %v4153, %v4150
        %v5840 = vpack.c.b16 %v4154, %v4151
        %v5841 = vpack.c.b16 %v4158, %v4155
        %v5842 = vpack.c.b16 %v4159, %v4156
        %v5843 = vpack.c.b16 %v4160, %v4157
        %v5844 = vpack.c.b16 %v4164, %v4161
        %v5845 = vpack.c.b16 %v4165, %v4162
        %v5846 = vpack.c.b16 %v4166, %v4163
        %v5847 = vpack.c.b16 %v4170, %v4167
        %v5848 = vpack.c.b16 %v4171, %v4168
        %v5849 = vpack.c.b16 %v4172, %v4169
        %v5850 = vpack.c.b16 %v4176, %v4173
        %v5851 = vpack.c.b16 %v4177, %v4174
        %v5852 = vpack.c.b16 %v4178, %v4175
        %v5853 = vpack.c.b16 %v4182, %v4179
        %v5854 = vpack.c.b16 %v4183, %v4180
        %v5855 = vpack.c.b16 %v4184, %v4181
        %v5856 = vpack.c.b16 %v4188, %v4185
        %v5857 = vpack.c.b16 %v4189, %v4186
        %v5858 = vpack.c.b16 %v4190, %v4187
        %v5859 = vpack.c.b16 %v4194, %v4191
        %v5860 = vpack.c.b16 %v4195, %v4192
        %v5861 = vpack.c.b16 %v4196, %v4193
        %v5862 = vpack.c.b16 %v4200, %v4197
        %v5863 = vpack.c.b16 %v4201, %v4198
        %v5864 = vpack.c.b16 %v4202, %v4199
        %v5865 = vpack.c.b16 %v4206, %v4203
        %v5866 = vpack.c.b16 %v4207, %v4204
        %v5867 = vpack.c.b16 %v4208, %v4205
        %v5868 = vpack.c.b16 %v4212, %v4209
        %v5869 = vpack.c.b16 %v4213, %v4210
        %v5870 = vpack.c.b16 %v4214, %v4211
        %v5871 = vpack.c.b16 %v4218, %v4215
        %v5872 = vpack.c.b16 %v4219, %v4216
        %v5873 = vpack.c.b16 %v4220, %v4217
        %v5874 = vpack.c.b16 %v4224, %v4221
        %v5875 = vpack.c.b16 %v4225, %v4222
        %v5876 = vpack.c.b16 %v4226, %v4223
        %v5877 = vpack.c.b16 %v4230, %v4227
        %v5878 = vpack.c.b16 %v4231, %v4228
        %v5879 = vpack.c.b16 %v4232, %v4229
        %v5880 = vpack.c.b16 %v4236, %v4233
        %v5881 = vpack.c.b16 %v4237, %v4234
        %v5882 = vpack.c.b16 %v4238, %v4235
        %v5883 = vpack.c.b16 %v4242, %v4239
        %v5884 = vpack.c.b16 %v4243, %v4240
        %v5885 = vpack.c.b16 %v4244, %v4241
        %v5886 = vpack.c.b16 %v4248, %v4245
        %v5887 = vpack.c.b16 %v4249, %v4246
        %v5888 = vpack.c.b16 %v4250, %v4247
        %v5889 = vpack.c.b16 %v4254, %v4251
        %v5890 = vpack.c.b16 %v4255, %v4252
        %v5891 = vpack.c.b16 %v4256, %v4253
        %v5892 = vpack.c.b16 %v4260, %v4257
        %v5893 = vpack.c.b16 %v4261, %v4258
        %v5894 = vpack.c.b16 %v4262, %v4259
        %v5895 = vpack.c.b16 %v4266, %v4263
        %v5896 = vpack.c.b16 %v4267, %v4264
        %v5897 = vpack.c.b16 %v4268, %v4265
        %v5898 = vpack.c.b16 %v4272, %v4269
        %v5899 = vpack.c.b16 %v4273, %v4270
        %v5900 = vpack.c.b16 %v4274, %v4271
        %v5901 = vpack.c.b16 %v4278, %v4275
        %v5902 = vpack.c.b16 %v4279, %v4276
        %v5903 = vpack.c.b16 %v4280, %v4277
        %v5904 = vpack.c.b16 %v4284, %v4281
        %v5905 = vpack.c.b16 %v4285, %v4282
        %v5906 = vpack.c.b16 %v4286, %v4283
        %v5907 = vpack.c.b16 %v4290, %v4287
        %v5908 = vpack.c.b16 %v4291, %v4288
        %v5909 = vpack.c.b16 %v4292, %v4289
        %v5910 = vpack.c.b16 %v4296, %v4293
        %v5911 = vpack.c.b16 %v4297, %v4294
        %v5912 = vpack.c.b16 %v4298, %v4295
        %v5913 = vpack.c.b16 %v4302, %v4299
        %v5914 = vpack.c.b16 %v4303, %v4300
        %v5915 = vpack.c.b16 %v4304, %v4301
        %v5916 = vpack.c.b16 %v4308, %v4305
        %v5917 = vpack.c.b16 %v4309, %v4306
        %v5918 = vpack.c.b16 %v4310, %v4307
        %v5919 = vpack.c.b16 %v4314, %v4311
        %v5920 = vpack.c.b16 %v4315, %v4312
        %v5921 = vpack.c.b16 %v4316, %v4313
        %v5922 = vpack.c.b16 %v4320, %v4317
        %v5923 = vpack.c.b16 %v4321, %v4318
        %v5924 = vpack.c.b16 %v4322, %v4319
        %v5925 = vpack.c.b16 %v4326, %v4323
        %v5926 = vpack.c.b16 %v4327, %v4324
        %v5927 = vpack.c.b16 %v4328, %v4325
        %v5928 = vpack.c.b16 %v4332, %v4329
        %v5929 = vpack.c.b16 %v4333, %v4330
        %v5930 = vpack.c.b16 %v4334, %v4331
        %v5931 = vpack.c.b16 %v4338, %v4335
        %v5932 = vpack.c.b16 %v4339, %v4336
        %v5933 = vpack.c.b16 %v4340, %v4337
        %v5934 = vpack.c.b16 %v4344, %v4341
        %v5935 = vpack.c.b16 %v4345, %v4342
        %v5936 = vpack.c.b16 %v4346, %v4343
        %v5937 = vpack.c.b16 %v4350, %v4347
        %v5938 = vpack.c.b16 %v4351, %v4348
        %v5939 = vpack.c.b16 %v4352, %v4349
        %v5940 = vpack.c.b16 %v4356, %v4353
        %v5941 = vpack.c.b16 %v4357, %v4354
        %v5942 = vpack.c.b16 %v4358, %v4355
        %v5943 = vpack.c.b16 %v4362, %v4359
        %v5944 = vpack.c.b16 %v4363, %v4360
        %v5945 = vpack.c.b16 %v4364, %v4361
        %v5946 = vpack.c.b16 %v4368, %v4365
        %v5947 = vpack.c.b16 %v4369, %v4366
        %v5948 = vpack.c.b16 %v4370, %v4367
        %v5949 = vpack.c.b16 %v4374, %v4371
        %v5950 = vpack.c.b16 %v4375, %v4372
        %v5951 = vpack.c.b16 %v4376, %v4373
        %v5952 = vpack.c.b16 %v4380, %v4377
        %v5953 = vpack.c.b16 %v4381, %v4378
        %v5954 = vpack.c.b16 %v4382, %v4379
        %v5955 = vpack.c.b16 %v4386, %v4383
        %v5956 = vpack.c.b16 %v4387, %v4384
        %v5957 = vpack.c.b16 %v4388, %v4385
        %v5958 = vpack.c.b16 %v4392, %v4389
        %v5959 = vpack.c.b16 %v4393, %v4390
        %v5960 = vpack.c.b16 %v4394, %v4391
        %v5961 = vpack.c.b16 %v4398, %v4395
        %v5962 = vpack.c.b16 %v4399, %v4396
        %v5963 = vpack.c.b16 %v4400, %v4397
        %v5964 = vpack.c.b16 %v4404, %v4401
        %v5965 = vpack.c.b16 %v4405, %v4402
        %v5966 = vpack.c.b16 %v4406, %v4403
        %v5967 = vpack.c.b16 %v4410, %v4407
        %v5968 = vpack.c.b16 %v4411, %v4408
        %v5969 = vpack.c.b16 %v4412, %v4409
        %v5970 = vpack.c.b16 %v4416, %v4413
        %v5971 = vpack.c.b16 %v4417, %v4414
        %v5972 = vpack.c.b16 %v4418, %v4415
        %v5973 = vpack.c.b16 %v4422, %v4419
        %v5974 = vpack.c.b16 %v4423, %v4420
        %v5975 = vpack.c.b16 %v4424, %v4421
        %v5976 = vpack.c.b16 %v4428, %v4425
        %v5977 = vpack.c.b16 %v4429, %v4426
        %v5978 = vpack.c.b16 %v4430, %v4427
        %v5979 = vpack.c.b16 %v4434, %v4431
        %v5980 = vpack.c.b16 %v4435, %v4432
        %v5981 = vpack.c.b16 %v4436, %v4433
        %v5982 = vpack.c.b16 %v4440, %v4437
        %v5983 = vpack.c.b16 %v4441, %v4438
        %v5984 = vpack.c.b16 %v4442, %v4439
        %v5985 = vpack.c.b16 %v4446, %v4443
        %v5986 = vpack.c.b16 %v4447, %v4444
        %v5987 = vpack.c.b16 %v4448, %v4445
        %v5988 = vpack.c.b16 %v4452, %v4449
        %v5989 = vpack.c.b16 %v4453, %v4450
        %v5990 = vpack.c.b16 %v4454, %v4451
        %v5991 = vpack.c.b16 %v4458, %v4455
        %v5992 = vpack.c.b16 %v4459, %v4456
        %v5993 = vpack.c.b16 %v4460, %v4457
        %v5994 = vpack.c.b16 %v4464, %v4461
        %v5995 = vpack.c.b16 %v4465, %v4462
        %v5996 = vpack.c.b16 %v4466, %v4463
        %v5997 = vpack.c.b16 %v4470, %v4467
        %v5998 = vpack.c.b16 %v4471, %v4468
        %v5999 = vpack.c.b16 %v4472, %v4469
        %v6000 = vpack.c.b16 %v4476, %v4473
        %v6001 = vpack.c.b16 %v4477, %v4474
        %v6002 = vpack.c.b16 %v4478, %v4475
        %v6003 = vpack.c.b16 %v4482, %v4479
        %v6004 = vpack.c.b16 %v4483, %v4480
        %v6005 = vpack.c.b16 %v4484, %v4481
        %v6006 = vpack.c.b16 %v4488, %v4485
        %v6007 = vpack.c.b16 %v4489, %v4486
        %v6008 = vpack.c.b16 %v4490, %v4487
        %v6009 = vpack.c.b16 %v4494, %v4491
        %v6010 = vpack.c.b16 %v4495, %v4492
        %v6011 = vpack.c.b16 %v4496, %v4493
        %v6012 = vpack.c.b16 %v4500, %v4497
        %v6013 = vpack.c.b16 %v4501, %v4498
        %v6014 = vpack.c.b16 %v4502, %v4499
        %v6015 = vpack.c.b16 %v4506, %v4503
        %v6016 = vpack.c.b16 %v4507, %v4504
        %v6017 = vpack.c.b16 %v4508, %v4505
        %v6018 = vpack.c.b16 %v4512, %v4509
        %v6019 = vpack.c.b16 %v4513, %v4510
        %v6020 = vpack.c.b16 %v4514, %v4511
        %v6021 = vpack.c.b16 %v4518, %v4515
        %v6022 = vpack.c.b16 %v4519, %v4516
        %v6023 = vpack.c.b16 %v4520, %v4517
        %v6024 = vpack.c.b16 %v4524, %v4521
        %v6025 = vpack.c.b16 %v4525, %v4522
        %v6026 = vpack.c.b16 %v4526, %v4523
        %v6027 = vpack.c.b16 %v4530, %v4527
        %v6028 = vpack.c.b16 %v4531, %v4528
        %v6029 = vpack.c.b16 %v4532, %v4529
        %v6030 = vpack.c.b16 %v4536, %v4533
        %v6031 = vpack.c.b16 %v4537, %v4534
        %v6032 = vpack.c.b16 %v4538, %v4535
        %v6033 = vpack.c.b16 %v4542, %v4539
        %v6034 = vpack.c.b16 %v4543, %v4540
        %v6035 = vpack.c.b16 %v4544, %v4541
        %v6036 = vpack.c.b16 %v4548, %v4545
        %v6037 = vpack.c.b16 %v4549, %v4546
        %v6038 = vpack.c.b16 %v4550, %v4547
        %v6039 = vpack.c.b16 %v4554, %v4551
        %v6040 = vpack.c.b16 %v4555, %v4552
        %v6041 = vpack.c.b16 %v4556, %v4553
        %v6042 = vpack.c.b16 %v4560, %v4557
        %v6043 = vpack.c.b16 %v4561, %v4558
        %v6044 = vpack.c.b16 %v4562, %v4559
        %v6045 = vpack.c.b16 %v4566, %v4563
        %v6046 = vpack.c.b16 %v4567, %v4564
        %v6047 = vpack.c.b16 %v4568, %v4565
        %v6048 = vpack.c.b16 %v4572, %v4569
        %v6049 = vpack.c.b16 %v4573, %v4570
        %v6050 = vpack.c.b16 %v4574, %v4571
        %v6051 = vpack.c.b16 %v4578, %v4575
        %v6052 = vpack.c.b16 %v4579, %v4576
        %v6053 = vpack.c.b16 %v4580, %v4577
        %v6054 = vpack.c.b16 %v4584, %v4581
        %v6055 = vpack.c.b16 %v4585, %v4582
        %v6056 = vpack.c.b16 %v4586, %v4583
        %v6057 = vpack.c.b16 %v4590, %v4587
        %v6058 = vpack.c.b16 %v4591, %v4588
        %v6059 = vpack.c.b16 %v4592, %v4589
        %v6060 = vpack.c.b16 %v4596, %v4593
        %v6061 = vpack.c.b16 %v4597, %v4594
        %v6062 = vpack.c.b16 %v4598, %v4595
        %v6063 = vpack.c.b16 %v4602, %v4599
        %v6064 = vpack.c.b16 %v4603, %v4600
        %v6065 = vpack.c.b16 %v4604, %v4601
        %v6066 = vpack.c.b16 %v4608, %v4605
        %v6067 = vpack.c.b16 %v4609, %v4606
        %v6068 = vpack.c.b16 %v4610, %v4607
        %v6069 = vpack.c.b16 %v4614, %v4611
        %v6070 = vpack.c.b16 %v4615, %v4612
        %v6071 = vpack.c.b16 %v4616, %v4613
        %v6072 = vpack.c.b16 %v4620, %v4617
        %v6073 = vpack.c.b16 %v4621, %v4618
        %v6074 = vpack.c.b16 %v4622, %v4619
        %v6075 = vpack.c.b16 %v4626, %v4623
        %v6076 = vpack.c.b16 %v4627, %v4624
        %v6077 = vpack.c.b16 %v4628, %v4625
        %v6078 = vpack.c.b16 %v4632, %v4629
        %v6079 = vpack.c.b16 %v4633, %v4630
        %v6080 = vpack.c.b16 %v4634, %v4631
        %v6081 = vpack.c.b16 %v4638, %v4635
        %v6082 = vpack.c.b16 %v4639, %v4636
        %v6083 = vpack.c.b16 %v4640, %v4637
        %v6084 = vpack.c.b16 %v4644, %v4641
        %v6085 = vpack.c.b16 %v4645, %v4642
        %v6086 = vpack.c.b16 %v4646, %v4643
        %v6087 = vpack.c.b16 %v4650, %v4647
        %v6088 = vpack.c.b16 %v4651, %v4648
        %v6089 = vpack.c.b16 %v4652, %v4649
        %v6090 = vpack.c.b16 %v4656, %v4653
        %v6091 = vpack.c.b16 %v4657, %v4654
        %v6092 = vpack.c.b16 %v4658, %v4655
        %v6093 = vpack.c.b16 %v4662, %v4659
        %v6094 = vpack.c.b16 %v4663, %v4660
        %v6095 = vpack.c.b16 %v4664, %v4661
        %v6096 = vpack.c.b16 %v4668, %v4665
        %v6097 = vpack.c.b16 %v4669, %v4666
        %v6098 = vpack.c.b16 %v4670, %v4667
        %v6099 = vpack.c.b16 %v4674, %v4671
        %v6100 = vpack.c.b16 %v4675, %v4672
        %v6101 = vpack.c.b16 %v4676, %v4673
        %v6102 = vpack.c.b16 %v4680, %v4677
        %v6103 = vpack.c.b16 %v4681, %v4678
        %v6104 = vpack.c.b16 %v4682, %v4679
        %v6105 = vpack.c.b16 %v4686, %v4683
        %v6106 = vpack.c.b16 %v4687, %v4684
        %v6107 = vpack.c.b16 %v4688, %v4685
        %v6108 = vpack.c.b16 %v4692, %v4689
        %v6109 = vpack.c.b16 %v4693, %v4690
        %v6110 = vpack.c.b16 %v4694, %v4691
        %v6111 = vpack.c.b16 %v4698, %v4695
        %v6112 = vpack.c.b16 %v4699, %v4696
        %v6113 = vpack.c.b16 %v4700, %v4697
        %v6114 = vpack.c.b16 %v4704, %v4701
        %v6115 = vpack.c.b16 %v4705, %v4702
        %v6116 = vpack.c.b16 %v4706, %v4703
        %v6117 = vpack.c.b16 %v4710, %v4707
        %v6118 = vpack.c.b16 %v4711, %v4708
        %v6119 = vpack.c.b16 %v4712, %v4709
        %v6120 = vpack.c.b16 %v4716, %v4713
        %v6121 = vpack.c.b16 %v4717, %v4714
        %v6122 = vpack.c.b16 %v4718, %v4715
        %v6123 = vpack.c.b16 %v4722, %v4719
        %v6124 = vpack.c.b16 %v4723, %v4720
        %v6125 = vpack.c.b16 %v4724, %v4721
        %v6126 = vpack.c.b16 %v4728, %v4725
        %v6127 = vpack.c.b16 %v4729, %v4726
        %v6128 = vpack.c.b16 %v4730, %v4727
        %v6129 = vpack.c.b16 %v4734, %v4731
        %v6130 = vpack.c.b16 %v4735, %v4732
        %v6131 = vpack.c.b16 %v4736, %v4733
        %v6132 = vpack.c.b16 %v4740, %v4737
        %v6133 = vpack.c.b16 %v4741, %v4738
        %v6134 = vpack.c.b16 %v4742, %v4739
        %v6135 = vpack.c.b16 %v4746, %v4743
        %v6136 = vpack.c.b16 %v4747, %v4744
        %v6137 = vpack.c.b16 %v4748, %v4745
        %v6138 = vpack.c.b16 %v4752, %v4749
        %v6139 = vpack.c.b16 %v4753, %v4750
        %v6140 = vpack.c.b16 %v4754, %v4751
        %v6141 = vpack.c.b16 %v4758, %v4755
        %v6142 = vpack.c.b16 %v4759, %v4756
        %v6143 = vpack.c.b16 %v4760, %v4757
        %v6144 = vpack.c.b16 %v4764, %v4761
        %v6145 = vpack.c.b16 %v4765, %v4762
        %v6146 = vpack.c.b16 %v4766, %v4763
        %v6147 = vpack.c.b16 %v4770, %v4767
        %v6148 = vpack.c.b16 %v4771, %v4768
        %v6149 = vpack.c.b16 %v4772, %v4769
        %v6150 = vpack.c.b16 %v4776, %v4773
        %v6151 = vpack.c.b16 %v4777, %v4774
        %v6152 = vpack.c.b16 %v4778, %v4775
        %v6153 = vpack.c.b16 %v4782, %v4779
        %v6154 = vpack.c.b16 %v4783, %v4780
        %v6155 = vpack.c.b16 %v4784, %v4781
        %v6156 = vpack.c.b16 %v4788, %v4785
        %v6157 = vpack.c.b16 %v4789, %v4786
        %v6158 = vpack.c.b16 %v4790, %v4787
        %v6159 = vpack.c.b16 %v4794, %v4791
        %v6160 = vpack.c.b16 %v4795, %v4792
        %v6161 = vpack.c.b16 %v4796, %v4793
        %v6162 = vpack.c.b16 %v4800, %v4797
        %v6163 = vpack.c.b16 %v4801, %v4798
        %v6164 = vpack.c.b16 %v4802, %v4799
        %v6165 = vpack.c.b16 %v4806, %v4803
        %v6166 = vpack.c.b16 %v4807, %v4804
        %v6167 = vpack.c.b16 %v4808, %v4805
        %v6168 = vpack.c.b16 %v4812, %v4809
        %v6169 = vpack.c.b16 %v4813, %v4810
        %v6170 = vpack.c.b16 %v4814, %v4811
        %v6171 = vpack.c.b16 %v4818, %v4815
        %v6172 = vpack.c.b16 %v4819, %v4816
        %v6173 = vpack.c.b16 %v4820, %v4817
        %v6174 = vpack.c.b16 %v4824, %v4821
        %v6175 = vpack.c.b16 %v4825, %v4822
        %v6176 = vpack.c.b16 %v4826, %v4823
        %v6177 = vpack.c.b16 %v4830, %v4827
        %v6178 = vpack.c.b16 %v4831, %v4828
        %v6179 = vpack.c.b16 %v4832, %v4829
        %v6180 = vpack.c.b16 %v4836, %v4833
        %v6181 = vpack.c.b16 %v4837, %v4834
        %v6182 = vpack.c.b16 %v4838, %v4835
        %v6183 = vpack.c.b16 %v4842, %v4839
        %v6184 = vpack.c.b16 %v4843, %v4840
        %v6185 = vpack.c.b16 %v4844, %v4841
        %v6186 = vpack.c.b16 %v4848, %v4845
        %v6187 = vpack.c.b16 %v4849, %v4846
        %v6188 = vpack.c.b16 %v4850, %v4847
        %v6189 = vpack.c.b16 %v4854, %v4851
        %v6190 = vpack.c.b16 %v4855, %v4852
        %v6191 = vpack.c.b16 %v4856, %v4853
        %v6192 = vpack.c.b16 %v4860, %v4857
        %v6193 = vpack.c.b16 %v4861, %v4858
        %v6194 = vpack.c.b16 %v4862, %v4859
        %v6195 = vpack.c.b16 %v4866, %v4863
        %v6196 = vpack.c.b16 %v4867, %v4864
        %v6197 = vpack.c.b16 %v4868, %v4865
        %v6198 = vpack.c.b16 %v4872, %v4869
        %v6199 = vpack.c.b16 %v4873, %v4870
        %v6200 = vpack.c.b16 %v4874, %v4871
        %v6201 = vpack.c.b16 %v4878, %v4875
        %v6202 = vpack.c.b16 %v4879, %v4876
        %v6203 = vpack.c.b16 %v4880, %v4877
        %v6204 = vpack.c.b16 %v4884, %v4881
        %v6205 = vpack.c.b16 %v4885, %v4882
        %v6206 = vpack.c.b16 %v4886, %v4883
        %v6207 = vpack.c.b16 %v4890, %v4887
        %v6208 = vpack.c.b16 %v4891, %v4888
        %v6209 = vpack.c.b16 %v4892, %v4889
        %v6210 = vpack.c.b16 %v4896, %v4893
        %v6211 = vpack.c.b16 %v4897, %v4894
        %v6212 = vpack.c.b16 %v4898, %v4895
        %v6213 = vpack.c.b16 %v4902, %v4899
        %v6214 = vpack.c.b16 %v4903, %v4900
        %v6215 = vpack.c.b16 %v4904, %v4901
        %v6216 = vpack.c.b16 %v4908, %v4905
        %v6217 = vpack.c.b16 %v4909, %v4906
        %v6218 = vpack.c.b16 %v4910, %v4907
        %v6219 = vpack.c.b16 %v4914, %v4911
        %v6220 = vpack.c.b16 %v4915, %v4912
        %v6221 = vpack.c.b16 %v4916, %v4913
        %v6222 = vpack.c.b16 %v4920, %v4917
        %v6223 = vpack.c.b16 %v4921, %v4918
        %v6224 = vpack.c.b16 %v4922, %v4919
        %v6225 = vpack.c.b16 %v4926, %v4923
        %v6226 = vpack.c.b16 %v4927, %v4924
        %v6227 = vpack.c.b16 %v4928, %v4925
        %v6228 = vpack.c.b16 %v4932, %v4929
        %v6229 = vpack.c.b16 %v4933, %v4930
        %v6230 = vpack.c.b16 %v4934, %v4931
        %v6231 = vpack.c.b16 %v4938, %v4935
        %v6232 = vpack.c.b16 %v4939, %v4936
        %v6233 = vpack.c.b16 %v4940, %v4937
        %v6234 = vpack.c.b16 %v4944, %v4941
        %v6235 = vpack.c.b16 %v4945, %v4942
        %v6236 = vpack.c.b16 %v4946, %v4943
        %v6237 = vpack.c.b16 %v4950, %v4947
        %v6238 = vpack.c.b16 %v4951, %v4948
        %v6239 = vpack.c.b16 %v4952, %v4949
        %v6240 = vpack.c.b16 %v4956, %v4953
        %v6241 = vpack.c.b16 %v4957, %v4954
        %v6242 = vpack.c.b16 %v4958, %v4955
        %v6243 = vpack.c.b16 %v4962, %v4959
        %v6244 = vpack.c.b16 %v4963, %v4960
        %v6245 = vpack.c.b16 %v4964, %v4961
        %v6246 = vpack.c.b16 %v4968, %v4965
        %v6247 = vpack.c.b16 %v4969, %v4966
        %v6248 = vpack.c.b16 %v4970, %v4967
        %v6249 = vpack.c.b16 %v4974, %v4971
        %v6250 = vpack.c.b16 %v4975, %v4972
        %v6251 = vpack.c.b16 %v4976, %v4973
        %v6252 = vpack.c.b16 %v4980, %v4977
        %v6253 = vpack.c.b16 %v4981, %v4978
        %v6254 = vpack.c.b16 %v4982, %v4979
        %v6255 = vpack.c.b16 %v4986, %v4983
        %v6256 = vpack.c.b16 %v4987, %v4984
        %v6257 = vpack.c.b16 %v4988, %v4985
        %v6258 = vpack.c.b16 %v4992, %v4989
        %v6259 = vpack.c.b16 %v4993, %v4990
        %v6260 = vpack.c.b16 %v4994, %v4991
        %v6261 = vpack.c.b16 %v4998, %v4995
        %v6262 = vpack.c.b16 %v4999, %v4996
        %v6263 = vpack.c.b16 %v5000, %v4997
        %v6264 = vpack.c.b16 %v5004, %v5001
        %v6265 = vpack.c.b16 %v5005, %v5002
        %v6266 = vpack.c.b16 %v5006, %v5003
        %v6267 = vpack.c.b16 %v5010, %v5007
        %v6268 = vpack.c.b16 %v5011, %v5008
        %v6269 = vpack.c.b16 %v5012, %v5009
        %v6270 = vpack.c.b16 %v5016, %v5013
        %v6271 = vpack.c.b16 %v5017, %v5014
        %v6272 = vpack.c.b16 %v5018, %v5015
        %v6273 = vpack.c.b16 %v5022, %v5019
        %v6274 = vpack.c.b16 %v5023, %v5020
        %v6275 = vpack.c.b16 %v5024, %v5021
        %v6276 = vpack.c.b16 %v5028, %v5025
        %v6277 = vpack.c.b16 %v5029, %v5026
        %v6278 = vpack.c.b16 %v5030, %v5027
        %v6279 = vpack.c.b16 %v5034, %v5031
        %v6280 = vpack.c.b16 %v5035, %v5032
        %v6281 = vpack.c.b16 %v5036, %v5033
        %v6282 = vpack.c.b16 %v5040, %v5037
        %v6283 = vpack.c.b16 %v5041, %v5038
        %v6284 = vpack.c.b16 %v5042, %v5039
        %v6285 = vpack.c.b16 %v5046, %v5043
        %v6286 = vpack.c.b16 %v5047, %v5044
        %v6287 = vpack.c.b16 %v5048, %v5045
        %v6288 = vpack.c.b16 %v5052, %v5049
        %v6289 = vpack.c.b16 %v5053, %v5050
        %v6290 = vpack.c.b16 %v5054, %v5051
        %v6291 = vpack.c.b16 %v5058, %v5055
        %v6292 = vpack.c.b16 %v5059, %v5056
        %v6293 = vpack.c.b16 %v5060, %v5057
        %v6294 = vpack.c.b16 %v5064, %v5061
        %v6295 = vpack.c.b16 %v5065, %v5062
        %v6296 = vpack.c.b16 %v5066, %v5063
        %v6297 = vpack.c.b16 %v5070, %v5067
        %v6298 = vpack.c.b16 %v5071, %v5068
        %v6299 = vpack.c.b16 %v5072, %v5069
        %v6300 = vpack.c.b16 %v5076, %v5073
        %v6301 = vpack.c.b16 %v5077, %v5074
        %v6302 = vpack.c.b16 %v5078, %v5075
        %v6303 = vpack.c.b16 %v5082, %v5079
        %v6304 = vpack.c.b16 %v5083, %v5080
        %v6305 = vpack.c.b16 %v5084, %v5081
        %v6306 = vpack.c.b16 %v5088, %v5085
        %v6307 = vpack.c.b16 %v5089, %v5086
        %v6308 = vpack.c.b16 %v5090, %v5087
        %v6309 = vpack.c.b16 %v5094, %v5091
        %v6310 = vpack.c.b16 %v5095, %v5092
        %v6311 = vpack.c.b16 %v5096, %v5093
        %v6312 = vpack.c.b16 %v5100, %v5097
        %v6313 = vpack.c.b16 %v5101, %v5098
        %v6314 = vpack.c.b16 %v5102, %v5099
        %v6315 = vpack.c.b16 %v5106, %v5103
        %v6316 = vpack.c.b16 %v5107, %v5104
        %v6317 = vpack.c.b16 %v5108, %v5105
        %v6318 = vpack.c.b16 %v5112, %v5109
        %v6319 = vpack.c.b16 %v5113, %v5110
        %v6320 = vpack.c.b16 %v5114, %v5111
        %v6321 = vpack.c.b16 %v5118, %v5115
        %v6322 = vpack.c.b16 %v5119, %v5116
        %v6323 = vpack.c.b16 %v5120, %v5117
        %v6324 = vpack.c.b16 %v5124, %v5121
        %v6325 = vpack.c.b16 %v5125, %v5122
        %v6326 = vpack.c.b16 %v5126, %v5123
        %v6327 = vpack.c.b16 %v5130, %v5127
        %v6328 = vpack.c.b16 %v5131, %v5128
        %v6329 = vpack.c.b16 %v5132, %v5129
        %v6330 = vpack.c.b16 %v5136, %v5133
        %v6331 = vpack.c.b16 %v5137, %v5134
        %v6332 = vpack.c.b16 %v5138, %v5135
        %v6333 = vpack.c.b16 %v5142, %v5139
        %v6334 = vpack.c.b16 %v5143, %v5140
        %v6335 = vpack.c.b16 %v5144, %v5141
        %v6336 = vpack.c.b16 %v5148, %v5145
        %v6337 = vpack.c.b16 %v5149, %v5146
        %v6338 = vpack.c.b16 %v5150, %v5147
        %v6339 = vpack.c.b16 %v5154, %v5151
        %v6340 = vpack.c.b16 %v5155, %v5152
        %v6341 = vpack.c.b16 %v5156, %v5153
        %v6342 = vpack.c.b16 %v5160, %v5157
        %v6343 = vpack.c.b16 %v5161, %v5158
        %v6344 = vpack.c.b16 %v5162, %v5159
        %v6345 = vpack.c.b16 %v5166, %v5163
        %v6346 = vpack.c.b16 %v5167, %v5164
        %v6347 = vpack.c.b16 %v5168, %v5165
        %v6348 = vpack.c.b16 %v5172, %v5169
        %v6349 = vpack.c.b16 %v5173, %v5170
        %v6350 = vpack.c.b16 %v5174, %v5171
        %v6351 = vpack.c.b16 %v5178, %v5175
        %v6352 = vpack.c.b16 %v5179, %v5176
        %v6353 = vpack.c.b16 %v5180, %v5177
        %v6354 = vpack.c.b16 %v5184, %v5181
        %v6355 = vpack.c.b16 %v5185, %v5182
        %v6356 = vpack.c.b16 %v5186, %v5183
        %v6357 = vpack.c.b16 %v5190, %v5187
        %v6358 = vpack.c.b16 %v5191, %v5188
        %v6359 = vpack.c.b16 %v5192, %v5189
        %v6360 = vpack.c.b16 %v5196, %v5193
        %v6361 = vpack.c.b16 %v5197, %v5194
        %v6362 = vpack.c.b16 %v5198, %v5195
        %v6363 = vpack.c.b16 %v5202, %v5199
        %v6364 = vpack.c.b16 %v5203, %v5200
        %v6365 = vpack.c.b16 %v5204, %v5201
        %v6366 = vpack.c.b16 %v5208, %v5205
        %v6367 = vpack.c.b16 %v5209, %v5206
        %v6368 = vpack.c.b16 %v5210, %v5207
        %v6369 = vpack.c.b16 %v5214, %v5211
        %v6370 = vpack.c.b16 %v5215, %v5212
        %v6371 = vpack.c.b16 %v5216, %v5213
        %v6372 = vpack.c.b16 %v5220, %v5217
        %v6373 = vpack.c.b16 %v5221, %v5218
        %v6374 = vpack.c.b16 %v5222, %v5219
        %v6375 = vpack.c.b16 %v5226, %v5223
        %v6376 = vpack.c.b16 %v5227, %v5224
        %v6377 = vpack.c.b16 %v5228, %v5225
        %v6378 = vpack.c.b16 %v5232, %v5229
        %v6379 = vpack.c.b16 %v5233, %v5230
        %v6380 = vpack.c.b16 %v5234, %v5231
        %v6381 = vpack.c.b16 %v5238, %v5235
        %v6382 = vpack.c.b16 %v5239, %v5236
        %v6383 = vpack.c.b16 %v5240, %v5237
        %v6384 = vpack.c.b16 %v5244, %v5241
        %v6385 = vpack.c.b16 %v5245, %v5242
        %v6386 = vpack.c.b16 %v5246, %v5243
        %v6387 = vpack.c.b16 %v5250, %v5247
        %v6388 = vpack.c.b16 %v5251, %v5248
        %v6389 = vpack.c.b16 %v5252, %v5249
        %v6390 = vpack.c.b16 %v5256, %v5253
        %v6391 = vpack.c.b16 %v5257, %v5254
        %v6392 = vpack.c.b16 %v5258, %v5255
        %v6393 = vpack.c.b16 %v5262, %v5259
        %v6394 = vpack.c.b16 %v5263, %v5260
        %v6395 = vpack.c.b16 %v5264, %v5261
        %v6396 = vpack.c.b16 %v5268, %v5265
        %v6397 = vpack.c.b16 %v5269, %v5266
        %v6398 = vpack.c.b16 %v5270, %v5267
        %v6399 = vpack.c.b16 %v5274, %v5271
        %v6400 = vpack.c.b16 %v5275, %v5272
        %v6401 = vpack.c.b16 %v5276, %v5273
        %v6402 = vpack.c.b16 %v5280, %v5277
        %v6403 = vpack.c.b16 %v5281, %v5278
        %v6404 = vpack.c.b16 %v5282, %v5279
        %v6405 = vpack.c.b16 %v5286, %v5283
        %v6406 = vpack.c.b16 %v5287, %v5284
        %v6407 = vpack.c.b16 %v5288, %v5285
        %v6408 = vpack.c.b16 %v5292, %v5289
        %v6409 = vpack.c.b16 %v5293, %v5290
        %v6410 = vpack.c.b16 %v5294, %v5291
        %v6411 = vpack.c.b16 %v5298, %v5295
        %v6412 = vpack.c.b16 %v5299, %v5296
        %v6413 = vpack.c.b16 %v5300, %v5297
        %v6414 = vpack.c.b16 %v5304, %v5301
        %v6415 = vpack.c.b16 %v5305, %v5302
        %v6416 = vpack.c.b16 %v5306, %v5303
        %v6417 = vpack.c.b16 %v5310, %v5307
        %v6418 = vpack.c.b16 %v5311, %v5308
        %v6419 = vpack.c.b16 %v5312, %v5309
        %v6420 = vpack.c.b16 %v5316, %v5313
        %v6421 = vpack.c.b16 %v5317, %v5314
        %v6422 = vpack.c.b16 %v5318, %v5315
        %v6423 = vpack.c.b16 %v5322, %v5319
        %v6424 = vpack.c.b16 %v5323, %v5320
        %v6425 = vpack.c.b16 %v5324, %v5321
        %v6426 = vpack.c.b16 %v5328, %v5325
        %v6427 = vpack.c.b16 %v5329, %v5326
        %v6428 = vpack.c.b16 %v5330, %v5327
        %v6429 = vpack.c.b16 %v5334, %v5331
        %v6430 = vpack.c.b16 %v5335, %v5332
        %v6431 = vpack.c.b16 %v5336, %v5333
        %v6432 = vpack.c.b16 %v5340, %v5337
        %v6433 = vpack.c.b16 %v5341, %v5338
        %v6434 = vpack.c.b16 %v5342, %v5339
        %v6435 = vpack.c.b16 %v5346, %v5343
        %v6436 = vpack.c.b16 %v5347, %v5344
        %v6437 = vpack.c.b16 %v5348, %v5345
        %v6438 = vpack.c.b16 %v5352, %v5349
        %v6439 = vpack.c.b16 %v5353, %v5350
        %v6440 = vpack.c.b16 %v5354, %v5351
        %vm7524 = vcmask 203776
        %v7526 = vsel %vm7524, %v286, 0
        %vm7528 = vcmask 1043456
        %vm7529 = vcmask 1044480
        %v7530 = vsel %vm7528, 4294967295, 65535
        %v7531 = vsel %vm7529, %v7530, 0
        %v7533 = vand.u32 %v6438, %v7531
        %v7536 = vand.u32 %v6439, %v7531
        %v7539 = vand.u32 %v6440, %v7531
        %7541 = vmatprep.subr.bf16.mxu0 %v5377
        %7542 = vmatpush1.bf16.msra.mxu0 %v5376
        %7543 = vmatprep.subr.bf16.mxu0 %v5374
        %7544 = vmatpush1.bf16.msra.mxu0 %v5373
        %7545 = vmatprep.subr.bf16.mxu0 %v5371
        %7546 = vmatpush1.bf16.msra.mxu0 %v5370
        %7547 = vmatprep.subr.bf16.mxu0 %v5368
        %7548 = vmatpush1.bf16.msra.mxu0 %v5367
        %7549 = vmatprep.subr.bf16.mxu0 %v5365
        %7550 = vmatpush1.bf16.msra.mxu0 %v5364
        %7551 = vmatprep.subr.bf16.mxu0 %v5362
        %7552 = vmatpush1.bf16.msra.mxu0 %v5361
        %7553 = vmatprep.subr.bf16.mxu0 %v5359
        %7554 = vmatpush1.bf16.msra.mxu0 %v5358
        %7555 = vmatprep.subr.bf16.mxu0 %v5356
        %7556 = vmatpush1.bf16.msra.mxu0 %v5355
        %7557 = vmatprep.subr.bf16.mxu0 %v5401
        %7558 = vmatpush2.bf16.msra.mxu0 %v5400
        %7559 = vmatprep.subr.bf16.mxu0 %v5398
        %7560 = vmatpush2.bf16.msra.mxu0 %v5397
        %7561 = vmatprep.subr.bf16.mxu0 %v5395
        %7562 = vmatpush2.bf16.msra.mxu0 %v5394
        %7563 = vmatprep.subr.bf16.mxu0 %v5392
        %7564 = vmatpush2.bf16.msra.mxu0 %v5391
        %7565 = vmatprep.subr.bf16.mxu0 %v5389
        %7566 = vmatpush2.bf16.msra.mxu0 %v5388
        %7567 = vmatprep.subr.bf16.mxu0 %v5386
        %7568 = vmatpush2.bf16.msra.mxu0 %v5385
        %7569 = vmatprep.subr.bf16.mxu0 %v5383
        %7570 = vmatpush2.bf16.msra.mxu0 %v5382
        %7571 = vmatprep.subr.bf16.mxu0 %v5380
        %7572 = vmatpush2.bf16.msra.mxu0 %v5379
        %7573 = vmatprep.mubr.bf16.mxu0 %v242
        %7574 = vmatmul.mubr.bf16.gmra.mxu0 %v241
        %v7575 = vpop.f32.mrf.mxu0
        %v7576 = vadd.f32 0.0, %v7575
        %v7577 = vpop.f32.mrf.mxu0
        %v7578 = vadd.f32 0.0, %v7577
        %v7579 = vpop.f32.mrf.mxu0
        %v7580 = vadd.f32 0.0, %v7579
        %v7581 = vpop.f32.mrf.mxu0
        %v7582 = vadd.f32 0.0, %v7581
        %7583 = vdwg.mxu0
        %7584 = vmatprep.subr.bf16.mxu0 %v5425
        %7585 = vmatpush1.bf16.msra.mxu0 %v5424
        %7586 = vmatprep.subr.bf16.mxu0 %v5422
        %7587 = vmatpush1.bf16.msra.mxu0 %v5421
        %7588 = vmatprep.subr.bf16.mxu0 %v5419
        %7589 = vmatpush1.bf16.msra.mxu0 %v5418
        %7590 = vmatprep.subr.bf16.mxu0 %v5416
        %7591 = vmatpush1.bf16.msra.mxu0 %v5415
        %7592 = vmatprep.subr.bf16.mxu0 %v5413
        %7593 = vmatpush1.bf16.msra.mxu0 %v5412
        %7594 = vmatprep.subr.bf16.mxu0 %v5410
        %7595 = vmatpush1.bf16.msra.mxu0 %v5409
        %7596 = vmatprep.subr.bf16.mxu0 %v5407
        %7597 = vmatpush1.bf16.msra.mxu0 %v5406
        %7598 = vmatprep.subr.bf16.mxu0 %v5404
        %7599 = vmatpush1.bf16.msra.mxu0 %v5403
        %7600 = vmatprep.subr.bf16.mxu0 %v5449
        %7601 = vmatpush2.bf16.msra.mxu0 %v5448
        %7602 = vmatprep.subr.bf16.mxu0 %v5446
        %7603 = vmatpush2.bf16.msra.mxu0 %v5445
        %7604 = vmatprep.subr.bf16.mxu0 %v5443
        %7605 = vmatpush2.bf16.msra.mxu0 %v5442
        %7606 = vmatprep.subr.bf16.mxu0 %v5440
        %7607 = vmatpush2.bf16.msra.mxu0 %v5439
        %7608 = vmatprep.subr.bf16.mxu0 %v5437
        %7609 = vmatpush2.bf16.msra.mxu0 %v5436
        %7610 = vmatprep.subr.bf16.mxu0 %v5434
        %7611 = vmatpush2.bf16.msra.mxu0 %v5433
        %7612 = vmatprep.subr.bf16.mxu0 %v5431
        %7613 = vmatpush2.bf16.msra.mxu0 %v5430
        %7614 = vmatprep.subr.bf16.mxu0 %v5428
        %7615 = vmatpush2.bf16.msra.mxu0 %v5427
        %7616 = vmatprep.mubr.bf16.mxu0 %v244
        %7617 = vmatmul.mubr.bf16.gmra.mxu0 %v243
        %v7618 = vpop.f32.mrf.mxu0
        %v7619 = vadd.f32 %v7576, %v7618
        %v7620 = vpop.f32.mrf.mxu0
        %v7621 = vadd.f32 %v7578, %v7620
        %v7622 = vpop.f32.mrf.mxu0
        %v7623 = vadd.f32 %v7580, %v7622
        %v7624 = vpop.f32.mrf.mxu0
        %v7625 = vadd.f32 %v7582, %v7624
        %7626 = vdwg.mxu0
        %7627 = vmatprep.subr.bf16.mxu0 %v5473
        %7628 = vmatpush1.bf16.msra.mxu0 %v5472
        %7629 = vmatprep.subr.bf16.mxu0 %v5470
        %7630 = vmatpush1.bf16.msra.mxu0 %v5469
        %7631 = vmatprep.subr.bf16.mxu0 %v5467
        %7632 = vmatpush1.bf16.msra.mxu0 %v5466
        %7633 = vmatprep.subr.bf16.mxu0 %v5464
        %7634 = vmatpush1.bf16.msra.mxu0 %v5463
        %7635 = vmatprep.subr.bf16.mxu0 %v5461
        %7636 = vmatpush1.bf16.msra.mxu0 %v5460
        %7637 = vmatprep.subr.bf16.mxu0 %v5458
        %7638 = vmatpush1.bf16.msra.mxu0 %v5457
        %7639 = vmatprep.subr.bf16.mxu0 %v5455
        %7640 = vmatpush1.bf16.msra.mxu0 %v5454
        %7641 = vmatprep.subr.bf16.mxu0 %v5452
        %7642 = vmatpush1.bf16.msra.mxu0 %v5451
        %7643 = vmatprep.subr.bf16.mxu0 %v5497
        %7644 = vmatpush2.bf16.msra.mxu0 %v5496
        %7645 = vmatprep.subr.bf16.mxu0 %v5494
        %7646 = vmatpush2.bf16.msra.mxu0 %v5493
        %7647 = vmatprep.subr.bf16.mxu0 %v5491
        %7648 = vmatpush2.bf16.msra.mxu0 %v5490
        %7649 = vmatprep.subr.bf16.mxu0 %v5488
        %7650 = vmatpush2.bf16.msra.mxu0 %v5487
        %7651 = vmatprep.subr.bf16.mxu0 %v5485
        %7652 = vmatpush2.bf16.msra.mxu0 %v5484
        %7653 = vmatprep.subr.bf16.mxu0 %v5482
        %7654 = vmatpush2.bf16.msra.mxu0 %v5481
        %7655 = vmatprep.subr.bf16.mxu0 %v5479
        %7656 = vmatpush2.bf16.msra.mxu0 %v5478
        %7657 = vmatprep.subr.bf16.mxu0 %v5476
        %7658 = vmatpush2.bf16.msra.mxu0 %v5475
        %7659 = vmatprep.mubr.bf16.mxu0 %v246
        %7660 = vmatmul.mubr.bf16.gmra.mxu0 %v245
        %v7661 = vpop.f32.mrf.mxu0
        %v7662 = vadd.f32 %v7619, %v7661
        %v7663 = vpop.f32.mrf.mxu0
        %v7664 = vadd.f32 %v7621, %v7663
        %v7665 = vpop.f32.mrf.mxu0
        %v7666 = vadd.f32 %v7623, %v7665
        %v7667 = vpop.f32.mrf.mxu0
        %v7668 = vadd.f32 %v7625, %v7667
        %7669 = vdwg.mxu0
        %7670 = vmatprep.subr.bf16.mxu0 %v5521
        %7671 = vmatpush1.bf16.msra.mxu0 %v5520
        %7672 = vmatprep.subr.bf16.mxu0 %v5518
        %7673 = vmatpush1.bf16.msra.mxu0 %v5517
        %7674 = vmatprep.subr.bf16.mxu0 %v5515
        %7675 = vmatpush1.bf16.msra.mxu0 %v5514
        %7676 = vmatprep.subr.bf16.mxu0 %v5512
        %7677 = vmatpush1.bf16.msra.mxu0 %v5511
        %7678 = vmatprep.subr.bf16.mxu0 %v5509
        %7679 = vmatpush1.bf16.msra.mxu0 %v5508
        %7680 = vmatprep.subr.bf16.mxu0 %v5506
        %7681 = vmatpush1.bf16.msra.mxu0 %v5505
        %7682 = vmatprep.subr.bf16.mxu0 %v5503
        %7683 = vmatpush1.bf16.msra.mxu0 %v5502
        %7684 = vmatprep.subr.bf16.mxu0 %v5500
        %7685 = vmatpush1.bf16.msra.mxu0 %v5499
        %7686 = vmatprep.subr.bf16.mxu0 %v5545
        %7687 = vmatpush2.bf16.msra.mxu0 %v5544
        %7688 = vmatprep.subr.bf16.mxu0 %v5542
        %7689 = vmatpush2.bf16.msra.mxu0 %v5541
        %7690 = vmatprep.subr.bf16.mxu0 %v5539
        %7691 = vmatpush2.bf16.msra.mxu0 %v5538
        %7692 = vmatprep.subr.bf16.mxu0 %v5536
        %7693 = vmatpush2.bf16.msra.mxu0 %v5535
        %7694 = vmatprep.subr.bf16.mxu0 %v5533
        %7695 = vmatpush2.bf16.msra.mxu0 %v5532
        %7696 = vmatprep.subr.bf16.mxu0 %v5530
        %7697 = vmatpush2.bf16.msra.mxu0 %v5529
        %7698 = vmatprep.subr.bf16.mxu0 %v5527
        %7699 = vmatpush2.bf16.msra.mxu0 %v5526
        %7700 = vmatprep.subr.bf16.mxu0 %v5524
        %7701 = vmatpush2.bf16.msra.mxu0 %v5523
        %7702 = vmatprep.mubr.bf16.mxu0 %v248
        %7703 = vmatmul.mubr.bf16.gmra.mxu0 %v247
        %v7704 = vpop.f32.mrf.mxu0
        %v7705 = vadd.f32 %v7662, %v7704
        %v7706 = vpop.f32.mrf.mxu0
        %v7707 = vadd.f32 %v7664, %v7706
        %v7708 = vpop.f32.mrf.mxu0
        %v7709 = vadd.f32 %v7666, %v7708
        %v7710 = vpop.f32.mrf.mxu0
        %v7711 = vadd.f32 %v7668, %v7710
        %7712 = vdwg.mxu0
        %7713 = vmatprep.subr.bf16.mxu0 %v5569
        %7714 = vmatpush1.bf16.msra.mxu0 %v5568
        %7715 = vmatprep.subr.bf16.mxu0 %v5566
        %7716 = vmatpush1.bf16.msra.mxu0 %v5565
        %7717 = vmatprep.subr.bf16.mxu0 %v5563
        %7718 = vmatpush1.bf16.msra.mxu0 %v5562
        %7719 = vmatprep.subr.bf16.mxu0 %v5560
        %7720 = vmatpush1.bf16.msra.mxu0 %v5559
        %7721 = vmatprep.subr.bf16.mxu0 %v5557
        %7722 = vmatpush1.bf16.msra.mxu0 %v5556
        %7723 = vmatprep.subr.bf16.mxu0 %v5554
        %7724 = vmatpush1.bf16.msra.mxu0 %v5553
        %7725 = vmatprep.subr.bf16.mxu0 %v5551
        %7726 = vmatpush1.bf16.msra.mxu0 %v5550
        %7727 = vmatprep.subr.bf16.mxu0 %v5548
        %7728 = vmatpush1.bf16.msra.mxu0 %v5547
        %7729 = vmatprep.subr.bf16.mxu0 %v5593
        %7730 = vmatpush2.bf16.msra.mxu0 %v5592
        %7731 = vmatprep.subr.bf16.mxu0 %v5590
        %7732 = vmatpush2.bf16.msra.mxu0 %v5589
        %7733 = vmatprep.subr.bf16.mxu0 %v5587
        %7734 = vmatpush2.bf16.msra.mxu0 %v5586
        %7735 = vmatprep.subr.bf16.mxu0 %v5584
        %7736 = vmatpush2.bf16.msra.mxu0 %v5583
        %7737 = vmatprep.subr.bf16.mxu0 %v5581
        %7738 = vmatpush2.bf16.msra.mxu0 %v5580
        %7739 = vmatprep.subr.bf16.mxu0 %v5578
        %7740 = vmatpush2.bf16.msra.mxu0 %v5577
        %7741 = vmatprep.subr.bf16.mxu0 %v5575
        %7742 = vmatpush2.bf16.msra.mxu0 %v5574
        %7743 = vmatprep.subr.bf16.mxu0 %v5572
        %7744 = vmatpush2.bf16.msra.mxu0 %v5571
        %7745 = vmatprep.mubr.bf16.mxu0 %v250
        %7746 = vmatmul.mubr.bf16.gmra.mxu0 %v249
        %v7747 = vpop.f32.mrf.mxu0
        %v7748 = vadd.f32 %v7705, %v7747
        %v7749 = vpop.f32.mrf.mxu0
        %v7750 = vadd.f32 %v7707, %v7749
        %v7751 = vpop.f32.mrf.mxu0
        %v7752 = vadd.f32 %v7709, %v7751
        %v7753 = vpop.f32.mrf.mxu0
        %v7754 = vadd.f32 %v7711, %v7753
        %7755 = vdwg.mxu0
        %7756 = vmatprep.subr.bf16.mxu0 %v5617
        %7757 = vmatpush1.bf16.msra.mxu0 %v5616
        %7758 = vmatprep.subr.bf16.mxu0 %v5614
        %7759 = vmatpush1.bf16.msra.mxu0 %v5613
        %7760 = vmatprep.subr.bf16.mxu0 %v5611
        %7761 = vmatpush1.bf16.msra.mxu0 %v5610
        %7762 = vmatprep.subr.bf16.mxu0 %v5608
        %7763 = vmatpush1.bf16.msra.mxu0 %v5607
        %7764 = vmatprep.subr.bf16.mxu0 %v5605
        %7765 = vmatpush1.bf16.msra.mxu0 %v5604
        %7766 = vmatprep.subr.bf16.mxu0 %v5602
        %7767 = vmatpush1.bf16.msra.mxu0 %v5601
        %7768 = vmatprep.subr.bf16.mxu0 %v5599
        %7769 = vmatpush1.bf16.msra.mxu0 %v5598
        %7770 = vmatprep.subr.bf16.mxu0 %v5596
        %7771 = vmatpush1.bf16.msra.mxu0 %v5595
        %7772 = vmatprep.subr.bf16.mxu0 %v5641
        %7773 = vmatpush2.bf16.msra.mxu0 %v5640
        %7774 = vmatprep.subr.bf16.mxu0 %v5638
        %7775 = vmatpush2.bf16.msra.mxu0 %v5637
        %7776 = vmatprep.subr.bf16.mxu0 %v5635
        %7777 = vmatpush2.bf16.msra.mxu0 %v5634
        %7778 = vmatprep.subr.bf16.mxu0 %v5632
        %7779 = vmatpush2.bf16.msra.mxu0 %v5631
        %7780 = vmatprep.subr.bf16.mxu0 %v5629
        %7781 = vmatpush2.bf16.msra.mxu0 %v5628
        %7782 = vmatprep.subr.bf16.mxu0 %v5626
        %7783 = vmatpush2.bf16.msra.mxu0 %v5625
        %7784 = vmatprep.subr.bf16.mxu0 %v5623
        %7785 = vmatpush2.bf16.msra.mxu0 %v5622
        %7786 = vmatprep.subr.bf16.mxu0 %v5620
        %7787 = vmatpush2.bf16.msra.mxu0 %v5619
        %7788 = vmatprep.mubr.bf16.mxu0 %v252
        %7789 = vmatmul.mubr.bf16.gmra.mxu0 %v251
        %v7790 = vpop.f32.mrf.mxu0
        %v7791 = vadd.f32 %v7748, %v7790
        %v7792 = vpop.f32.mrf.mxu0
        %v7793 = vadd.f32 %v7750, %v7792
        %v7794 = vpop.f32.mrf.mxu0
        %v7795 = vadd.f32 %v7752, %v7794
        %v7796 = vpop.f32.mrf.mxu0
        %v7797 = vadd.f32 %v7754, %v7796
        %7798 = vdwg.mxu0
        %7799 = vmatprep.subr.bf16.mxu0 %v5665
        %7800 = vmatpush1.bf16.msra.mxu0 %v5664
        %7801 = vmatprep.subr.bf16.mxu0 %v5662
        %7802 = vmatpush1.bf16.msra.mxu0 %v5661
        %7803 = vmatprep.subr.bf16.mxu0 %v5659
        %7804 = vmatpush1.bf16.msra.mxu0 %v5658
        %7805 = vmatprep.subr.bf16.mxu0 %v5656
        %7806 = vmatpush1.bf16.msra.mxu0 %v5655
        %7807 = vmatprep.subr.bf16.mxu0 %v5653
        %7808 = vmatpush1.bf16.msra.mxu0 %v5652
        %7809 = vmatprep.subr.bf16.mxu0 %v5650
        %7810 = vmatpush1.bf16.msra.mxu0 %v5649
        %7811 = vmatprep.subr.bf16.mxu0 %v5647
        %7812 = vmatpush1.bf16.msra.mxu0 %v5646
        %7813 = vmatprep.subr.bf16.mxu0 %v5644
        %7814 = vmatpush1.bf16.msra.mxu0 %v5643
        %7815 = vmatprep.subr.bf16.mxu0 %v5689
        %7816 = vmatpush2.bf16.msra.mxu0 %v5688
        %7817 = vmatprep.subr.bf16.mxu0 %v5686
        %7818 = vmatpush2.bf16.msra.mxu0 %v5685
        %7819 = vmatprep.subr.bf16.mxu0 %v5683
        %7820 = vmatpush2.bf16.msra.mxu0 %v5682
        %7821 = vmatprep.subr.bf16.mxu0 %v5680
        %7822 = vmatpush2.bf16.msra.mxu0 %v5679
        %7823 = vmatprep.subr.bf16.mxu0 %v5677
        %7824 = vmatpush2.bf16.msra.mxu0 %v5676
        %7825 = vmatprep.subr.bf16.mxu0 %v5674
        %7826 = vmatpush2.bf16.msra.mxu0 %v5673
        %7827 = vmatprep.subr.bf16.mxu0 %v5671
        %7828 = vmatpush2.bf16.msra.mxu0 %v5670
        %7829 = vmatprep.subr.bf16.mxu0 %v5668
        %7830 = vmatpush2.bf16.msra.mxu0 %v5667
        %7831 = vmatprep.mubr.bf16.mxu0 %v254
        %7832 = vmatmul.mubr.bf16.gmra.mxu0 %v253
        %v7833 = vpop.f32.mrf.mxu0
        %v7834 = vadd.f32 %v7791, %v7833
        %v7835 = vpop.f32.mrf.mxu0
        %v7836 = vadd.f32 %v7793, %v7835
        %v7837 = vpop.f32.mrf.mxu0
        %v7838 = vadd.f32 %v7795, %v7837
        %v7839 = vpop.f32.mrf.mxu0
        %v7840 = vadd.f32 %v7797, %v7839
        %7841 = vdwg.mxu0
        %7842 = vmatprep.subr.bf16.mxu0 %v5713
        %7843 = vmatpush1.bf16.msra.mxu0 %v5712
        %7844 = vmatprep.subr.bf16.mxu0 %v5710
        %7845 = vmatpush1.bf16.msra.mxu0 %v5709
        %7846 = vmatprep.subr.bf16.mxu0 %v5707
        %7847 = vmatpush1.bf16.msra.mxu0 %v5706
        %7848 = vmatprep.subr.bf16.mxu0 %v5704
        %7849 = vmatpush1.bf16.msra.mxu0 %v5703
        %7850 = vmatprep.subr.bf16.mxu0 %v5701
        %7851 = vmatpush1.bf16.msra.mxu0 %v5700
        %7852 = vmatprep.subr.bf16.mxu0 %v5698
        %7853 = vmatpush1.bf16.msra.mxu0 %v5697
        %7854 = vmatprep.subr.bf16.mxu0 %v5695
        %7855 = vmatpush1.bf16.msra.mxu0 %v5694
        %7856 = vmatprep.subr.bf16.mxu0 %v5692
        %7857 = vmatpush1.bf16.msra.mxu0 %v5691
        %7858 = vmatprep.subr.bf16.mxu0 %v5737
        %7859 = vmatpush2.bf16.msra.mxu0 %v5736
        %7860 = vmatprep.subr.bf16.mxu0 %v5734
        %7861 = vmatpush2.bf16.msra.mxu0 %v5733
        %7862 = vmatprep.subr.bf16.mxu0 %v5731
        %7863 = vmatpush2.bf16.msra.mxu0 %v5730
        %7864 = vmatprep.subr.bf16.mxu0 %v5728
        %7865 = vmatpush2.bf16.msra.mxu0 %v5727
        %7866 = vmatprep.subr.bf16.mxu0 %v5725
        %7867 = vmatpush2.bf16.msra.mxu0 %v5724
        %7868 = vmatprep.subr.bf16.mxu0 %v5722
        %7869 = vmatpush2.bf16.msra.mxu0 %v5721
        %7870 = vmatprep.subr.bf16.mxu0 %v5719
        %7871 = vmatpush2.bf16.msra.mxu0 %v5718
        %7872 = vmatprep.subr.bf16.mxu0 %v5716
        %7873 = vmatpush2.bf16.msra.mxu0 %v5715
        %7874 = vmatprep.mubr.bf16.mxu0 %v256
        %7875 = vmatmul.mubr.bf16.gmra.mxu0 %v255
        %v7876 = vpop.f32.mrf.mxu0
        %v7877 = vadd.f32 %v7834, %v7876
        %v7878 = vpop.f32.mrf.mxu0
        %v7879 = vadd.f32 %v7836, %v7878
        %v7880 = vpop.f32.mrf.mxu0
        %v7881 = vadd.f32 %v7838, %v7880
        %v7882 = vpop.f32.mrf.mxu0
        %v7883 = vadd.f32 %v7840, %v7882
        %7884 = vdwg.mxu0
        %7885 = vmatprep.subr.bf16.mxu0 %v5761
        %7886 = vmatpush1.bf16.msra.mxu0 %v5760
        %7887 = vmatprep.subr.bf16.mxu0 %v5758
        %7888 = vmatpush1.bf16.msra.mxu0 %v5757
        %7889 = vmatprep.subr.bf16.mxu0 %v5755
        %7890 = vmatpush1.bf16.msra.mxu0 %v5754
        %7891 = vmatprep.subr.bf16.mxu0 %v5752
        %7892 = vmatpush1.bf16.msra.mxu0 %v5751
        %7893 = vmatprep.subr.bf16.mxu0 %v5749
        %7894 = vmatpush1.bf16.msra.mxu0 %v5748
        %7895 = vmatprep.subr.bf16.mxu0 %v5746
        %7896 = vmatpush1.bf16.msra.mxu0 %v5745
        %7897 = vmatprep.subr.bf16.mxu0 %v5743
        %7898 = vmatpush1.bf16.msra.mxu0 %v5742
        %7899 = vmatprep.subr.bf16.mxu0 %v5740
        %7900 = vmatpush1.bf16.msra.mxu0 %v5739
        %7901 = vmatprep.subr.bf16.mxu0 %v5785
        %7902 = vmatpush2.bf16.msra.mxu0 %v5784
        %7903 = vmatprep.subr.bf16.mxu0 %v5782
        %7904 = vmatpush2.bf16.msra.mxu0 %v5781
        %7905 = vmatprep.subr.bf16.mxu0 %v5779
        %7906 = vmatpush2.bf16.msra.mxu0 %v5778
        %7907 = vmatprep.subr.bf16.mxu0 %v5776
        %7908 = vmatpush2.bf16.msra.mxu0 %v5775
        %7909 = vmatprep.subr.bf16.mxu0 %v5773
        %7910 = vmatpush2.bf16.msra.mxu0 %v5772
        %7911 = vmatprep.subr.bf16.mxu0 %v5770
        %7912 = vmatpush2.bf16.msra.mxu0 %v5769
        %7913 = vmatprep.subr.bf16.mxu0 %v5767
        %7914 = vmatpush2.bf16.msra.mxu0 %v5766
        %7915 = vmatprep.subr.bf16.mxu0 %v5764
        %7916 = vmatpush2.bf16.msra.mxu0 %v5763
        %7917 = vmatprep.mubr.bf16.mxu0 %v258
        %7918 = vmatmul.mubr.bf16.gmra.mxu0 %v257
        %v7919 = vpop.f32.mrf.mxu0
        %v7920 = vadd.f32 %v7877, %v7919
        %v7921 = vpop.f32.mrf.mxu0
        %v7922 = vadd.f32 %v7879, %v7921
        %v7923 = vpop.f32.mrf.mxu0
        %v7924 = vadd.f32 %v7881, %v7923
        %v7925 = vpop.f32.mrf.mxu0
        %v7926 = vadd.f32 %v7883, %v7925
        %7927 = vdwg.mxu0
        %7928 = vmatprep.subr.bf16.mxu0 %v5809
        %7929 = vmatpush1.bf16.msra.mxu0 %v5808
        %7930 = vmatprep.subr.bf16.mxu0 %v5806
        %7931 = vmatpush1.bf16.msra.mxu0 %v5805
        %7932 = vmatprep.subr.bf16.mxu0 %v5803
        %7933 = vmatpush1.bf16.msra.mxu0 %v5802
        %7934 = vmatprep.subr.bf16.mxu0 %v5800
        %7935 = vmatpush1.bf16.msra.mxu0 %v5799
        %7936 = vmatprep.subr.bf16.mxu0 %v5797
        %7937 = vmatpush1.bf16.msra.mxu0 %v5796
        %7938 = vmatprep.subr.bf16.mxu0 %v5794
        %7939 = vmatpush1.bf16.msra.mxu0 %v5793
        %7940 = vmatprep.subr.bf16.mxu0 %v5791
        %7941 = vmatpush1.bf16.msra.mxu0 %v5790
        %7942 = vmatprep.subr.bf16.mxu0 %v5788
        %7943 = vmatpush1.bf16.msra.mxu0 %v5787
        %7944 = vmatprep.subr.bf16.mxu0 %v5833
        %7945 = vmatpush2.bf16.msra.mxu0 %v5832
        %7946 = vmatprep.subr.bf16.mxu0 %v5830
        %7947 = vmatpush2.bf16.msra.mxu0 %v5829
        %7948 = vmatprep.subr.bf16.mxu0 %v5827
        %7949 = vmatpush2.bf16.msra.mxu0 %v5826
        %7950 = vmatprep.subr.bf16.mxu0 %v5824
        %7951 = vmatpush2.bf16.msra.mxu0 %v5823
        %7952 = vmatprep.subr.bf16.mxu0 %v5821
        %7953 = vmatpush2.bf16.msra.mxu0 %v5820
        %7954 = vmatprep.subr.bf16.mxu0 %v5818
        %7955 = vmatpush2.bf16.msra.mxu0 %v5817
        %7956 = vmatprep.subr.bf16.mxu0 %v5815
        %7957 = vmatpush2.bf16.msra.mxu0 %v5814
        %7958 = vmatprep.subr.bf16.mxu0 %v5812
        %7959 = vmatpush2.bf16.msra.mxu0 %v5811
        %7960 = vmatprep.mubr.bf16.mxu0 %v260
        %7961 = vmatmul.mubr.bf16.gmra.mxu0 %v259
        %v7962 = vpop.f32.mrf.mxu0
        %v7963 = vadd.f32 %v7920, %v7962
        %v7964 = vpop.f32.mrf.mxu0
        %v7965 = vadd.f32 %v7922, %v7964
        %v7966 = vpop.f32.mrf.mxu0
        %v7967 = vadd.f32 %v7924, %v7966
        %v7968 = vpop.f32.mrf.mxu0
        %v7969 = vadd.f32 %v7926, %v7968
        %7970 = vdwg.mxu0
        %7971 = vmatprep.subr.bf16.mxu0 %v5857
        %7972 = vmatpush1.bf16.msra.mxu0 %v5856
        %7973 = vmatprep.subr.bf16.mxu0 %v5854
        %7974 = vmatpush1.bf16.msra.mxu0 %v5853
        %7975 = vmatprep.subr.bf16.mxu0 %v5851
        %7976 = vmatpush1.bf16.msra.mxu0 %v5850
        %7977 = vmatprep.subr.bf16.mxu0 %v5848
        %7978 = vmatpush1.bf16.msra.mxu0 %v5847
        %7979 = vmatprep.subr.bf16.mxu0 %v5845
        %7980 = vmatpush1.bf16.msra.mxu0 %v5844
        %7981 = vmatprep.subr.bf16.mxu0 %v5842
        %7982 = vmatpush1.bf16.msra.mxu0 %v5841
        %7983 = vmatprep.subr.bf16.mxu0 %v5839
        %7984 = vmatpush1.bf16.msra.mxu0 %v5838
        %7985 = vmatprep.subr.bf16.mxu0 %v5836
        %7986 = vmatpush1.bf16.msra.mxu0 %v5835
        %7987 = vmatprep.subr.bf16.mxu0 %v5881
        %7988 = vmatpush2.bf16.msra.mxu0 %v5880
        %7989 = vmatprep.subr.bf16.mxu0 %v5878
        %7990 = vmatpush2.bf16.msra.mxu0 %v5877
        %7991 = vmatprep.subr.bf16.mxu0 %v5875
        %7992 = vmatpush2.bf16.msra.mxu0 %v5874
        %7993 = vmatprep.subr.bf16.mxu0 %v5872
        %7994 = vmatpush2.bf16.msra.mxu0 %v5871
        %7995 = vmatprep.subr.bf16.mxu0 %v5869
        %7996 = vmatpush2.bf16.msra.mxu0 %v5868
        %7997 = vmatprep.subr.bf16.mxu0 %v5866
        %7998 = vmatpush2.bf16.msra.mxu0 %v5865
        %7999 = vmatprep.subr.bf16.mxu0 %v5863
        %8000 = vmatpush2.bf16.msra.mxu0 %v5862
        %8001 = vmatprep.subr.bf16.mxu0 %v5860
        %8002 = vmatpush2.bf16.msra.mxu0 %v5859
        %8003 = vmatprep.mubr.bf16.mxu0 %v262
        %8004 = vmatmul.mubr.bf16.gmra.mxu0 %v261
        %v8005 = vpop.f32.mrf.mxu0
        %v8006 = vadd.f32 %v7963, %v8005
        %v8007 = vpop.f32.mrf.mxu0
        %v8008 = vadd.f32 %v7965, %v8007
        %v8009 = vpop.f32.mrf.mxu0
        %v8010 = vadd.f32 %v7967, %v8009
        %v8011 = vpop.f32.mrf.mxu0
        %v8012 = vadd.f32 %v7969, %v8011
        %8013 = vdwg.mxu0
        %8014 = vmatprep.subr.bf16.mxu0 %v5905
        %8015 = vmatpush1.bf16.msra.mxu0 %v5904
        %8016 = vmatprep.subr.bf16.mxu0 %v5902
        %8017 = vmatpush1.bf16.msra.mxu0 %v5901
        %8018 = vmatprep.subr.bf16.mxu0 %v5899
        %8019 = vmatpush1.bf16.msra.mxu0 %v5898
        %8020 = vmatprep.subr.bf16.mxu0 %v5896
        %8021 = vmatpush1.bf16.msra.mxu0 %v5895
        %8022 = vmatprep.subr.bf16.mxu0 %v5893
        %8023 = vmatpush1.bf16.msra.mxu0 %v5892
        %8024 = vmatprep.subr.bf16.mxu0 %v5890
        %8025 = vmatpush1.bf16.msra.mxu0 %v5889
        %8026 = vmatprep.subr.bf16.mxu0 %v5887
        %8027 = vmatpush1.bf16.msra.mxu0 %v5886
        %8028 = vmatprep.subr.bf16.mxu0 %v5884
        %8029 = vmatpush1.bf16.msra.mxu0 %v5883
        %8030 = vmatprep.subr.bf16.mxu0 %v5929
        %8031 = vmatpush2.bf16.msra.mxu0 %v5928
        %8032 = vmatprep.subr.bf16.mxu0 %v5926
        %8033 = vmatpush2.bf16.msra.mxu0 %v5925
        %8034 = vmatprep.subr.bf16.mxu0 %v5923
        %8035 = vmatpush2.bf16.msra.mxu0 %v5922
        %8036 = vmatprep.subr.bf16.mxu0 %v5920
        %8037 = vmatpush2.bf16.msra.mxu0 %v5919
        %8038 = vmatprep.subr.bf16.mxu0 %v5917
        %8039 = vmatpush2.bf16.msra.mxu0 %v5916
        %8040 = vmatprep.subr.bf16.mxu0 %v5914
        %8041 = vmatpush2.bf16.msra.mxu0 %v5913
        %8042 = vmatprep.subr.bf16.mxu0 %v5911
        %8043 = vmatpush2.bf16.msra.mxu0 %v5910
        %8044 = vmatprep.subr.bf16.mxu0 %v5908
        %8045 = vmatpush2.bf16.msra.mxu0 %v5907
        %8046 = vmatprep.mubr.bf16.mxu0 %v264
        %8047 = vmatmul.mubr.bf16.gmra.mxu0 %v263
        %v8048 = vpop.f32.mrf.mxu0
        %v8049 = vadd.f32 %v8006, %v8048
        %v8050 = vpop.f32.mrf.mxu0
        %v8051 = vadd.f32 %v8008, %v8050
        %v8052 = vpop.f32.mrf.mxu0
        %v8053 = vadd.f32 %v8010, %v8052
        %v8054 = vpop.f32.mrf.mxu0
        %v8055 = vadd.f32 %v8012, %v8054
        %8056 = vdwg.mxu0
        %8057 = vmatprep.subr.bf16.mxu0 %v5953
        %8058 = vmatpush1.bf16.msra.mxu0 %v5952
        %8059 = vmatprep.subr.bf16.mxu0 %v5950
        %8060 = vmatpush1.bf16.msra.mxu0 %v5949
        %8061 = vmatprep.subr.bf16.mxu0 %v5947
        %8062 = vmatpush1.bf16.msra.mxu0 %v5946
        %8063 = vmatprep.subr.bf16.mxu0 %v5944
        %8064 = vmatpush1.bf16.msra.mxu0 %v5943
        %8065 = vmatprep.subr.bf16.mxu0 %v5941
        %8066 = vmatpush1.bf16.msra.mxu0 %v5940
        %8067 = vmatprep.subr.bf16.mxu0 %v5938
        %8068 = vmatpush1.bf16.msra.mxu0 %v5937
        %8069 = vmatprep.subr.bf16.mxu0 %v5935
        %8070 = vmatpush1.bf16.msra.mxu0 %v5934
        %8071 = vmatprep.subr.bf16.mxu0 %v5932
        %8072 = vmatpush1.bf16.msra.mxu0 %v5931
        %8073 = vmatprep.subr.bf16.mxu0 %v5977
        %8074 = vmatpush2.bf16.msra.mxu0 %v5976
        %8075 = vmatprep.subr.bf16.mxu0 %v5974
        %8076 = vmatpush2.bf16.msra.mxu0 %v5973
        %8077 = vmatprep.subr.bf16.mxu0 %v5971
        %8078 = vmatpush2.bf16.msra.mxu0 %v5970
        %8079 = vmatprep.subr.bf16.mxu0 %v5968
        %8080 = vmatpush2.bf16.msra.mxu0 %v5967
        %8081 = vmatprep.subr.bf16.mxu0 %v5965
        %8082 = vmatpush2.bf16.msra.mxu0 %v5964
        %8083 = vmatprep.subr.bf16.mxu0 %v5962
        %8084 = vmatpush2.bf16.msra.mxu0 %v5961
        %8085 = vmatprep.subr.bf16.mxu0 %v5959
        %8086 = vmatpush2.bf16.msra.mxu0 %v5958
        %8087 = vmatprep.subr.bf16.mxu0 %v5956
        %8088 = vmatpush2.bf16.msra.mxu0 %v5955
        %8089 = vmatprep.mubr.bf16.mxu0 %v266
        %8090 = vmatmul.mubr.bf16.gmra.mxu0 %v265
        %v8091 = vpop.f32.mrf.mxu0
        %v8092 = vadd.f32 %v8049, %v8091
        %v8093 = vpop.f32.mrf.mxu0
        %v8094 = vadd.f32 %v8051, %v8093
        %v8095 = vpop.f32.mrf.mxu0
        %v8096 = vadd.f32 %v8053, %v8095
        %v8097 = vpop.f32.mrf.mxu0
        %v8098 = vadd.f32 %v8055, %v8097
        %8099 = vdwg.mxu0
        %8100 = vmatprep.subr.bf16.mxu0 %v6001
        %8101 = vmatpush1.bf16.msra.mxu0 %v6000
        %8102 = vmatprep.subr.bf16.mxu0 %v5998
        %8103 = vmatpush1.bf16.msra.mxu0 %v5997
        %8104 = vmatprep.subr.bf16.mxu0 %v5995
        %8105 = vmatpush1.bf16.msra.mxu0 %v5994
        %8106 = vmatprep.subr.bf16.mxu0 %v5992
        %8107 = vmatpush1.bf16.msra.mxu0 %v5991
        %8108 = vmatprep.subr.bf16.mxu0 %v5989
        %8109 = vmatpush1.bf16.msra.mxu0 %v5988
        %8110 = vmatprep.subr.bf16.mxu0 %v5986
        %8111 = vmatpush1.bf16.msra.mxu0 %v5985
        %8112 = vmatprep.subr.bf16.mxu0 %v5983
        %8113 = vmatpush1.bf16.msra.mxu0 %v5982
        %8114 = vmatprep.subr.bf16.mxu0 %v5980
        %8115 = vmatpush1.bf16.msra.mxu0 %v5979
        %8116 = vmatprep.subr.bf16.mxu0 %v6025
        %8117 = vmatpush2.bf16.msra.mxu0 %v6024
        %8118 = vmatprep.subr.bf16.mxu0 %v6022
        %8119 = vmatpush2.bf16.msra.mxu0 %v6021
        %8120 = vmatprep.subr.bf16.mxu0 %v6019
        %8121 = vmatpush2.bf16.msra.mxu0 %v6018
        %8122 = vmatprep.subr.bf16.mxu0 %v6016
        %8123 = vmatpush2.bf16.msra.mxu0 %v6015
        %8124 = vmatprep.subr.bf16.mxu0 %v6013
        %8125 = vmatpush2.bf16.msra.mxu0 %v6012
        %8126 = vmatprep.subr.bf16.mxu0 %v6010
        %8127 = vmatpush2.bf16.msra.mxu0 %v6009
        %8128 = vmatprep.subr.bf16.mxu0 %v6007
        %8129 = vmatpush2.bf16.msra.mxu0 %v6006
        %8130 = vmatprep.subr.bf16.mxu0 %v6004
        %8131 = vmatpush2.bf16.msra.mxu0 %v6003
        %8132 = vmatprep.mubr.bf16.mxu0 %v268
        %8133 = vmatmul.mubr.bf16.gmra.mxu0 %v267
        %v8134 = vpop.f32.mrf.mxu0
        %v8135 = vadd.f32 %v8092, %v8134
        %v8136 = vpop.f32.mrf.mxu0
        %v8137 = vadd.f32 %v8094, %v8136
        %v8138 = vpop.f32.mrf.mxu0
        %v8139 = vadd.f32 %v8096, %v8138
        %v8140 = vpop.f32.mrf.mxu0
        %v8141 = vadd.f32 %v8098, %v8140
        %8142 = vdwg.mxu0
        %8143 = vmatprep.subr.bf16.mxu0 %v6049
        %8144 = vmatpush1.bf16.msra.mxu0 %v6048
        %8145 = vmatprep.subr.bf16.mxu0 %v6046
        %8146 = vmatpush1.bf16.msra.mxu0 %v6045
        %8147 = vmatprep.subr.bf16.mxu0 %v6043
        %8148 = vmatpush1.bf16.msra.mxu0 %v6042
        %8149 = vmatprep.subr.bf16.mxu0 %v6040
        %8150 = vmatpush1.bf16.msra.mxu0 %v6039
        %8151 = vmatprep.subr.bf16.mxu0 %v6037
        %8152 = vmatpush1.bf16.msra.mxu0 %v6036
        %8153 = vmatprep.subr.bf16.mxu0 %v6034
        %8154 = vmatpush1.bf16.msra.mxu0 %v6033
        %8155 = vmatprep.subr.bf16.mxu0 %v6031
        %8156 = vmatpush1.bf16.msra.mxu0 %v6030
        %8157 = vmatprep.subr.bf16.mxu0 %v6028
        %8158 = vmatpush1.bf16.msra.mxu0 %v6027
        %8159 = vmatprep.subr.bf16.mxu0 %v6073
        %8160 = vmatpush2.bf16.msra.mxu0 %v6072
        %8161 = vmatprep.subr.bf16.mxu0 %v6070
        %8162 = vmatpush2.bf16.msra.mxu0 %v6069
        %8163 = vmatprep.subr.bf16.mxu0 %v6067
        %8164 = vmatpush2.bf16.msra.mxu0 %v6066
        %8165 = vmatprep.subr.bf16.mxu0 %v6064
        %8166 = vmatpush2.bf16.msra.mxu0 %v6063
        %8167 = vmatprep.subr.bf16.mxu0 %v6061
        %8168 = vmatpush2.bf16.msra.mxu0 %v6060
        %8169 = vmatprep.subr.bf16.mxu0 %v6058
        %8170 = vmatpush2.bf16.msra.mxu0 %v6057
        %8171 = vmatprep.subr.bf16.mxu0 %v6055
        %8172 = vmatpush2.bf16.msra.mxu0 %v6054
        %8173 = vmatprep.subr.bf16.mxu0 %v6052
        %8174 = vmatpush2.bf16.msra.mxu0 %v6051
        %8175 = vmatprep.mubr.bf16.mxu0 %v270
        %8176 = vmatmul.mubr.bf16.gmra.mxu0 %v269
        %v8177 = vpop.f32.mrf.mxu0
        %v8178 = vadd.f32 %v8135, %v8177
        %v8179 = vpop.f32.mrf.mxu0
        %v8180 = vadd.f32 %v8137, %v8179
        %v8181 = vpop.f32.mrf.mxu0
        %v8182 = vadd.f32 %v8139, %v8181
        %v8183 = vpop.f32.mrf.mxu0
        %v8184 = vadd.f32 %v8141, %v8183
        %8185 = vdwg.mxu0
        %8186 = vmatprep.subr.bf16.mxu0 %v6097
        %8187 = vmatpush1.bf16.msra.mxu0 %v6096
        %8188 = vmatprep.subr.bf16.mxu0 %v6094
        %8189 = vmatpush1.bf16.msra.mxu0 %v6093
        %8190 = vmatprep.subr.bf16.mxu0 %v6091
        %8191 = vmatpush1.bf16.msra.mxu0 %v6090
        %8192 = vmatprep.subr.bf16.mxu0 %v6088
        %8193 = vmatpush1.bf16.msra.mxu0 %v6087
        %8194 = vmatprep.subr.bf16.mxu0 %v6085
        %8195 = vmatpush1.bf16.msra.mxu0 %v6084
        %8196 = vmatprep.subr.bf16.mxu0 %v6082
        %8197 = vmatpush1.bf16.msra.mxu0 %v6081
        %8198 = vmatprep.subr.bf16.mxu0 %v6079
        %8199 = vmatpush1.bf16.msra.mxu0 %v6078
        %8200 = vmatprep.subr.bf16.mxu0 %v6076
        %8201 = vmatpush1.bf16.msra.mxu0 %v6075
        %8202 = vmatprep.subr.bf16.mxu0 %v6121
        %8203 = vmatpush2.bf16.msra.mxu0 %v6120
        %8204 = vmatprep.subr.bf16.mxu0 %v6118
        %8205 = vmatpush2.bf16.msra.mxu0 %v6117
        %8206 = vmatprep.subr.bf16.mxu0 %v6115
        %8207 = vmatpush2.bf16.msra.mxu0 %v6114
        %8208 = vmatprep.subr.bf16.mxu0 %v6112
        %8209 = vmatpush2.bf16.msra.mxu0 %v6111
        %8210 = vmatprep.subr.bf16.mxu0 %v6109
        %8211 = vmatpush2.bf16.msra.mxu0 %v6108
        %8212 = vmatprep.subr.bf16.mxu0 %v6106
        %8213 = vmatpush2.bf16.msra.mxu0 %v6105
        %8214 = vmatprep.subr.bf16.mxu0 %v6103
        %8215 = vmatpush2.bf16.msra.mxu0 %v6102
        %8216 = vmatprep.subr.bf16.mxu0 %v6100
        %8217 = vmatpush2.bf16.msra.mxu0 %v6099
        %8218 = vmatprep.mubr.bf16.mxu0 %v272
        %8219 = vmatmul.mubr.bf16.gmra.mxu0 %v271
        %v8220 = vpop.f32.mrf.mxu0
        %v8221 = vadd.f32 %v8178, %v8220
        %v8222 = vpop.f32.mrf.mxu0
        %v8223 = vadd.f32 %v8180, %v8222
        %v8224 = vpop.f32.mrf.mxu0
        %v8225 = vadd.f32 %v8182, %v8224
        %v8226 = vpop.f32.mrf.mxu0
        %v8227 = vadd.f32 %v8184, %v8226
        %8228 = vdwg.mxu0
        %8229 = vmatprep.subr.bf16.mxu0 %v6145
        %8230 = vmatpush1.bf16.msra.mxu0 %v6144
        %8231 = vmatprep.subr.bf16.mxu0 %v6142
        %8232 = vmatpush1.bf16.msra.mxu0 %v6141
        %8233 = vmatprep.subr.bf16.mxu0 %v6139
        %8234 = vmatpush1.bf16.msra.mxu0 %v6138
        %8235 = vmatprep.subr.bf16.mxu0 %v6136
        %8236 = vmatpush1.bf16.msra.mxu0 %v6135
        %8237 = vmatprep.subr.bf16.mxu0 %v6133
        %8238 = vmatpush1.bf16.msra.mxu0 %v6132
        %8239 = vmatprep.subr.bf16.mxu0 %v6130
        %8240 = vmatpush1.bf16.msra.mxu0 %v6129
        %8241 = vmatprep.subr.bf16.mxu0 %v6127
        %8242 = vmatpush1.bf16.msra.mxu0 %v6126
        %8243 = vmatprep.subr.bf16.mxu0 %v6124
        %8244 = vmatpush1.bf16.msra.mxu0 %v6123
        %8245 = vmatprep.subr.bf16.mxu0 %v6169
        %8246 = vmatpush2.bf16.msra.mxu0 %v6168
        %8247 = vmatprep.subr.bf16.mxu0 %v6166
        %8248 = vmatpush2.bf16.msra.mxu0 %v6165
        %8249 = vmatprep.subr.bf16.mxu0 %v6163
        %8250 = vmatpush2.bf16.msra.mxu0 %v6162
        %8251 = vmatprep.subr.bf16.mxu0 %v6160
        %8252 = vmatpush2.bf16.msra.mxu0 %v6159
        %8253 = vmatprep.subr.bf16.mxu0 %v6157
        %8254 = vmatpush2.bf16.msra.mxu0 %v6156
        %8255 = vmatprep.subr.bf16.mxu0 %v6154
        %8256 = vmatpush2.bf16.msra.mxu0 %v6153
        %8257 = vmatprep.subr.bf16.mxu0 %v6151
        %8258 = vmatpush2.bf16.msra.mxu0 %v6150
        %8259 = vmatprep.subr.bf16.mxu0 %v6148
        %8260 = vmatpush2.bf16.msra.mxu0 %v6147
        %8261 = vmatprep.mubr.bf16.mxu0 %v274
        %8262 = vmatmul.mubr.bf16.gmra.mxu0 %v273
        %v8263 = vpop.f32.mrf.mxu0
        %v8264 = vadd.f32 %v8221, %v8263
        %v8265 = vpop.f32.mrf.mxu0
        %v8266 = vadd.f32 %v8223, %v8265
        %v8267 = vpop.f32.mrf.mxu0
        %v8268 = vadd.f32 %v8225, %v8267
        %v8269 = vpop.f32.mrf.mxu0
        %v8270 = vadd.f32 %v8227, %v8269
        %8271 = vdwg.mxu0
        %8272 = vmatprep.subr.bf16.mxu0 %v6193
        %8273 = vmatpush1.bf16.msra.mxu0 %v6192
        %8274 = vmatprep.subr.bf16.mxu0 %v6190
        %8275 = vmatpush1.bf16.msra.mxu0 %v6189
        %8276 = vmatprep.subr.bf16.mxu0 %v6187
        %8277 = vmatpush1.bf16.msra.mxu0 %v6186
        %8278 = vmatprep.subr.bf16.mxu0 %v6184
        %8279 = vmatpush1.bf16.msra.mxu0 %v6183
        %8280 = vmatprep.subr.bf16.mxu0 %v6181
        %8281 = vmatpush1.bf16.msra.mxu0 %v6180
        %8282 = vmatprep.subr.bf16.mxu0 %v6178
        %8283 = vmatpush1.bf16.msra.mxu0 %v6177
        %8284 = vmatprep.subr.bf16.mxu0 %v6175
        %8285 = vmatpush1.bf16.msra.mxu0 %v6174
        %8286 = vmatprep.subr.bf16.mxu0 %v6172
        %8287 = vmatpush1.bf16.msra.mxu0 %v6171
        %8288 = vmatprep.subr.bf16.mxu0 %v6217
        %8289 = vmatpush2.bf16.msra.mxu0 %v6216
        %8290 = vmatprep.subr.bf16.mxu0 %v6214
        %8291 = vmatpush2.bf16.msra.mxu0 %v6213
        %8292 = vmatprep.subr.bf16.mxu0 %v6211
        %8293 = vmatpush2.bf16.msra.mxu0 %v6210
        %8294 = vmatprep.subr.bf16.mxu0 %v6208
        %8295 = vmatpush2.bf16.msra.mxu0 %v6207
        %8296 = vmatprep.subr.bf16.mxu0 %v6205
        %8297 = vmatpush2.bf16.msra.mxu0 %v6204
        %8298 = vmatprep.subr.bf16.mxu0 %v6202
        %8299 = vmatpush2.bf16.msra.mxu0 %v6201
        %8300 = vmatprep.subr.bf16.mxu0 %v6199
        %8301 = vmatpush2.bf16.msra.mxu0 %v6198
        %8302 = vmatprep.subr.bf16.mxu0 %v6196
        %8303 = vmatpush2.bf16.msra.mxu0 %v6195
        %8304 = vmatprep.mubr.bf16.mxu0 %v276
        %8305 = vmatmul.mubr.bf16.gmra.mxu0 %v275
        %v8306 = vpop.f32.mrf.mxu0
        %v8307 = vadd.f32 %v8264, %v8306
        %v8308 = vpop.f32.mrf.mxu0
        %v8309 = vadd.f32 %v8266, %v8308
        %v8310 = vpop.f32.mrf.mxu0
        %v8311 = vadd.f32 %v8268, %v8310
        %v8312 = vpop.f32.mrf.mxu0
        %v8313 = vadd.f32 %v8270, %v8312
        %8314 = vdwg.mxu0
        %8315 = vmatprep.subr.bf16.mxu0 %v6241
        %8316 = vmatpush1.bf16.msra.mxu0 %v6240
        %8317 = vmatprep.subr.bf16.mxu0 %v6238
        %8318 = vmatpush1.bf16.msra.mxu0 %v6237
        %8319 = vmatprep.subr.bf16.mxu0 %v6235
        %8320 = vmatpush1.bf16.msra.mxu0 %v6234
        %8321 = vmatprep.subr.bf16.mxu0 %v6232
        %8322 = vmatpush1.bf16.msra.mxu0 %v6231
        %8323 = vmatprep.subr.bf16.mxu0 %v6229
        %8324 = vmatpush1.bf16.msra.mxu0 %v6228
        %8325 = vmatprep.subr.bf16.mxu0 %v6226
        %8326 = vmatpush1.bf16.msra.mxu0 %v6225
        %8327 = vmatprep.subr.bf16.mxu0 %v6223
        %8328 = vmatpush1.bf16.msra.mxu0 %v6222
        %8329 = vmatprep.subr.bf16.mxu0 %v6220
        %8330 = vmatpush1.bf16.msra.mxu0 %v6219
        %8331 = vmatprep.subr.bf16.mxu0 %v6265
        %8332 = vmatpush2.bf16.msra.mxu0 %v6264
        %8333 = vmatprep.subr.bf16.mxu0 %v6262
        %8334 = vmatpush2.bf16.msra.mxu0 %v6261
        %8335 = vmatprep.subr.bf16.mxu0 %v6259
        %8336 = vmatpush2.bf16.msra.mxu0 %v6258
        %8337 = vmatprep.subr.bf16.mxu0 %v6256
        %8338 = vmatpush2.bf16.msra.mxu0 %v6255
        %8339 = vmatprep.subr.bf16.mxu0 %v6253
        %8340 = vmatpush2.bf16.msra.mxu0 %v6252
        %8341 = vmatprep.subr.bf16.mxu0 %v6250
        %8342 = vmatpush2.bf16.msra.mxu0 %v6249
        %8343 = vmatprep.subr.bf16.mxu0 %v6247
        %8344 = vmatpush2.bf16.msra.mxu0 %v6246
        %8345 = vmatprep.subr.bf16.mxu0 %v6244
        %8346 = vmatpush2.bf16.msra.mxu0 %v6243
        %8347 = vmatprep.mubr.bf16.mxu0 %v278
        %8348 = vmatmul.mubr.bf16.gmra.mxu0 %v277
        %v8349 = vpop.f32.mrf.mxu0
        %v8350 = vadd.f32 %v8307, %v8349
        %v8351 = vpop.f32.mrf.mxu0
        %v8352 = vadd.f32 %v8309, %v8351
        %v8353 = vpop.f32.mrf.mxu0
        %v8354 = vadd.f32 %v8311, %v8353
        %v8355 = vpop.f32.mrf.mxu0
        %v8356 = vadd.f32 %v8313, %v8355
        %8357 = vdwg.mxu0
        %8358 = vmatprep.subr.bf16.mxu0 %v6289
        %8359 = vmatpush1.bf16.msra.mxu0 %v6288
        %8360 = vmatprep.subr.bf16.mxu0 %v6286
        %8361 = vmatpush1.bf16.msra.mxu0 %v6285
        %8362 = vmatprep.subr.bf16.mxu0 %v6283
        %8363 = vmatpush1.bf16.msra.mxu0 %v6282
        %8364 = vmatprep.subr.bf16.mxu0 %v6280
        %8365 = vmatpush1.bf16.msra.mxu0 %v6279
        %8366 = vmatprep.subr.bf16.mxu0 %v6277
        %8367 = vmatpush1.bf16.msra.mxu0 %v6276
        %8368 = vmatprep.subr.bf16.mxu0 %v6274
        %8369 = vmatpush1.bf16.msra.mxu0 %v6273
        %8370 = vmatprep.subr.bf16.mxu0 %v6271
        %8371 = vmatpush1.bf16.msra.mxu0 %v6270
        %8372 = vmatprep.subr.bf16.mxu0 %v6268
        %8373 = vmatpush1.bf16.msra.mxu0 %v6267
        %8374 = vmatprep.subr.bf16.mxu0 %v6313
        %8375 = vmatpush2.bf16.msra.mxu0 %v6312
        %8376 = vmatprep.subr.bf16.mxu0 %v6310
        %8377 = vmatpush2.bf16.msra.mxu0 %v6309
        %8378 = vmatprep.subr.bf16.mxu0 %v6307
        %8379 = vmatpush2.bf16.msra.mxu0 %v6306
        %8380 = vmatprep.subr.bf16.mxu0 %v6304
        %8381 = vmatpush2.bf16.msra.mxu0 %v6303
        %8382 = vmatprep.subr.bf16.mxu0 %v6301
        %8383 = vmatpush2.bf16.msra.mxu0 %v6300
        %8384 = vmatprep.subr.bf16.mxu0 %v6298
        %8385 = vmatpush2.bf16.msra.mxu0 %v6297
        %8386 = vmatprep.subr.bf16.mxu0 %v6295
        %8387 = vmatpush2.bf16.msra.mxu0 %v6294
        %8388 = vmatprep.subr.bf16.mxu0 %v6292
        %8389 = vmatpush2.bf16.msra.mxu0 %v6291
        %8390 = vmatprep.mubr.bf16.mxu0 %v280
        %8391 = vmatmul.mubr.bf16.gmra.mxu0 %v279
        %v8392 = vpop.f32.mrf.mxu0
        %v8393 = vadd.f32 %v8350, %v8392
        %v8394 = vpop.f32.mrf.mxu0
        %v8395 = vadd.f32 %v8352, %v8394
        %v8396 = vpop.f32.mrf.mxu0
        %v8397 = vadd.f32 %v8354, %v8396
        %v8398 = vpop.f32.mrf.mxu0
        %v8399 = vadd.f32 %v8356, %v8398
        %8400 = vdwg.mxu0
        %8401 = vmatprep.subr.bf16.mxu0 %v6337
        %8402 = vmatpush1.bf16.msra.mxu0 %v6336
        %8403 = vmatprep.subr.bf16.mxu0 %v6334
        %8404 = vmatpush1.bf16.msra.mxu0 %v6333
        %8405 = vmatprep.subr.bf16.mxu0 %v6331
        %8406 = vmatpush1.bf16.msra.mxu0 %v6330
        %8407 = vmatprep.subr.bf16.mxu0 %v6328
        %8408 = vmatpush1.bf16.msra.mxu0 %v6327
        %8409 = vmatprep.subr.bf16.mxu0 %v6325
        %8410 = vmatpush1.bf16.msra.mxu0 %v6324
        %8411 = vmatprep.subr.bf16.mxu0 %v6322
        %8412 = vmatpush1.bf16.msra.mxu0 %v6321
        %8413 = vmatprep.subr.bf16.mxu0 %v6319
        %8414 = vmatpush1.bf16.msra.mxu0 %v6318
        %8415 = vmatprep.subr.bf16.mxu0 %v6316
        %8416 = vmatpush1.bf16.msra.mxu0 %v6315
        %8417 = vmatprep.subr.bf16.mxu0 %v6361
        %8418 = vmatpush2.bf16.msra.mxu0 %v6360
        %8419 = vmatprep.subr.bf16.mxu0 %v6358
        %8420 = vmatpush2.bf16.msra.mxu0 %v6357
        %8421 = vmatprep.subr.bf16.mxu0 %v6355
        %8422 = vmatpush2.bf16.msra.mxu0 %v6354
        %8423 = vmatprep.subr.bf16.mxu0 %v6352
        %8424 = vmatpush2.bf16.msra.mxu0 %v6351
        %8425 = vmatprep.subr.bf16.mxu0 %v6349
        %8426 = vmatpush2.bf16.msra.mxu0 %v6348
        %8427 = vmatprep.subr.bf16.mxu0 %v6346
        %8428 = vmatpush2.bf16.msra.mxu0 %v6345
        %8429 = vmatprep.subr.bf16.mxu0 %v6343
        %8430 = vmatpush2.bf16.msra.mxu0 %v6342
        %8431 = vmatprep.subr.bf16.mxu0 %v6340
        %8432 = vmatpush2.bf16.msra.mxu0 %v6339
        %8433 = vmatprep.mubr.bf16.mxu0 %v282
        %8434 = vmatmul.mubr.bf16.gmra.mxu0 %v281
        %v8435 = vpop.f32.mrf.mxu0
        %v8436 = vadd.f32 %v8393, %v8435
        %v8437 = vpop.f32.mrf.mxu0
        %v8438 = vadd.f32 %v8395, %v8437
        %v8439 = vpop.f32.mrf.mxu0
        %v8440 = vadd.f32 %v8397, %v8439
        %v8441 = vpop.f32.mrf.mxu0
        %v8442 = vadd.f32 %v8399, %v8441
        %8443 = vdwg.mxu0
        %8444 = vmatprep.subr.bf16.mxu0 %v6385
        %8445 = vmatpush1.bf16.msra.mxu0 %v6384
        %8446 = vmatprep.subr.bf16.mxu0 %v6382
        %8447 = vmatpush1.bf16.msra.mxu0 %v6381
        %8448 = vmatprep.subr.bf16.mxu0 %v6379
        %8449 = vmatpush1.bf16.msra.mxu0 %v6378
        %8450 = vmatprep.subr.bf16.mxu0 %v6376
        %8451 = vmatpush1.bf16.msra.mxu0 %v6375
        %8452 = vmatprep.subr.bf16.mxu0 %v6373
        %8453 = vmatpush1.bf16.msra.mxu0 %v6372
        %8454 = vmatprep.subr.bf16.mxu0 %v6370
        %8455 = vmatpush1.bf16.msra.mxu0 %v6369
        %8456 = vmatprep.subr.bf16.mxu0 %v6367
        %8457 = vmatpush1.bf16.msra.mxu0 %v6366
        %8458 = vmatprep.subr.bf16.mxu0 %v6364
        %8459 = vmatpush1.bf16.msra.mxu0 %v6363
        %8460 = vmatprep.subr.bf16.mxu0 %v6409
        %8461 = vmatpush2.bf16.msra.mxu0 %v6408
        %8462 = vmatprep.subr.bf16.mxu0 %v6406
        %8463 = vmatpush2.bf16.msra.mxu0 %v6405
        %8464 = vmatprep.subr.bf16.mxu0 %v6403
        %8465 = vmatpush2.bf16.msra.mxu0 %v6402
        %8466 = vmatprep.subr.bf16.mxu0 %v6400
        %8467 = vmatpush2.bf16.msra.mxu0 %v6399
        %8468 = vmatprep.subr.bf16.mxu0 %v6397
        %8469 = vmatpush2.bf16.msra.mxu0 %v6396
        %8470 = vmatprep.subr.bf16.mxu0 %v6394
        %8471 = vmatpush2.bf16.msra.mxu0 %v6393
        %8472 = vmatprep.subr.bf16.mxu0 %v6391
        %8473 = vmatpush2.bf16.msra.mxu0 %v6390
        %8474 = vmatprep.subr.bf16.mxu0 %v6388
        %8475 = vmatpush2.bf16.msra.mxu0 %v6387
        %8476 = vmatprep.mubr.bf16.mxu0 %v284
        %8477 = vmatmul.mubr.bf16.gmra.mxu0 %v283
        %v8478 = vpop.f32.mrf.mxu0
        %v8479 = vadd.f32 %v8436, %v8478
        %v8480 = vpop.f32.mrf.mxu0
        %v8481 = vadd.f32 %v8438, %v8480
        %v8482 = vpop.f32.mrf.mxu0
        %v8483 = vadd.f32 %v8440, %v8482
        %v8484 = vpop.f32.mrf.mxu0
        %v8485 = vadd.f32 %v8442, %v8484
        %8486 = vdwg.mxu0
        %8487 = vmatprep.subr.bf16.mxu0 %v6433
        %8488 = vmatpush1.bf16.msra.mxu0 %v6432
        %8489 = vmatprep.subr.bf16.mxu0 %v6430
        %8490 = vmatpush1.bf16.msra.mxu0 %v6429
        %8491 = vmatprep.subr.bf16.mxu0 %v6427
        %8492 = vmatpush1.bf16.msra.mxu0 %v6426
        %8493 = vmatprep.subr.bf16.mxu0 %v6424
        %8494 = vmatpush1.bf16.msra.mxu0 %v6423
        %8495 = vmatprep.subr.bf16.mxu0 %v6421
        %8496 = vmatpush1.bf16.msra.mxu0 %v6420
        %8497 = vmatprep.subr.bf16.mxu0 %v6418
        %8498 = vmatpush1.bf16.msra.mxu0 %v6417
        %8499 = vmatprep.subr.bf16.mxu0 %v6415
        %8500 = vmatpush1.bf16.msra.mxu0 %v6414
        %8501 = vmatprep.subr.bf16.mxu0 %v6412
        %8502 = vmatpush1.bf16.msra.mxu0 %v6411
        %8503 = vmatprep.subr.bf16.mxu0 0
        %8504 = vmatpush2.bf16.msra.mxu0 0
        %8505 = vmatprep.subr.bf16.mxu0 0
        %8506 = vmatpush2.bf16.msra.mxu0 0
        %8507 = vmatprep.subr.bf16.mxu0 0
        %8508 = vmatpush2.bf16.msra.mxu0 0
        %8509 = vmatprep.subr.bf16.mxu0 0
        %8510 = vmatpush2.bf16.msra.mxu0 0
        %8511 = vmatprep.subr.bf16.mxu0 0
        %8512 = vmatpush2.bf16.msra.mxu0 0
        %8513 = vmatprep.subr.bf16.mxu0 0
        %8514 = vmatpush2.bf16.msra.mxu0 0
        %8515 = vmatprep.subr.bf16.mxu0 %v7536
        %8516 = vmatpush2.bf16.msra.mxu0 %v7533
        %8517 = vmatprep.subr.bf16.mxu0 %v6436
        %8518 = vmatpush2.bf16.msra.mxu0 %v6435
        %8519 = vmatprep.mubr.bf16.mxu0 %v7526
        %8520 = vmatmul.mubr.bf16.gmra.mxu0 %v285
        %v8521 = vpop.f32.mrf.mxu0
        %v8522 = vadd.f32 %v8479, %v8521
        %v8523 = vpop.f32.mrf.mxu0
        %v8524 = vadd.f32 %v8481, %v8523
        %v8525 = vpop.f32.mrf.mxu0
        %v8526 = vadd.f32 %v8483, %v8525
        %v8527 = vpop.f32.mrf.mxu0
        %v8528 = vadd.f32 %v8485, %v8527
        %8529 = vdwg.mxu0
        %8530 = vmatprep.subr.bf16.mxu0 0
        %8531 = vmatpush1.bf16.msra.mxu0 %v5378
        %8532 = vmatprep.subr.bf16.mxu0 0
        %8533 = vmatpush1.bf16.msra.mxu0 %v5375
        %8534 = vmatprep.subr.bf16.mxu0 0
        %8535 = vmatpush1.bf16.msra.mxu0 %v5372
        %8536 = vmatprep.subr.bf16.mxu0 0
        %8537 = vmatpush1.bf16.msra.mxu0 %v5369
        %8538 = vmatprep.subr.bf16.mxu0 0
        %8539 = vmatpush1.bf16.msra.mxu0 %v5366
        %8540 = vmatprep.subr.bf16.mxu0 0
        %8541 = vmatpush1.bf16.msra.mxu0 %v5363
        %8542 = vmatprep.subr.bf16.mxu0 0
        %8543 = vmatpush1.bf16.msra.mxu0 %v5360
        %8544 = vmatprep.subr.bf16.mxu0 0
        %8545 = vmatpush1.bf16.msra.mxu0 %v5357
        %8546 = vmatprep.subr.bf16.mxu0 0
        %8547 = vmatpush2.bf16.msra.mxu0 %v5402
        %8548 = vmatprep.subr.bf16.mxu0 0
        %8549 = vmatpush2.bf16.msra.mxu0 %v5399
        %8550 = vmatprep.subr.bf16.mxu0 0
        %8551 = vmatpush2.bf16.msra.mxu0 %v5396
        %8552 = vmatprep.subr.bf16.mxu0 0
        %8553 = vmatpush2.bf16.msra.mxu0 %v5393
        %8554 = vmatprep.subr.bf16.mxu0 0
        %8555 = vmatpush2.bf16.msra.mxu0 %v5390
        %8556 = vmatprep.subr.bf16.mxu0 0
        %8557 = vmatpush2.bf16.msra.mxu0 %v5387
        %8558 = vmatprep.subr.bf16.mxu0 0
        %8559 = vmatpush2.bf16.msra.mxu0 %v5384
        %8560 = vmatprep.subr.bf16.mxu0 0
        %8561 = vmatpush2.bf16.msra.mxu0 %v5381
        %8562 = vmatprep.mubr.bf16.mxu0 %v242
        %8563 = vmatmul.mubr.bf16.gmra.mxu0 %v241
        %v8564 = vpop.f32.mrf.mxu0
        %v8565 = vadd.f32 0.0, %v8564
        %v8566 = vpop.f32.mrf.mxu0
        %v8567 = vpop.f32.mrf.mxu0
        %v8568 = vadd.f32 0.0, %v8567
        %v8569 = vpop.f32.mrf.mxu0
        %8570 = vdwg.mxu0
        %8571 = vmatprep.subr.bf16.mxu0 0
        %8572 = vmatpush1.bf16.msra.mxu0 %v5426
        %8573 = vmatprep.subr.bf16.mxu0 0
        %8574 = vmatpush1.bf16.msra.mxu0 %v5423
        %8575 = vmatprep.subr.bf16.mxu0 0
        %8576 = vmatpush1.bf16.msra.mxu0 %v5420
        %8577 = vmatprep.subr.bf16.mxu0 0
        %8578 = vmatpush1.bf16.msra.mxu0 %v5417
        %8579 = vmatprep.subr.bf16.mxu0 0
        %8580 = vmatpush1.bf16.msra.mxu0 %v5414
        %8581 = vmatprep.subr.bf16.mxu0 0
        %8582 = vmatpush1.bf16.msra.mxu0 %v5411
        %8583 = vmatprep.subr.bf16.mxu0 0
        %8584 = vmatpush1.bf16.msra.mxu0 %v5408
        %8585 = vmatprep.subr.bf16.mxu0 0
        %8586 = vmatpush1.bf16.msra.mxu0 %v5405
        %8587 = vmatprep.subr.bf16.mxu0 0
        %8588 = vmatpush2.bf16.msra.mxu0 %v5450
        %8589 = vmatprep.subr.bf16.mxu0 0
        %8590 = vmatpush2.bf16.msra.mxu0 %v5447
        %8591 = vmatprep.subr.bf16.mxu0 0
        %8592 = vmatpush2.bf16.msra.mxu0 %v5444
        %8593 = vmatprep.subr.bf16.mxu0 0
        %8594 = vmatpush2.bf16.msra.mxu0 %v5441
        %8595 = vmatprep.subr.bf16.mxu0 0
        %8596 = vmatpush2.bf16.msra.mxu0 %v5438
        %8597 = vmatprep.subr.bf16.mxu0 0
        %8598 = vmatpush2.bf16.msra.mxu0 %v5435
        %8599 = vmatprep.subr.bf16.mxu0 0
        %8600 = vmatpush2.bf16.msra.mxu0 %v5432
        %8601 = vmatprep.subr.bf16.mxu0 0
        %8602 = vmatpush2.bf16.msra.mxu0 %v5429
        %8603 = vmatprep.mubr.bf16.mxu0 %v244
        %8604 = vmatmul.mubr.bf16.gmra.mxu0 %v243
        %v8605 = vpop.f32.mrf.mxu0
        %v8606 = vadd.f32 %v8565, %v8605
        %v8607 = vpop.f32.mrf.mxu0
        %v8608 = vpop.f32.mrf.mxu0
        %v8609 = vadd.f32 %v8568, %v8608
        %v8610 = vpop.f32.mrf.mxu0
        %8611 = vdwg.mxu0
        %8612 = vmatprep.subr.bf16.mxu0 0
        %8613 = vmatpush1.bf16.msra.mxu0 %v5474
        %8614 = vmatprep.subr.bf16.mxu0 0
        %8615 = vmatpush1.bf16.msra.mxu0 %v5471
        %8616 = vmatprep.subr.bf16.mxu0 0
        %8617 = vmatpush1.bf16.msra.mxu0 %v5468
        %8618 = vmatprep.subr.bf16.mxu0 0
        %8619 = vmatpush1.bf16.msra.mxu0 %v5465
        %8620 = vmatprep.subr.bf16.mxu0 0
        %8621 = vmatpush1.bf16.msra.mxu0 %v5462
        %8622 = vmatprep.subr.bf16.mxu0 0
        %8623 = vmatpush1.bf16.msra.mxu0 %v5459
        %8624 = vmatprep.subr.bf16.mxu0 0
        %8625 = vmatpush1.bf16.msra.mxu0 %v5456
        %8626 = vmatprep.subr.bf16.mxu0 0
        %8627 = vmatpush1.bf16.msra.mxu0 %v5453
        %8628 = vmatprep.subr.bf16.mxu0 0
        %8629 = vmatpush2.bf16.msra.mxu0 %v5498
        %8630 = vmatprep.subr.bf16.mxu0 0
        %8631 = vmatpush2.bf16.msra.mxu0 %v5495
        %8632 = vmatprep.subr.bf16.mxu0 0
        %8633 = vmatpush2.bf16.msra.mxu0 %v5492
        %8634 = vmatprep.subr.bf16.mxu0 0
        %8635 = vmatpush2.bf16.msra.mxu0 %v5489
        %8636 = vmatprep.subr.bf16.mxu0 0
        %8637 = vmatpush2.bf16.msra.mxu0 %v5486
        %8638 = vmatprep.subr.bf16.mxu0 0
        %8639 = vmatpush2.bf16.msra.mxu0 %v5483
        %8640 = vmatprep.subr.bf16.mxu0 0
        %8641 = vmatpush2.bf16.msra.mxu0 %v5480
        %8642 = vmatprep.subr.bf16.mxu0 0
        %8643 = vmatpush2.bf16.msra.mxu0 %v5477
        %8644 = vmatprep.mubr.bf16.mxu0 %v246
        %8645 = vmatmul.mubr.bf16.gmra.mxu0 %v245
        %v8646 = vpop.f32.mrf.mxu0
        %v8647 = vadd.f32 %v8606, %v8646
        %v8648 = vpop.f32.mrf.mxu0
        %v8649 = vpop.f32.mrf.mxu0
        %v8650 = vadd.f32 %v8609, %v8649
        %v8651 = vpop.f32.mrf.mxu0
        %8652 = vdwg.mxu0
        %8653 = vmatprep.subr.bf16.mxu0 0
        %8654 = vmatpush1.bf16.msra.mxu0 %v5522
        %8655 = vmatprep.subr.bf16.mxu0 0
        %8656 = vmatpush1.bf16.msra.mxu0 %v5519
        %8657 = vmatprep.subr.bf16.mxu0 0
        %8658 = vmatpush1.bf16.msra.mxu0 %v5516
        %8659 = vmatprep.subr.bf16.mxu0 0
        %8660 = vmatpush1.bf16.msra.mxu0 %v5513
        %8661 = vmatprep.subr.bf16.mxu0 0
        %8662 = vmatpush1.bf16.msra.mxu0 %v5510
        %8663 = vmatprep.subr.bf16.mxu0 0
        %8664 = vmatpush1.bf16.msra.mxu0 %v5507
        %8665 = vmatprep.subr.bf16.mxu0 0
        %8666 = vmatpush1.bf16.msra.mxu0 %v5504
        %8667 = vmatprep.subr.bf16.mxu0 0
        %8668 = vmatpush1.bf16.msra.mxu0 %v5501
        %8669 = vmatprep.subr.bf16.mxu0 0
        %8670 = vmatpush2.bf16.msra.mxu0 %v5546
        %8671 = vmatprep.subr.bf16.mxu0 0
        %8672 = vmatpush2.bf16.msra.mxu0 %v5543
        %8673 = vmatprep.subr.bf16.mxu0 0
        %8674 = vmatpush2.bf16.msra.mxu0 %v5540
        %8675 = vmatprep.subr.bf16.mxu0 0
        %8676 = vmatpush2.bf16.msra.mxu0 %v5537
        %8677 = vmatprep.subr.bf16.mxu0 0
        %8678 = vmatpush2.bf16.msra.mxu0 %v5534
        %8679 = vmatprep.subr.bf16.mxu0 0
        %8680 = vmatpush2.bf16.msra.mxu0 %v5531
        %8681 = vmatprep.subr.bf16.mxu0 0
        %8682 = vmatpush2.bf16.msra.mxu0 %v5528
        %8683 = vmatprep.subr.bf16.mxu0 0
        %8684 = vmatpush2.bf16.msra.mxu0 %v5525
        %8685 = vmatprep.mubr.bf16.mxu0 %v248
        %8686 = vmatmul.mubr.bf16.gmra.mxu0 %v247
        %v8687 = vpop.f32.mrf.mxu0
        %v8688 = vadd.f32 %v8647, %v8687
        %v8689 = vpop.f32.mrf.mxu0
        %v8690 = vpop.f32.mrf.mxu0
        %v8691 = vadd.f32 %v8650, %v8690
        %v8692 = vpop.f32.mrf.mxu0
        %8693 = vdwg.mxu0
        %8694 = vmatprep.subr.bf16.mxu0 0
        %8695 = vmatpush1.bf16.msra.mxu0 %v5570
        %8696 = vmatprep.subr.bf16.mxu0 0
        %8697 = vmatpush1.bf16.msra.mxu0 %v5567
        %8698 = vmatprep.subr.bf16.mxu0 0
        %8699 = vmatpush1.bf16.msra.mxu0 %v5564
        %8700 = vmatprep.subr.bf16.mxu0 0
        %8701 = vmatpush1.bf16.msra.mxu0 %v5561
        %8702 = vmatprep.subr.bf16.mxu0 0
        %8703 = vmatpush1.bf16.msra.mxu0 %v5558
        %8704 = vmatprep.subr.bf16.mxu0 0
        %8705 = vmatpush1.bf16.msra.mxu0 %v5555
        %8706 = vmatprep.subr.bf16.mxu0 0
        %8707 = vmatpush1.bf16.msra.mxu0 %v5552
        %8708 = vmatprep.subr.bf16.mxu0 0
        %8709 = vmatpush1.bf16.msra.mxu0 %v5549
        %8710 = vmatprep.subr.bf16.mxu0 0
        %8711 = vmatpush2.bf16.msra.mxu0 %v5594
        %8712 = vmatprep.subr.bf16.mxu0 0
        %8713 = vmatpush2.bf16.msra.mxu0 %v5591
        %8714 = vmatprep.subr.bf16.mxu0 0
        %8715 = vmatpush2.bf16.msra.mxu0 %v5588
        %8716 = vmatprep.subr.bf16.mxu0 0
        %8717 = vmatpush2.bf16.msra.mxu0 %v5585
        %8718 = vmatprep.subr.bf16.mxu0 0
        %8719 = vmatpush2.bf16.msra.mxu0 %v5582
        %8720 = vmatprep.subr.bf16.mxu0 0
        %8721 = vmatpush2.bf16.msra.mxu0 %v5579
        %8722 = vmatprep.subr.bf16.mxu0 0
        %8723 = vmatpush2.bf16.msra.mxu0 %v5576
        %8724 = vmatprep.subr.bf16.mxu0 0
        %8725 = vmatpush2.bf16.msra.mxu0 %v5573
        %8726 = vmatprep.mubr.bf16.mxu0 %v250
        %8727 = vmatmul.mubr.bf16.gmra.mxu0 %v249
        %v8728 = vpop.f32.mrf.mxu0
        %v8729 = vadd.f32 %v8688, %v8728
        %v8730 = vpop.f32.mrf.mxu0
        %v8731 = vpop.f32.mrf.mxu0
        %v8732 = vadd.f32 %v8691, %v8731
        %v8733 = vpop.f32.mrf.mxu0
        %8734 = vdwg.mxu0
        %8735 = vmatprep.subr.bf16.mxu0 0
        %8736 = vmatpush1.bf16.msra.mxu0 %v5618
        %8737 = vmatprep.subr.bf16.mxu0 0
        %8738 = vmatpush1.bf16.msra.mxu0 %v5615
        %8739 = vmatprep.subr.bf16.mxu0 0
        %8740 = vmatpush1.bf16.msra.mxu0 %v5612
        %8741 = vmatprep.subr.bf16.mxu0 0
        %8742 = vmatpush1.bf16.msra.mxu0 %v5609
        %8743 = vmatprep.subr.bf16.mxu0 0
        %8744 = vmatpush1.bf16.msra.mxu0 %v5606
        %8745 = vmatprep.subr.bf16.mxu0 0
        %8746 = vmatpush1.bf16.msra.mxu0 %v5603
        %8747 = vmatprep.subr.bf16.mxu0 0
        %8748 = vmatpush1.bf16.msra.mxu0 %v5600
        %8749 = vmatprep.subr.bf16.mxu0 0
        %8750 = vmatpush1.bf16.msra.mxu0 %v5597
        %8751 = vmatprep.subr.bf16.mxu0 0
        %8752 = vmatpush2.bf16.msra.mxu0 %v5642
        %8753 = vmatprep.subr.bf16.mxu0 0
        %8754 = vmatpush2.bf16.msra.mxu0 %v5639
        %8755 = vmatprep.subr.bf16.mxu0 0
        %8756 = vmatpush2.bf16.msra.mxu0 %v5636
        %8757 = vmatprep.subr.bf16.mxu0 0
        %8758 = vmatpush2.bf16.msra.mxu0 %v5633
        %8759 = vmatprep.subr.bf16.mxu0 0
        %8760 = vmatpush2.bf16.msra.mxu0 %v5630
        %8761 = vmatprep.subr.bf16.mxu0 0
        %8762 = vmatpush2.bf16.msra.mxu0 %v5627
        %8763 = vmatprep.subr.bf16.mxu0 0
        %8764 = vmatpush2.bf16.msra.mxu0 %v5624
        %8765 = vmatprep.subr.bf16.mxu0 0
        %8766 = vmatpush2.bf16.msra.mxu0 %v5621
        %8767 = vmatprep.mubr.bf16.mxu0 %v252
        %8768 = vmatmul.mubr.bf16.gmra.mxu0 %v251
        %v8769 = vpop.f32.mrf.mxu0
        %v8770 = vadd.f32 %v8729, %v8769
        %v8771 = vpop.f32.mrf.mxu0
        %v8772 = vpop.f32.mrf.mxu0
        %v8773 = vadd.f32 %v8732, %v8772
        %v8774 = vpop.f32.mrf.mxu0
        %8775 = vdwg.mxu0
        %8776 = vmatprep.subr.bf16.mxu0 0
        %8777 = vmatpush1.bf16.msra.mxu0 %v5666
        %8778 = vmatprep.subr.bf16.mxu0 0
        %8779 = vmatpush1.bf16.msra.mxu0 %v5663
        %8780 = vmatprep.subr.bf16.mxu0 0
        %8781 = vmatpush1.bf16.msra.mxu0 %v5660
        %8782 = vmatprep.subr.bf16.mxu0 0
        %8783 = vmatpush1.bf16.msra.mxu0 %v5657
        %8784 = vmatprep.subr.bf16.mxu0 0
        %8785 = vmatpush1.bf16.msra.mxu0 %v5654
        %8786 = vmatprep.subr.bf16.mxu0 0
        %8787 = vmatpush1.bf16.msra.mxu0 %v5651
        %8788 = vmatprep.subr.bf16.mxu0 0
        %8789 = vmatpush1.bf16.msra.mxu0 %v5648
        %8790 = vmatprep.subr.bf16.mxu0 0
        %8791 = vmatpush1.bf16.msra.mxu0 %v5645
        %8792 = vmatprep.subr.bf16.mxu0 0
        %8793 = vmatpush2.bf16.msra.mxu0 %v5690
        %8794 = vmatprep.subr.bf16.mxu0 0
        %8795 = vmatpush2.bf16.msra.mxu0 %v5687
        %8796 = vmatprep.subr.bf16.mxu0 0
        %8797 = vmatpush2.bf16.msra.mxu0 %v5684
        %8798 = vmatprep.subr.bf16.mxu0 0
        %8799 = vmatpush2.bf16.msra.mxu0 %v5681
        %8800 = vmatprep.subr.bf16.mxu0 0
        %8801 = vmatpush2.bf16.msra.mxu0 %v5678
        %8802 = vmatprep.subr.bf16.mxu0 0
        %8803 = vmatpush2.bf16.msra.mxu0 %v5675
        %8804 = vmatprep.subr.bf16.mxu0 0
        %8805 = vmatpush2.bf16.msra.mxu0 %v5672
        %8806 = vmatprep.subr.bf16.mxu0 0
        %8807 = vmatpush2.bf16.msra.mxu0 %v5669
        %8808 = vmatprep.mubr.bf16.mxu0 %v254
        %8809 = vmatmul.mubr.bf16.gmra.mxu0 %v253
        %v8810 = vpop.f32.mrf.mxu0
        %v8811 = vadd.f32 %v8770, %v8810
        %v8812 = vpop.f32.mrf.mxu0
        %v8813 = vpop.f32.mrf.mxu0
        %v8814 = vadd.f32 %v8773, %v8813
        %v8815 = vpop.f32.mrf.mxu0
        %8816 = vdwg.mxu0
        %8817 = vmatprep.subr.bf16.mxu0 0
        %8818 = vmatpush1.bf16.msra.mxu0 %v5714
        %8819 = vmatprep.subr.bf16.mxu0 0
        %8820 = vmatpush1.bf16.msra.mxu0 %v5711
        %8821 = vmatprep.subr.bf16.mxu0 0
        %8822 = vmatpush1.bf16.msra.mxu0 %v5708
        %8823 = vmatprep.subr.bf16.mxu0 0
        %8824 = vmatpush1.bf16.msra.mxu0 %v5705
        %8825 = vmatprep.subr.bf16.mxu0 0
        %8826 = vmatpush1.bf16.msra.mxu0 %v5702
        %8827 = vmatprep.subr.bf16.mxu0 0
        %8828 = vmatpush1.bf16.msra.mxu0 %v5699
        %8829 = vmatprep.subr.bf16.mxu0 0
        %8830 = vmatpush1.bf16.msra.mxu0 %v5696
        %8831 = vmatprep.subr.bf16.mxu0 0
        %8832 = vmatpush1.bf16.msra.mxu0 %v5693
        %8833 = vmatprep.subr.bf16.mxu0 0
        %8834 = vmatpush2.bf16.msra.mxu0 %v5738
        %8835 = vmatprep.subr.bf16.mxu0 0
        %8836 = vmatpush2.bf16.msra.mxu0 %v5735
        %8837 = vmatprep.subr.bf16.mxu0 0
        %8838 = vmatpush2.bf16.msra.mxu0 %v5732
        %8839 = vmatprep.subr.bf16.mxu0 0
        %8840 = vmatpush2.bf16.msra.mxu0 %v5729
        %8841 = vmatprep.subr.bf16.mxu0 0
        %8842 = vmatpush2.bf16.msra.mxu0 %v5726
        %8843 = vmatprep.subr.bf16.mxu0 0
        %8844 = vmatpush2.bf16.msra.mxu0 %v5723
        %8845 = vmatprep.subr.bf16.mxu0 0
        %8846 = vmatpush2.bf16.msra.mxu0 %v5720
        %8847 = vmatprep.subr.bf16.mxu0 0
        %8848 = vmatpush2.bf16.msra.mxu0 %v5717
        %8849 = vmatprep.mubr.bf16.mxu0 %v256
        %8850 = vmatmul.mubr.bf16.gmra.mxu0 %v255
        %v8851 = vpop.f32.mrf.mxu0
        %v8852 = vadd.f32 %v8811, %v8851
        %v8853 = vpop.f32.mrf.mxu0
        %v8854 = vpop.f32.mrf.mxu0
        %v8855 = vadd.f32 %v8814, %v8854
        %v8856 = vpop.f32.mrf.mxu0
        %8857 = vdwg.mxu0
        %8858 = vmatprep.subr.bf16.mxu0 0
        %8859 = vmatpush1.bf16.msra.mxu0 %v5762
        %8860 = vmatprep.subr.bf16.mxu0 0
        %8861 = vmatpush1.bf16.msra.mxu0 %v5759
        %8862 = vmatprep.subr.bf16.mxu0 0
        %8863 = vmatpush1.bf16.msra.mxu0 %v5756
        %8864 = vmatprep.subr.bf16.mxu0 0
        %8865 = vmatpush1.bf16.msra.mxu0 %v5753
        %8866 = vmatprep.subr.bf16.mxu0 0
        %8867 = vmatpush1.bf16.msra.mxu0 %v5750
        %8868 = vmatprep.subr.bf16.mxu0 0
        %8869 = vmatpush1.bf16.msra.mxu0 %v5747
        %8870 = vmatprep.subr.bf16.mxu0 0
        %8871 = vmatpush1.bf16.msra.mxu0 %v5744
        %8872 = vmatprep.subr.bf16.mxu0 0
        %8873 = vmatpush1.bf16.msra.mxu0 %v5741
        %8874 = vmatprep.subr.bf16.mxu0 0
        %8875 = vmatpush2.bf16.msra.mxu0 %v5786
        %8876 = vmatprep.subr.bf16.mxu0 0
        %8877 = vmatpush2.bf16.msra.mxu0 %v5783
        %8878 = vmatprep.subr.bf16.mxu0 0
        %8879 = vmatpush2.bf16.msra.mxu0 %v5780
        %8880 = vmatprep.subr.bf16.mxu0 0
        %8881 = vmatpush2.bf16.msra.mxu0 %v5777
        %8882 = vmatprep.subr.bf16.mxu0 0
        %8883 = vmatpush2.bf16.msra.mxu0 %v5774
        %8884 = vmatprep.subr.bf16.mxu0 0
        %8885 = vmatpush2.bf16.msra.mxu0 %v5771
        %8886 = vmatprep.subr.bf16.mxu0 0
        %8887 = vmatpush2.bf16.msra.mxu0 %v5768
        %8888 = vmatprep.subr.bf16.mxu0 0
        %8889 = vmatpush2.bf16.msra.mxu0 %v5765
        %8890 = vmatprep.mubr.bf16.mxu0 %v258
        %8891 = vmatmul.mubr.bf16.gmra.mxu0 %v257
        %v8892 = vpop.f32.mrf.mxu0
        %v8893 = vadd.f32 %v8852, %v8892
        %v8894 = vpop.f32.mrf.mxu0
        %v8895 = vpop.f32.mrf.mxu0
        %v8896 = vadd.f32 %v8855, %v8895
        %v8897 = vpop.f32.mrf.mxu0
        %8898 = vdwg.mxu0
        %8899 = vmatprep.subr.bf16.mxu0 0
        %8900 = vmatpush1.bf16.msra.mxu0 %v5810
        %8901 = vmatprep.subr.bf16.mxu0 0
        %8902 = vmatpush1.bf16.msra.mxu0 %v5807
        %8903 = vmatprep.subr.bf16.mxu0 0
        %8904 = vmatpush1.bf16.msra.mxu0 %v5804
        %8905 = vmatprep.subr.bf16.mxu0 0
        %8906 = vmatpush1.bf16.msra.mxu0 %v5801
        %8907 = vmatprep.subr.bf16.mxu0 0
        %8908 = vmatpush1.bf16.msra.mxu0 %v5798
        %8909 = vmatprep.subr.bf16.mxu0 0
        %8910 = vmatpush1.bf16.msra.mxu0 %v5795
        %8911 = vmatprep.subr.bf16.mxu0 0
        %8912 = vmatpush1.bf16.msra.mxu0 %v5792
        %8913 = vmatprep.subr.bf16.mxu0 0
        %8914 = vmatpush1.bf16.msra.mxu0 %v5789
        %8915 = vmatprep.subr.bf16.mxu0 0
        %8916 = vmatpush2.bf16.msra.mxu0 %v5834
        %8917 = vmatprep.subr.bf16.mxu0 0
        %8918 = vmatpush2.bf16.msra.mxu0 %v5831
        %8919 = vmatprep.subr.bf16.mxu0 0
        %8920 = vmatpush2.bf16.msra.mxu0 %v5828
        %8921 = vmatprep.subr.bf16.mxu0 0
        %8922 = vmatpush2.bf16.msra.mxu0 %v5825
        %8923 = vmatprep.subr.bf16.mxu0 0
        %8924 = vmatpush2.bf16.msra.mxu0 %v5822
        %8925 = vmatprep.subr.bf16.mxu0 0
        %8926 = vmatpush2.bf16.msra.mxu0 %v5819
        %8927 = vmatprep.subr.bf16.mxu0 0
        %8928 = vmatpush2.bf16.msra.mxu0 %v5816
        %8929 = vmatprep.subr.bf16.mxu0 0
        %8930 = vmatpush2.bf16.msra.mxu0 %v5813
        %8931 = vmatprep.mubr.bf16.mxu0 %v260
        %8932 = vmatmul.mubr.bf16.gmra.mxu0 %v259
        %v8933 = vpop.f32.mrf.mxu0
        %v8934 = vadd.f32 %v8893, %v8933
        %v8935 = vpop.f32.mrf.mxu0
        %v8936 = vpop.f32.mrf.mxu0
        %v8937 = vadd.f32 %v8896, %v8936
        %v8938 = vpop.f32.mrf.mxu0
        %8939 = vdwg.mxu0
        %8940 = vmatprep.subr.bf16.mxu0 0
        %8941 = vmatpush1.bf16.msra.mxu0 %v5858
        %8942 = vmatprep.subr.bf16.mxu0 0
        %8943 = vmatpush1.bf16.msra.mxu0 %v5855
        %8944 = vmatprep.subr.bf16.mxu0 0
        %8945 = vmatpush1.bf16.msra.mxu0 %v5852
        %8946 = vmatprep.subr.bf16.mxu0 0
        %8947 = vmatpush1.bf16.msra.mxu0 %v5849
        %8948 = vmatprep.subr.bf16.mxu0 0
        %8949 = vmatpush1.bf16.msra.mxu0 %v5846
        %8950 = vmatprep.subr.bf16.mxu0 0
        %8951 = vmatpush1.bf16.msra.mxu0 %v5843
        %8952 = vmatprep.subr.bf16.mxu0 0
        %8953 = vmatpush1.bf16.msra.mxu0 %v5840
        %8954 = vmatprep.subr.bf16.mxu0 0
        %8955 = vmatpush1.bf16.msra.mxu0 %v5837
        %8956 = vmatprep.subr.bf16.mxu0 0
        %8957 = vmatpush2.bf16.msra.mxu0 %v5882
        %8958 = vmatprep.subr.bf16.mxu0 0
        %8959 = vmatpush2.bf16.msra.mxu0 %v5879
        %8960 = vmatprep.subr.bf16.mxu0 0
        %8961 = vmatpush2.bf16.msra.mxu0 %v5876
        %8962 = vmatprep.subr.bf16.mxu0 0
        %8963 = vmatpush2.bf16.msra.mxu0 %v5873
        %8964 = vmatprep.subr.bf16.mxu0 0
        %8965 = vmatpush2.bf16.msra.mxu0 %v5870
        %8966 = vmatprep.subr.bf16.mxu0 0
        %8967 = vmatpush2.bf16.msra.mxu0 %v5867
        %8968 = vmatprep.subr.bf16.mxu0 0
        %8969 = vmatpush2.bf16.msra.mxu0 %v5864
        %8970 = vmatprep.subr.bf16.mxu0 0
        %8971 = vmatpush2.bf16.msra.mxu0 %v5861
        %8972 = vmatprep.mubr.bf16.mxu0 %v262
        %8973 = vmatmul.mubr.bf16.gmra.mxu0 %v261
        %v8974 = vpop.f32.mrf.mxu0
        %v8975 = vadd.f32 %v8934, %v8974
        %v8976 = vpop.f32.mrf.mxu0
        %v8977 = vpop.f32.mrf.mxu0
        %v8978 = vadd.f32 %v8937, %v8977
        %v8979 = vpop.f32.mrf.mxu0
        %8980 = vdwg.mxu0
        %8981 = vmatprep.subr.bf16.mxu0 0
        %8982 = vmatpush1.bf16.msra.mxu0 %v5906
        %8983 = vmatprep.subr.bf16.mxu0 0
        %8984 = vmatpush1.bf16.msra.mxu0 %v5903
        %8985 = vmatprep.subr.bf16.mxu0 0
        %8986 = vmatpush1.bf16.msra.mxu0 %v5900
        %8987 = vmatprep.subr.bf16.mxu0 0
        %8988 = vmatpush1.bf16.msra.mxu0 %v5897
        %8989 = vmatprep.subr.bf16.mxu0 0
        %8990 = vmatpush1.bf16.msra.mxu0 %v5894
        %8991 = vmatprep.subr.bf16.mxu0 0
        %8992 = vmatpush1.bf16.msra.mxu0 %v5891
        %8993 = vmatprep.subr.bf16.mxu0 0
        %8994 = vmatpush1.bf16.msra.mxu0 %v5888
        %8995 = vmatprep.subr.bf16.mxu0 0
        %8996 = vmatpush1.bf16.msra.mxu0 %v5885
        %8997 = vmatprep.subr.bf16.mxu0 0
        %8998 = vmatpush2.bf16.msra.mxu0 %v5930
        %8999 = vmatprep.subr.bf16.mxu0 0
        %9000 = vmatpush2.bf16.msra.mxu0 %v5927
        %9001 = vmatprep.subr.bf16.mxu0 0
        %9002 = vmatpush2.bf16.msra.mxu0 %v5924
        %9003 = vmatprep.subr.bf16.mxu0 0
        %9004 = vmatpush2.bf16.msra.mxu0 %v5921
        %9005 = vmatprep.subr.bf16.mxu0 0
        %9006 = vmatpush2.bf16.msra.mxu0 %v5918
        %9007 = vmatprep.subr.bf16.mxu0 0
        %9008 = vmatpush2.bf16.msra.mxu0 %v5915
        %9009 = vmatprep.subr.bf16.mxu0 0
        %9010 = vmatpush2.bf16.msra.mxu0 %v5912
        %9011 = vmatprep.subr.bf16.mxu0 0
        %9012 = vmatpush2.bf16.msra.mxu0 %v5909
        %9013 = vmatprep.mubr.bf16.mxu0 %v264
        %9014 = vmatmul.mubr.bf16.gmra.mxu0 %v263
        %v9015 = vpop.f32.mrf.mxu0
        %v9016 = vadd.f32 %v8975, %v9015
        %v9017 = vpop.f32.mrf.mxu0
        %v9018 = vpop.f32.mrf.mxu0
        %v9019 = vadd.f32 %v8978, %v9018
        %v9020 = vpop.f32.mrf.mxu0
        %9021 = vdwg.mxu0
        %9022 = vmatprep.subr.bf16.mxu0 0
        %9023 = vmatpush1.bf16.msra.mxu0 %v5954
        %9024 = vmatprep.subr.bf16.mxu0 0
        %9025 = vmatpush1.bf16.msra.mxu0 %v5951
        %9026 = vmatprep.subr.bf16.mxu0 0
        %9027 = vmatpush1.bf16.msra.mxu0 %v5948
        %9028 = vmatprep.subr.bf16.mxu0 0
        %9029 = vmatpush1.bf16.msra.mxu0 %v5945
        %9030 = vmatprep.subr.bf16.mxu0 0
        %9031 = vmatpush1.bf16.msra.mxu0 %v5942
        %9032 = vmatprep.subr.bf16.mxu0 0
        %9033 = vmatpush1.bf16.msra.mxu0 %v5939
        %9034 = vmatprep.subr.bf16.mxu0 0
        %9035 = vmatpush1.bf16.msra.mxu0 %v5936
        %9036 = vmatprep.subr.bf16.mxu0 0
        %9037 = vmatpush1.bf16.msra.mxu0 %v5933
        %9038 = vmatprep.subr.bf16.mxu0 0
        %9039 = vmatpush2.bf16.msra.mxu0 %v5978
        %9040 = vmatprep.subr.bf16.mxu0 0
        %9041 = vmatpush2.bf16.msra.mxu0 %v5975
        %9042 = vmatprep.subr.bf16.mxu0 0
        %9043 = vmatpush2.bf16.msra.mxu0 %v5972
        %9044 = vmatprep.subr.bf16.mxu0 0
        %9045 = vmatpush2.bf16.msra.mxu0 %v5969
        %9046 = vmatprep.subr.bf16.mxu0 0
        %9047 = vmatpush2.bf16.msra.mxu0 %v5966
        %9048 = vmatprep.subr.bf16.mxu0 0
        %9049 = vmatpush2.bf16.msra.mxu0 %v5963
        %9050 = vmatprep.subr.bf16.mxu0 0
        %9051 = vmatpush2.bf16.msra.mxu0 %v5960
        %9052 = vmatprep.subr.bf16.mxu0 0
        %9053 = vmatpush2.bf16.msra.mxu0 %v5957
        %9054 = vmatprep.mubr.bf16.mxu0 %v266
        %9055 = vmatmul.mubr.bf16.gmra.mxu0 %v265
        %v9056 = vpop.f32.mrf.mxu0
        %v9057 = vadd.f32 %v9016, %v9056
        %v9058 = vpop.f32.mrf.mxu0
        %v9059 = vpop.f32.mrf.mxu0
        %v9060 = vadd.f32 %v9019, %v9059
        %v9061 = vpop.f32.mrf.mxu0
        %9062 = vdwg.mxu0
        %9063 = vmatprep.subr.bf16.mxu0 0
        %9064 = vmatpush1.bf16.msra.mxu0 %v6002
        %9065 = vmatprep.subr.bf16.mxu0 0
        %9066 = vmatpush1.bf16.msra.mxu0 %v5999
        %9067 = vmatprep.subr.bf16.mxu0 0
        %9068 = vmatpush1.bf16.msra.mxu0 %v5996
        %9069 = vmatprep.subr.bf16.mxu0 0
        %9070 = vmatpush1.bf16.msra.mxu0 %v5993
        %9071 = vmatprep.subr.bf16.mxu0 0
        %9072 = vmatpush1.bf16.msra.mxu0 %v5990
        %9073 = vmatprep.subr.bf16.mxu0 0
        %9074 = vmatpush1.bf16.msra.mxu0 %v5987
        %9075 = vmatprep.subr.bf16.mxu0 0
        %9076 = vmatpush1.bf16.msra.mxu0 %v5984
        %9077 = vmatprep.subr.bf16.mxu0 0
        %9078 = vmatpush1.bf16.msra.mxu0 %v5981
        %9079 = vmatprep.subr.bf16.mxu0 0
        %9080 = vmatpush2.bf16.msra.mxu0 %v6026
        %9081 = vmatprep.subr.bf16.mxu0 0
        %9082 = vmatpush2.bf16.msra.mxu0 %v6023
        %9083 = vmatprep.subr.bf16.mxu0 0
        %9084 = vmatpush2.bf16.msra.mxu0 %v6020
        %9085 = vmatprep.subr.bf16.mxu0 0
        %9086 = vmatpush2.bf16.msra.mxu0 %v6017
        %9087 = vmatprep.subr.bf16.mxu0 0
        %9088 = vmatpush2.bf16.msra.mxu0 %v6014
        %9089 = vmatprep.subr.bf16.mxu0 0
        %9090 = vmatpush2.bf16.msra.mxu0 %v6011
        %9091 = vmatprep.subr.bf16.mxu0 0
        %9092 = vmatpush2.bf16.msra.mxu0 %v6008
        %9093 = vmatprep.subr.bf16.mxu0 0
        %9094 = vmatpush2.bf16.msra.mxu0 %v6005
        %9095 = vmatprep.mubr.bf16.mxu0 %v268
        %9096 = vmatmul.mubr.bf16.gmra.mxu0 %v267
        %v9097 = vpop.f32.mrf.mxu0
        %v9098 = vadd.f32 %v9057, %v9097
        %v9099 = vpop.f32.mrf.mxu0
        %v9100 = vpop.f32.mrf.mxu0
        %v9101 = vadd.f32 %v9060, %v9100
        %v9102 = vpop.f32.mrf.mxu0
        %9103 = vdwg.mxu0
        %9104 = vmatprep.subr.bf16.mxu0 0
        %9105 = vmatpush1.bf16.msra.mxu0 %v6050
        %9106 = vmatprep.subr.bf16.mxu0 0
        %9107 = vmatpush1.bf16.msra.mxu0 %v6047
        %9108 = vmatprep.subr.bf16.mxu0 0
        %9109 = vmatpush1.bf16.msra.mxu0 %v6044
        %9110 = vmatprep.subr.bf16.mxu0 0
        %9111 = vmatpush1.bf16.msra.mxu0 %v6041
        %9112 = vmatprep.subr.bf16.mxu0 0
        %9113 = vmatpush1.bf16.msra.mxu0 %v6038
        %9114 = vmatprep.subr.bf16.mxu0 0
        %9115 = vmatpush1.bf16.msra.mxu0 %v6035
        %9116 = vmatprep.subr.bf16.mxu0 0
        %9117 = vmatpush1.bf16.msra.mxu0 %v6032
        %9118 = vmatprep.subr.bf16.mxu0 0
        %9119 = vmatpush1.bf16.msra.mxu0 %v6029
        %9120 = vmatprep.subr.bf16.mxu0 0
        %9121 = vmatpush2.bf16.msra.mxu0 %v6074
        %9122 = vmatprep.subr.bf16.mxu0 0
        %9123 = vmatpush2.bf16.msra.mxu0 %v6071
        %9124 = vmatprep.subr.bf16.mxu0 0
        %9125 = vmatpush2.bf16.msra.mxu0 %v6068
        %9126 = vmatprep.subr.bf16.mxu0 0
        %9127 = vmatpush2.bf16.msra.mxu0 %v6065
        %9128 = vmatprep.subr.bf16.mxu0 0
        %9129 = vmatpush2.bf16.msra.mxu0 %v6062
        %9130 = vmatprep.subr.bf16.mxu0 0
        %9131 = vmatpush2.bf16.msra.mxu0 %v6059
        %9132 = vmatprep.subr.bf16.mxu0 0
        %9133 = vmatpush2.bf16.msra.mxu0 %v6056
        %9134 = vmatprep.subr.bf16.mxu0 0
        %9135 = vmatpush2.bf16.msra.mxu0 %v6053
        %9136 = vmatprep.mubr.bf16.mxu0 %v270
        %9137 = vmatmul.mubr.bf16.gmra.mxu0 %v269
        %v9138 = vpop.f32.mrf.mxu0
        %v9139 = vadd.f32 %v9098, %v9138
        %v9140 = vpop.f32.mrf.mxu0
        %v9141 = vpop.f32.mrf.mxu0
        %v9142 = vadd.f32 %v9101, %v9141
        %v9143 = vpop.f32.mrf.mxu0
        %9144 = vdwg.mxu0
        %9145 = vmatprep.subr.bf16.mxu0 0
        %9146 = vmatpush1.bf16.msra.mxu0 %v6098
        %9147 = vmatprep.subr.bf16.mxu0 0
        %9148 = vmatpush1.bf16.msra.mxu0 %v6095
        %9149 = vmatprep.subr.bf16.mxu0 0
        %9150 = vmatpush1.bf16.msra.mxu0 %v6092
        %9151 = vmatprep.subr.bf16.mxu0 0
        %9152 = vmatpush1.bf16.msra.mxu0 %v6089
        %9153 = vmatprep.subr.bf16.mxu0 0
        %9154 = vmatpush1.bf16.msra.mxu0 %v6086
        %9155 = vmatprep.subr.bf16.mxu0 0
        %9156 = vmatpush1.bf16.msra.mxu0 %v6083
        %9157 = vmatprep.subr.bf16.mxu0 0
        %9158 = vmatpush1.bf16.msra.mxu0 %v6080
        %9159 = vmatprep.subr.bf16.mxu0 0
        %9160 = vmatpush1.bf16.msra.mxu0 %v6077
        %9161 = vmatprep.subr.bf16.mxu0 0
        %9162 = vmatpush2.bf16.msra.mxu0 %v6122
        %9163 = vmatprep.subr.bf16.mxu0 0
        %9164 = vmatpush2.bf16.msra.mxu0 %v6119
        %9165 = vmatprep.subr.bf16.mxu0 0
        %9166 = vmatpush2.bf16.msra.mxu0 %v6116
        %9167 = vmatprep.subr.bf16.mxu0 0
        %9168 = vmatpush2.bf16.msra.mxu0 %v6113
        %9169 = vmatprep.subr.bf16.mxu0 0
        %9170 = vmatpush2.bf16.msra.mxu0 %v6110
        %9171 = vmatprep.subr.bf16.mxu0 0
        %9172 = vmatpush2.bf16.msra.mxu0 %v6107
        %9173 = vmatprep.subr.bf16.mxu0 0
        %9174 = vmatpush2.bf16.msra.mxu0 %v6104
        %9175 = vmatprep.subr.bf16.mxu0 0
        %9176 = vmatpush2.bf16.msra.mxu0 %v6101
        %9177 = vmatprep.mubr.bf16.mxu0 %v272
        %9178 = vmatmul.mubr.bf16.gmra.mxu0 %v271
        %v9179 = vpop.f32.mrf.mxu0
        %v9180 = vadd.f32 %v9139, %v9179
        %v9181 = vpop.f32.mrf.mxu0
        %v9182 = vpop.f32.mrf.mxu0
        %v9183 = vadd.f32 %v9142, %v9182
        %v9184 = vpop.f32.mrf.mxu0
        %9185 = vdwg.mxu0
        %9186 = vmatprep.subr.bf16.mxu0 0
        %9187 = vmatpush1.bf16.msra.mxu0 %v6146
        %9188 = vmatprep.subr.bf16.mxu0 0
        %9189 = vmatpush1.bf16.msra.mxu0 %v6143
        %9190 = vmatprep.subr.bf16.mxu0 0
        %9191 = vmatpush1.bf16.msra.mxu0 %v6140
        %9192 = vmatprep.subr.bf16.mxu0 0
        %9193 = vmatpush1.bf16.msra.mxu0 %v6137
        %9194 = vmatprep.subr.bf16.mxu0 0
        %9195 = vmatpush1.bf16.msra.mxu0 %v6134
        %9196 = vmatprep.subr.bf16.mxu0 0
        %9197 = vmatpush1.bf16.msra.mxu0 %v6131
        %9198 = vmatprep.subr.bf16.mxu0 0
        %9199 = vmatpush1.bf16.msra.mxu0 %v6128
        %9200 = vmatprep.subr.bf16.mxu0 0
        %9201 = vmatpush1.bf16.msra.mxu0 %v6125
        %9202 = vmatprep.subr.bf16.mxu0 0
        %9203 = vmatpush2.bf16.msra.mxu0 %v6170
        %9204 = vmatprep.subr.bf16.mxu0 0
        %9205 = vmatpush2.bf16.msra.mxu0 %v6167
        %9206 = vmatprep.subr.bf16.mxu0 0
        %9207 = vmatpush2.bf16.msra.mxu0 %v6164
        %9208 = vmatprep.subr.bf16.mxu0 0
        %9209 = vmatpush2.bf16.msra.mxu0 %v6161
        %9210 = vmatprep.subr.bf16.mxu0 0
        %9211 = vmatpush2.bf16.msra.mxu0 %v6158
        %9212 = vmatprep.subr.bf16.mxu0 0
        %9213 = vmatpush2.bf16.msra.mxu0 %v6155
        %9214 = vmatprep.subr.bf16.mxu0 0
        %9215 = vmatpush2.bf16.msra.mxu0 %v6152
        %9216 = vmatprep.subr.bf16.mxu0 0
        %9217 = vmatpush2.bf16.msra.mxu0 %v6149
        %9218 = vmatprep.mubr.bf16.mxu0 %v274
        %9219 = vmatmul.mubr.bf16.gmra.mxu0 %v273
        %v9220 = vpop.f32.mrf.mxu0
        %v9221 = vadd.f32 %v9180, %v9220
        %v9222 = vpop.f32.mrf.mxu0
        %v9223 = vpop.f32.mrf.mxu0
        %v9224 = vadd.f32 %v9183, %v9223
        %v9225 = vpop.f32.mrf.mxu0
        %9226 = vdwg.mxu0
        %9227 = vmatprep.subr.bf16.mxu0 0
        %9228 = vmatpush1.bf16.msra.mxu0 %v6194
        %9229 = vmatprep.subr.bf16.mxu0 0
        %9230 = vmatpush1.bf16.msra.mxu0 %v6191
        %9231 = vmatprep.subr.bf16.mxu0 0
        %9232 = vmatpush1.bf16.msra.mxu0 %v6188
        %9233 = vmatprep.subr.bf16.mxu0 0
        %9234 = vmatpush1.bf16.msra.mxu0 %v6185
        %9235 = vmatprep.subr.bf16.mxu0 0
        %9236 = vmatpush1.bf16.msra.mxu0 %v6182
        %9237 = vmatprep.subr.bf16.mxu0 0
        %9238 = vmatpush1.bf16.msra.mxu0 %v6179
        %9239 = vmatprep.subr.bf16.mxu0 0
        %9240 = vmatpush1.bf16.msra.mxu0 %v6176
        %9241 = vmatprep.subr.bf16.mxu0 0
        %9242 = vmatpush1.bf16.msra.mxu0 %v6173
        %9243 = vmatprep.subr.bf16.mxu0 0
        %9244 = vmatpush2.bf16.msra.mxu0 %v6218
        %9245 = vmatprep.subr.bf16.mxu0 0
        %9246 = vmatpush2.bf16.msra.mxu0 %v6215
        %9247 = vmatprep.subr.bf16.mxu0 0
        %9248 = vmatpush2.bf16.msra.mxu0 %v6212
        %9249 = vmatprep.subr.bf16.mxu0 0
        %9250 = vmatpush2.bf16.msra.mxu0 %v6209
        %9251 = vmatprep.subr.bf16.mxu0 0
        %9252 = vmatpush2.bf16.msra.mxu0 %v6206
        %9253 = vmatprep.subr.bf16.mxu0 0
        %9254 = vmatpush2.bf16.msra.mxu0 %v6203
        %9255 = vmatprep.subr.bf16.mxu0 0
        %9256 = vmatpush2.bf16.msra.mxu0 %v6200
        %9257 = vmatprep.subr.bf16.mxu0 0
        %9258 = vmatpush2.bf16.msra.mxu0 %v6197
        %9259 = vmatprep.mubr.bf16.mxu0 %v276
        %9260 = vmatmul.mubr.bf16.gmra.mxu0 %v275
        %v9261 = vpop.f32.mrf.mxu0
        %v9262 = vadd.f32 %v9221, %v9261
        %v9263 = vpop.f32.mrf.mxu0
        %v9264 = vpop.f32.mrf.mxu0
        %v9265 = vadd.f32 %v9224, %v9264
        %v9266 = vpop.f32.mrf.mxu0
        %9267 = vdwg.mxu0
        %9268 = vmatprep.subr.bf16.mxu0 0
        %9269 = vmatpush1.bf16.msra.mxu0 %v6242
        %9270 = vmatprep.subr.bf16.mxu0 0
        %9271 = vmatpush1.bf16.msra.mxu0 %v6239
        %9272 = vmatprep.subr.bf16.mxu0 0
        %9273 = vmatpush1.bf16.msra.mxu0 %v6236
        %9274 = vmatprep.subr.bf16.mxu0 0
        %9275 = vmatpush1.bf16.msra.mxu0 %v6233
        %9276 = vmatprep.subr.bf16.mxu0 0
        %9277 = vmatpush1.bf16.msra.mxu0 %v6230
        %9278 = vmatprep.subr.bf16.mxu0 0
        %9279 = vmatpush1.bf16.msra.mxu0 %v6227
        %9280 = vmatprep.subr.bf16.mxu0 0
        %9281 = vmatpush1.bf16.msra.mxu0 %v6224
        %9282 = vmatprep.subr.bf16.mxu0 0
        %9283 = vmatpush1.bf16.msra.mxu0 %v6221
        %9284 = vmatprep.subr.bf16.mxu0 0
        %9285 = vmatpush2.bf16.msra.mxu0 %v6266
        %9286 = vmatprep.subr.bf16.mxu0 0
        %9287 = vmatpush2.bf16.msra.mxu0 %v6263
        %9288 = vmatprep.subr.bf16.mxu0 0
        %9289 = vmatpush2.bf16.msra.mxu0 %v6260
        %9290 = vmatprep.subr.bf16.mxu0 0
        %9291 = vmatpush2.bf16.msra.mxu0 %v6257
        %9292 = vmatprep.subr.bf16.mxu0 0
        %9293 = vmatpush2.bf16.msra.mxu0 %v6254
        %9294 = vmatprep.subr.bf16.mxu0 0
        %9295 = vmatpush2.bf16.msra.mxu0 %v6251
        %9296 = vmatprep.subr.bf16.mxu0 0
        %9297 = vmatpush2.bf16.msra.mxu0 %v6248
        %9298 = vmatprep.subr.bf16.mxu0 0
        %9299 = vmatpush2.bf16.msra.mxu0 %v6245
        %9300 = vmatprep.mubr.bf16.mxu0 %v278
        %9301 = vmatmul.mubr.bf16.gmra.mxu0 %v277
        %v9302 = vpop.f32.mrf.mxu0
        %v9303 = vadd.f32 %v9262, %v9302
        %v9304 = vpop.f32.mrf.mxu0
        %v9305 = vpop.f32.mrf.mxu0
        %v9306 = vadd.f32 %v9265, %v9305
        %v9307 = vpop.f32.mrf.mxu0
        %9308 = vdwg.mxu0
        %9309 = vmatprep.subr.bf16.mxu0 0
        %9310 = vmatpush1.bf16.msra.mxu0 %v6290
        %9311 = vmatprep.subr.bf16.mxu0 0
        %9312 = vmatpush1.bf16.msra.mxu0 %v6287
        %9313 = vmatprep.subr.bf16.mxu0 0
        %9314 = vmatpush1.bf16.msra.mxu0 %v6284
        %9315 = vmatprep.subr.bf16.mxu0 0
        %9316 = vmatpush1.bf16.msra.mxu0 %v6281
        %9317 = vmatprep.subr.bf16.mxu0 0
        %9318 = vmatpush1.bf16.msra.mxu0 %v6278
        %9319 = vmatprep.subr.bf16.mxu0 0
        %9320 = vmatpush1.bf16.msra.mxu0 %v6275
        %9321 = vmatprep.subr.bf16.mxu0 0
        %9322 = vmatpush1.bf16.msra.mxu0 %v6272
        %9323 = vmatprep.subr.bf16.mxu0 0
        %9324 = vmatpush1.bf16.msra.mxu0 %v6269
        %9325 = vmatprep.subr.bf16.mxu0 0
        %9326 = vmatpush2.bf16.msra.mxu0 %v6314
        %9327 = vmatprep.subr.bf16.mxu0 0
        %9328 = vmatpush2.bf16.msra.mxu0 %v6311
        %9329 = vmatprep.subr.bf16.mxu0 0
        %9330 = vmatpush2.bf16.msra.mxu0 %v6308
        %9331 = vmatprep.subr.bf16.mxu0 0
        %9332 = vmatpush2.bf16.msra.mxu0 %v6305
        %9333 = vmatprep.subr.bf16.mxu0 0
        %9334 = vmatpush2.bf16.msra.mxu0 %v6302
        %9335 = vmatprep.subr.bf16.mxu0 0
        %9336 = vmatpush2.bf16.msra.mxu0 %v6299
        %9337 = vmatprep.subr.bf16.mxu0 0
        %9338 = vmatpush2.bf16.msra.mxu0 %v6296
        %9339 = vmatprep.subr.bf16.mxu0 0
        %9340 = vmatpush2.bf16.msra.mxu0 %v6293
        %9341 = vmatprep.mubr.bf16.mxu0 %v280
        %9342 = vmatmul.mubr.bf16.gmra.mxu0 %v279
        %v9343 = vpop.f32.mrf.mxu0
        %v9344 = vadd.f32 %v9303, %v9343
        %v9345 = vpop.f32.mrf.mxu0
        %v9346 = vpop.f32.mrf.mxu0
        %v9347 = vadd.f32 %v9306, %v9346
        %v9348 = vpop.f32.mrf.mxu0
        %9349 = vdwg.mxu0
        %9350 = vmatprep.subr.bf16.mxu0 0
        %9351 = vmatpush1.bf16.msra.mxu0 %v6338
        %9352 = vmatprep.subr.bf16.mxu0 0
        %9353 = vmatpush1.bf16.msra.mxu0 %v6335
        %9354 = vmatprep.subr.bf16.mxu0 0
        %9355 = vmatpush1.bf16.msra.mxu0 %v6332
        %9356 = vmatprep.subr.bf16.mxu0 0
        %9357 = vmatpush1.bf16.msra.mxu0 %v6329
        %9358 = vmatprep.subr.bf16.mxu0 0
        %9359 = vmatpush1.bf16.msra.mxu0 %v6326
        %9360 = vmatprep.subr.bf16.mxu0 0
        %9361 = vmatpush1.bf16.msra.mxu0 %v6323
        %9362 = vmatprep.subr.bf16.mxu0 0
        %9363 = vmatpush1.bf16.msra.mxu0 %v6320
        %9364 = vmatprep.subr.bf16.mxu0 0
        %9365 = vmatpush1.bf16.msra.mxu0 %v6317
        %9366 = vmatprep.subr.bf16.mxu0 0
        %9367 = vmatpush2.bf16.msra.mxu0 %v6362
        %9368 = vmatprep.subr.bf16.mxu0 0
        %9369 = vmatpush2.bf16.msra.mxu0 %v6359
        %9370 = vmatprep.subr.bf16.mxu0 0
        %9371 = vmatpush2.bf16.msra.mxu0 %v6356
        %9372 = vmatprep.subr.bf16.mxu0 0
        %9373 = vmatpush2.bf16.msra.mxu0 %v6353
        %9374 = vmatprep.subr.bf16.mxu0 0
        %9375 = vmatpush2.bf16.msra.mxu0 %v6350
        %9376 = vmatprep.subr.bf16.mxu0 0
        %9377 = vmatpush2.bf16.msra.mxu0 %v6347
        %9378 = vmatprep.subr.bf16.mxu0 0
        %9379 = vmatpush2.bf16.msra.mxu0 %v6344
        %9380 = vmatprep.subr.bf16.mxu0 0
        %9381 = vmatpush2.bf16.msra.mxu0 %v6341
        %9382 = vmatprep.mubr.bf16.mxu0 %v282
        %9383 = vmatmul.mubr.bf16.gmra.mxu0 %v281
        %v9384 = vpop.f32.mrf.mxu0
        %v9385 = vadd.f32 %v9344, %v9384
        %v9386 = vpop.f32.mrf.mxu0
        %v9387 = vpop.f32.mrf.mxu0
        %v9388 = vadd.f32 %v9347, %v9387
        %v9389 = vpop.f32.mrf.mxu0
        %9390 = vdwg.mxu0
        %9391 = vmatprep.subr.bf16.mxu0 0
        %9392 = vmatpush1.bf16.msra.mxu0 %v6386
        %9393 = vmatprep.subr.bf16.mxu0 0
        %9394 = vmatpush1.bf16.msra.mxu0 %v6383
        %9395 = vmatprep.subr.bf16.mxu0 0
        %9396 = vmatpush1.bf16.msra.mxu0 %v6380
        %9397 = vmatprep.subr.bf16.mxu0 0
        %9398 = vmatpush1.bf16.msra.mxu0 %v6377
        %9399 = vmatprep.subr.bf16.mxu0 0
        %9400 = vmatpush1.bf16.msra.mxu0 %v6374
        %9401 = vmatprep.subr.bf16.mxu0 0
        %9402 = vmatpush1.bf16.msra.mxu0 %v6371
        %9403 = vmatprep.subr.bf16.mxu0 0
        %9404 = vmatpush1.bf16.msra.mxu0 %v6368
        %9405 = vmatprep.subr.bf16.mxu0 0
        %9406 = vmatpush1.bf16.msra.mxu0 %v6365
        %9407 = vmatprep.subr.bf16.mxu0 0
        %9408 = vmatpush2.bf16.msra.mxu0 %v6410
        %9409 = vmatprep.subr.bf16.mxu0 0
        %9410 = vmatpush2.bf16.msra.mxu0 %v6407
        %9411 = vmatprep.subr.bf16.mxu0 0
        %9412 = vmatpush2.bf16.msra.mxu0 %v6404
        %9413 = vmatprep.subr.bf16.mxu0 0
        %9414 = vmatpush2.bf16.msra.mxu0 %v6401
        %9415 = vmatprep.subr.bf16.mxu0 0
        %9416 = vmatpush2.bf16.msra.mxu0 %v6398
        %9417 = vmatprep.subr.bf16.mxu0 0
        %9418 = vmatpush2.bf16.msra.mxu0 %v6395
        %9419 = vmatprep.subr.bf16.mxu0 0
        %9420 = vmatpush2.bf16.msra.mxu0 %v6392
        %9421 = vmatprep.subr.bf16.mxu0 0
        %9422 = vmatpush2.bf16.msra.mxu0 %v6389
        %9423 = vmatprep.mubr.bf16.mxu0 %v284
        %9424 = vmatmul.mubr.bf16.gmra.mxu0 %v283
        %v9425 = vpop.f32.mrf.mxu0
        %v9426 = vadd.f32 %v9385, %v9425
        %v9427 = vpop.f32.mrf.mxu0
        %v9428 = vpop.f32.mrf.mxu0
        %v9429 = vadd.f32 %v9388, %v9428
        %v9430 = vpop.f32.mrf.mxu0
        %9431 = vdwg.mxu0
        %9432 = vmatprep.subr.bf16.mxu0 0
        %9433 = vmatpush1.bf16.msra.mxu0 %v6434
        %9434 = vmatprep.subr.bf16.mxu0 0
        %9435 = vmatpush1.bf16.msra.mxu0 %v6431
        %9436 = vmatprep.subr.bf16.mxu0 0
        %9437 = vmatpush1.bf16.msra.mxu0 %v6428
        %9438 = vmatprep.subr.bf16.mxu0 0
        %9439 = vmatpush1.bf16.msra.mxu0 %v6425
        %9440 = vmatprep.subr.bf16.mxu0 0
        %9441 = vmatpush1.bf16.msra.mxu0 %v6422
        %9442 = vmatprep.subr.bf16.mxu0 0
        %9443 = vmatpush1.bf16.msra.mxu0 %v6419
        %9444 = vmatprep.subr.bf16.mxu0 0
        %9445 = vmatpush1.bf16.msra.mxu0 %v6416
        %9446 = vmatprep.subr.bf16.mxu0 0
        %9447 = vmatpush1.bf16.msra.mxu0 %v6413
        %9448 = vmatprep.subr.bf16.mxu0 0
        %9449 = vmatpush2.bf16.msra.mxu0 0
        %9450 = vmatprep.subr.bf16.mxu0 0
        %9451 = vmatpush2.bf16.msra.mxu0 0
        %9452 = vmatprep.subr.bf16.mxu0 0
        %9453 = vmatpush2.bf16.msra.mxu0 0
        %9454 = vmatprep.subr.bf16.mxu0 0
        %9455 = vmatpush2.bf16.msra.mxu0 0
        %9456 = vmatprep.subr.bf16.mxu0 0
        %9457 = vmatpush2.bf16.msra.mxu0 0
        %9458 = vmatprep.subr.bf16.mxu0 0
        %9459 = vmatpush2.bf16.msra.mxu0 0
        %9460 = vmatprep.subr.bf16.mxu0 0
        %9461 = vmatpush2.bf16.msra.mxu0 %v7539
        %9462 = vmatprep.subr.bf16.mxu0 0
        %9463 = vmatpush2.bf16.msra.mxu0 %v6437
        %9464 = vmatprep.mubr.bf16.mxu0 %v7526
        %9465 = vmatmul.mubr.bf16.gmra.mxu0 %v285
        %v9466 = vpop.f32.mrf.mxu0
        %v9467 = vadd.f32 %v9426, %v9466
        %v9468 = vpop.f32.mrf.mxu0
        %v9469 = vpop.f32.mrf.mxu0
        %v9470 = vadd.f32 %v9429, %v9469
        %v9471 = vpop.f32.mrf.mxu0
        %9472 = vdwg.mxu0
        %9473 = vst [vmem:[%s139] sm:$0xff] %v8522
        %9474 = vst [vmem:[%s139 + $0x8] sm:$0xff] %v8524
        %vm9475 = vcmask 375808
        %9476 = vst.msk [vmem:[%s139 + $0x10] sm:$0xff] %vm9475, %v9467
        %9477 = vst [vmem:[%s139 + $0x18] sm:$0xff] %v8526
        %9478 = vst [vmem:[%s139 + $0x20] sm:$0xff] %v8528
        %9479 = vst.msk [vmem:[%s139 + $0x28] sm:$0xff] %vm9475, %v9470
        %s9480 = sand.u32 %s71, 1
        %s9481 = scalar_lea.sflag [#allocation3], %s9480
        %s9482 = sand.u32 %s71, 1
        %s9483 = smul.addr %s9482, 48
        %s9484 = scalar_lea.vmem [#allocation2], %s9483
        // Predicated region
        $region29: #{tpu_custom_call.1} parent=27 // pred_check
          %p9485 = pneg %p81
        $region30: #{tpu_custom_call.1} parent=27 // pred_check_branch
          %9487 = sbr.rel (%p9485) target = $region32
        $region31: #{tpu_custom_call.1} parent=27 // pred_region
          %s9488 = smul.u32 2, %s16
          %s9490 = ssub.s32 768, 768
          %9491 = vsyncadd %s9481, %s9490
          %s9492 = smul.addr %s9488, 3
          %s9493 = smul.addr %s9492, 128
          %s9494 = scalar_lea.hbm %s2, %s9493
          %s9495 = sshll.u32 %s9484, 4
          %s9496 = int_to_ptr.vmem [resolvable:$true] %s9495
          %9501 = dma.vmem_to_hbm [thread:$0]  %s9496, 768, %s9494, %s9481, 384, 384, 24
        $region32: #{tpu_custom_call.1} parent=27 // pred_fallthru
          _
      $region28: #{tpu_custom_call.1} parent=5 // pred_fallthru
        _
      %p9502 = scmp.le.s32.totalorder 2, %s11
      // Predicated region
      $region33: #{tpu_custom_call.1} parent=5 // pred_check
        %p9503 = pneg %p9502
      $region34: #{tpu_custom_call.1} parent=5 // pred_check_branch
        %9505 = sbr.rel (%p9503) target = $region36
      $region35: #{tpu_custom_call.1} parent=5 // pred_region
        %s9506 = ssub.s32 %s11, 2
        // Predicated region
        $region37: #{tpu_custom_call.1} parent=35 // pred_check
          %p9507 = pneg %p87
        $region38: #{tpu_custom_call.1} parent=35 // pred_check_branch
          %9509 = sbr.rel (%p9507) target = $region40
        $region39: #{tpu_custom_call.1} parent=35 // pred_region
          %s9510 = sand.u32 %s72, 1
          %s9511 = scalar_lea.sflag [#allocation3], %s9510
          %s9512 = sand.u32 %s72, 1
          %s9513 = smul.addr %s9512, 48
          %s9514 = scalar_lea.vmem [#allocation2], %s9513
          %9515 = dma.done %s9511, 768
        $region40: #{tpu_custom_call.1} parent=35 // pred_fallthru
          _
      $region36: #{tpu_custom_call.1} parent=5 // pred_fallthru
        _
    $region6: #{tpu_custom_call.1} parent=1 // loop_footer
      %s15 = sadd.s32 1, %s11
    $region7: #{tpu_custom_call.1} parent=1 // loop_footer_branch
      %10 = sbr.rel target = $region3
    $region8: #{tpu_custom_call.1} parent=1 // loop_exit
      _
    %9516 = vsyncpa [#allocation3], 1
    %s9517 = scalar_lea.sflag [#allocation3], 1
    %9518 = vsyncpa %s9517, 1

</llo_original>
